<compile_context>
chip_gen: v7x
topology: tpu7x:2x2x1
jax: 0.10.0
libtpu: 0.0.40
codegen_flags: <defaults>
</compile_context>

<pallas_src>
import jax
import jax.numpy as jnp
import numpy as np
from jax.experimental import pallas as pl
from jax.experimental.pallas import tpu as pltpu

_LN_EPS = 1e-6


def _recip(d):
    # Approx reciprocal runs in the EUP slot; one Newton-Raphson step restores
    # ~1e-7 relative accuracy.
    r = pl.reciprocal(d, approx=True)
    return r * (2.0 - d * r)


def _layer_norm(z, gamma, beta):
    # PyTorch LayerNorm: biased variance, eps inside the sqrt.
    mu = jnp.mean(z, axis=-1, keepdims=True)
    zc = z - mu
    var = jnp.mean(zc * zc, axis=-1, keepdims=True)
    return zc * jax.lax.rsqrt(var + _LN_EPS) * gamma + beta


def _erf(z):
    # Abramowitz & Stegun 7.1.26 polynomial (|abs err| <= 1.5e-7): keeps the
    # exact-erf GELU semantics of nn.GELU() well within test tolerance.
    p = 0.3275911
    a1, a2, a3, a4, a5 = 0.254829592, -0.284496736, 1.421413741, -1.453152027, 1.061405429
    za = jnp.abs(z)
    t = _recip(1.0 + p * za)
    poly = t * (a1 + t * (a2 + t * (a3 + t * (a4 + t * a5))))
    y = 1.0 - poly * jnp.exp(-za * za)
    return jnp.where(z >= 0.0, y, -y)


def _gelu(z):
    return 0.5 * z * (1.0 + _erf(z * 0.7071067811865476))


def _block_kernel(xq_ref, xf_ref, g1_ref, b1_ref, wq_ref, wkv_ref, wp_ref, bp_ref,
                  g2_ref, b2_ref, w1_ref, bf1_ref, w2_ref, bf2_ref,
                  out_ref, attn_ref, k_scr, v_scr):
    """Grid = (batch, query-tile).  K/V for the whole sequence are built once
    per batch element (at q-tile 0) into VMEM scratch; every q-tile then runs
    scores -> softmax -> AV -> proj -> MLP on its own token slab."""
    H, N, D = k_scr.shape
    C = H * D

    # ---- K / V for the full sequence: once per batch element --------------
    @pl.when(pl.program_id(1) == 0)
    def _():
        xf = xf_ref[0].astype(jnp.float32)                               # (N, C)
        xnf = _layer_norm(xf, g1_ref[...], b1_ref[...])
        # one lane-dense (N, C) x (C, 2C) matmul for both K and V
        kv = jnp.dot(xnf, wkv_ref[...], preferred_element_type=jnp.float32)
        for h in range(H):                                               # static, cheap relayout
            k_scr[h] = kv[:, h * D:(h + 1) * D]
            v_scr[h] = kv[:, C + h * D:C + (h + 1) * D]

    # ---- attention for this query tile -------------------------------------
    xq = xq_ref[0].astype(jnp.float32)                                   # (tq, C)
    xnq = _layer_norm(xq, g1_ref[...], b1_ref[...])
    # lane-dense q projection (output width C); softmax scale pre-folded in wq.
    q2 = jnp.dot(xnq, wq_ref[...], preferred_element_type=jnp.float32)   # (tq, C)
    q = jnp.stack([q2[:, h * D:(h + 1) * D] for h in range(H)], axis=0)  # (H, tq, D)

    s = jnp.einsum('hnd,hmd->hnm', q, k_scr[...],
                   preferred_element_type=jnp.float32)                   # (H, tq, N)
    s = s - jnp.max(s, axis=-1, keepdims=True)
    e = jnp.exp(s)
    a = e * _recip(jnp.sum(e, axis=-1, keepdims=True))                   # softmax
    attn_ref[0] = a.astype(attn_ref.dtype)

    o = jnp.einsum('hnm,hmd->hnd', a, v_scr[...],
                   preferred_element_type=jnp.float32)                   # (H, tq, D)
    # Output projection: per-head (tq,D)x(D,C) with lane-dense output width C,
    # reduced over heads.  Intermediate is only (H, tq, C) thanks to q-tiling.
    yh = jnp.einsum('hnd,hdc->hnc', o, wp_ref[...],
                    preferred_element_type=jnp.float32)
    y = jnp.sum(yh, axis=0) + bp_ref[...]                                # (tq, C)

    x2 = xq + y                                                          # residual 1 (drop_path = id)

    # ---- MLP ----------------------------------------------------------------
    h2 = _layer_norm(x2, g2_ref[...], b2_ref[...])
    m = jnp.dot(h2, w1_ref[...], preferred_element_type=jnp.float32) + bf1_ref[...]
    m = _gelu(m)
    m = jnp.dot(m, w2_ref[...], preferred_element_type=jnp.float32) + bf2_ref[...]

    out_ref[0] = (x2 + m).astype(out_ref.dtype)                          # residual 2


def block_forward(x, p, num_heads, *, q_tile=None):
    """x: (B, N, C).  p: dict with ln1_{g,b}, w_qkv (C,3C), w_proj (C,C), b_proj (C,),
    ln2_{g,b}, w_fc1 (C,Ch), b_fc1 (Ch,), w_fc2 (Ch,C), b_fc2 (C,)."""
    B, N, C = x.shape
    H = num_heads
    D = C // H
    Ch = p["w_fc1"].shape[1]
    scale = D ** (-0.5)

    if q_tile is None:
        q_tile = N if N <= 256 else next(
            t for t in (256, 128, 64, 32, 16, 8, N) if N % t == 0)
    assert N % q_tile == 0 and (q_tile == N or q_tile % 8 == 0)
    nq = N // q_tile

    # Weight prep (plain XLA, outside the kernel):
    wq_s = p["w_qkv"][:, :C] * scale          # (C, C)   scale folded in
    wkv = p["w_qkv"][:, C:]                   # (C, 2C)  K|V packed, lane-dense
    wp_h = p["w_proj"].reshape(H, D, C)       # (H, D, C) head-major proj

    args = (
        x, x,                                              # q-tile view / full-seq view
        p["ln1_g"].reshape(1, C), p["ln1_b"].reshape(1, C),
        wq_s, wkv,
        wp_h, p["b_proj"].reshape(1, C),
        p["ln2_g"].reshape(1, C), p["ln2_b"].reshape(1, C),
        p["w_fc1"], p["b_fc1"].reshape(1, Ch),
        p["w_fc2"], p["b_fc2"].reshape(1, C),
    )

    def rep(shape):                                        # grid-invariant operand
        zeros = (0,) * len(shape)
        return pl.BlockSpec(shape, lambda b, qi, _z=zeros: _z)

    in_specs = [
        pl.BlockSpec((1, q_tile, C), lambda b, qi: (b, qi, 0)),   # x: query tile
        pl.BlockSpec((1, N, C), lambda b, qi: (b, 0, 0)),         # x: full sequence (K/V)
        rep((1, C)), rep((1, C)),
        rep((C, C)), rep((C, 2 * C)),
        rep((H, D, C)), rep((1, C)),
        rep((1, C)), rep((1, C)),
        rep((C, Ch)), rep((1, Ch)),
        rep((Ch, C)), rep((1, C)),
    ]
    out_specs = (
        pl.BlockSpec((1, q_tile, C), lambda b, qi: (b, qi, 0)),
        pl.BlockSpec((1, H, q_tile, N), lambda b, qi: (b, 0, qi, 0)),
    )
    out_shape = (
        jax.ShapeDtypeStruct((B, N, C), x.dtype),          # block output
        jax.ShapeDtypeStruct((B, H, N, N), jnp.float32),   # attention weights
    )
    scratch_shapes = [
        pltpu.VMEM((H, N, D), jnp.float32),                # K, head-major, full seq
        pltpu.VMEM((H, N, D), jnp.float32),                # V, head-major, full seq
    ]

    # Explicit VMEM budget: weights + (double-buffered) activation blocks + scratch.
    itemsize = jnp.dtype(x.dtype).itemsize
    repl_bytes = sum(int(np.prod(a.shape)) * jnp.dtype(a.dtype).itemsize
                     for a in args[2:])
    blk_bytes = (2 * q_tile * C + N * C) * itemsize + H * q_tile * N * 4
    scratch_bytes = 2 * H * N * D * 4
    est = 2 * (repl_bytes + blk_bytes) + scratch_bytes + (4 << 20)
    vmem_limit = int(min(max(est, 32 << 20), 64 << 20))    # cap at v7x physical VMEM

    return pl.pallas_call(
        _block_kernel,
        out_shape=out_shape,
        grid=(B, nq),
        in_specs=in_specs,
        out_specs=out_specs,
        scratch_shapes=scratch_shapes,
        compiler_params=pltpu.CompilerParams(
            # batch axis sharded across v7x cores; q-tile axis carries the K/V
            # scratch so it must stay sequential ("arbitrary").
            dimension_semantics=("parallel", "arbitrary"),
            vmem_limit_bytes=vmem_limit,
        ),
    )(*args)


def block_reference(x, p, num_heads):
    """Pure-JAX replica of the PyTorch Block forward (eval mode)."""
    B, N, C = x.shape
    H = num_heads
    D = C // H
    scale = D ** (-0.5)

    def ln(z, g, b):
        mu = z.mean(-1, keepdims=True)
        var = ((z - mu) ** 2).mean(-1, keepdims=True)
        return (z - mu) / jnp.sqrt(var + _LN_EPS) * g + b

    xn = ln(x, p["ln1_g"], p["ln1_b"])
    qkv = xn @ p["w_qkv"]                                        # (B, N, 3C)
    qkv = qkv.reshape(B, N, 3, H, D).transpose(2, 0, 3, 1, 4)
    q, k, v = qkv[0], qkv[1], qkv[2]                             # (B, H, N, D)
    attn = (q @ jnp.swapaxes(k, -2, -1)) * scale
    attn = jax.nn.softmax(attn, axis=-1)
    x1 = (attn @ v).transpose(0, 2, 1, 3).reshape(B, N, C)
    x1 = x1 @ p["w_proj"] + p["b_proj"]
    x = x + x1

    xn2 = ln(x, p["ln2_g"], p["ln2_b"])
    h = xn2 @ p["w_fc1"] + p["b_fc1"]
    h = 0.5 * h * (1.0 + jax.lax.erf(h * 0.7071067811865476))    # exact GELU
    m = h @ p["w_fc2"] + p["b_fc2"]
    out = x + m
    return out, attn


if __name__ == "__main__":
    # Small but lane-dense shapes: C and N multiples of 128, head_dim = 64
    # (matches real ViT head size).  q_tile=64 -> 2 query tiles per batch, so
    # the K/V-scratch reuse path across the q-tile grid axis is exercised.
    B, N, C, H = 2, 128, 256, 4
    Ch = 4 * C

    key = jax.random.PRNGKey(0)
    ks = jax.random.split(key, 12)
    x = jax.random.normal(ks[0], (B, N, C), dtype=jnp.float32)
    p = dict(
        ln1_g=1.0 + 0.1 * jax.random.normal(ks[1], (C,), jnp.float32),
        ln1_b=0.1 * jax.random.normal(ks[2], (C,), jnp.float32),
        w_qkv=0.05 * jax.random.normal(ks[3], (C, 3 * C), jnp.float32),
        w_proj=0.05 * jax.random.normal(ks[4], (C, C), jnp.float32),
        b_proj=0.05 * jax.random.normal(ks[5], (C,), jnp.float32),
        ln2_g=1.0 + 0.1 * jax.random.normal(ks[6], (C,), jnp.float32),
        ln2_b=0.1 * jax.random.normal(ks[7], (C,), jnp.float32),
        w_fc1=0.05 * jax.random.normal(ks[8], (C, Ch), jnp.float32),
        b_fc1=0.05 * jax.random.normal(ks[9], (Ch,), jnp.float32),
        w_fc2=0.05 * jax.random.normal(ks[10], (Ch, C), jnp.float32),
        b_fc2=0.05 * jax.random.normal(ks[11], (C,), jnp.float32),
    )

    out, attn = block_forward(x, p, H, q_tile=64)
    jax.block_until_ready((out, attn))

    out_ref, attn_ref = block_reference(x, p, H)
    np.testing.assert_allclose(np.asarray(out), np.asarray(out_ref), rtol=1e-4, atol=1e-4)
    np.testing.assert_allclose(np.asarray(attn), np.asarray(attn_ref), rtol=1e-4, atol=1e-4)

    print("KERNEL_OK")
</pallas_src>

<mosaic_0001>
module attributes {stable_mosaic.version = 11 : i64} {
  func.func @_block_kernel(%arg0: i32, %arg1: i32, %arg2: memref<1x64x256xf32, #tpu.memory_space<vmem>>, %arg3: memref<1x128x256xf32, #tpu.memory_space<vmem>>, %arg4: memref<1x256xf32, #tpu.memory_space<vmem>>, %arg5: memref<1x256xf32, #tpu.memory_space<vmem>>, %arg6: memref<256x256xf32, #tpu.memory_space<vmem>>, %arg7: memref<256x512xf32, #tpu.memory_space<vmem>>, %arg8: memref<4x64x256xf32, #tpu.memory_space<vmem>>, %arg9: memref<1x256xf32, #tpu.memory_space<vmem>>, %arg10: memref<1x256xf32, #tpu.memory_space<vmem>>, %arg11: memref<1x256xf32, #tpu.memory_space<vmem>>, %arg12: memref<256x1024xf32, #tpu.memory_space<vmem>>, %arg13: memref<1x1024xf32, #tpu.memory_space<vmem>>, %arg14: memref<1024x256xf32, #tpu.memory_space<vmem>>, %arg15: memref<1x256xf32, #tpu.memory_space<vmem>>, %arg16: memref<1x64x256xf32, #tpu.memory_space<vmem>>, %arg17: memref<1x4x64x128xf32, #tpu.memory_space<vmem>>, %arg18: memref<4x128x64xf32, #tpu.memory_space<vmem>>, %arg19: memref<4x128x64xf32, #tpu.memory_space<vmem>>) attributes {dimension_semantics = [#tpu.dimension_semantics<parallel>, #tpu.dimension_semantics<arbitrary>], iteration_bounds = array<i64: 2, 2>, scalar_prefetch = 0 : i64, scratch_operands = 2 : i64, tpu.core_type = #tpu.core_type<tc>, window_params = [{transform_indices = @transform_0, window_bounds = array<i64: 1, 64, 256>}, {transform_indices = @transform_1, window_bounds = array<i64: 1, 128, 256>}, {pipeline_mode = #tpu.pipeline_mode<synchronous>, transform_indices = @transform_2, window_bounds = array<i64: 1, 256>}, {pipeline_mode = #tpu.pipeline_mode<synchronous>, transform_indices = @transform_3, window_bounds = array<i64: 1, 256>}, {pipeline_mode = #tpu.pipeline_mode<synchronous>, transform_indices = @transform_4, window_bounds = array<i64: 256, 256>}, {pipeline_mode = #tpu.pipeline_mode<synchronous>, transform_indices = @transform_5, window_bounds = array<i64: 256, 512>}, {pipeline_mode = #tpu.pipeline_mode<synchronous>, transform_indices = @transform_6, window_bounds = array<i64: 4, 64, 256>}, {pipeline_mode = #tpu.pipeline_mode<synchronous>, transform_indices = @transform_7, window_bounds = array<i64: 1, 256>}, {pipeline_mode = #tpu.pipeline_mode<synchronous>, transform_indices = @transform_8, window_bounds = array<i64: 1, 256>}, {pipeline_mode = #tpu.pipeline_mode<synchronous>, transform_indices = @transform_9, window_bounds = array<i64: 1, 256>}, {pipeline_mode = #tpu.pipeline_mode<synchronous>, transform_indices = @transform_10, window_bounds = array<i64: 256, 1024>}, {pipeline_mode = #tpu.pipeline_mode<synchronous>, transform_indices = @transform_11, window_bounds = array<i64: 1, 1024>}, {pipeline_mode = #tpu.pipeline_mode<synchronous>, transform_indices = @transform_12, window_bounds = array<i64: 1024, 256>}, {pipeline_mode = #tpu.pipeline_mode<synchronous>, transform_indices = @transform_13, window_bounds = array<i64: 1, 256>}, {transform_indices = @transform_14, window_bounds = array<i64: 1, 64, 256>}, {transform_indices = @transform_15, window_bounds = array<i64: 1, 4, 64, 128>}]} {
    %c0_i32 = arith.constant 0 : i32
    %0 = arith.cmpi eq, %arg1, %c0_i32 : i32
    %1 = arith.extui %0 : i1 to i32
    %c0_i32_0 = arith.constant 0 : i32
    %2 = arith.cmpi ne, %1, %c0_i32_0 : i32
    scf.if %2 {
      %c0_73 = arith.constant 0 : index
      %c0_74 = arith.constant 0 : index
      %c0_75 = arith.constant 0 : index
      %145 = vector.load %arg3[%c0_73, %c0_74, %c0_75] : memref<1x128x256xf32, #tpu.memory_space<vmem>>, vector<1x128x256xf32>
      %146 = vector.shape_cast %145 : vector<1x128x256xf32> to vector<128x256xf32>
      %c0_76 = arith.constant 0 : index
      %c0_77 = arith.constant 0 : index
      %147 = vector.load %arg4[%c0_76, %c0_77] : memref<1x256xf32, #tpu.memory_space<vmem>>, vector<1x256xf32>
      %c0_78 = arith.constant 0 : index
      %c0_79 = arith.constant 0 : index
      %148 = vector.load %arg5[%c0_78, %c0_79] : memref<1x256xf32, #tpu.memory_space<vmem>>, vector<1x256xf32>
      %cst_80 = arith.constant dense<0.000000e+00> : vector<128xf32>
      %149 = vector.multi_reduction <add>, %146, %cst_80 [1] : vector<128x256xf32> to vector<128xf32>
      %150 = vector.shape_cast %149 : vector<128xf32> to vector<128x1xf32>
      %cst_81 = arith.constant 2.560000e+02 : f32
      %151 = vector.broadcast %cst_81 : f32 to vector<128x1xf32>
      %152 = arith.divf %150, %151 : vector<128x1xf32>
      %153 = vector.broadcast %152 : vector<128x1xf32> to vector<128x256xf32>
      %154 = arith.subf %146, %153 : vector<128x256xf32>
      %155 = arith.mulf %154, %154 : vector<128x256xf32>
      %cst_82 = arith.constant dense<0.000000e+00> : vector<128xf32>
      %156 = vector.multi_reduction <add>, %155, %cst_82 [1] : vector<128x256xf32> to vector<128xf32>
      %157 = vector.shape_cast %156 : vector<128xf32> to vector<128x1xf32>
      %cst_83 = arith.constant 2.560000e+02 : f32
      %158 = vector.broadcast %cst_83 : f32 to vector<128x1xf32>
      %159 = arith.divf %157, %158 : vector<128x1xf32>
      %cst_84 = arith.constant 9.99999997E-7 : f32
      %160 = vector.broadcast %cst_84 : f32 to vector<128x1xf32>
      %161 = arith.addf %159, %160 : vector<128x1xf32>
      %162 = math.rsqrt %161 : vector<128x1xf32>
      %163 = vector.broadcast %162 : vector<128x1xf32> to vector<128x256xf32>
      %164 = arith.mulf %154, %163 : vector<128x256xf32>
      %165 = vector.broadcast %147 : vector<1x256xf32> to vector<128x256xf32>
      %166 = arith.mulf %164, %165 : vector<128x256xf32>
      %167 = vector.broadcast %148 : vector<1x256xf32> to vector<128x256xf32>
      %168 = arith.addf %166, %167 : vector<128x256xf32>
      %c0_85 = arith.constant 0 : index
      %c0_86 = arith.constant 0 : index
      %169 = vector.load %arg7[%c0_85, %c0_86] : memref<256x512xf32, #tpu.memory_space<vmem>>, vector<256x512xf32>
      %cst_87 = arith.constant dense<0.000000e+00> : vector<128x512xf32>
      %170 = tpu.matmul %168, %169, %cst_87 {dimension_numbers = #tpu.dot_dimension_numbers<[1], [0], [0], [1], [0, 0, 1, 1], [], []>} : vector<128x256xf32>, vector<256x512xf32>, vector<128x512xf32> -> vector<128x512xf32>
      %171 = vector.extract_strided_slice %170 {offsets = [0, 0], sizes = [128, 64], strides = [1, 1]} : vector<128x512xf32> to vector<128x64xf32>
      %c0_88 = arith.constant 0 : index
      %c0_89 = arith.constant 0 : index
      %c0_90 = arith.constant 0 : index
      %172 = vector.load %arg18[%c0_88, %c0_89, %c0_90] : memref<4x128x64xf32, #tpu.memory_space<vmem>>, vector<1x128x64xf32>
      %173 = vector.shape_cast %172 : vector<1x128x64xf32> to vector<128x64xf32>
      %174 = vector.shape_cast %171 : vector<128x64xf32> to vector<1x128x64xf32>
      tpu.vector_store %arg18[%c0_88, %c0_89, %c0_90], %174 {strides = array<i32>} : memref<4x128x64xf32, #tpu.memory_space<vmem>>, vector<1x128x64xf32>,
      %175 = vector.extract_strided_slice %170 {offsets = [0, 256], sizes = [128, 64], strides = [1, 1]} : vector<128x512xf32> to vector<128x64xf32>
      %c0_91 = arith.constant 0 : index
      %c0_92 = arith.constant 0 : index
      %c0_93 = arith.constant 0 : index
      %176 = vector.load %arg19[%c0_91, %c0_92, %c0_93] : memref<4x128x64xf32, #tpu.memory_space<vmem>>, vector<1x128x64xf32>
      %177 = vector.shape_cast %176 : vector<1x128x64xf32> to vector<128x64xf32>
      %178 = vector.shape_cast %175 : vector<128x64xf32> to vector<1x128x64xf32>
      tpu.vector_store %arg19[%c0_91, %c0_92, %c0_93], %178 {strides = array<i32>} : memref<4x128x64xf32, #tpu.memory_space<vmem>>, vector<1x128x64xf32>,
      %179 = vector.extract_strided_slice %170 {offsets = [0, 64], sizes = [128, 64], strides = [1, 1]} : vector<128x512xf32> to vector<128x64xf32>
      %c1 = arith.constant 1 : index
      %c0_94 = arith.constant 0 : index
      %c0_95 = arith.constant 0 : index
      %180 = vector.load %arg18[%c1, %c0_94, %c0_95] : memref<4x128x64xf32, #tpu.memory_space<vmem>>, vector<1x128x64xf32>
      %181 = vector.shape_cast %180 : vector<1x128x64xf32> to vector<128x64xf32>
      %182 = vector.shape_cast %179 : vector<128x64xf32> to vector<1x128x64xf32>
      tpu.vector_store %arg18[%c1, %c0_94, %c0_95], %182 {strides = array<i32>} : memref<4x128x64xf32, #tpu.memory_space<vmem>>, vector<1x128x64xf32>,
      %183 = vector.extract_strided_slice %170 {offsets = [0, 320], sizes = [128, 64], strides = [1, 1]} : vector<128x512xf32> to vector<128x64xf32>
      %c1_96 = arith.constant 1 : index
      %c0_97 = arith.constant 0 : index
      %c0_98 = arith.constant 0 : index
      %184 = vector.load %arg19[%c1_96, %c0_97, %c0_98] : memref<4x128x64xf32, #tpu.memory_space<vmem>>, vector<1x128x64xf32>
      %185 = vector.shape_cast %184 : vector<1x128x64xf32> to vector<128x64xf32>
      %186 = vector.shape_cast %183 : vector<128x64xf32> to vector<1x128x64xf32>
      tpu.vector_store %arg19[%c1_96, %c0_97, %c0_98], %186 {strides = array<i32>} : memref<4x128x64xf32, #tpu.memory_space<vmem>>, vector<1x128x64xf32>,
      %187 = vector.extract_strided_slice %170 {offsets = [0, 128], sizes = [128, 64], strides = [1, 1]} : vector<128x512xf32> to vector<128x64xf32>
      %c2 = arith.constant 2 : index
      %c0_99 = arith.constant 0 : index
      %c0_100 = arith.constant 0 : index
      %188 = vector.load %arg18[%c2, %c0_99, %c0_100] : memref<4x128x64xf32, #tpu.memory_space<vmem>>, vector<1x128x64xf32>
      %189 = vector.shape_cast %188 : vector<1x128x64xf32> to vector<128x64xf32>
      %190 = vector.shape_cast %187 : vector<128x64xf32> to vector<1x128x64xf32>
      tpu.vector_store %arg18[%c2, %c0_99, %c0_100], %190 {strides = array<i32>} : memref<4x128x64xf32, #tpu.memory_space<vmem>>, vector<1x128x64xf32>,
      %191 = vector.extract_strided_slice %170 {offsets = [0, 384], sizes = [128, 64], strides = [1, 1]} : vector<128x512xf32> to vector<128x64xf32>
      %c2_101 = arith.constant 2 : index
      %c0_102 = arith.constant 0 : index
      %c0_103 = arith.constant 0 : index
      %192 = vector.load %arg19[%c2_101, %c0_102, %c0_103] : memref<4x128x64xf32, #tpu.memory_space<vmem>>, vector<1x128x64xf32>
      %193 = vector.shape_cast %192 : vector<1x128x64xf32> to vector<128x64xf32>
      %194 = vector.shape_cast %191 : vector<128x64xf32> to vector<1x128x64xf32>
      tpu.vector_store %arg19[%c2_101, %c0_102, %c0_103], %194 {strides = array<i32>} : memref<4x128x64xf32, #tpu.memory_space<vmem>>, vector<1x128x64xf32>,
      %195 = vector.extract_strided_slice %170 {offsets = [0, 192], sizes = [128, 64], strides = [1, 1]} : vector<128x512xf32> to vector<128x64xf32>
      %c3 = arith.constant 3 : index
      %c0_104 = arith.constant 0 : index
      %c0_105 = arith.constant 0 : index
      %196 = vector.load %arg18[%c3, %c0_104, %c0_105] : memref<4x128x64xf32, #tpu.memory_space<vmem>>, vector<1x128x64xf32>
      %197 = vector.shape_cast %196 : vector<1x128x64xf32> to vector<128x64xf32>
      %198 = vector.shape_cast %195 : vector<128x64xf32> to vector<1x128x64xf32>
      tpu.vector_store %arg18[%c3, %c0_104, %c0_105], %198 {strides = array<i32>} : memref<4x128x64xf32, #tpu.memory_space<vmem>>, vector<1x128x64xf32>,
      %199 = vector.extract_strided_slice %170 {offsets = [0, 448], sizes = [128, 64], strides = [1, 1]} : vector<128x512xf32> to vector<128x64xf32>
      %c3_106 = arith.constant 3 : index
      %c0_107 = arith.constant 0 : index
      %c0_108 = arith.constant 0 : index
      %200 = vector.load %arg19[%c3_106, %c0_107, %c0_108] : memref<4x128x64xf32, #tpu.memory_space<vmem>>, vector<1x128x64xf32>
      %201 = vector.shape_cast %200 : vector<1x128x64xf32> to vector<128x64xf32>
      %202 = vector.shape_cast %199 : vector<128x64xf32> to vector<1x128x64xf32>
      tpu.vector_store %arg19[%c3_106, %c0_107, %c0_108], %202 {strides = array<i32>} : memref<4x128x64xf32, #tpu.memory_space<vmem>>, vector<1x128x64xf32>,
    } else {
    }
    %c0 = arith.constant 0 : index
    %c0_1 = arith.constant 0 : index
    %c0_2 = arith.constant 0 : index
    %3 = vector.load %arg2[%c0, %c0_1, %c0_2] : memref<1x64x256xf32, #tpu.memory_space<vmem>>, vector<1x64x256xf32>
    %4 = vector.shape_cast %3 : vector<1x64x256xf32> to vector<64x256xf32>
    %c0_3 = arith.constant 0 : index
    %c0_4 = arith.constant 0 : index
    %5 = vector.load %arg4[%c0_3, %c0_4] : memref<1x256xf32, #tpu.memory_space<vmem>>, vector<1x256xf32>
    %c0_5 = arith.constant 0 : index
    %c0_6 = arith.constant 0 : index
    %6 = vector.load %arg5[%c0_5, %c0_6] : memref<1x256xf32, #tpu.memory_space<vmem>>, vector<1x256xf32>
    %cst = arith.constant dense<0.000000e+00> : vector<64xf32>
    %7 = vector.multi_reduction <add>, %4, %cst [1] : vector<64x256xf32> to vector<64xf32>
    %8 = vector.shape_cast %7 : vector<64xf32> to vector<64x1xf32>
    %cst_7 = arith.constant 2.560000e+02 : f32
    %9 = vector.broadcast %cst_7 : f32 to vector<64x1xf32>
    %10 = arith.divf %8, %9 : vector<64x1xf32>
    %11 = vector.broadcast %10 : vector<64x1xf32> to vector<64x256xf32>
    %12 = arith.subf %4, %11 : vector<64x256xf32>
    %13 = arith.mulf %12, %12 : vector<64x256xf32>
    %cst_8 = arith.constant dense<0.000000e+00> : vector<64xf32>
    %14 = vector.multi_reduction <add>, %13, %cst_8 [1] : vector<64x256xf32> to vector<64xf32>
    %15 = vector.shape_cast %14 : vector<64xf32> to vector<64x1xf32>
    %cst_9 = arith.constant 2.560000e+02 : f32
    %16 = vector.broadcast %cst_9 : f32 to vector<64x1xf32>
    %17 = arith.divf %15, %16 : vector<64x1xf32>
    %cst_10 = arith.constant 9.99999997E-7 : f32
    %18 = vector.broadcast %cst_10 : f32 to vector<64x1xf32>
    %19 = arith.addf %17, %18 : vector<64x1xf32>
    %20 = math.rsqrt %19 : vector<64x1xf32>
    %21 = vector.broadcast %20 : vector<64x1xf32> to vector<64x256xf32>
    %22 = arith.mulf %12, %21 : vector<64x256xf32>
    %23 = vector.broadcast %5 : vector<1x256xf32> to vector<64x256xf32>
    %24 = arith.mulf %22, %23 : vector<64x256xf32>
    %25 = vector.broadcast %6 : vector<1x256xf32> to vector<64x256xf32>
    %26 = arith.addf %24, %25 : vector<64x256xf32>
    %c0_11 = arith.constant 0 : index
    %c0_12 = arith.constant 0 : index
    %27 = vector.load %arg6[%c0_11, %c0_12] : memref<256x256xf32, #tpu.memory_space<vmem>>, vector<256x256xf32>
    %cst_13 = arith.constant dense<0.000000e+00> : vector<64x256xf32>
    %28 = tpu.matmul %26, %27, %cst_13 {dimension_numbers = #tpu.dot_dimension_numbers<[1], [0], [0], [1], [0, 0, 1, 1], [], []>} : vector<64x256xf32>, vector<256x256xf32>, vector<64x256xf32> -> vector<64x256xf32>
    %29 = vector.extract_strided_slice %28 {offsets = [0, 0], sizes = [64, 64], strides = [1, 1]} : vector<64x256xf32> to vector<64x64xf32>
    %30 = vector.extract_strided_slice %28 {offsets = [0, 64], sizes = [64, 64], strides = [1, 1]} : vector<64x256xf32> to vector<64x64xf32>
    %31 = vector.extract_strided_slice %28 {offsets = [0, 128], sizes = [64, 64], strides = [1, 1]} : vector<64x256xf32> to vector<64x64xf32>
    %32 = vector.extract_strided_slice %28 {offsets = [0, 192], sizes = [64, 64], strides = [1, 1]} : vector<64x256xf32> to vector<64x64xf32>
    %33 = vector.shape_cast %29 : vector<64x64xf32> to vector<1x64x64xf32>
    %34 = vector.shape_cast %30 : vector<64x64xf32> to vector<1x64x64xf32>
    %35 = vector.shape_cast %31 : vector<64x64xf32> to vector<1x64x64xf32>
    %36 = vector.shape_cast %32 : vector<64x64xf32> to vector<1x64x64xf32>
    %37 = tpu.concatenate %33, %34, %35, %36 in 0 : vector<1x64x64xf32>, vector<1x64x64xf32>, vector<1x64x64xf32>, vector<1x64x64xf32> -> vector<4x64x64xf32>
    %c0_14 = arith.constant 0 : index
    %c0_15 = arith.constant 0 : index
    %c0_16 = arith.constant 0 : index
    %38 = vector.load %arg18[%c0_14, %c0_15, %c0_16] : memref<4x128x64xf32, #tpu.memory_space<vmem>>, vector<4x128x64xf32>
    "tpu.trace_start"() <{level = 10 : i32, message = "hnd,hmd->hnm"}> : () -> ()
    %cst_17 = arith.constant dense<0.000000e+00> : vector<4x64x128xf32>
    %39 = tpu.matmul %37, %38, %cst_17 {dimension_numbers = #tpu.dot_dimension_numbers<[2], [2], [1], [1], [0, 0, 0, 1, 1, 1], [0], [0]>} : vector<4x64x64xf32>, vector<4x128x64xf32>, vector<4x64x128xf32> -> vector<4x64x128xf32>
    "tpu.trace_stop"() : () -> ()
    %cst_18 = arith.constant dense<0xFF800000> : vector<4x64xf32>
    %40 = vector.multi_reduction <maximumf>, %39, %cst_18 [2] : vector<4x64x128xf32> to vector<4x64xf32>
    %41 = vector.shape_cast %40 : vector<4x64xf32> to vector<4x64x1xf32>
    %42 = vector.broadcast %41 : vector<4x64x1xf32> to vector<4x64x128xf32>
    %43 = arith.subf %39, %42 : vector<4x64x128xf32>
    %44 = math.exp %43 : vector<4x64x128xf32>
    %cst_19 = arith.constant dense<0.000000e+00> : vector<4x64xf32>
    %45 = vector.multi_reduction <add>, %44, %cst_19 [2] : vector<4x64x128xf32> to vector<4x64xf32>
    %46 = vector.shape_cast %45 : vector<4x64xf32> to vector<4x64x1xf32>
    %47 = tpu.reciprocal %46 {approx = true} : vector<4x64x1xf32> -> vector<4x64x1xf32>
    %48 = arith.mulf %46, %47 : vector<4x64x1xf32>
    %cst_20 = arith.constant 2.000000e+00 : f32
    %49 = vector.broadcast %cst_20 : f32 to vector<4x64x1xf32>
    %50 = arith.subf %49, %48 : vector<4x64x1xf32>
    %51 = arith.mulf %47, %50 : vector<4x64x1xf32>
    %52 = vector.broadcast %51 : vector<4x64x1xf32> to vector<4x64x128xf32>
    %53 = arith.mulf %44, %52 : vector<4x64x128xf32>
    %c0_21 = arith.constant 0 : index
    %c0_22 = arith.constant 0 : index
    %c0_23 = arith.constant 0 : index
    %c0_24 = arith.constant 0 : index
    %54 = vector.load %arg17[%c0_21, %c0_22, %c0_23, %c0_24] : memref<1x4x64x128xf32, #tpu.memory_space<vmem>>, vector<1x4x64x128xf32>
    %55 = vector.shape_cast %54 : vector<1x4x64x128xf32> to vector<4x64x128xf32>
    %56 = vector.shape_cast %53 : vector<4x64x128xf32> to vector<1x4x64x128xf32>
    tpu.vector_store %arg17[%c0_21, %c0_22, %c0_23, %c0_24], %56 {strides = array<i32>} : memref<1x4x64x128xf32, #tpu.memory_space<vmem>>, vector<1x4x64x128xf32>,
    %c0_25 = arith.constant 0 : index
    %c0_26 = arith.constant 0 : index
    %c0_27 = arith.constant 0 : index
    %57 = vector.load %arg19[%c0_25, %c0_26, %c0_27] : memref<4x128x64xf32, #tpu.memory_space<vmem>>, vector<4x128x64xf32>
    "tpu.trace_start"() <{level = 10 : i32, message = "hnm,hmd->hnd"}> : () -> ()
    %cst_28 = arith.constant dense<0.000000e+00> : vector<4x64x64xf32>
    %58 = tpu.matmul %53, %57, %cst_28 {dimension_numbers = #tpu.dot_dimension_numbers<[2], [1], [1], [2], [0, 0, 0, 1, 1, 2], [0], [0]>} : vector<4x64x128xf32>, vector<4x128x64xf32>, vector<4x64x64xf32> -> vector<4x64x64xf32>
    "tpu.trace_stop"() : () -> ()
    %c0_29 = arith.constant 0 : index
    %c0_30 = arith.constant 0 : index
    %c0_31 = arith.constant 0 : index
    %59 = vector.load %arg8[%c0_29, %c0_30, %c0_31] : memref<4x64x256xf32, #tpu.memory_space<vmem>>, vector<4x64x256xf32>
    "tpu.trace_start"() <{level = 10 : i32, message = "hnd,hdc->hnc"}> : () -> ()
    %cst_32 = arith.constant dense<0.000000e+00> : vector<4x64x256xf32>
    %60 = tpu.matmul %58, %59, %cst_32 {dimension_numbers = #tpu.dot_dimension_numbers<[2], [1], [1], [2], [0, 0, 0, 1, 1, 2], [0], [0]>} : vector<4x64x64xf32>, vector<4x64x256xf32>, vector<4x64x256xf32> -> vector<4x64x256xf32>
    "tpu.trace_stop"() : () -> ()
    %cst_33 = arith.constant dense<0.000000e+00> : vector<64x256xf32>
    %61 = vector.multi_reduction <add>, %60, %cst_33 [0] : vector<4x64x256xf32> to vector<64x256xf32>
    %c0_34 = arith.constant 0 : index
    %c0_35 = arith.constant 0 : index
    %62 = vector.load %arg9[%c0_34, %c0_35] : memref<1x256xf32, #tpu.memory_space<vmem>>, vector<1x256xf32>
    %63 = vector.broadcast %62 : vector<1x256xf32> to vector<64x256xf32>
    %64 = arith.addf %61, %63 : vector<64x256xf32>
    %65 = arith.addf %4, %64 : vector<64x256xf32>
    %c0_36 = arith.constant 0 : index
    %c0_37 = arith.constant 0 : index
    %66 = vector.load %arg10[%c0_36, %c0_37] : memref<1x256xf32, #tpu.memory_space<vmem>>, vector<1x256xf32>
    %c0_38 = arith.constant 0 : index
    %c0_39 = arith.constant 0 : index
    %67 = vector.load %arg11[%c0_38, %c0_39] : memref<1x256xf32, #tpu.memory_space<vmem>>, vector<1x256xf32>
    %cst_40 = arith.constant dense<0.000000e+00> : vector<64xf32>
    %68 = vector.multi_reduction <add>, %65, %cst_40 [1] : vector<64x256xf32> to vector<64xf32>
    %69 = vector.shape_cast %68 : vector<64xf32> to vector<64x1xf32>
    %cst_41 = arith.constant 2.560000e+02 : f32
    %70 = vector.broadcast %cst_41 : f32 to vector<64x1xf32>
    %71 = arith.divf %69, %70 : vector<64x1xf32>
    %72 = vector.broadcast %71 : vector<64x1xf32> to vector<64x256xf32>
    %73 = arith.subf %65, %72 : vector<64x256xf32>
    %74 = arith.mulf %73, %73 : vector<64x256xf32>
    %cst_42 = arith.constant dense<0.000000e+00> : vector<64xf32>
    %75 = vector.multi_reduction <add>, %74, %cst_42 [1] : vector<64x256xf32> to vector<64xf32>
    %76 = vector.shape_cast %75 : vector<64xf32> to vector<64x1xf32>
    %cst_43 = arith.constant 2.560000e+02 : f32
    %77 = vector.broadcast %cst_43 : f32 to vector<64x1xf32>
    %78 = arith.divf %76, %77 : vector<64x1xf32>
    %cst_44 = arith.constant 9.99999997E-7 : f32
    %79 = vector.broadcast %cst_44 : f32 to vector<64x1xf32>
    %80 = arith.addf %78, %79 : vector<64x1xf32>
    %81 = math.rsqrt %80 : vector<64x1xf32>
    %82 = vector.broadcast %81 : vector<64x1xf32> to vector<64x256xf32>
    %83 = arith.mulf %73, %82 : vector<64x256xf32>
    %84 = vector.broadcast %66 : vector<1x256xf32> to vector<64x256xf32>
    %85 = arith.mulf %83, %84 : vector<64x256xf32>
    %86 = vector.broadcast %67 : vector<1x256xf32> to vector<64x256xf32>
    %87 = arith.addf %85, %86 : vector<64x256xf32>
    %c0_45 = arith.constant 0 : index
    %c0_46 = arith.constant 0 : index
    %88 = vector.load %arg12[%c0_45, %c0_46] : memref<256x1024xf32, #tpu.memory_space<vmem>>, vector<256x1024xf32>
    %cst_47 = arith.constant dense<0.000000e+00> : vector<64x1024xf32>
    %89 = tpu.matmul %87, %88, %cst_47 {dimension_numbers = #tpu.dot_dimension_numbers<[1], [0], [0], [1], [0, 0, 1, 1], [], []>} : vector<64x256xf32>, vector<256x1024xf32>, vector<64x1024xf32> -> vector<64x1024xf32>
    %c0_48 = arith.constant 0 : index
    %c0_49 = arith.constant 0 : index
    %90 = vector.load %arg13[%c0_48, %c0_49] : memref<1x1024xf32, #tpu.memory_space<vmem>>, vector<1x1024xf32>
    %91 = vector.broadcast %90 : vector<1x1024xf32> to vector<64x1024xf32>
    %92 = arith.addf %89, %91 : vector<64x1024xf32>
    %cst_50 = arith.constant 5.000000e-01 : f32
    %93 = vector.broadcast %cst_50 : f32 to vector<64x1024xf32>
    %94 = arith.mulf %93, %92 : vector<64x1024xf32>
    %cst_51 = arith.constant 0.707106769 : f32
    %95 = vector.broadcast %cst_51 : f32 to vector<64x1024xf32>
    %96 = arith.mulf %92, %95 : vector<64x1024xf32>
    %97 = math.absf %96 : vector<64x1024xf32>
    %cst_52 = arith.constant 0.327591091 : f32
    %98 = vector.broadcast %cst_52 : f32 to vector<64x1024xf32>
    %99 = arith.mulf %98, %97 : vector<64x1024xf32>
    %cst_53 = arith.constant 1.000000e+00 : f32
    %100 = vector.broadcast %cst_53 : f32 to vector<64x1024xf32>
    %101 = arith.addf %100, %99 : vector<64x1024xf32>
    %102 = tpu.reciprocal %101 {approx = true} : vector<64x1024xf32> -> vector<64x1024xf32>
    %103 = arith.mulf %101, %102 : vector<64x1024xf32>
    %cst_54 = arith.constant 2.000000e+00 : f32
    %104 = vector.broadcast %cst_54 : f32 to vector<64x1024xf32>
    %105 = arith.subf %104, %103 : vector<64x1024xf32>
    %106 = arith.mulf %102, %105 : vector<64x1024xf32>
    %cst_55 = arith.constant 1.06140542 : f32
    %107 = vector.broadcast %cst_55 : f32 to vector<64x1024xf32>
    %108 = arith.mulf %106, %107 : vector<64x1024xf32>
    %cst_56 = arith.constant -1.45315206 : f32
    %109 = vector.broadcast %cst_56 : f32 to vector<64x1024xf32>
    %110 = arith.addf %109, %108 : vector<64x1024xf32>
    %111 = arith.mulf %106, %110 : vector<64x1024xf32>
    %cst_57 = arith.constant 1.42141378 : f32
    %112 = vector.broadcast %cst_57 : f32 to vector<64x1024xf32>
    %113 = arith.addf %112, %111 : vector<64x1024xf32>
    %114 = arith.mulf %106, %113 : vector<64x1024xf32>
    %cst_58 = arith.constant -0.284496725 : f32
    %115 = vector.broadcast %cst_58 : f32 to vector<64x1024xf32>
    %116 = arith.addf %115, %114 : vector<64x1024xf32>
    %117 = arith.mulf %106, %116 : vector<64x1024xf32>
    %cst_59 = arith.constant 0.254829586 : f32
    %118 = vector.broadcast %cst_59 : f32 to vector<64x1024xf32>
    %119 = arith.addf %118, %117 : vector<64x1024xf32>
    %120 = arith.mulf %106, %119 : vector<64x1024xf32>
    %cst_60 = arith.constant 0.000000e+00 : f32
    %121 = vector.broadcast %cst_60 : f32 to vector<64x1024xf32>
    %122 = arith.subf %121, %97 : vector<64x1024xf32>
    %123 = arith.mulf %122, %97 : vector<64x1024xf32>
    %124 = math.exp %123 : vector<64x1024xf32>
    %125 = arith.mulf %120, %124 : vector<64x1024xf32>
    %cst_61 = arith.constant 1.000000e+00 : f32
    %126 = vector.broadcast %cst_61 : f32 to vector<64x1024xf32>
    %127 = arith.subf %126, %125 : vector<64x1024xf32>
    %cst_62 = arith.constant 0.000000e+00 : f32
    %128 = vector.broadcast %cst_62 : f32 to vector<64x1024xf32>
    %129 = arith.cmpf oge, %96, %128 : vector<64x1024xf32>
    %cst_63 = arith.constant 0.000000e+00 : f32
    %130 = vector.broadcast %cst_63 : f32 to vector<64x1024xf32>
    %131 = arith.subf %130, %127 : vector<64x1024xf32>
    %132 = arith.select %129, %127, %131 : vector<64x1024xi1>, vector<64x1024xf32>
    %cst_64 = arith.constant 1.000000e+00 : f32
    %133 = vector.broadcast %cst_64 : f32 to vector<64x1024xf32>
    %134 = arith.addf %133, %132 : vector<64x1024xf32>
    %135 = arith.mulf %94, %134 : vector<64x1024xf32>
    %c0_65 = arith.constant 0 : index
    %c0_66 = arith.constant 0 : index
    %136 = vector.load %arg14[%c0_65, %c0_66] : memref<1024x256xf32, #tpu.memory_space<vmem>>, vector<1024x256xf32>
    %cst_67 = arith.constant dense<0.000000e+00> : vector<64x256xf32>
    %137 = tpu.matmul %135, %136, %cst_67 {dimension_numbers = #tpu.dot_dimension_numbers<[1], [0], [0], [1], [0, 0, 1, 1], [], []>} : vector<64x1024xf32>, vector<1024x256xf32>, vector<64x256xf32> -> vector<64x256xf32>
    %c0_68 = arith.constant 0 : index
    %c0_69 = arith.constant 0 : index
    %138 = vector.load %arg15[%c0_68, %c0_69] : memref<1x256xf32, #tpu.memory_space<vmem>>, vector<1x256xf32>
    %139 = vector.broadcast %138 : vector<1x256xf32> to vector<64x256xf32>
    %140 = arith.addf %137, %139 : vector<64x256xf32>
    %141 = arith.addf %65, %140 : vector<64x256xf32>
    %c0_70 = arith.constant 0 : index
    %c0_71 = arith.constant 0 : index
    %c0_72 = arith.constant 0 : index
    %142 = vector.load %arg16[%c0_70, %c0_71, %c0_72] : memref<1x64x256xf32, #tpu.memory_space<vmem>>, vector<1x64x256xf32>
    %143 = vector.shape_cast %142 : vector<1x64x256xf32> to vector<64x256xf32>
    %144 = vector.shape_cast %141 : vector<64x256xf32> to vector<1x64x256xf32>
    tpu.vector_store %arg16[%c0_70, %c0_71, %c0_72], %144 {strides = array<i32>} : memref<1x64x256xf32, #tpu.memory_space<vmem>>, vector<1x64x256xf32>,
    return
  }
  func.func @transform_0(%arg0: i32, %arg1: i32) -> (i32, i32, i32) {
    %c0_i32 = arith.constant 0 : i32
    %c0_i32_0 = arith.constant 0 : i32
    return %arg0, %arg1, %c0_i32 : i32, i32, i32
  }
  func.func @transform_1(%arg0: i32, %arg1: i32) -> (i32, i32, i32) {
    %c0_i32 = arith.constant 0 : i32
    %c0_i32_0 = arith.constant 0 : i32
    %c0_i32_1 = arith.constant 0 : i32
    return %arg0, %c0_i32, %c0_i32_0 : i32, i32, i32
  }
  func.func @transform_2(%arg0: i32, %arg1: i32) -> (i32, i32) {
    %c0_i32 = arith.constant 0 : i32
    %c0_i32_0 = arith.constant 0 : i32
    %c0_i32_1 = arith.constant 0 : i32
    return %c0_i32, %c0_i32_0 : i32, i32
  }
  func.func @transform_3(%arg0: i32, %arg1: i32) -> (i32, i32) {
    %c0_i32 = arith.constant 0 : i32
    %c0_i32_0 = arith.constant 0 : i32
    %c0_i32_1 = arith.constant 0 : i32
    return %c0_i32, %c0_i32_0 : i32, i32
  }
  func.func @transform_4(%arg0: i32, %arg1: i32) -> (i32, i32) {
    %c0_i32 = arith.constant 0 : i32
    %c0_i32_0 = arith.constant 0 : i32
    %c0_i32_1 = arith.constant 0 : i32
    return %c0_i32, %c0_i32_0 : i32, i32
  }
  func.func @transform_5(%arg0: i32, %arg1: i32) -> (i32, i32) {
    %c0_i32 = arith.constant 0 : i32
    %c0_i32_0 = arith.constant 0 : i32
    %c0_i32_1 = arith.constant 0 : i32
    return %c0_i32, %c0_i32_0 : i32, i32
  }
  func.func @transform_6(%arg0: i32, %arg1: i32) -> (i32, i32, i32) {
    %c0_i32 = arith.constant 0 : i32
    %c0_i32_0 = arith.constant 0 : i32
    %c0_i32_1 = arith.constant 0 : i32
    %c0_i32_2 = arith.constant 0 : i32
    return %c0_i32, %c0_i32_0, %c0_i32_1 : i32, i32, i32
  }
  func.func @transform_7(%arg0: i32, %arg1: i32) -> (i32, i32) {
    %c0_i32 = arith.constant 0 : i32
    %c0_i32_0 = arith.constant 0 : i32
    %c0_i32_1 = arith.constant 0 : i32
    return %c0_i32, %c0_i32_0 : i32, i32
  }
  func.func @transform_8(%arg0: i32, %arg1: i32) -> (i32, i32) {
    %c0_i32 = arith.constant 0 : i32
    %c0_i32_0 = arith.constant 0 : i32
    %c0_i32_1 = arith.constant 0 : i32
    return %c0_i32, %c0_i32_0 : i32, i32
  }
  func.func @transform_9(%arg0: i32, %arg1: i32) -> (i32, i32) {
    %c0_i32 = arith.constant 0 : i32
    %c0_i32_0 = arith.constant 0 : i32
    %c0_i32_1 = arith.constant 0 : i32
    return %c0_i32, %c0_i32_0 : i32, i32
  }
  func.func @transform_10(%arg0: i32, %arg1: i32) -> (i32, i32) {
    %c0_i32 = arith.constant 0 : i32
    %c0_i32_0 = arith.constant 0 : i32
    %c0_i32_1 = arith.constant 0 : i32
    return %c0_i32, %c0_i32_0 : i32, i32
  }
  func.func @transform_11(%arg0: i32, %arg1: i32) -> (i32, i32) {
    %c0_i32 = arith.constant 0 : i32
    %c0_i32_0 = arith.constant 0 : i32
    %c0_i32_1 = arith.constant 0 : i32
    return %c0_i32, %c0_i32_0 : i32, i32
  }
  func.func @transform_12(%arg0: i32, %arg1: i32) -> (i32, i32) {
    %c0_i32 = arith.constant 0 : i32
    %c0_i32_0 = arith.constant 0 : i32
    %c0_i32_1 = arith.constant 0 : i32
    return %c0_i32, %c0_i32_0 : i32, i32
  }
  func.func @transform_13(%arg0: i32, %arg1: i32) -> (i32, i32) {
    %c0_i32 = arith.constant 0 : i32
    %c0_i32_0 = arith.constant 0 : i32
    %c0_i32_1 = arith.constant 0 : i32
    return %c0_i32, %c0_i32_0 : i32, i32
  }
  func.func @transform_14(%arg0: i32, %arg1: i32) -> (i32, i32, i32) {
    %c0_i32 = arith.constant 0 : i32
    %c0_i32_0 = arith.constant 0 : i32
    return %arg0, %arg1, %c0_i32 : i32, i32, i32
  }
  func.func @transform_15(%arg0: i32, %arg1: i32) -> (i32, i32, i32, i32) {
    %c0_i32 = arith.constant 0 : i32
    %c0_i32_0 = arith.constant 0 : i32
    %c0_i32_1 = arith.constant 0 : i32
    return %arg0, %c0_i32, %arg1, %c0_i32_0 : i32, i32, i32, i32
  }
}

</mosaic_0001>

<llo_original>
// kernel: tpu_custom_call.1
$region0: #{tpu_custom_call.1}
  #allocation0 [shape = 'u32[]', space=smem, size = 0x4, offset = 0x4, fixed_abs, tag = 'smem constant byte address 0x4 - core index']
  #allocation1 [shape = 'u32[144,128]{1,0:T(1,128)}', space=vmem, size = 0x12000, scoped, tag = 'internal scratch']
  #allocation2 [shape = 'f32[4,128,64]{2,1,0:T(8,128)}', space=vmem, size = 0x40000, scoped, tag = 'scratch operand']
  #allocation3 [shape = 'f32[4,128,64]{2,1,0:T(8,128)}', space=vmem, size = 0x40000, scoped, tag = 'scratch operand']
  #allocation19 [shape = 's32[]', space=sflag, size = 0x4, offset = 0, fixed_abs, tag = 'sflag constant byte address 0x0 - dummy sync flag']
  %s0 = inlined_call_operand.hbm [shape: f32[2,128,256], index: 0, kind: input, shape index: {}]
  %s1 = inlined_call_operand.hbm [shape: f32[2,128,256], index: 1, kind: input, shape index: {}]
  %s2 = inlined_call_operand.vmem [shape: f32[1,256], index: 2, kind: input, shape index: {}]
  %s3 = inlined_call_operand.vmem [shape: f32[1,256], index: 3, kind: input, shape index: {}]
  %s4 = inlined_call_operand.hbm [shape: f32[256,256], index: 4, kind: input, shape index: {}]
  %s5 = inlined_call_operand.hbm [shape: f32[256,512], index: 5, kind: input, shape index: {}]
  %s6 = inlined_call_operand.hbm [shape: f32[4,64,256], index: 6, kind: input, shape index: {}]
  %s7 = inlined_call_operand.vmem [shape: f32[1,256], index: 7, kind: input, shape index: {}]
  %s8 = inlined_call_operand.vmem [shape: f32[1,256], index: 8, kind: input, shape index: {}]
  %s9 = inlined_call_operand.vmem [shape: f32[1,256], index: 9, kind: input, shape index: {}]
  %s10 = inlined_call_operand.hbm [shape: f32[256,1024], index: 10, kind: input, shape index: {}]
  %s11 = inlined_call_operand.vmem [shape: f32[1,1024], index: 11, kind: input, shape index: {}]
  %s12 = inlined_call_operand.hbm [shape: f32[1024,256], index: 12, kind: input, shape index: {}]
  %s13 = inlined_call_operand.vmem [shape: f32[1,256], index: 13, kind: input, shape index: {}]
  %s14 = inlined_call_operand.hbm [shape: f32[2,128,256], index: 14, kind: output, shape index: {0}]
  %s15 = inlined_call_operand.hbm [shape: f32[2,4,128,128], index: 15, kind: output, shape index: {1}]
  %16 = xla_tuple %s14, %s15
  %s17 = sld [smem:[#allocation0]]
  $region129: #{tpu_custom_call.1} parent=0
    _
  %s19 = ssub.s32 1, %s17
  %s20 = scalar_select 0, %s19, %s17
  $region1: #{tpu_custom_call.1} parent=0
    #allocation4 [shape = 'u8[131072]{0}', space=vmem, size = 0x20000, scoped, tag = 'input window, operand 0']
    #allocation5 [shape = 's32[2]{0}', space=sflag, size = 0x8, scoped, tag = 'scoped memory for tpu_custom_call.1']
    #allocation6 [shape = 's32[2]{0}', space=sflag, size = 0x8, scoped, tag = 'scoped memory for tpu_custom_call.1']
    #allocation7 [shape = 'u8[262144]{0}', space=vmem, size = 0x40000, scoped, tag = 'input window, operand 1']
    #allocation8 [shape = 's32[2]{0}', space=sflag, size = 0x8, scoped, tag = 'scoped memory for tpu_custom_call.1']
    #allocation9 [shape = 'u8[262144]{0}', space=vmem, size = 0x40000, scoped, tag = 'input window, operand 4, single buffered']
    #allocation10 [shape = 'u8[524288]{0}', space=vmem, size = 0x80000, scoped, tag = 'input window, operand 5, single buffered']
    #allocation11 [shape = 's32[1]{0}', space=sflag, size = 0x4, scoped, tag = 'scoped memory for tpu_custom_call.1']
    #allocation12 [shape = 'u8[262144]{0}', space=vmem, size = 0x40000, scoped, tag = 'input window, operand 6, single buffered']
    #allocation13 [shape = 'u8[1048576]{0}', space=vmem, size = 0x100000, scoped, tag = 'input window, operand 10, single buffered']
    #allocation14 [shape = 's32[1]{0}', space=sflag, size = 0x4, scoped, tag = 'scoped memory for tpu_custom_call.1']
    #allocation15 [shape = 'u8[1048576]{0}', space=vmem, size = 0x100000, scoped, tag = 'input window, operand 12, single buffered']
    #allocation16 [shape = 'u8[131072]{0}', space=vmem, size = 0x20000, scoped, tag = 'output window, operand 0']
    #allocation17 [shape = 'u8[262144]{0}', space=vmem, size = 0x40000, scoped, tag = 'output window, operand 1']
    #allocation18 [shape = 's32[2]{0}', space=sflag, size = 0x8, scoped, tag = 'scoped memory for tpu_custom_call.1']
    %21 = vsyncpa [#allocation5], 0
    %s22 = scalar_lea.sflag [#allocation5], 1
    %23 = vsyncpa %s22, 0
    %24 = vsyncpa [#allocation8], 0
    %s25 = scalar_lea.sflag [#allocation8], 1
    %26 = vsyncpa %s25, 0
    %27 = vsyncpa [#allocation11], 0
    %28 = vsyncpa [#allocation14], 0
    %29 = vsyncpa [#allocation6], 0
    %s30 = scalar_lea.sflag [#allocation6], 1
    %31 = vsyncpa %s30, 0
    %32 = vsyncpa [#allocation18], 0
    %s33 = scalar_lea.sflag [#allocation18], 1
    %34 = vsyncpa %s33, 0
    loop: start=0, step=1, limit=6
    $region2: #{tpu_custom_call.1} parent=1 // loop_pre_header
      _
    $region3: #{tpu_custom_call.1} parent=1 // loop_header
      %s36 = sphi 0, %s40
      %p37 = scmp.ge.s32.totalorder %s36, 6
      %s43 = sphi 0, %s55
      %s44 = sphi 0, %s51
      %s45 = sphi 0, %s43
      %s46 = sphi 0, %s44
      %s47 = sphi 0, %s45
      %s48 = sphi 0, %s46
      %s60 = sphi 0, %s62
      %s63 = sphi 0, %s60
      %s64 = sphi 0, %s63
      %s80 = sphi 0, %s64
      %s86 = sphi 0, %s88
      %s89 = sphi 0, %s86
      %s90 = sphi 0, %s89
      %s106 = sphi 0, %s90
      %s110 = sphi 0, %s110
      %s112 = sphi 0, %s110
      %s113 = sphi 0, %s112
      %s127 = sphi 0, %s113
      %s131 = sphi 0, %s131
      %s133 = sphi 0, %s131
      %s134 = sphi 0, %s133
      %s148 = sphi 0, %s134
      %s152 = sphi 0, %s152
      %s154 = sphi 0, %s152
      %s155 = sphi 0, %s154
      %s169 = sphi 0, %s155
      %s173 = sphi 0, %s173
      %s175 = sphi 0, %s173
      %s176 = sphi 0, %s175
      %s190 = sphi 0, %s176
      %s194 = sphi 0, %s194
      %s196 = sphi 0, %s194
      %s197 = sphi 0, %s196
      %s211 = sphi 0, %s197
      %s215 = sphi 0, %s215
      %s217 = sphi 0, %s215
      %s218 = sphi 0, %s217
      %s232 = sphi 0, %s218
      %s236 = sphi 0, %s236
      %s238 = sphi 0, %s236
      %s239 = sphi 0, %s238
      %s253 = sphi 0, %s239
      %s257 = sphi 0, %s257
      %s259 = sphi 0, %s257
      %s260 = sphi 0, %s259
      %s274 = sphi 0, %s260
      %s278 = sphi 0, %s278
      %s280 = sphi 0, %s278
      %s281 = sphi 0, %s280
      %s295 = sphi 0, %s281
      %s299 = sphi 0, %s299
      %s301 = sphi 0, %s299
      %s302 = sphi 0, %s301
      %s316 = sphi 0, %s302
      %s320 = sphi 0, %s320
      %s322 = sphi 0, %s320
      %s323 = sphi 0, %s322
      %s337 = sphi 0, %s323
      %s341 = sphi 0, %s341
      %s343 = sphi 0, %s341
      %s344 = sphi 0, %s343
      %s358 = sphi 0, %s344
      %s366 = sphi 0, %s368
      %s369 = sphi 0, %s366
      %s370 = sphi 0, %s369
      %s386 = sphi 0, %s370
      %s394 = sphi 0, %s396
      %s397 = sphi 0, %s394
      %s398 = sphi 0, %s397
      %s414 = sphi 0, %s398
    $region4: #{tpu_custom_call.1} parent=1 // loop_header_branch
      %39 = sbr.rel (%p37) target = $region8
    $region5: #{tpu_custom_call.1} parent=1 // loop_body
      %s41 = ssub.s32 %s36, 1
      %s42 = ssub.s32 %s36, 2
      %s49 = sadd.s32 1, %s44
      %p50 = scmp.ge.s32.totalorder %s49, 2
      %s51 = scalar_select %p50, 0, %s49
      %s52 = sadd.s32 1, %s43
      %s53 = scalar_select %p50, %s52, %s43
      %p54 = scmp.ge.s32.totalorder %s53, 2
      %s55 = scalar_select %p54, 0, %s53
      %s56 = ssub.s32 %s43, %s55
      %s57 = ssub.s32 %s44, %s51
      %s58 = sor.u32 %s56, %s57
      %p59 = scmp.eq.s32.totalorder %s58, 0
      %s61 = sadd.s32 %s60, 1
      %s62 = scalar_select %p59, %s60, %s61
      %p65 = pneg %p59
      %p66 = scmp.eq.s32.totalorder %s36, 3
      %p67 = por %p65, %p66
      %p68 = scmp.ne.s32.totalorder %s60, %s63
      %p69 = scmp.eq.s32.totalorder %s36, 0
      %p70 = por %p68, %p69
      %p71 = scmp.ne.s32.totalorder %s60, %s63
      %p72 = scmp.eq.s32.totalorder %s41, 3
      %p73 = por %p71, %p72
      %p74 = scmp.ne.s32.totalorder %s63, %s64
      %p75 = scmp.eq.s32.totalorder %s41, 0
      %p76 = por %p74, %p75
      %p77 = scmp.ne.s32.totalorder %s63, %s64
      %p78 = scmp.eq.s32.totalorder %s42, 3
      %p79 = por %p77, %p78
      %p81 = scmp.ne.s32.totalorder %s64, %s80
      %p82 = scmp.eq.s32.totalorder %s42, 0
      %p83 = por %p81, %p82
      %s84 = ssub.s32 %s43, %s55
      %p85 = scmp.eq.s32.totalorder %s84, 0
      %s87 = sadd.s32 %s86, 1
      %s88 = scalar_select %p85, %s86, %s87
      %p91 = pneg %p85
      %p92 = scmp.eq.s32.totalorder %s36, 3
      %p93 = por %p91, %p92
      %p94 = scmp.ne.s32.totalorder %s86, %s89
      %p95 = scmp.eq.s32.totalorder %s36, 0
      %p96 = por %p94, %p95
      %p97 = scmp.ne.s32.totalorder %s86, %s89
      %p98 = scmp.eq.s32.totalorder %s41, 3
      %p99 = por %p97, %p98
      %p100 = scmp.ne.s32.totalorder %s89, %s90
      %p101 = scmp.eq.s32.totalorder %s41, 0
      %p102 = por %p100, %p101
      %p103 = scmp.ne.s32.totalorder %s89, %s90
      %p104 = scmp.eq.s32.totalorder %s42, 3
      %p105 = por %p103, %p104
      %p107 = scmp.ne.s32.totalorder %s90, %s106
      %p108 = scmp.eq.s32.totalorder %s42, 0
      %p109 = por %p107, %p108
      %s111 = sadd.s32 %s110, 1
      %p114 = scmp.eq.s32.totalorder %s36, 3
      %p115 = scmp.ne.s32.totalorder %s110, %s112
      %p116 = scmp.eq.s32.totalorder %s36, 0
      %p117 = por %p115, %p116
      %p118 = scmp.ne.s32.totalorder %s110, %s112
      %p119 = scmp.eq.s32.totalorder %s41, 3
      %p120 = por %p118, %p119
      %p121 = scmp.ne.s32.totalorder %s112, %s113
      %p122 = scmp.eq.s32.totalorder %s41, 0
      %p123 = por %p121, %p122
      %p124 = scmp.ne.s32.totalorder %s112, %s113
      %p125 = scmp.eq.s32.totalorder %s42, 3
      %p126 = por %p124, %p125
      %p128 = scmp.ne.s32.totalorder %s113, %s127
      %p129 = scmp.eq.s32.totalorder %s42, 0
      %p130 = por %p128, %p129
      %s132 = sadd.s32 %s131, 1
      %p135 = scmp.eq.s32.totalorder %s36, 3
      %p136 = scmp.ne.s32.totalorder %s131, %s133
      %p137 = scmp.eq.s32.totalorder %s36, 0
      %p138 = por %p136, %p137
      %p139 = scmp.ne.s32.totalorder %s131, %s133
      %p140 = scmp.eq.s32.totalorder %s41, 3
      %p141 = por %p139, %p140
      %p142 = scmp.ne.s32.totalorder %s133, %s134
      %p143 = scmp.eq.s32.totalorder %s41, 0
      %p144 = por %p142, %p143
      %p145 = scmp.ne.s32.totalorder %s133, %s134
      %p146 = scmp.eq.s32.totalorder %s42, 3
      %p147 = por %p145, %p146
      %p149 = scmp.ne.s32.totalorder %s134, %s148
      %p150 = scmp.eq.s32.totalorder %s42, 0
      %p151 = por %p149, %p150
      %s153 = sadd.s32 %s152, 1
      %p156 = scmp.eq.s32.totalorder %s36, 3
      %p157 = scmp.ne.s32.totalorder %s152, %s154
      %p158 = scmp.eq.s32.totalorder %s36, 0
      %p159 = por %p157, %p158
      %p160 = scmp.ne.s32.totalorder %s152, %s154
      %p161 = scmp.eq.s32.totalorder %s41, 3
      %p162 = por %p160, %p161
      %p163 = scmp.ne.s32.totalorder %s154, %s155
      %p164 = scmp.eq.s32.totalorder %s41, 0
      %p165 = por %p163, %p164
      %p166 = scmp.ne.s32.totalorder %s154, %s155
      %p167 = scmp.eq.s32.totalorder %s42, 3
      %p168 = por %p166, %p167
      %p170 = scmp.ne.s32.totalorder %s155, %s169
      %p171 = scmp.eq.s32.totalorder %s42, 0
      %p172 = por %p170, %p171
      %s174 = sadd.s32 %s173, 1
      %p177 = scmp.eq.s32.totalorder %s36, 3
      %p178 = scmp.ne.s32.totalorder %s173, %s175
      %p179 = scmp.eq.s32.totalorder %s36, 0
      %p180 = por %p178, %p179
      %p181 = scmp.ne.s32.totalorder %s173, %s175
      %p182 = scmp.eq.s32.totalorder %s41, 3
      %p183 = por %p181, %p182
      %p184 = scmp.ne.s32.totalorder %s175, %s176
      %p185 = scmp.eq.s32.totalorder %s41, 0
      %p186 = por %p184, %p185
      %p187 = scmp.ne.s32.totalorder %s175, %s176
      %p188 = scmp.eq.s32.totalorder %s42, 3
      %p189 = por %p187, %p188
      %p191 = scmp.ne.s32.totalorder %s176, %s190
      %p192 = scmp.eq.s32.totalorder %s42, 0
      %p193 = por %p191, %p192
      %s195 = sadd.s32 %s194, 1
      %p198 = scmp.eq.s32.totalorder %s36, 3
      %p199 = scmp.ne.s32.totalorder %s194, %s196
      %p200 = scmp.eq.s32.totalorder %s36, 0
      %p201 = por %p199, %p200
      %p202 = scmp.ne.s32.totalorder %s194, %s196
      %p203 = scmp.eq.s32.totalorder %s41, 3
      %p204 = por %p202, %p203
      %p205 = scmp.ne.s32.totalorder %s196, %s197
      %p206 = scmp.eq.s32.totalorder %s41, 0
      %p207 = por %p205, %p206
      %p208 = scmp.ne.s32.totalorder %s196, %s197
      %p209 = scmp.eq.s32.totalorder %s42, 3
      %p210 = por %p208, %p209
      %p212 = scmp.ne.s32.totalorder %s197, %s211
      %p213 = scmp.eq.s32.totalorder %s42, 0
      %p214 = por %p212, %p213
      %s216 = sadd.s32 %s215, 1
      %p219 = scmp.eq.s32.totalorder %s36, 3
      %p220 = scmp.ne.s32.totalorder %s215, %s217
      %p221 = scmp.eq.s32.totalorder %s36, 0
      %p222 = por %p220, %p221
      %p223 = scmp.ne.s32.totalorder %s215, %s217
      %p224 = scmp.eq.s32.totalorder %s41, 3
      %p225 = por %p223, %p224
      %p226 = scmp.ne.s32.totalorder %s217, %s218
      %p227 = scmp.eq.s32.totalorder %s41, 0
      %p228 = por %p226, %p227
      %p229 = scmp.ne.s32.totalorder %s217, %s218
      %p230 = scmp.eq.s32.totalorder %s42, 3
      %p231 = por %p229, %p230
      %p233 = scmp.ne.s32.totalorder %s218, %s232
      %p234 = scmp.eq.s32.totalorder %s42, 0
      %p235 = por %p233, %p234
      %s237 = sadd.s32 %s236, 1
      %p240 = scmp.eq.s32.totalorder %s36, 3
      %p241 = scmp.ne.s32.totalorder %s236, %s238
      %p242 = scmp.eq.s32.totalorder %s36, 0
      %p243 = por %p241, %p242
      %p244 = scmp.ne.s32.totalorder %s236, %s238
      %p245 = scmp.eq.s32.totalorder %s41, 3
      %p246 = por %p244, %p245
      %p247 = scmp.ne.s32.totalorder %s238, %s239
      %p248 = scmp.eq.s32.totalorder %s41, 0
      %p249 = por %p247, %p248
      %p250 = scmp.ne.s32.totalorder %s238, %s239
      %p251 = scmp.eq.s32.totalorder %s42, 3
      %p252 = por %p250, %p251
      %p254 = scmp.ne.s32.totalorder %s239, %s253
      %p255 = scmp.eq.s32.totalorder %s42, 0
      %p256 = por %p254, %p255
      %s258 = sadd.s32 %s257, 1
      %p261 = scmp.eq.s32.totalorder %s36, 3
      %p262 = scmp.ne.s32.totalorder %s257, %s259
      %p263 = scmp.eq.s32.totalorder %s36, 0
      %p264 = por %p262, %p263
      %p265 = scmp.ne.s32.totalorder %s257, %s259
      %p266 = scmp.eq.s32.totalorder %s41, 3
      %p267 = por %p265, %p266
      %p268 = scmp.ne.s32.totalorder %s259, %s260
      %p269 = scmp.eq.s32.totalorder %s41, 0
      %p270 = por %p268, %p269
      %p271 = scmp.ne.s32.totalorder %s259, %s260
      %p272 = scmp.eq.s32.totalorder %s42, 3
      %p273 = por %p271, %p272
      %p275 = scmp.ne.s32.totalorder %s260, %s274
      %p276 = scmp.eq.s32.totalorder %s42, 0
      %p277 = por %p275, %p276
      %s279 = sadd.s32 %s278, 1
      %p282 = scmp.eq.s32.totalorder %s36, 3
      %p283 = scmp.ne.s32.totalorder %s278, %s280
      %p284 = scmp.eq.s32.totalorder %s36, 0
      %p285 = por %p283, %p284
      %p286 = scmp.ne.s32.totalorder %s278, %s280
      %p287 = scmp.eq.s32.totalorder %s41, 3
      %p288 = por %p286, %p287
      %p289 = scmp.ne.s32.totalorder %s280, %s281
      %p290 = scmp.eq.s32.totalorder %s41, 0
      %p291 = por %p289, %p290
      %p292 = scmp.ne.s32.totalorder %s280, %s281
      %p293 = scmp.eq.s32.totalorder %s42, 3
      %p294 = por %p292, %p293
      %p296 = scmp.ne.s32.totalorder %s281, %s295
      %p297 = scmp.eq.s32.totalorder %s42, 0
      %p298 = por %p296, %p297
      %s300 = sadd.s32 %s299, 1
      %p303 = scmp.eq.s32.totalorder %s36, 3
      %p304 = scmp.ne.s32.totalorder %s299, %s301
      %p305 = scmp.eq.s32.totalorder %s36, 0
      %p306 = por %p304, %p305
      %p307 = scmp.ne.s32.totalorder %s299, %s301
      %p308 = scmp.eq.s32.totalorder %s41, 3
      %p309 = por %p307, %p308
      %p310 = scmp.ne.s32.totalorder %s301, %s302
      %p311 = scmp.eq.s32.totalorder %s41, 0
      %p312 = por %p310, %p311
      %p313 = scmp.ne.s32.totalorder %s301, %s302
      %p314 = scmp.eq.s32.totalorder %s42, 3
      %p315 = por %p313, %p314
      %p317 = scmp.ne.s32.totalorder %s302, %s316
      %p318 = scmp.eq.s32.totalorder %s42, 0
      %p319 = por %p317, %p318
      %s321 = sadd.s32 %s320, 1
      %p324 = scmp.eq.s32.totalorder %s36, 3
      %p325 = scmp.ne.s32.totalorder %s320, %s322
      %p326 = scmp.eq.s32.totalorder %s36, 0
      %p327 = por %p325, %p326
      %p328 = scmp.ne.s32.totalorder %s320, %s322
      %p329 = scmp.eq.s32.totalorder %s41, 3
      %p330 = por %p328, %p329
      %p331 = scmp.ne.s32.totalorder %s322, %s323
      %p332 = scmp.eq.s32.totalorder %s41, 0
      %p333 = por %p331, %p332
      %p334 = scmp.ne.s32.totalorder %s322, %s323
      %p335 = scmp.eq.s32.totalorder %s42, 3
      %p336 = por %p334, %p335
      %p338 = scmp.ne.s32.totalorder %s323, %s337
      %p339 = scmp.eq.s32.totalorder %s42, 0
      %p340 = por %p338, %p339
      %s342 = sadd.s32 %s341, 1
      %p345 = scmp.eq.s32.totalorder %s36, 3
      %p346 = scmp.ne.s32.totalorder %s341, %s343
      %p347 = scmp.eq.s32.totalorder %s36, 0
      %p348 = por %p346, %p347
      %p349 = scmp.ne.s32.totalorder %s341, %s343
      %p350 = scmp.eq.s32.totalorder %s41, 3
      %p351 = por %p349, %p350
      %p352 = scmp.ne.s32.totalorder %s343, %s344
      %p353 = scmp.eq.s32.totalorder %s41, 0
      %p354 = por %p352, %p353
      %p355 = scmp.ne.s32.totalorder %s343, %s344
      %p356 = scmp.eq.s32.totalorder %s42, 3
      %p357 = por %p355, %p356
      %p359 = scmp.ne.s32.totalorder %s344, %s358
      %p360 = scmp.eq.s32.totalorder %s42, 0
      %p361 = por %p359, %p360
      %s362 = ssub.s32 %s43, %s55
      %s363 = ssub.s32 %s44, %s51
      %s364 = sor.u32 %s362, %s363
      %p365 = scmp.eq.s32.totalorder %s364, 0
      %s367 = sadd.s32 %s366, 1
      %s368 = scalar_select %p365, %s366, %s367
      %p371 = pneg %p365
      %p372 = scmp.eq.s32.totalorder %s36, 3
      %p373 = por %p371, %p372
      %p374 = scmp.ne.s32.totalorder %s366, %s369
      %p375 = scmp.eq.s32.totalorder %s36, 0
      %p376 = por %p374, %p375
      %p377 = scmp.ne.s32.totalorder %s366, %s369
      %p378 = scmp.eq.s32.totalorder %s41, 3
      %p379 = por %p377, %p378
      %p380 = scmp.ne.s32.totalorder %s369, %s370
      %p381 = scmp.eq.s32.totalorder %s41, 0
      %p382 = por %p380, %p381
      %p383 = scmp.ne.s32.totalorder %s369, %s370
      %p384 = scmp.eq.s32.totalorder %s42, 3
      %p385 = por %p383, %p384
      %p387 = scmp.ne.s32.totalorder %s370, %s386
      %p388 = scmp.eq.s32.totalorder %s42, 0
      %p389 = por %p387, %p388
      %s390 = ssub.s32 %s43, %s55
      %s391 = ssub.s32 %s44, %s51
      %s392 = sor.u32 %s390, %s391
      %p393 = scmp.eq.s32.totalorder %s392, 0
      %s395 = sadd.s32 %s394, 1
      %s396 = scalar_select %p393, %s394, %s395
      %p399 = pneg %p393
      %p400 = scmp.eq.s32.totalorder %s36, 3
      %p401 = por %p399, %p400
      %p402 = scmp.ne.s32.totalorder %s394, %s397
      %p403 = scmp.eq.s32.totalorder %s36, 0
      %p404 = por %p402, %p403
      %p405 = scmp.ne.s32.totalorder %s394, %s397
      %p406 = scmp.eq.s32.totalorder %s41, 3
      %p407 = por %p405, %p406
      %p408 = scmp.ne.s32.totalorder %s397, %s398
      %p409 = scmp.eq.s32.totalorder %s41, 0
      %p410 = por %p408, %p409
      %p411 = scmp.ne.s32.totalorder %s397, %s398
      %p412 = scmp.eq.s32.totalorder %s42, 3
      %p413 = por %p411, %p412
      %p415 = scmp.ne.s32.totalorder %s398, %s414
      %p416 = scmp.eq.s32.totalorder %s42, 0
      %p417 = por %p415, %p416
      %p418 = scmp.le.s32.totalorder 1, %s36
      %p419 = scmp.lt.s32.totalorder %s36, 5
      %p420 = pnand %p418, %p419
      %p421 = pneg %p420
      // Predicated region
      $region9: #{tpu_custom_call.1} parent=5 // pred_check
        _
      $region10: #{tpu_custom_call.1} parent=5 // pred_check_branch
        %423 = sbr.rel (%p420) target = $region12
      $region11: #{tpu_custom_call.1} parent=5 // pred_region
        %s424 = ssub.s32 %s36, 1
        // Predicated region
        $region13: #{tpu_custom_call.1} parent=11 // pred_check
          %p425 = pneg %p123
        $region14: #{tpu_custom_call.1} parent=11 // pred_check_branch
          %427 = sbr.rel (%p425) target = $region16
        $region15: #{tpu_custom_call.1} parent=11 // pred_region
          _
        $region16: #{tpu_custom_call.1} parent=11 // pred_fallthru
          _
        // Predicated region
        $region17: #{tpu_custom_call.1} parent=11 // pred_check
          %p428 = pneg %p144
        $region18: #{tpu_custom_call.1} parent=11 // pred_check_branch
          %430 = sbr.rel (%p428) target = $region20
        $region19: #{tpu_custom_call.1} parent=11 // pred_region
          _
        $region20: #{tpu_custom_call.1} parent=11 // pred_fallthru
          _
        // Predicated region
        $region21: #{tpu_custom_call.1} parent=11 // pred_check
          %p431 = pneg %p165
        $region22: #{tpu_custom_call.1} parent=11 // pred_check_branch
          %433 = sbr.rel (%p431) target = $region24
        $region23: #{tpu_custom_call.1} parent=11 // pred_region
          %s435 = ssub.s32 8192, 8192
          %436 = vsyncadd [#allocation8], %s435
          %s437 = sshll.u32 [#allocation9], 4
          %s438 = int_to_ptr.vmem [resolvable:$true] %s437
          %443 = dma.hbm_to_vmem [thread:$0]  %s4, 8192, %s438, [#allocation8], 256, 256, 16
        $region24: #{tpu_custom_call.1} parent=11 // pred_fallthru
          _
        // Predicated region
        $region25: #{tpu_custom_call.1} parent=11 // pred_check
          %p444 = pneg %p186
        $region26: #{tpu_custom_call.1} parent=11 // pred_check_branch
          %446 = sbr.rel (%p444) target = $region28
        $region27: #{tpu_custom_call.1} parent=11 // pred_region
          %s448 = ssub.s32 16384, 16384
          %449 = vsyncadd [#allocation11], %s448
          %s450 = sshll.u32 [#allocation10], 4
          %s451 = int_to_ptr.vmem [resolvable:$true] %s450
          %456 = dma.hbm_to_vmem [thread:$0]  %s5, 16384, %s451, [#allocation11], 512, 512, 32
        $region28: #{tpu_custom_call.1} parent=11 // pred_fallthru
          _
        // Predicated region
        $region29: #{tpu_custom_call.1} parent=11 // pred_check
          %p457 = pneg %p207
        $region30: #{tpu_custom_call.1} parent=11 // pred_check_branch
          %459 = sbr.rel (%p457) target = $region32
        $region31: #{tpu_custom_call.1} parent=11 // pred_region
          %s461 = ssub.s32 8192, 8192
          %462 = vsyncadd [#allocation11], %s461
          %s463 = sshll.u32 [#allocation12], 4
          %s464 = int_to_ptr.vmem [resolvable:$true] %s463
          %469 = dma.hbm_to_vmem [thread:$0]  %s6, 8192, %s464, [#allocation11], 256, 256, 16
        $region32: #{tpu_custom_call.1} parent=11 // pred_fallthru
          _
        // Predicated region
        $region33: #{tpu_custom_call.1} parent=11 // pred_check
          %p470 = pneg %p228
        $region34: #{tpu_custom_call.1} parent=11 // pred_check_branch
          %472 = sbr.rel (%p470) target = $region36
        $region35: #{tpu_custom_call.1} parent=11 // pred_region
          _
        $region36: #{tpu_custom_call.1} parent=11 // pred_fallthru
          _
        // Predicated region
        $region37: #{tpu_custom_call.1} parent=11 // pred_check
          %p473 = pneg %p249
        $region38: #{tpu_custom_call.1} parent=11 // pred_check_branch
          %475 = sbr.rel (%p473) target = $region40
        $region39: #{tpu_custom_call.1} parent=11 // pred_region
          _
        $region40: #{tpu_custom_call.1} parent=11 // pred_fallthru
          _
        // Predicated region
        $region41: #{tpu_custom_call.1} parent=11 // pred_check
          %p476 = pneg %p270
        $region42: #{tpu_custom_call.1} parent=11 // pred_check_branch
          %478 = sbr.rel (%p476) target = $region44
        $region43: #{tpu_custom_call.1} parent=11 // pred_region
          _
        $region44: #{tpu_custom_call.1} parent=11 // pred_fallthru
          _
        // Predicated region
        $region45: #{tpu_custom_call.1} parent=11 // pred_check
          %p479 = pneg %p291
        $region46: #{tpu_custom_call.1} parent=11 // pred_check_branch
          %481 = sbr.rel (%p479) target = $region48
        $region47: #{tpu_custom_call.1} parent=11 // pred_region
          %s483 = ssub.s32 32768, 32768
          %484 = vsyncadd [#allocation14], %s483
          %s485 = sshll.u32 [#allocation13], 4
          %s486 = int_to_ptr.vmem [resolvable:$true] %s485
          %491 = dma.hbm_to_vmem [thread:$0]  %s10, 32768, %s486, [#allocation14], 1024, 1024, 64
        $region48: #{tpu_custom_call.1} parent=11 // pred_fallthru
          _
        // Predicated region
        $region49: #{tpu_custom_call.1} parent=11 // pred_check
          %p492 = pneg %p312
        $region50: #{tpu_custom_call.1} parent=11 // pred_check_branch
          %494 = sbr.rel (%p492) target = $region52
        $region51: #{tpu_custom_call.1} parent=11 // pred_region
          _
        $region52: #{tpu_custom_call.1} parent=11 // pred_fallthru
          _
        // Predicated region
        $region53: #{tpu_custom_call.1} parent=11 // pred_check
          %p495 = pneg %p333
        $region54: #{tpu_custom_call.1} parent=11 // pred_check_branch
          %497 = sbr.rel (%p495) target = $region56
        $region55: #{tpu_custom_call.1} parent=11 // pred_region
          %s499 = ssub.s32 32768, 32768
          %500 = vsyncadd [#allocation14], %s499
          %s501 = sshll.u32 [#allocation15], 4
          %s502 = int_to_ptr.vmem [resolvable:$true] %s501
          %507 = dma.hbm_to_vmem [thread:$0]  %s12, 32768, %s502, [#allocation14], 256, 256, 16
        $region56: #{tpu_custom_call.1} parent=11 // pred_fallthru
          _
        // Predicated region
        $region57: #{tpu_custom_call.1} parent=11 // pred_check
          %p508 = pneg %p354
        $region58: #{tpu_custom_call.1} parent=11 // pred_check_branch
          %510 = sbr.rel (%p508) target = $region60
        $region59: #{tpu_custom_call.1} parent=11 // pred_region
          _
        $region60: #{tpu_custom_call.1} parent=11 // pred_fallthru
          _
      $region12: #{tpu_custom_call.1} parent=5 // pred_fallthru
        _
      %p511 = scmp.lt.s32.totalorder %s36, 4
      // Predicated region
      $region61: #{tpu_custom_call.1} parent=5 // pred_check
        %p512 = pneg %p511
      $region62: #{tpu_custom_call.1} parent=5 // pred_check_branch
        %514 = sbr.rel (%p512) target = $region64
      $region63: #{tpu_custom_call.1} parent=5 // pred_region
        // Predicated region
        $region65: #{tpu_custom_call.1} parent=63 // pred_check
          %p515 = pneg %p70
        $region66: #{tpu_custom_call.1} parent=63 // pred_check_branch
          %517 = sbr.rel (%p515) target = $region68
        $region67: #{tpu_custom_call.1} parent=63 // pred_region
          %s518 = sand.u32 %s60, 1
          %s519 = scalar_lea.sflag [#allocation5], %s518
          %s520 = sand.u32 %s60, 1
          %s521 = smul.addr %s520, 128
          %s522 = scalar_lea.vmem [#allocation4], %s521
          %s523 = smul.u32 8, %s44
          %s525 = ssub.s32 2048, 2048
          %526 = vsyncadd %s519, %s525
          %s527 = smul.addr %s523, 2
          %s528 = smul.addr %s43, 32
          %s529 = sadd.s32 %s527, %s528
          %s530 = smul.addr %s529, 128
          %s531 = scalar_lea.hbm %s0, %s530
          %s532 = sshll.u32 %s522, 4
          %s533 = int_to_ptr.vmem [resolvable:$true] %s532
          %538 = dma.hbm_to_vmem [thread:$0]  %s531, 2048, %s533, %s519, 256, 256, 16
        $region68: #{tpu_custom_call.1} parent=63 // pred_fallthru
          _
        // Predicated region
        $region69: #{tpu_custom_call.1} parent=63 // pred_check
          %p539 = pneg %p96
        $region70: #{tpu_custom_call.1} parent=63 // pred_check_branch
          %541 = sbr.rel (%p539) target = $region72
        $region71: #{tpu_custom_call.1} parent=63 // pred_region
          %s542 = sand.u32 %s36, 1
          %s543 = scalar_lea.sflag [#allocation8], %s542
          %s544 = sand.u32 %s86, 1
          %s545 = smul.addr %s544, 256
          %s546 = scalar_lea.vmem [#allocation7], %s545
          %s548 = ssub.s32 4096, 4096
          %549 = vsyncadd %s543, %s548
          %s550 = smul.addr %s43, 32
          %s551 = smul.addr %s550, 128
          %s552 = scalar_lea.hbm %s1, %s551
          %s553 = sshll.u32 %s546, 4
          %s554 = int_to_ptr.vmem [resolvable:$true] %s553
          %559 = dma.hbm_to_vmem [thread:$0]  %s552, 4096, %s554, %s543, 256, 256, 16
        $region72: #{tpu_custom_call.1} parent=63 // pred_fallthru
          _
      $region64: #{tpu_custom_call.1} parent=5 // pred_fallthru
        _
      %p560 = scmp.le.s32.totalorder 1, %s36
      %p561 = scmp.lt.s32.totalorder %s36, 5
      %p562 = pnand %p560, %p561
      %p563 = pneg %p562
      // Predicated region
      $region73: #{tpu_custom_call.1} parent=5 // pred_check
        _
      $region74: #{tpu_custom_call.1} parent=5 // pred_check_branch
        %565 = sbr.rel (%p562) target = $region76
      $region75: #{tpu_custom_call.1} parent=5 // pred_region
        %s566 = ssub.s32 %s36, 1
        %s567 = sand.u32 %s63, 1
        %s568 = scalar_lea.sflag [#allocation5], %s567
        %s569 = sand.u32 %s63, 1
        %s570 = smul.addr %s569, 128
        %s571 = scalar_lea.vmem [#allocation4], %s570
        // Predicated region
        $region77: #{tpu_custom_call.1} parent=75 // pred_check
          %p572 = pneg %p76
        $region78: #{tpu_custom_call.1} parent=75 // pred_check_branch
          %574 = sbr.rel (%p572) target = $region80
        $region79: #{tpu_custom_call.1} parent=75 // pred_region
          %575 = dma.done %s568, 2048
        $region80: #{tpu_custom_call.1} parent=75 // pred_fallthru
          _
        %s576 = sand.u32 %s41, 1
        %s577 = scalar_lea.sflag [#allocation8], %s576
        %s578 = sand.u32 %s89, 1
        %s579 = smul.addr %s578, 256
        %s580 = scalar_lea.vmem [#allocation7], %s579
        // Predicated region
        $region81: #{tpu_custom_call.1} parent=75 // pred_check
          %p581 = pneg %p102
        $region82: #{tpu_custom_call.1} parent=75 // pred_check_branch
          %583 = sbr.rel (%p581) target = $region84
        $region83: #{tpu_custom_call.1} parent=75 // pred_region
          %584 = dma.done %s577, 4096
        $region84: #{tpu_custom_call.1} parent=75 // pred_fallthru
          _
        // Predicated region
        $region85: #{tpu_custom_call.1} parent=75 // pred_check
          %p585 = pneg %p165
        $region86: #{tpu_custom_call.1} parent=75 // pred_check_branch
          %587 = sbr.rel (%p585) target = $region88
        $region87: #{tpu_custom_call.1} parent=75 // pred_region
          %588 = dma.done [#allocation8], 8192
        $region88: #{tpu_custom_call.1} parent=75 // pred_fallthru
          _
        // Predicated region
        $region89: #{tpu_custom_call.1} parent=75 // pred_check
          %p589 = pneg %p186
        $region90: #{tpu_custom_call.1} parent=75 // pred_check_branch
          %591 = sbr.rel (%p589) target = $region92
        $region91: #{tpu_custom_call.1} parent=75 // pred_region
          %592 = dma.done [#allocation11], 16384
        $region92: #{tpu_custom_call.1} parent=75 // pred_fallthru
          _
        // Predicated region
        $region93: #{tpu_custom_call.1} parent=75 // pred_check
          %p593 = pneg %p207
        $region94: #{tpu_custom_call.1} parent=75 // pred_check_branch
          %595 = sbr.rel (%p593) target = $region96
        $region95: #{tpu_custom_call.1} parent=75 // pred_region
          %596 = dma.done [#allocation11], 8192
        $region96: #{tpu_custom_call.1} parent=75 // pred_fallthru
          _
        // Predicated region
        $region97: #{tpu_custom_call.1} parent=75 // pred_check
          %p597 = pneg %p291
        $region98: #{tpu_custom_call.1} parent=75 // pred_check_branch
          %599 = sbr.rel (%p597) target = $region100
        $region99: #{tpu_custom_call.1} parent=75 // pred_region
          %600 = dma.done [#allocation14], 32768
        $region100: #{tpu_custom_call.1} parent=75 // pred_fallthru
          _
        // Predicated region
        $region101: #{tpu_custom_call.1} parent=75 // pred_check
          %p601 = pneg %p333
        $region102: #{tpu_custom_call.1} parent=75 // pred_check_branch
          %603 = sbr.rel (%p601) target = $region104
        $region103: #{tpu_custom_call.1} parent=75 // pred_region
          %604 = dma.done [#allocation14], 32768
        $region104: #{tpu_custom_call.1} parent=75 // pred_fallthru
          _
        %s605 = sand.u32 %s63, 1
        %s606 = scalar_lea.sflag [#allocation5], %s605
        %s607 = sand.u32 %s63, 1
        %s608 = smul.addr %s607, 128
        %s609 = scalar_lea.vmem [#allocation4], %s608
        %p610 = pneg %p76
        %p611 = pneg %p73
        %s612 = sand.u32 %s41, 1
        %s613 = scalar_lea.sflag [#allocation8], %s612
        %s614 = sand.u32 %s89, 1
        %s615 = smul.addr %s614, 256
        %s616 = scalar_lea.vmem [#allocation7], %s615
        %p617 = pneg %p102
        %p618 = pneg %p99
        %p619 = pneg %p123
        %p620 = pneg %p120
        %p621 = pneg %p144
        %p622 = pneg %p141
        %p623 = pneg %p165
        %p624 = pneg %p162
        %p625 = pneg %p186
        %p626 = pneg %p183
        %p627 = pneg %p207
        %p628 = pneg %p204
        %p629 = pneg %p228
        %p630 = pneg %p225
        %p631 = pneg %p249
        %p632 = pneg %p246
        %p633 = pneg %p270
        %p634 = pneg %p267
        %p635 = pneg %p291
        %p636 = pneg %p288
        %p637 = pneg %p312
        %p638 = pneg %p309
        %p639 = pneg %p333
        %p640 = pneg %p330
        %p641 = pneg %p354
        %p642 = pneg %p351
        %p643 = pneg %p382
        %p644 = pneg %p379
        %s645 = sand.u32 %s369, 1
        %s646 = scalar_lea.sflag [#allocation6], %s645
        %s647 = sand.u32 %s369, 1
        %s648 = smul.addr %s647, 128
        %s649 = scalar_lea.vmem [#allocation16], %s648
        %p650 = pneg %p410
        %p651 = pneg %p407
        %s652 = sand.u32 %s397, 1
        %s653 = scalar_lea.sflag [#allocation18], %s652
        %s654 = sand.u32 %s397, 1
        %s655 = smul.addr %s654, 256
        %s656 = scalar_lea.vmem [#allocation17], %s655
        %s657 = smul.u32 8, %s46
        %s658 = smul.u32 8, %s46
        %s659 = smul.u32 8, %s46
        %p660 = scmp.eq.s32.totalorder %s46, 0
        // Predicated region
        $region105: #{tpu_custom_call.1} parent=75 // pred_check
          %p661 = pneg %p660
        $region106: #{tpu_custom_call.1} parent=75 // pred_check_branch
          %663 = sbr.rel (%p661) target = $region108
        $region107: #{tpu_custom_call.1} parent=75 // pred_region
          %v664 = vld [vmem:[%s580] sm:$0xff]
          %v665 = vld [vmem:[%s580 + $0x8] sm:$0xff]
          %v666 = vld [vmem:[%s580 + $0x10] sm:$0xff]
          %v667 = vld [vmem:[%s580 + $0x18] sm:$0xff]
          %v668 = vld [vmem:[%s580 + $0x20] sm:$0xff]
          %v669 = vld [vmem:[%s580 + $0x28] sm:$0xff]
          %v670 = vld [vmem:[%s580 + $0x30] sm:$0xff]
          %v671 = vld [vmem:[%s580 + $0x38] sm:$0xff]
          %v672 = vld [vmem:[%s580 + $0x40] sm:$0xff]
          %v673 = vld [vmem:[%s580 + $0x48] sm:$0xff]
          %v674 = vld [vmem:[%s580 + $0x50] sm:$0xff]
          %v675 = vld [vmem:[%s580 + $0x58] sm:$0xff]
          %v676 = vld [vmem:[%s580 + $0x60] sm:$0xff]
          %v677 = vld [vmem:[%s580 + $0x68] sm:$0xff]
          %v678 = vld [vmem:[%s580 + $0x70] sm:$0xff]
          %v679 = vld [vmem:[%s580 + $0x78] sm:$0xff]
          %v680 = vld [vmem:[%s580 + $0x80] sm:$0xff]
          %v681 = vld [vmem:[%s580 + $0x88] sm:$0xff]
          %v682 = vld [vmem:[%s580 + $0x90] sm:$0xff]
          %v683 = vld [vmem:[%s580 + $0x98] sm:$0xff]
          %v684 = vld [vmem:[%s580 + $0xa0] sm:$0xff]
          %v685 = vld [vmem:[%s580 + $0xa8] sm:$0xff]
          %v686 = vld [vmem:[%s580 + $0xb0] sm:$0xff]
          %v687 = vld [vmem:[%s580 + $0xb8] sm:$0xff]
          %v688 = vld [vmem:[%s580 + $0xc0] sm:$0xff]
          %v689 = vld [vmem:[%s580 + $0xc8] sm:$0xff]
          %v690 = vld [vmem:[%s580 + $0xd0] sm:$0xff]
          %v691 = vld [vmem:[%s580 + $0xd8] sm:$0xff]
          %v692 = vld [vmem:[%s580 + $0xe0] sm:$0xff]
          %v693 = vld [vmem:[%s580 + $0xe8] sm:$0xff]
          %v694 = vld [vmem:[%s580 + $0xf0] sm:$0xff]
          %v695 = vld [vmem:[%s580 + $0xf8] sm:$0xff]
          %v696 = vld [vmem:[%s2] sm:$0x3]
          %v697 = vld [vmem:[%s3] sm:$0x3]
          %v698 = vadd.f32 %v664, %v665
          %699 = vadd.xlane.f32.xlu0 %v698
          %v700 = vpop.xlane.xlu0 %699
          %v701 = vadd.f32 %v666, %v667
          %702 = vadd.xlane.f32.xlu0 %v701
          %v703 = vpop.xlane.xlu0 %702
          %v704 = vadd.f32 %v668, %v669
          %705 = vadd.xlane.f32.xlu0 %v704
          %v706 = vpop.xlane.xlu0 %705
          %v707 = vadd.f32 %v670, %v671
          %708 = vadd.xlane.f32.xlu0 %v707
          %v709 = vpop.xlane.xlu0 %708
          %v710 = vadd.f32 %v672, %v673
          %711 = vadd.xlane.f32.xlu0 %v710
          %v712 = vpop.xlane.xlu0 %711
          %v713 = vadd.f32 %v674, %v675
          %714 = vadd.xlane.f32.xlu0 %v713
          %v715 = vpop.xlane.xlu0 %714
          %v716 = vadd.f32 %v676, %v677
          %717 = vadd.xlane.f32.xlu0 %v716
          %v718 = vpop.xlane.xlu0 %717
          %v719 = vadd.f32 %v678, %v679
          %720 = vadd.xlane.f32.xlu0 %v719
          %v721 = vpop.xlane.xlu0 %720
          %v722 = vadd.f32 %v680, %v681
          %723 = vadd.xlane.f32.xlu0 %v722
          %v724 = vpop.xlane.xlu0 %723
          %v725 = vadd.f32 %v682, %v683
          %726 = vadd.xlane.f32.xlu0 %v725
          %v727 = vpop.xlane.xlu0 %726
          %v728 = vadd.f32 %v684, %v685
          %729 = vadd.xlane.f32.xlu0 %v728
          %v730 = vpop.xlane.xlu0 %729
          %v731 = vadd.f32 %v686, %v687
          %732 = vadd.xlane.f32.xlu0 %v731
          %v733 = vpop.xlane.xlu0 %732
          %v734 = vadd.f32 %v688, %v689
          %735 = vadd.xlane.f32.xlu0 %v734
          %v736 = vpop.xlane.xlu0 %735
          %v737 = vadd.f32 %v690, %v691
          %738 = vadd.xlane.f32.xlu0 %v737
          %v739 = vpop.xlane.xlu0 %738
          %v740 = vadd.f32 %v692, %v693
          %741 = vadd.xlane.f32.xlu0 %v740
          %v742 = vpop.xlane.xlu0 %741
          %v743 = vadd.f32 %v694, %v695
          %744 = vadd.xlane.f32.xlu0 %v743
          %v745 = vpop.xlane.xlu0 %744
          %v746 = vrcp.pop 256.0
          %v747 = vmul.f32 %v700, %v746
          %v748 = vmul.f32 %v703, %v746
          %v749 = vmul.f32 %v706, %v746
          %v750 = vmul.f32 %v709, %v746
          %v751 = vmul.f32 %v712, %v746
          %v752 = vmul.f32 %v715, %v746
          %v753 = vmul.f32 %v718, %v746
          %v754 = vmul.f32 %v721, %v746
          %v755 = vmul.f32 %v724, %v746
          %v756 = vmul.f32 %v727, %v746
          %v757 = vmul.f32 %v730, %v746
          %v758 = vmul.f32 %v733, %v746
          %v759 = vmul.f32 %v736, %v746
          %v760 = vmul.f32 %v739, %v746
          %v761 = vmul.f32 %v742, %v746
          %v762 = vmul.f32 %v745, %v746
          %v763 = vsub.f32 %v664, %v747
          %v764 = vsub.f32 %v665, %v747
          %v765 = vsub.f32 %v666, %v748
          %v766 = vsub.f32 %v667, %v748
          %v767 = vsub.f32 %v668, %v749
          %v768 = vsub.f32 %v669, %v749
          %v769 = vsub.f32 %v670, %v750
          %v770 = vsub.f32 %v671, %v750
          %v771 = vsub.f32 %v672, %v751
          %v772 = vsub.f32 %v673, %v751
          %v773 = vsub.f32 %v674, %v752
          %v774 = vsub.f32 %v675, %v752
          %v775 = vsub.f32 %v676, %v753
          %v776 = vsub.f32 %v677, %v753
          %v777 = vsub.f32 %v678, %v754
          %v778 = vsub.f32 %v679, %v754
          %v779 = vsub.f32 %v680, %v755
          %v780 = vsub.f32 %v681, %v755
          %v781 = vsub.f32 %v682, %v756
          %v782 = vsub.f32 %v683, %v756
          %v783 = vsub.f32 %v684, %v757
          %v784 = vsub.f32 %v685, %v757
          %v785 = vsub.f32 %v686, %v758
          %v786 = vsub.f32 %v687, %v758
          %v787 = vsub.f32 %v688, %v759
          %v788 = vsub.f32 %v689, %v759
          %v789 = vsub.f32 %v690, %v760
          %v790 = vsub.f32 %v691, %v760
          %v791 = vsub.f32 %v692, %v761
          %v792 = vsub.f32 %v693, %v761
          %v793 = vsub.f32 %v694, %v762
          %v794 = vsub.f32 %v695, %v762
          %v795 = vmul.f32 %v763, %v763
          %v796 = vmul.f32 %v764, %v764
          %v797 = vmul.f32 %v765, %v765
          %v798 = vmul.f32 %v766, %v766
          %v799 = vmul.f32 %v767, %v767
          %v800 = vmul.f32 %v768, %v768
          %v801 = vmul.f32 %v769, %v769
          %v802 = vmul.f32 %v770, %v770
          %v803 = vmul.f32 %v771, %v771
          %v804 = vmul.f32 %v772, %v772
          %v805 = vmul.f32 %v773, %v773
          %v806 = vmul.f32 %v774, %v774
          %v807 = vmul.f32 %v775, %v775
          %v808 = vmul.f32 %v776, %v776
          %v809 = vmul.f32 %v777, %v777
          %v810 = vmul.f32 %v778, %v778
          %v811 = vmul.f32 %v779, %v779
          %v812 = vmul.f32 %v780, %v780
          %v813 = vmul.f32 %v781, %v781
          %v814 = vmul.f32 %v782, %v782
          %v815 = vmul.f32 %v783, %v783
          %v816 = vmul.f32 %v784, %v784
          %v817 = vmul.f32 %v785, %v785
          %v818 = vmul.f32 %v786, %v786
          %v819 = vmul.f32 %v787, %v787
          %v820 = vmul.f32 %v788, %v788
          %v821 = vmul.f32 %v789, %v789
          %v822 = vmul.f32 %v790, %v790
          %v823 = vmul.f32 %v791, %v791
          %v824 = vmul.f32 %v792, %v792
          %v825 = vmul.f32 %v793, %v793
          %v826 = vmul.f32 %v794, %v794
          %v827 = vadd.f32 %v795, %v796
          %828 = vadd.xlane.f32.xlu0 %v827
          %v829 = vpop.xlane.xlu0 %828
          %v830 = vadd.f32 %v797, %v798
          %831 = vadd.xlane.f32.xlu0 %v830
          %v832 = vpop.xlane.xlu0 %831
          %v833 = vadd.f32 %v799, %v800
          %834 = vadd.xlane.f32.xlu0 %v833
          %v835 = vpop.xlane.xlu0 %834
          %v836 = vadd.f32 %v801, %v802
          %837 = vadd.xlane.f32.xlu0 %v836
          %v838 = vpop.xlane.xlu0 %837
          %v839 = vadd.f32 %v803, %v804
          %840 = vadd.xlane.f32.xlu0 %v839
          %v841 = vpop.xlane.xlu0 %840
          %v842 = vadd.f32 %v805, %v806
          %843 = vadd.xlane.f32.xlu0 %v842
          %v844 = vpop.xlane.xlu0 %843
          %v845 = vadd.f32 %v807, %v808
          %846 = vadd.xlane.f32.xlu0 %v845
          %v847 = vpop.xlane.xlu0 %846
          %v848 = vadd.f32 %v809, %v810
          %849 = vadd.xlane.f32.xlu0 %v848
          %v850 = vpop.xlane.xlu0 %849
          %v851 = vadd.f32 %v811, %v812
          %852 = vadd.xlane.f32.xlu0 %v851
          %v853 = vpop.xlane.xlu0 %852
          %v854 = vadd.f32 %v813, %v814
          %855 = vadd.xlane.f32.xlu0 %v854
          %v856 = vpop.xlane.xlu0 %855
          %v857 = vadd.f32 %v815, %v816
          %858 = vadd.xlane.f32.xlu0 %v857
          %v859 = vpop.xlane.xlu0 %858
          %v860 = vadd.f32 %v817, %v818
          %861 = vadd.xlane.f32.xlu0 %v860
          %v862 = vpop.xlane.xlu0 %861
          %v863 = vadd.f32 %v819, %v820
          %864 = vadd.xlane.f32.xlu0 %v863
          %v865 = vpop.xlane.xlu0 %864
          %v866 = vadd.f32 %v821, %v822
          %867 = vadd.xlane.f32.xlu0 %v866
          %v868 = vpop.xlane.xlu0 %867
          %v869 = vadd.f32 %v823, %v824
          %870 = vadd.xlane.f32.xlu0 %v869
          %v871 = vpop.xlane.xlu0 %870
          %v872 = vadd.f32 %v825, %v826
          %873 = vadd.xlane.f32.xlu0 %v872
          %v874 = vpop.xlane.xlu0 %873
          %v875 = vmul.f32 %v829, %v746
          %v876 = vmul.f32 %v832, %v746
          %v877 = vmul.f32 %v835, %v746
          %v878 = vmul.f32 %v838, %v746
          %v879 = vmul.f32 %v841, %v746
          %v880 = vmul.f32 %v844, %v746
          %v881 = vmul.f32 %v847, %v746
          %v882 = vmul.f32 %v850, %v746
          %v883 = vmul.f32 %v853, %v746
          %v884 = vmul.f32 %v856, %v746
          %v885 = vmul.f32 %v859, %v746
          %v886 = vmul.f32 %v862, %v746
          %v887 = vmul.f32 %v865, %v746
          %v888 = vmul.f32 %v868, %v746
          %v889 = vmul.f32 %v871, %v746
          %v890 = vmul.f32 %v874, %v746
          %v891 = vadd.f32 %v875, 1e-06
          %v892 = vadd.f32 %v876, 1e-06
          %v893 = vadd.f32 %v877, 1e-06
          %v894 = vadd.f32 %v878, 1e-06
          %v895 = vadd.f32 %v879, 1e-06
          %v896 = vadd.f32 %v880, 1e-06
          %v897 = vadd.f32 %v881, 1e-06
          %v898 = vadd.f32 %v882, 1e-06
          %v899 = vadd.f32 %v883, 1e-06
          %v900 = vadd.f32 %v884, 1e-06
          %v901 = vadd.f32 %v885, 1e-06
          %v902 = vadd.f32 %v886, 1e-06
          %v903 = vadd.f32 %v887, 1e-06
          %v904 = vadd.f32 %v888, 1e-06
          %v905 = vadd.f32 %v889, 1e-06
          %v906 = vadd.f32 %v890, 1e-06
          %v907 = vrsqrt.pop %v891
          %v908 = vrsqrt.pop %v892
          %v909 = vrsqrt.pop %v893
          %v910 = vrsqrt.pop %v894
          %v911 = vrsqrt.pop %v895
          %v912 = vrsqrt.pop %v896
          %v913 = vrsqrt.pop %v897
          %v914 = vrsqrt.pop %v898
          %v915 = vrsqrt.pop %v899
          %v916 = vrsqrt.pop %v900
          %v917 = vrsqrt.pop %v901
          %v918 = vrsqrt.pop %v902
          %v919 = vrsqrt.pop %v903
          %v920 = vrsqrt.pop %v904
          %v921 = vrsqrt.pop %v905
          %v922 = vrsqrt.pop %v906
          %v923 = vmul.f32 %v763, %v907
          %v924 = vmul.f32 %v764, %v907
          %v925 = vmul.f32 %v765, %v908
          %v926 = vmul.f32 %v766, %v908
          %v927 = vmul.f32 %v767, %v909
          %v928 = vmul.f32 %v768, %v909
          %v929 = vmul.f32 %v769, %v910
          %v930 = vmul.f32 %v770, %v910
          %v931 = vmul.f32 %v771, %v911
          %v932 = vmul.f32 %v772, %v911
          %v933 = vmul.f32 %v773, %v912
          %v934 = vmul.f32 %v774, %v912
          %v935 = vmul.f32 %v775, %v913
          %v936 = vmul.f32 %v776, %v913
          %v937 = vmul.f32 %v777, %v914
          %v938 = vmul.f32 %v778, %v914
          %v939 = vmul.f32 %v779, %v915
          %v940 = vmul.f32 %v780, %v915
          %v941 = vmul.f32 %v781, %v916
          %v942 = vmul.f32 %v782, %v916
          %v943 = vmul.f32 %v783, %v917
          %v944 = vmul.f32 %v784, %v917
          %v945 = vmul.f32 %v785, %v918
          %v946 = vmul.f32 %v786, %v918
          %v947 = vmul.f32 %v787, %v919
          %v948 = vmul.f32 %v788, %v919
          %v949 = vmul.f32 %v789, %v920
          %v950 = vmul.f32 %v790, %v920
          %v951 = vmul.f32 %v791, %v921
          %v952 = vmul.f32 %v792, %v921
          %v953 = vmul.f32 %v793, %v922
          %v954 = vmul.f32 %v794, %v922
          %v956 = vlaneseq
          %v957 = vshrl.u32 %v956, 7
          %v958 = vsub.s32 0, %v957
          %v959 = vrot.slane %v696, %v958
          %v960 = vlaneseq
          %v961 = vshrl.u32 %v960, 7
          %v962 = vsub.s32 1, %v961
          %v963 = vrot.slane %v696, %v962
          %v966 = vmul.f32 %v923, %v959
          %v967 = vmul.f32 %v924, %v963
          %v968 = vmul.f32 %v925, %v959
          %v969 = vmul.f32 %v926, %v963
          %v970 = vmul.f32 %v927, %v959
          %v971 = vmul.f32 %v928, %v963
          %v972 = vmul.f32 %v929, %v959
          %v973 = vmul.f32 %v930, %v963
          %v974 = vmul.f32 %v931, %v959
          %v975 = vmul.f32 %v932, %v963
          %v976 = vmul.f32 %v933, %v959
          %v977 = vmul.f32 %v934, %v963
          %v978 = vmul.f32 %v935, %v959
          %v979 = vmul.f32 %v936, %v963
          %v980 = vmul.f32 %v937, %v959
          %v981 = vmul.f32 %v938, %v963
          %v982 = vmul.f32 %v939, %v959
          %v983 = vmul.f32 %v940, %v963
          %v984 = vmul.f32 %v941, %v959
          %v985 = vmul.f32 %v942, %v963
          %v986 = vmul.f32 %v943, %v959
          %v987 = vmul.f32 %v944, %v963
          %v988 = vmul.f32 %v945, %v959
          %v989 = vmul.f32 %v946, %v963
          %v990 = vmul.f32 %v947, %v959
          %v991 = vmul.f32 %v948, %v963
          %v992 = vmul.f32 %v949, %v959
          %v993 = vmul.f32 %v950, %v963
          %v994 = vmul.f32 %v951, %v959
          %v995 = vmul.f32 %v952, %v963
          %v996 = vmul.f32 %v953, %v959
          %v997 = vmul.f32 %v954, %v963
          %v999 = vlaneseq
          %v1000 = vshrl.u32 %v999, 7
          %v1001 = vsub.s32 0, %v1000
          %v1002 = vrot.slane %v697, %v1001
          %v1003 = vlaneseq
          %v1004 = vshrl.u32 %v1003, 7
          %v1005 = vsub.s32 1, %v1004
          %v1006 = vrot.slane %v697, %v1005
          %v1009 = vadd.f32 %v966, %v1002
          %v1010 = vadd.f32 %v967, %v1006
          %v1011 = vadd.f32 %v968, %v1002
          %v1012 = vadd.f32 %v969, %v1006
          %v1013 = vadd.f32 %v970, %v1002
          %v1014 = vadd.f32 %v971, %v1006
          %v1015 = vadd.f32 %v972, %v1002
          %v1016 = vadd.f32 %v973, %v1006
          %v1017 = vadd.f32 %v974, %v1002
          %v1018 = vadd.f32 %v975, %v1006
          %v1019 = vadd.f32 %v976, %v1002
          %v1020 = vadd.f32 %v977, %v1006
          %v1021 = vadd.f32 %v978, %v1002
          %v1022 = vadd.f32 %v979, %v1006
          %v1023 = vadd.f32 %v980, %v1002
          %v1024 = vadd.f32 %v981, %v1006
          %v1025 = vadd.f32 %v982, %v1002
          %v1026 = vadd.f32 %v983, %v1006
          %v1027 = vadd.f32 %v984, %v1002
          %v1028 = vadd.f32 %v985, %v1006
          %v1029 = vadd.f32 %v986, %v1002
          %v1030 = vadd.f32 %v987, %v1006
          %v1031 = vadd.f32 %v988, %v1002
          %v1032 = vadd.f32 %v989, %v1006
          %v1033 = vadd.f32 %v990, %v1002
          %v1034 = vadd.f32 %v991, %v1006
          %v1035 = vadd.f32 %v992, %v1002
          %v1036 = vadd.f32 %v993, %v1006
          %v1037 = vadd.f32 %v994, %v1002
          %v1038 = vadd.f32 %v995, %v1006
          %v1039 = vadd.f32 %v996, %v1002
          %v1040 = vadd.f32 %v997, %v1006
          %v1041 = vld [vmem:[#allocation10] sm:$0xff]
          %v1042 = vld [vmem:[#allocation10 + $0x8] sm:$0xff]
          %v1043 = vld [vmem:[#allocation10 + $0x10] sm:$0xff]
          %v1044 = vld [vmem:[#allocation10 + $0x18] sm:$0xff]
          %v1045 = vld [vmem:[#allocation10 + $0x20] sm:$0xff]
          %v1046 = vld [vmem:[#allocation10 + $0x28] sm:$0xff]
          %v1047 = vld [vmem:[#allocation10 + $0x30] sm:$0xff]
          %v1048 = vld [vmem:[#allocation10 + $0x38] sm:$0xff]
          %v1049 = vld [vmem:[#allocation10 + $0x40] sm:$0xff]
          %v1050 = vld [vmem:[#allocation10 + $0x48] sm:$0xff]
          %v1051 = vld [vmem:[#allocation10 + $0x50] sm:$0xff]
          %v1052 = vld [vmem:[#allocation10 + $0x58] sm:$0xff]
          %v1053 = vld [vmem:[#allocation10 + $0x60] sm:$0xff]
          %v1054 = vld [vmem:[#allocation10 + $0x68] sm:$0xff]
          %v1055 = vld [vmem:[#allocation10 + $0x70] sm:$0xff]
          %v1056 = vld [vmem:[#allocation10 + $0x78] sm:$0xff]
          %v1057 = vld [vmem:[#allocation10 + $0x80] sm:$0xff]
          %v1058 = vld [vmem:[#allocation10 + $0x88] sm:$0xff]
          %v1059 = vld [vmem:[#allocation10 + $0x90] sm:$0xff]
          %v1060 = vld [vmem:[#allocation10 + $0x98] sm:$0xff]
          %v1061 = vld [vmem:[#allocation10 + $0xa0] sm:$0xff]
          %v1062 = vld [vmem:[#allocation10 + $0xa8] sm:$0xff]
          %v1063 = vld [vmem:[#allocation10 + $0xb0] sm:$0xff]
          %v1064 = vld [vmem:[#allocation10 + $0xb8] sm:$0xff]
          %v1065 = vld [vmem:[#allocation10 + $0xc0] sm:$0xff]
          %v1066 = vld [vmem:[#allocation10 + $0xc8] sm:$0xff]
          %v1067 = vld [vmem:[#allocation10 + $0xd0] sm:$0xff]
          %v1068 = vld [vmem:[#allocation10 + $0xd8] sm:$0xff]
          %v1069 = vld [vmem:[#allocation10 + $0xe0] sm:$0xff]
          %v1070 = vld [vmem:[#allocation10 + $0xe8] sm:$0xff]
          %v1071 = vld [vmem:[#allocation10 + $0xf0] sm:$0xff]
          %v1072 = vld [vmem:[#allocation10 + $0xf8] sm:$0xff]
          %v1073 = vld [vmem:[#allocation10 + $0x100] sm:$0xff]
          %v1074 = vld [vmem:[#allocation10 + $0x108] sm:$0xff]
          %v1075 = vld [vmem:[#allocation10 + $0x110] sm:$0xff]
          %v1076 = vld [vmem:[#allocation10 + $0x118] sm:$0xff]
          %v1077 = vld [vmem:[#allocation10 + $0x120] sm:$0xff]
          %v1078 = vld [vmem:[#allocation10 + $0x128] sm:$0xff]
          %v1079 = vld [vmem:[#allocation10 + $0x130] sm:$0xff]
          %v1080 = vld [vmem:[#allocation10 + $0x138] sm:$0xff]
          %v1081 = vld [vmem:[#allocation10 + $0x140] sm:$0xff]
          %v1082 = vld [vmem:[#allocation10 + $0x148] sm:$0xff]
          %v1083 = vld [vmem:[#allocation10 + $0x150] sm:$0xff]
          %v1084 = vld [vmem:[#allocation10 + $0x158] sm:$0xff]
          %v1085 = vld [vmem:[#allocation10 + $0x160] sm:$0xff]
          %v1086 = vld [vmem:[#allocation10 + $0x168] sm:$0xff]
          %v1087 = vld [vmem:[#allocation10 + $0x170] sm:$0xff]
          %v1088 = vld [vmem:[#allocation10 + $0x178] sm:$0xff]
          %v1089 = vld [vmem:[#allocation10 + $0x180] sm:$0xff]
          %v1090 = vld [vmem:[#allocation10 + $0x188] sm:$0xff]
          %v1091 = vld [vmem:[#allocation10 + $0x190] sm:$0xff]
          %v1092 = vld [vmem:[#allocation10 + $0x198] sm:$0xff]
          %v1093 = vld [vmem:[#allocation10 + $0x1a0] sm:$0xff]
          %v1094 = vld [vmem:[#allocation10 + $0x1a8] sm:$0xff]
          %v1095 = vld [vmem:[#allocation10 + $0x1b0] sm:$0xff]
          %v1096 = vld [vmem:[#allocation10 + $0x1b8] sm:$0xff]
          %v1097 = vld [vmem:[#allocation10 + $0x1c0] sm:$0xff]
          %v1098 = vld [vmem:[#allocation10 + $0x1c8] sm:$0xff]
          %v1099 = vld [vmem:[#allocation10 + $0x1d0] sm:$0xff]
          %v1100 = vld [vmem:[#allocation10 + $0x1d8] sm:$0xff]
          %v1101 = vld [vmem:[#allocation10 + $0x1e0] sm:$0xff]
          %v1102 = vld [vmem:[#allocation10 + $0x1e8] sm:$0xff]
          %v1103 = vld [vmem:[#allocation10 + $0x1f0] sm:$0xff]
          %v1104 = vld [vmem:[#allocation10 + $0x1f8] sm:$0xff]
          %v1105 = vld [vmem:[#allocation10 + $0x200] sm:$0xff]
          %v1106 = vld [vmem:[#allocation10 + $0x208] sm:$0xff]
          %v1107 = vld [vmem:[#allocation10 + $0x210] sm:$0xff]
          %v1108 = vld [vmem:[#allocation10 + $0x218] sm:$0xff]
          %v1109 = vld [vmem:[#allocation10 + $0x220] sm:$0xff]
          %v1110 = vld [vmem:[#allocation10 + $0x228] sm:$0xff]
          %v1111 = vld [vmem:[#allocation10 + $0x230] sm:$0xff]
          %v1112 = vld [vmem:[#allocation10 + $0x238] sm:$0xff]
          %v1113 = vld [vmem:[#allocation10 + $0x240] sm:$0xff]
          %v1114 = vld [vmem:[#allocation10 + $0x248] sm:$0xff]
          %v1115 = vld [vmem:[#allocation10 + $0x250] sm:$0xff]
          %v1116 = vld [vmem:[#allocation10 + $0x258] sm:$0xff]
          %v1117 = vld [vmem:[#allocation10 + $0x260] sm:$0xff]
          %v1118 = vld [vmem:[#allocation10 + $0x268] sm:$0xff]
          %v1119 = vld [vmem:[#allocation10 + $0x270] sm:$0xff]
          %v1120 = vld [vmem:[#allocation10 + $0x278] sm:$0xff]
          %v1121 = vld [vmem:[#allocation10 + $0x280] sm:$0xff]
          %v1122 = vld [vmem:[#allocation10 + $0x288] sm:$0xff]
          %v1123 = vld [vmem:[#allocation10 + $0x290] sm:$0xff]
          %v1124 = vld [vmem:[#allocation10 + $0x298] sm:$0xff]
          %v1125 = vld [vmem:[#allocation10 + $0x2a0] sm:$0xff]
          %v1126 = vld [vmem:[#allocation10 + $0x2a8] sm:$0xff]
          %v1127 = vld [vmem:[#allocation10 + $0x2b0] sm:$0xff]
          %v1128 = vld [vmem:[#allocation10 + $0x2b8] sm:$0xff]
          %v1129 = vld [vmem:[#allocation10 + $0x2c0] sm:$0xff]
          %v1130 = vld [vmem:[#allocation10 + $0x2c8] sm:$0xff]
          %v1131 = vld [vmem:[#allocation10 + $0x2d0] sm:$0xff]
          %v1132 = vld [vmem:[#allocation10 + $0x2d8] sm:$0xff]
          %v1133 = vld [vmem:[#allocation10 + $0x2e0] sm:$0xff]
          %v1134 = vld [vmem:[#allocation10 + $0x2e8] sm:$0xff]
          %v1135 = vld [vmem:[#allocation10 + $0x2f0] sm:$0xff]
          %v1136 = vld [vmem:[#allocation10 + $0x2f8] sm:$0xff]
          %v1137 = vld [vmem:[#allocation10 + $0x300] sm:$0xff]
          %v1138 = vld [vmem:[#allocation10 + $0x308] sm:$0xff]
          %v1139 = vld [vmem:[#allocation10 + $0x310] sm:$0xff]
          %v1140 = vld [vmem:[#allocation10 + $0x318] sm:$0xff]
          %v1141 = vld [vmem:[#allocation10 + $0x320] sm:$0xff]
          %v1142 = vld [vmem:[#allocation10 + $0x328] sm:$0xff]
          %v1143 = vld [vmem:[#allocation10 + $0x330] sm:$0xff]
          %v1144 = vld [vmem:[#allocation10 + $0x338] sm:$0xff]
          %v1145 = vld [vmem:[#allocation10 + $0x340] sm:$0xff]
          %v1146 = vld [vmem:[#allocation10 + $0x348] sm:$0xff]
          %v1147 = vld [vmem:[#allocation10 + $0x350] sm:$0xff]
          %v1148 = vld [vmem:[#allocation10 + $0x358] sm:$0xff]
          %v1149 = vld [vmem:[#allocation10 + $0x360] sm:$0xff]
          %v1150 = vld [vmem:[#allocation10 + $0x368] sm:$0xff]
          %v1151 = vld [vmem:[#allocation10 + $0x370] sm:$0xff]
          %v1152 = vld [vmem:[#allocation10 + $0x378] sm:$0xff]
          %v1153 = vld [vmem:[#allocation10 + $0x380] sm:$0xff]
          %v1154 = vld [vmem:[#allocation10 + $0x388] sm:$0xff]
          %v1155 = vld [vmem:[#allocation10 + $0x390] sm:$0xff]
          %v1156 = vld [vmem:[#allocation10 + $0x398] sm:$0xff]
          %v1157 = vld [vmem:[#allocation10 + $0x3a0] sm:$0xff]
          %v1158 = vld [vmem:[#allocation10 + $0x3a8] sm:$0xff]
          %v1159 = vld [vmem:[#allocation10 + $0x3b0] sm:$0xff]
          %v1160 = vld [vmem:[#allocation10 + $0x3b8] sm:$0xff]
          %v1161 = vld [vmem:[#allocation10 + $0x3c0] sm:$0xff]
          %v1162 = vld [vmem:[#allocation10 + $0x3c8] sm:$0xff]
          %v1163 = vld [vmem:[#allocation10 + $0x3d0] sm:$0xff]
          %v1164 = vld [vmem:[#allocation10 + $0x3d8] sm:$0xff]
          %v1165 = vld [vmem:[#allocation10 + $0x3e0] sm:$0xff]
          %v1166 = vld [vmem:[#allocation10 + $0x3e8] sm:$0xff]
          %v1167 = vld [vmem:[#allocation10 + $0x3f0] sm:$0xff]
          %v1168 = vld [vmem:[#allocation10 + $0x3f8] sm:$0xff]
          %1169 = vmatprep.subr.mxu0 %v1042
          %1170 = vmatpush1.msra.mxu0 %v1041
          %1171 = vmatprep.subr.mxu0 %v1046
          %1172 = vmatpush1.msra.mxu0 %v1045
          %1173 = vmatprep.subr.mxu0 %v1050
          %1174 = vmatpush1.msra.mxu0 %v1049
          %1175 = vmatprep.subr.mxu0 %v1054
          %1176 = vmatpush1.msra.mxu0 %v1053
          %1177 = vmatprep.subr.mxu0 %v1058
          %1178 = vmatpush1.msra.mxu0 %v1057
          %1179 = vmatprep.subr.mxu0 %v1062
          %1180 = vmatpush1.msra.mxu0 %v1061
          %1181 = vmatprep.subr.mxu0 %v1066
          %1182 = vmatpush1.msra.mxu0 %v1065
          %1183 = vmatprep.subr.mxu0 %v1070
          %1184 = vmatpush1.msra.mxu0 %v1069
          %1185 = vmatprep.subr.mxu0 %v1074
          %1186 = vmatpush1.msra.mxu0 %v1073
          %1187 = vmatprep.subr.mxu0 %v1078
          %1188 = vmatpush1.msra.mxu0 %v1077
          %1189 = vmatprep.subr.mxu0 %v1082
          %1190 = vmatpush1.msra.mxu0 %v1081
          %1191 = vmatprep.subr.mxu0 %v1086
          %1192 = vmatpush1.msra.mxu0 %v1085
          %1193 = vmatprep.subr.mxu0 %v1090
          %1194 = vmatpush1.msra.mxu0 %v1089
          %1195 = vmatprep.subr.mxu0 %v1094
          %1196 = vmatpush1.msra.mxu0 %v1093
          %1197 = vmatprep.subr.mxu0 %v1098
          %1198 = vmatpush1.msra.mxu0 %v1097
          %1199 = vmatprep.subr.mxu0 %v1102
          %1200 = vmatpush1.msra.mxu0 %v1101
          %1201 = vmatprep.subr.mxu0 %v1106
          %1202 = vmatpush1.msra.mxu0 %v1105
          %1203 = vmatprep.subr.mxu0 %v1110
          %1204 = vmatpush1.msra.mxu0 %v1109
          %1205 = vmatprep.subr.mxu0 %v1114
          %1206 = vmatpush1.msra.mxu0 %v1113
          %1207 = vmatprep.subr.mxu0 %v1118
          %1208 = vmatpush1.msra.mxu0 %v1117
          %1209 = vmatprep.subr.mxu0 %v1122
          %1210 = vmatpush1.msra.mxu0 %v1121
          %1211 = vmatprep.subr.mxu0 %v1126
          %1212 = vmatpush1.msra.mxu0 %v1125
          %1213 = vmatprep.subr.mxu0 %v1130
          %1214 = vmatpush1.msra.mxu0 %v1129
          %1215 = vmatprep.subr.mxu0 %v1134
          %1216 = vmatpush1.msra.mxu0 %v1133
          %1217 = vmatprep.subr.mxu0 %v1138
          %1218 = vmatpush1.msra.mxu0 %v1137
          %1219 = vmatprep.subr.mxu0 %v1142
          %1220 = vmatpush1.msra.mxu0 %v1141
          %1221 = vmatprep.subr.mxu0 %v1146
          %1222 = vmatpush1.msra.mxu0 %v1145
          %1223 = vmatprep.subr.mxu0 %v1150
          %1224 = vmatpush1.msra.mxu0 %v1149
          %1225 = vmatprep.subr.mxu0 %v1154
          %1226 = vmatpush1.msra.mxu0 %v1153
          %1227 = vmatprep.subr.mxu0 %v1158
          %1228 = vmatpush1.msra.mxu0 %v1157
          %1229 = vmatprep.subr.mxu0 %v1162
          %1230 = vmatpush1.msra.mxu0 %v1161
          %1231 = vmatprep.subr.mxu0 %v1166
          %1232 = vmatpush1.msra.mxu0 %v1165
          %1233 = vmatprep.mubr.f32.mxu0 %v1010
          %1234 = vmatmul.mubr.f32.gmra.mrb[0].mxu0 %v1009
          %v1235 = vpop.f32.mrb[0].mxu0
          %v1236 = vadd.f32 0.0, %v1235
          %v1237 = vpop.f32.mrb[0].mxu0
          %v1238 = vadd.f32 0.0, %v1237
          %1239 = vmatprep.mubr.f32.mxu0 %v1012
          %1240 = vmatmul.mubr.f32.gmra.mrb[0].mxu0 %v1011
          %v1241 = vpop.f32.mrb[0].mxu0
          %v1242 = vadd.f32 0.0, %v1241
          %v1243 = vpop.f32.mrb[0].mxu0
          %v1244 = vadd.f32 0.0, %v1243
          %1245 = vmatprep.mubr.f32.mxu0 %v1014
          %1246 = vmatmul.mubr.f32.gmra.mrb[0].mxu0 %v1013
          %v1247 = vpop.f32.mrb[0].mxu0
          %v1248 = vadd.f32 0.0, %v1247
          %v1249 = vpop.f32.mrb[0].mxu0
          %v1250 = vadd.f32 0.0, %v1249
          %1251 = vmatprep.mubr.f32.mxu0 %v1016
          %1252 = vmatmul.mubr.f32.gmra.mrb[0].mxu0 %v1015
          %v1253 = vpop.f32.mrb[0].mxu0
          %v1254 = vadd.f32 0.0, %v1253
          %v1255 = vpop.f32.mrb[0].mxu0
          %v1256 = vadd.f32 0.0, %v1255
          %1257 = vmatprep.mubr.f32.mxu0 %v1018
          %1258 = vmatmul.mubr.f32.gmra.mrb[0].mxu0 %v1017
          %v1259 = vpop.f32.mrb[0].mxu0
          %v1260 = vadd.f32 0.0, %v1259
          %v1261 = vpop.f32.mrb[0].mxu0
          %v1262 = vadd.f32 0.0, %v1261
          %1263 = vmatprep.mubr.f32.mxu0 %v1020
          %1264 = vmatmul.mubr.f32.gmra.mrb[0].mxu0 %v1019
          %v1265 = vpop.f32.mrb[0].mxu0
          %v1266 = vadd.f32 0.0, %v1265
          %v1267 = vpop.f32.mrb[0].mxu0
          %v1268 = vadd.f32 0.0, %v1267
          %1269 = vmatprep.mubr.f32.mxu0 %v1022
          %1270 = vmatmul.mubr.f32.gmra.mrb[0].mxu0 %v1021
          %v1271 = vpop.f32.mrb[0].mxu0
          %v1272 = vadd.f32 0.0, %v1271
          %v1273 = vpop.f32.mrb[0].mxu0
          %v1274 = vadd.f32 0.0, %v1273
          %1275 = vmatprep.mubr.f32.mxu0 %v1024
          %1276 = vmatmul.mubr.f32.gmra.mrb[0].mxu0 %v1023
          %v1277 = vpop.f32.mrb[0].mxu0
          %v1278 = vadd.f32 0.0, %v1277
          %v1279 = vpop.f32.mrb[0].mxu0
          %v1280 = vadd.f32 0.0, %v1279
          %1281 = vmatprep.mubr.f32.mxu0 %v1026
          %1282 = vmatmul.mubr.f32.gmra.mrb[0].mxu0 %v1025
          %v1283 = vpop.f32.mrb[0].mxu0
          %v1284 = vadd.f32 0.0, %v1283
          %v1285 = vpop.f32.mrb[0].mxu0
          %v1286 = vadd.f32 0.0, %v1285
          %1287 = vmatprep.mubr.f32.mxu0 %v1028
          %1288 = vmatmul.mubr.f32.gmra.mrb[0].mxu0 %v1027
          %v1289 = vpop.f32.mrb[0].mxu0
          %v1290 = vadd.f32 0.0, %v1289
          %v1291 = vpop.f32.mrb[0].mxu0
          %v1292 = vadd.f32 0.0, %v1291
          %1293 = vmatprep.mubr.f32.mxu0 %v1030
          %1294 = vmatmul.mubr.f32.gmra.mrb[0].mxu0 %v1029
          %v1295 = vpop.f32.mrb[0].mxu0
          %v1296 = vadd.f32 0.0, %v1295
          %v1297 = vpop.f32.mrb[0].mxu0
          %v1298 = vadd.f32 0.0, %v1297
          %1299 = vmatprep.mubr.f32.mxu0 %v1032
          %1300 = vmatmul.mubr.f32.gmra.mrb[0].mxu0 %v1031
          %v1301 = vpop.f32.mrb[0].mxu0
          %v1302 = vadd.f32 0.0, %v1301
          %v1303 = vpop.f32.mrb[0].mxu0
          %v1304 = vadd.f32 0.0, %v1303
          %1305 = vmatprep.mubr.f32.mxu0 %v1034
          %1306 = vmatmul.mubr.f32.gmra.mrb[0].mxu0 %v1033
          %v1307 = vpop.f32.mrb[0].mxu0
          %v1308 = vadd.f32 0.0, %v1307
          %v1309 = vpop.f32.mrb[0].mxu0
          %v1310 = vadd.f32 0.0, %v1309
          %1311 = vmatprep.mubr.f32.mxu0 %v1036
          %1312 = vmatmul.mubr.f32.gmra.mrb[0].mxu0 %v1035
          %v1313 = vpop.f32.mrb[0].mxu0
          %v1314 = vadd.f32 0.0, %v1313
          %v1315 = vpop.f32.mrb[0].mxu0
          %v1316 = vadd.f32 0.0, %v1315
          %1317 = vmatprep.mubr.f32.mxu0 %v1038
          %1318 = vmatmul.mubr.f32.gmra.mrb[0].mxu0 %v1037
          %v1319 = vpop.f32.mrb[0].mxu0
          %v1320 = vadd.f32 0.0, %v1319
          %v1321 = vpop.f32.mrb[0].mxu0
          %v1322 = vadd.f32 0.0, %v1321
          %1323 = vmatprep.mubr.f32.mxu0 %v1040
          %1324 = vmatmul.mubr.f32.gmra.mrb[0].mxu0 %v1039
          %v1325 = vpop.f32.mrb[0].mxu0
          %v1326 = vadd.f32 0.0, %v1325
          %v1327 = vpop.f32.mrb[0].mxu0
          %v1328 = vadd.f32 0.0, %v1327
          %1329 = vdwg.mxu0
          %1330 = vmatprep.subr.mxu0 %v1044
          %1331 = vmatpush1.msra.mxu0 %v1043
          %1332 = vmatprep.subr.mxu0 %v1048
          %1333 = vmatpush1.msra.mxu0 %v1047
          %1334 = vmatprep.subr.mxu0 %v1052
          %1335 = vmatpush1.msra.mxu0 %v1051
          %1336 = vmatprep.subr.mxu0 %v1056
          %1337 = vmatpush1.msra.mxu0 %v1055
          %1338 = vmatprep.subr.mxu0 %v1060
          %1339 = vmatpush1.msra.mxu0 %v1059
          %1340 = vmatprep.subr.mxu0 %v1064
          %1341 = vmatpush1.msra.mxu0 %v1063
          %1342 = vmatprep.subr.mxu0 %v1068
          %1343 = vmatpush1.msra.mxu0 %v1067
          %1344 = vmatprep.subr.mxu0 %v1072
          %1345 = vmatpush1.msra.mxu0 %v1071
          %1346 = vmatprep.subr.mxu0 %v1076
          %1347 = vmatpush1.msra.mxu0 %v1075
          %1348 = vmatprep.subr.mxu0 %v1080
          %1349 = vmatpush1.msra.mxu0 %v1079
          %1350 = vmatprep.subr.mxu0 %v1084
          %1351 = vmatpush1.msra.mxu0 %v1083
          %1352 = vmatprep.subr.mxu0 %v1088
          %1353 = vmatpush1.msra.mxu0 %v1087
          %1354 = vmatprep.subr.mxu0 %v1092
          %1355 = vmatpush1.msra.mxu0 %v1091
          %1356 = vmatprep.subr.mxu0 %v1096
          %1357 = vmatpush1.msra.mxu0 %v1095
          %1358 = vmatprep.subr.mxu0 %v1100
          %1359 = vmatpush1.msra.mxu0 %v1099
          %1360 = vmatprep.subr.mxu0 %v1104
          %1361 = vmatpush1.msra.mxu0 %v1103
          %1362 = vmatprep.subr.mxu0 %v1108
          %1363 = vmatpush1.msra.mxu0 %v1107
          %1364 = vmatprep.subr.mxu0 %v1112
          %1365 = vmatpush1.msra.mxu0 %v1111
          %1366 = vmatprep.subr.mxu0 %v1116
          %1367 = vmatpush1.msra.mxu0 %v1115
          %1368 = vmatprep.subr.mxu0 %v1120
          %1369 = vmatpush1.msra.mxu0 %v1119
          %1370 = vmatprep.subr.mxu0 %v1124
          %1371 = vmatpush1.msra.mxu0 %v1123
          %1372 = vmatprep.subr.mxu0 %v1128
          %1373 = vmatpush1.msra.mxu0 %v1127
          %1374 = vmatprep.subr.mxu0 %v1132
          %1375 = vmatpush1.msra.mxu0 %v1131
          %1376 = vmatprep.subr.mxu0 %v1136
          %1377 = vmatpush1.msra.mxu0 %v1135
          %1378 = vmatprep.subr.mxu0 %v1140
          %1379 = vmatpush1.msra.mxu0 %v1139
          %1380 = vmatprep.subr.mxu0 %v1144
          %1381 = vmatpush1.msra.mxu0 %v1143
          %1382 = vmatprep.subr.mxu0 %v1148
          %1383 = vmatpush1.msra.mxu0 %v1147
          %1384 = vmatprep.subr.mxu0 %v1152
          %1385 = vmatpush1.msra.mxu0 %v1151
          %1386 = vmatprep.subr.mxu0 %v1156
          %1387 = vmatpush1.msra.mxu0 %v1155
          %1388 = vmatprep.subr.mxu0 %v1160
          %1389 = vmatpush1.msra.mxu0 %v1159
          %1390 = vmatprep.subr.mxu0 %v1164
          %1391 = vmatpush1.msra.mxu0 %v1163
          %1392 = vmatprep.subr.mxu0 %v1168
          %1393 = vmatpush1.msra.mxu0 %v1167
          %1394 = vmatprep.mubr.f32.mxu0 %v1010
          %1395 = vmatmul.mubr.f32.gmra.mrb[0].mxu0 %v1009
          %v1396 = vpop.f32.mrb[0].mxu0
          %v1397 = vadd.f32 0.0, %v1396
          %v1398 = vpop.f32.mrb[0].mxu0
          %v1399 = vadd.f32 0.0, %v1398
          %1400 = vmatprep.mubr.f32.mxu0 %v1012
          %1401 = vmatmul.mubr.f32.gmra.mrb[0].mxu0 %v1011
          %v1402 = vpop.f32.mrb[0].mxu0
          %v1403 = vadd.f32 0.0, %v1402
          %v1404 = vpop.f32.mrb[0].mxu0
          %v1405 = vadd.f32 0.0, %v1404
          %1406 = vmatprep.mubr.f32.mxu0 %v1014
          %1407 = vmatmul.mubr.f32.gmra.mrb[0].mxu0 %v1013
          %v1408 = vpop.f32.mrb[0].mxu0
          %v1409 = vadd.f32 0.0, %v1408
          %v1410 = vpop.f32.mrb[0].mxu0
          %v1411 = vadd.f32 0.0, %v1410
          %1412 = vmatprep.mubr.f32.mxu0 %v1016
          %1413 = vmatmul.mubr.f32.gmra.mrb[0].mxu0 %v1015
          %v1414 = vpop.f32.mrb[0].mxu0
          %v1415 = vadd.f32 0.0, %v1414
          %v1416 = vpop.f32.mrb[0].mxu0
          %v1417 = vadd.f32 0.0, %v1416
          %1418 = vmatprep.mubr.f32.mxu0 %v1018
          %1419 = vmatmul.mubr.f32.gmra.mrb[0].mxu0 %v1017
          %v1420 = vpop.f32.mrb[0].mxu0
          %v1421 = vadd.f32 0.0, %v1420
          %v1422 = vpop.f32.mrb[0].mxu0
          %v1423 = vadd.f32 0.0, %v1422
          %1424 = vmatprep.mubr.f32.mxu0 %v1020
          %1425 = vmatmul.mubr.f32.gmra.mrb[0].mxu0 %v1019
          %v1426 = vpop.f32.mrb[0].mxu0
          %v1427 = vadd.f32 0.0, %v1426
          %v1428 = vpop.f32.mrb[0].mxu0
          %v1429 = vadd.f32 0.0, %v1428
          %1430 = vmatprep.mubr.f32.mxu0 %v1022
          %1431 = vmatmul.mubr.f32.gmra.mrb[0].mxu0 %v1021
          %v1432 = vpop.f32.mrb[0].mxu0
          %v1433 = vadd.f32 0.0, %v1432
          %v1434 = vpop.f32.mrb[0].mxu0
          %v1435 = vadd.f32 0.0, %v1434
          %1436 = vmatprep.mubr.f32.mxu0 %v1024
          %1437 = vmatmul.mubr.f32.gmra.mrb[0].mxu0 %v1023
          %v1438 = vpop.f32.mrb[0].mxu0
          %v1439 = vadd.f32 0.0, %v1438
          %v1440 = vpop.f32.mrb[0].mxu0
          %v1441 = vadd.f32 0.0, %v1440
          %1442 = vmatprep.mubr.f32.mxu0 %v1026
          %1443 = vmatmul.mubr.f32.gmra.mrb[0].mxu0 %v1025
          %v1444 = vpop.f32.mrb[0].mxu0
          %v1445 = vadd.f32 0.0, %v1444
          %v1446 = vpop.f32.mrb[0].mxu0
          %v1447 = vadd.f32 0.0, %v1446
          %1448 = vmatprep.mubr.f32.mxu0 %v1028
          %1449 = vmatmul.mubr.f32.gmra.mrb[0].mxu0 %v1027
          %v1450 = vpop.f32.mrb[0].mxu0
          %v1451 = vadd.f32 0.0, %v1450
          %v1452 = vpop.f32.mrb[0].mxu0
          %v1453 = vadd.f32 0.0, %v1452
          %1454 = vmatprep.mubr.f32.mxu0 %v1030
          %1455 = vmatmul.mubr.f32.gmra.mrb[0].mxu0 %v1029
          %v1456 = vpop.f32.mrb[0].mxu0
          %v1457 = vadd.f32 0.0, %v1456
          %v1458 = vpop.f32.mrb[0].mxu0
          %v1459 = vadd.f32 0.0, %v1458
          %1460 = vmatprep.mubr.f32.mxu0 %v1032
          %1461 = vmatmul.mubr.f32.gmra.mrb[0].mxu0 %v1031
          %v1462 = vpop.f32.mrb[0].mxu0
          %v1463 = vadd.f32 0.0, %v1462
          %v1464 = vpop.f32.mrb[0].mxu0
          %v1465 = vadd.f32 0.0, %v1464
          %1466 = vmatprep.mubr.f32.mxu0 %v1034
          %1467 = vmatmul.mubr.f32.gmra.mrb[0].mxu0 %v1033
          %v1468 = vpop.f32.mrb[0].mxu0
          %v1469 = vadd.f32 0.0, %v1468
          %v1470 = vpop.f32.mrb[0].mxu0
          %v1471 = vadd.f32 0.0, %v1470
          %1472 = vmatprep.mubr.f32.mxu0 %v1036
          %1473 = vmatmul.mubr.f32.gmra.mrb[0].mxu0 %v1035
          %v1474 = vpop.f32.mrb[0].mxu0
          %v1475 = vadd.f32 0.0, %v1474
          %v1476 = vpop.f32.mrb[0].mxu0
          %v1477 = vadd.f32 0.0, %v1476
          %1478 = vmatprep.mubr.f32.mxu0 %v1038
          %1479 = vmatmul.mubr.f32.gmra.mrb[0].mxu0 %v1037
          %v1480 = vpop.f32.mrb[0].mxu0
          %v1481 = vadd.f32 0.0, %v1480
          %v1482 = vpop.f32.mrb[0].mxu0
          %v1483 = vadd.f32 0.0, %v1482
          %1484 = vmatprep.mubr.f32.mxu0 %v1040
          %1485 = vmatmul.mubr.f32.gmra.mrb[0].mxu0 %v1039
          %v1486 = vpop.f32.mrb[0].mxu0
          %v1487 = vadd.f32 0.0, %v1486
          %v1488 = vpop.f32.mrb[0].mxu0
          %v1489 = vadd.f32 0.0, %v1488
          %1490 = vdwg.mxu0
          %vm1491 = vcmask 523264
          %1492 = vst.msk [vmem:[#allocation2] sm:$0xff] %vm1491, %v1236
          %1493 = vst.msk [vmem:[#allocation2 + $0x8] sm:$0xff] %vm1491, %v1242
          %1494 = vst.msk [vmem:[#allocation2 + $0x10] sm:$0xff] %vm1491, %v1248
          %1495 = vst.msk [vmem:[#allocation2 + $0x18] sm:$0xff] %vm1491, %v1254
          %1496 = vst.msk [vmem:[#allocation2 + $0x20] sm:$0xff] %vm1491, %v1260
          %1497 = vst.msk [vmem:[#allocation2 + $0x28] sm:$0xff] %vm1491, %v1266
          %1498 = vst.msk [vmem:[#allocation2 + $0x30] sm:$0xff] %vm1491, %v1272
          %1499 = vst.msk [vmem:[#allocation2 + $0x38] sm:$0xff] %vm1491, %v1278
          %1500 = vst.msk [vmem:[#allocation2 + $0x40] sm:$0xff] %vm1491, %v1284
          %1501 = vst.msk [vmem:[#allocation2 + $0x48] sm:$0xff] %vm1491, %v1290
          %1502 = vst.msk [vmem:[#allocation2 + $0x50] sm:$0xff] %vm1491, %v1296
          %1503 = vst.msk [vmem:[#allocation2 + $0x58] sm:$0xff] %vm1491, %v1302
          %1504 = vst.msk [vmem:[#allocation2 + $0x60] sm:$0xff] %vm1491, %v1308
          %1505 = vst.msk [vmem:[#allocation2 + $0x68] sm:$0xff] %vm1491, %v1314
          %1506 = vst.msk [vmem:[#allocation2 + $0x70] sm:$0xff] %vm1491, %v1320
          %1507 = vst.msk [vmem:[#allocation2 + $0x78] sm:$0xff] %vm1491, %v1326
          %1508 = vst.msk [vmem:[#allocation3] sm:$0xff] %vm1491, %v1397
          %1509 = vst.msk [vmem:[#allocation3 + $0x8] sm:$0xff] %vm1491, %v1403
          %1510 = vst.msk [vmem:[#allocation3 + $0x10] sm:$0xff] %vm1491, %v1409
          %1511 = vst.msk [vmem:[#allocation3 + $0x18] sm:$0xff] %vm1491, %v1415
          %1512 = vst.msk [vmem:[#allocation3 + $0x20] sm:$0xff] %vm1491, %v1421
          %1513 = vst.msk [vmem:[#allocation3 + $0x28] sm:$0xff] %vm1491, %v1427
          %1514 = vst.msk [vmem:[#allocation3 + $0x30] sm:$0xff] %vm1491, %v1433
          %1515 = vst.msk [vmem:[#allocation3 + $0x38] sm:$0xff] %vm1491, %v1439
          %1516 = vst.msk [vmem:[#allocation3 + $0x40] sm:$0xff] %vm1491, %v1445
          %1517 = vst.msk [vmem:[#allocation3 + $0x48] sm:$0xff] %vm1491, %v1451
          %1518 = vst.msk [vmem:[#allocation3 + $0x50] sm:$0xff] %vm1491, %v1457
          %1519 = vst.msk [vmem:[#allocation3 + $0x58] sm:$0xff] %vm1491, %v1463
          %1520 = vst.msk [vmem:[#allocation3 + $0x60] sm:$0xff] %vm1491, %v1469
          %1521 = vst.msk [vmem:[#allocation3 + $0x68] sm:$0xff] %vm1491, %v1475
          %1522 = vst.msk [vmem:[#allocation3 + $0x70] sm:$0xff] %vm1491, %v1481
          %1523 = vst.msk [vmem:[#allocation3 + $0x78] sm:$0xff] %vm1491, %v1487
          %1540 = vrot.lane.b32.xlu0 %v1236, 64
          %v1541 = vpop.permute.xlu0 %1540
          %1542 = vrot.lane.b32.xlu0 %v1242, 64
          %v1543 = vpop.permute.xlu0 %1542
          %1544 = vrot.lane.b32.xlu0 %v1248, 64
          %v1545 = vpop.permute.xlu0 %1544
          %1546 = vrot.lane.b32.xlu0 %v1254, 64
          %v1547 = vpop.permute.xlu0 %1546
          %1548 = vrot.lane.b32.xlu0 %v1260, 64
          %v1549 = vpop.permute.xlu0 %1548
          %1550 = vrot.lane.b32.xlu0 %v1266, 64
          %v1551 = vpop.permute.xlu0 %1550
          %1552 = vrot.lane.b32.xlu0 %v1272, 64
          %v1553 = vpop.permute.xlu0 %1552
          %1554 = vrot.lane.b32.xlu0 %v1278, 64
          %v1555 = vpop.permute.xlu0 %1554
          %1556 = vrot.lane.b32.xlu0 %v1284, 64
          %v1557 = vpop.permute.xlu0 %1556
          %1558 = vrot.lane.b32.xlu0 %v1290, 64
          %v1559 = vpop.permute.xlu0 %1558
          %1560 = vrot.lane.b32.xlu0 %v1296, 64
          %v1561 = vpop.permute.xlu0 %1560
          %1562 = vrot.lane.b32.xlu0 %v1302, 64
          %v1563 = vpop.permute.xlu0 %1562
          %1564 = vrot.lane.b32.xlu0 %v1308, 64
          %v1565 = vpop.permute.xlu0 %1564
          %1566 = vrot.lane.b32.xlu0 %v1314, 64
          %v1567 = vpop.permute.xlu0 %1566
          %1568 = vrot.lane.b32.xlu0 %v1320, 64
          %v1569 = vpop.permute.xlu0 %1568
          %1570 = vrot.lane.b32.xlu0 %v1326, 64
          %v1571 = vpop.permute.xlu0 %1570
          %s1588 = scalar_lea.vmem [#allocation2], 128
          %1589 = vst.msk [vmem:[%s1588] sm:$0xff] %vm1491, %v1541
          %1590 = vst.msk [vmem:[%s1588 + $0x8] sm:$0xff] %vm1491, %v1543
          %1591 = vst.msk [vmem:[%s1588 + $0x10] sm:$0xff] %vm1491, %v1545
          %1592 = vst.msk [vmem:[%s1588 + $0x18] sm:$0xff] %vm1491, %v1547
          %1593 = vst.msk [vmem:[%s1588 + $0x20] sm:$0xff] %vm1491, %v1549
          %1594 = vst.msk [vmem:[%s1588 + $0x28] sm:$0xff] %vm1491, %v1551
          %1595 = vst.msk [vmem:[%s1588 + $0x30] sm:$0xff] %vm1491, %v1553
          %1596 = vst.msk [vmem:[%s1588 + $0x38] sm:$0xff] %vm1491, %v1555
          %1597 = vst.msk [vmem:[%s1588 + $0x40] sm:$0xff] %vm1491, %v1557
          %1598 = vst.msk [vmem:[%s1588 + $0x48] sm:$0xff] %vm1491, %v1559
          %1599 = vst.msk [vmem:[%s1588 + $0x50] sm:$0xff] %vm1491, %v1561
          %1600 = vst.msk [vmem:[%s1588 + $0x58] sm:$0xff] %vm1491, %v1563
          %1601 = vst.msk [vmem:[%s1588 + $0x60] sm:$0xff] %vm1491, %v1565
          %1602 = vst.msk [vmem:[%s1588 + $0x68] sm:$0xff] %vm1491, %v1567
          %1603 = vst.msk [vmem:[%s1588 + $0x70] sm:$0xff] %vm1491, %v1569
          %1604 = vst.msk [vmem:[%s1588 + $0x78] sm:$0xff] %vm1491, %v1571
          %1621 = vrot.lane.b32.xlu0 %v1397, 64
          %v1622 = vpop.permute.xlu0 %1621
          %1623 = vrot.lane.b32.xlu0 %v1403, 64
          %v1624 = vpop.permute.xlu0 %1623
          %1625 = vrot.lane.b32.xlu0 %v1409, 64
          %v1626 = vpop.permute.xlu0 %1625
          %1627 = vrot.lane.b32.xlu0 %v1415, 64
          %v1628 = vpop.permute.xlu0 %1627
          %1629 = vrot.lane.b32.xlu0 %v1421, 64
          %v1630 = vpop.permute.xlu0 %1629
          %1631 = vrot.lane.b32.xlu0 %v1427, 64
          %v1632 = vpop.permute.xlu0 %1631
          %1633 = vrot.lane.b32.xlu0 %v1433, 64
          %v1634 = vpop.permute.xlu0 %1633
          %1635 = vrot.lane.b32.xlu0 %v1439, 64
          %v1636 = vpop.permute.xlu0 %1635
          %1637 = vrot.lane.b32.xlu0 %v1445, 64
          %v1638 = vpop.permute.xlu0 %1637
          %1639 = vrot.lane.b32.xlu0 %v1451, 64
          %v1640 = vpop.permute.xlu0 %1639
          %1641 = vrot.lane.b32.xlu0 %v1457, 64
          %v1642 = vpop.permute.xlu0 %1641
          %1643 = vrot.lane.b32.xlu0 %v1463, 64
          %v1644 = vpop.permute.xlu0 %1643
          %1645 = vrot.lane.b32.xlu0 %v1469, 64
          %v1646 = vpop.permute.xlu0 %1645
          %1647 = vrot.lane.b32.xlu0 %v1475, 64
          %v1648 = vpop.permute.xlu0 %1647
          %1649 = vrot.lane.b32.xlu0 %v1481, 64
          %v1650 = vpop.permute.xlu0 %1649
          %1651 = vrot.lane.b32.xlu0 %v1487, 64
          %v1652 = vpop.permute.xlu0 %1651
          %s1669 = scalar_lea.vmem [#allocation3], 128
          %1670 = vst.msk [vmem:[%s1669] sm:$0xff] %vm1491, %v1622
          %1671 = vst.msk [vmem:[%s1669 + $0x8] sm:$0xff] %vm1491, %v1624
          %1672 = vst.msk [vmem:[%s1669 + $0x10] sm:$0xff] %vm1491, %v1626
          %1673 = vst.msk [vmem:[%s1669 + $0x18] sm:$0xff] %vm1491, %v1628
          %1674 = vst.msk [vmem:[%s1669 + $0x20] sm:$0xff] %vm1491, %v1630
          %1675 = vst.msk [vmem:[%s1669 + $0x28] sm:$0xff] %vm1491, %v1632
          %1676 = vst.msk [vmem:[%s1669 + $0x30] sm:$0xff] %vm1491, %v1634
          %1677 = vst.msk [vmem:[%s1669 + $0x38] sm:$0xff] %vm1491, %v1636
          %1678 = vst.msk [vmem:[%s1669 + $0x40] sm:$0xff] %vm1491, %v1638
          %1679 = vst.msk [vmem:[%s1669 + $0x48] sm:$0xff] %vm1491, %v1640
          %1680 = vst.msk [vmem:[%s1669 + $0x50] sm:$0xff] %vm1491, %v1642
          %1681 = vst.msk [vmem:[%s1669 + $0x58] sm:$0xff] %vm1491, %v1644
          %1682 = vst.msk [vmem:[%s1669 + $0x60] sm:$0xff] %vm1491, %v1646
          %1683 = vst.msk [vmem:[%s1669 + $0x68] sm:$0xff] %vm1491, %v1648
          %1684 = vst.msk [vmem:[%s1669 + $0x70] sm:$0xff] %vm1491, %v1650
          %1685 = vst.msk [vmem:[%s1669 + $0x78] sm:$0xff] %vm1491, %v1652
          %s1686 = scalar_lea.vmem [#allocation2], 256
          %1687 = vst.msk [vmem:[%s1686] sm:$0xff] %vm1491, %v1238
          %1688 = vst.msk [vmem:[%s1686 + $0x8] sm:$0xff] %vm1491, %v1244
          %1689 = vst.msk [vmem:[%s1686 + $0x10] sm:$0xff] %vm1491, %v1250
          %1690 = vst.msk [vmem:[%s1686 + $0x18] sm:$0xff] %vm1491, %v1256
          %1691 = vst.msk [vmem:[%s1686 + $0x20] sm:$0xff] %vm1491, %v1262
          %1692 = vst.msk [vmem:[%s1686 + $0x28] sm:$0xff] %vm1491, %v1268
          %1693 = vst.msk [vmem:[%s1686 + $0x30] sm:$0xff] %vm1491, %v1274
          %1694 = vst.msk [vmem:[%s1686 + $0x38] sm:$0xff] %vm1491, %v1280
          %1695 = vst.msk [vmem:[%s1686 + $0x40] sm:$0xff] %vm1491, %v1286
          %1696 = vst.msk [vmem:[%s1686 + $0x48] sm:$0xff] %vm1491, %v1292
          %1697 = vst.msk [vmem:[%s1686 + $0x50] sm:$0xff] %vm1491, %v1298
          %1698 = vst.msk [vmem:[%s1686 + $0x58] sm:$0xff] %vm1491, %v1304
          %1699 = vst.msk [vmem:[%s1686 + $0x60] sm:$0xff] %vm1491, %v1310
          %1700 = vst.msk [vmem:[%s1686 + $0x68] sm:$0xff] %vm1491, %v1316
          %1701 = vst.msk [vmem:[%s1686 + $0x70] sm:$0xff] %vm1491, %v1322
          %1702 = vst.msk [vmem:[%s1686 + $0x78] sm:$0xff] %vm1491, %v1328
          %s1703 = scalar_lea.vmem [#allocation3], 256
          %1704 = vst.msk [vmem:[%s1703] sm:$0xff] %vm1491, %v1399
          %1705 = vst.msk [vmem:[%s1703 + $0x8] sm:$0xff] %vm1491, %v1405
          %1706 = vst.msk [vmem:[%s1703 + $0x10] sm:$0xff] %vm1491, %v1411
          %1707 = vst.msk [vmem:[%s1703 + $0x18] sm:$0xff] %vm1491, %v1417
          %1708 = vst.msk [vmem:[%s1703 + $0x20] sm:$0xff] %vm1491, %v1423
          %1709 = vst.msk [vmem:[%s1703 + $0x28] sm:$0xff] %vm1491, %v1429
          %1710 = vst.msk [vmem:[%s1703 + $0x30] sm:$0xff] %vm1491, %v1435
          %1711 = vst.msk [vmem:[%s1703 + $0x38] sm:$0xff] %vm1491, %v1441
          %1712 = vst.msk [vmem:[%s1703 + $0x40] sm:$0xff] %vm1491, %v1447
          %1713 = vst.msk [vmem:[%s1703 + $0x48] sm:$0xff] %vm1491, %v1453
          %1714 = vst.msk [vmem:[%s1703 + $0x50] sm:$0xff] %vm1491, %v1459
          %1715 = vst.msk [vmem:[%s1703 + $0x58] sm:$0xff] %vm1491, %v1465
          %1716 = vst.msk [vmem:[%s1703 + $0x60] sm:$0xff] %vm1491, %v1471
          %1717 = vst.msk [vmem:[%s1703 + $0x68] sm:$0xff] %vm1491, %v1477
          %1718 = vst.msk [vmem:[%s1703 + $0x70] sm:$0xff] %vm1491, %v1483
          %1719 = vst.msk [vmem:[%s1703 + $0x78] sm:$0xff] %vm1491, %v1489
          %1736 = vrot.lane.b32.xlu0 %v1238, 64
          %v1737 = vpop.permute.xlu0 %1736
          %1738 = vrot.lane.b32.xlu0 %v1244, 64
          %v1739 = vpop.permute.xlu0 %1738
          %1740 = vrot.lane.b32.xlu0 %v1250, 64
          %v1741 = vpop.permute.xlu0 %1740
          %1742 = vrot.lane.b32.xlu0 %v1256, 64
          %v1743 = vpop.permute.xlu0 %1742
          %1744 = vrot.lane.b32.xlu0 %v1262, 64
          %v1745 = vpop.permute.xlu0 %1744
          %1746 = vrot.lane.b32.xlu0 %v1268, 64
          %v1747 = vpop.permute.xlu0 %1746
          %1748 = vrot.lane.b32.xlu0 %v1274, 64
          %v1749 = vpop.permute.xlu0 %1748
          %1750 = vrot.lane.b32.xlu0 %v1280, 64
          %v1751 = vpop.permute.xlu0 %1750
          %1752 = vrot.lane.b32.xlu0 %v1286, 64
          %v1753 = vpop.permute.xlu0 %1752
          %1754 = vrot.lane.b32.xlu0 %v1292, 64
          %v1755 = vpop.permute.xlu0 %1754
          %1756 = vrot.lane.b32.xlu0 %v1298, 64
          %v1757 = vpop.permute.xlu0 %1756
          %1758 = vrot.lane.b32.xlu0 %v1304, 64
          %v1759 = vpop.permute.xlu0 %1758
          %1760 = vrot.lane.b32.xlu0 %v1310, 64
          %v1761 = vpop.permute.xlu0 %1760
          %1762 = vrot.lane.b32.xlu0 %v1316, 64
          %v1763 = vpop.permute.xlu0 %1762
          %1764 = vrot.lane.b32.xlu0 %v1322, 64
          %v1765 = vpop.permute.xlu0 %1764
          %1766 = vrot.lane.b32.xlu0 %v1328, 64
          %v1767 = vpop.permute.xlu0 %1766
          %s1784 = scalar_lea.vmem [#allocation2], 384
          %1785 = vst.msk [vmem:[%s1784] sm:$0xff] %vm1491, %v1737
          %1786 = vst.msk [vmem:[%s1784 + $0x8] sm:$0xff] %vm1491, %v1739
          %1787 = vst.msk [vmem:[%s1784 + $0x10] sm:$0xff] %vm1491, %v1741
          %1788 = vst.msk [vmem:[%s1784 + $0x18] sm:$0xff] %vm1491, %v1743
          %1789 = vst.msk [vmem:[%s1784 + $0x20] sm:$0xff] %vm1491, %v1745
          %1790 = vst.msk [vmem:[%s1784 + $0x28] sm:$0xff] %vm1491, %v1747
          %1791 = vst.msk [vmem:[%s1784 + $0x30] sm:$0xff] %vm1491, %v1749
          %1792 = vst.msk [vmem:[%s1784 + $0x38] sm:$0xff] %vm1491, %v1751
          %1793 = vst.msk [vmem:[%s1784 + $0x40] sm:$0xff] %vm1491, %v1753
          %1794 = vst.msk [vmem:[%s1784 + $0x48] sm:$0xff] %vm1491, %v1755
          %1795 = vst.msk [vmem:[%s1784 + $0x50] sm:$0xff] %vm1491, %v1757
          %1796 = vst.msk [vmem:[%s1784 + $0x58] sm:$0xff] %vm1491, %v1759
          %1797 = vst.msk [vmem:[%s1784 + $0x60] sm:$0xff] %vm1491, %v1761
          %1798 = vst.msk [vmem:[%s1784 + $0x68] sm:$0xff] %vm1491, %v1763
          %1799 = vst.msk [vmem:[%s1784 + $0x70] sm:$0xff] %vm1491, %v1765
          %1800 = vst.msk [vmem:[%s1784 + $0x78] sm:$0xff] %vm1491, %v1767
          %1817 = vrot.lane.b32.xlu0 %v1399, 64
          %v1818 = vpop.permute.xlu0 %1817
          %1819 = vrot.lane.b32.xlu0 %v1405, 64
          %v1820 = vpop.permute.xlu0 %1819
          %1821 = vrot.lane.b32.xlu0 %v1411, 64
          %v1822 = vpop.permute.xlu0 %1821
          %1823 = vrot.lane.b32.xlu0 %v1417, 64
          %v1824 = vpop.permute.xlu0 %1823
          %1825 = vrot.lane.b32.xlu0 %v1423, 64
          %v1826 = vpop.permute.xlu0 %1825
          %1827 = vrot.lane.b32.xlu0 %v1429, 64
          %v1828 = vpop.permute.xlu0 %1827
          %1829 = vrot.lane.b32.xlu0 %v1435, 64
          %v1830 = vpop.permute.xlu0 %1829
          %1831 = vrot.lane.b32.xlu0 %v1441, 64
          %v1832 = vpop.permute.xlu0 %1831
          %1833 = vrot.lane.b32.xlu0 %v1447, 64
          %v1834 = vpop.permute.xlu0 %1833
          %1835 = vrot.lane.b32.xlu0 %v1453, 64
          %v1836 = vpop.permute.xlu0 %1835
          %1837 = vrot.lane.b32.xlu0 %v1459, 64
          %v1838 = vpop.permute.xlu0 %1837
          %1839 = vrot.lane.b32.xlu0 %v1465, 64
          %v1840 = vpop.permute.xlu0 %1839
          %1841 = vrot.lane.b32.xlu0 %v1471, 64
          %v1842 = vpop.permute.xlu0 %1841
          %1843 = vrot.lane.b32.xlu0 %v1477, 64
          %v1844 = vpop.permute.xlu0 %1843
          %1845 = vrot.lane.b32.xlu0 %v1483, 64
          %v1846 = vpop.permute.xlu0 %1845
          %1847 = vrot.lane.b32.xlu0 %v1489, 64
          %v1848 = vpop.permute.xlu0 %1847
          %s1865 = scalar_lea.vmem [#allocation3], 384
          %1866 = vst.msk [vmem:[%s1865] sm:$0xff] %vm1491, %v1818
          %1867 = vst.msk [vmem:[%s1865 + $0x8] sm:$0xff] %vm1491, %v1820
          %1868 = vst.msk [vmem:[%s1865 + $0x10] sm:$0xff] %vm1491, %v1822
          %1869 = vst.msk [vmem:[%s1865 + $0x18] sm:$0xff] %vm1491, %v1824
          %1870 = vst.msk [vmem:[%s1865 + $0x20] sm:$0xff] %vm1491, %v1826
          %1871 = vst.msk [vmem:[%s1865 + $0x28] sm:$0xff] %vm1491, %v1828
          %1872 = vst.msk [vmem:[%s1865 + $0x30] sm:$0xff] %vm1491, %v1830
          %1873 = vst.msk [vmem:[%s1865 + $0x38] sm:$0xff] %vm1491, %v1832
          %1874 = vst.msk [vmem:[%s1865 + $0x40] sm:$0xff] %vm1491, %v1834
          %1875 = vst.msk [vmem:[%s1865 + $0x48] sm:$0xff] %vm1491, %v1836
          %1876 = vst.msk [vmem:[%s1865 + $0x50] sm:$0xff] %vm1491, %v1838
          %1877 = vst.msk [vmem:[%s1865 + $0x58] sm:$0xff] %vm1491, %v1840
          %1878 = vst.msk [vmem:[%s1865 + $0x60] sm:$0xff] %vm1491, %v1842
          %1879 = vst.msk [vmem:[%s1865 + $0x68] sm:$0xff] %vm1491, %v1844
          %1880 = vst.msk [vmem:[%s1865 + $0x70] sm:$0xff] %vm1491, %v1846
          %1881 = vst.msk [vmem:[%s1865 + $0x78] sm:$0xff] %vm1491, %v1848
        $region108: #{tpu_custom_call.1} parent=75 // pred_fallthru
          _
        %v1882 = vld [vmem:[%s571] sm:$0xff]
        %v1883 = vld [vmem:[%s571 + $0x8] sm:$0xff]
        %v1884 = vld [vmem:[%s571 + $0x10] sm:$0xff]
        %v1885 = vld [vmem:[%s571 + $0x18] sm:$0xff]
        %v1886 = vld [vmem:[%s571 + $0x20] sm:$0xff]
        %v1887 = vld [vmem:[%s571 + $0x28] sm:$0xff]
        %v1888 = vld [vmem:[%s571 + $0x30] sm:$0xff]
        %v1889 = vld [vmem:[%s571 + $0x38] sm:$0xff]
        %v1890 = vld [vmem:[%s571 + $0x40] sm:$0xff]
        %v1891 = vld [vmem:[%s571 + $0x48] sm:$0xff]
        %v1892 = vld [vmem:[%s571 + $0x50] sm:$0xff]
        %v1893 = vld [vmem:[%s571 + $0x58] sm:$0xff]
        %v1894 = vld [vmem:[%s571 + $0x60] sm:$0xff]
        %v1895 = vld [vmem:[%s571 + $0x68] sm:$0xff]
        %v1896 = vld [vmem:[%s571 + $0x70] sm:$0xff]
        %v1897 = vld [vmem:[%s571 + $0x78] sm:$0xff]
        %v1898 = vld [vmem:[%s2] sm:$0x3]
        %v1899 = vld [vmem:[%s3] sm:$0x3]
        %v1900 = vadd.f32 %v1882, %v1883
        %1901 = vadd.xlane.f32.xlu0 %v1900
        %v1902 = vpop.xlane.xlu0 %1901
        %v1903 = vadd.f32 %v1884, %v1885
        %1904 = vadd.xlane.f32.xlu0 %v1903
        %v1905 = vpop.xlane.xlu0 %1904
        %v1906 = vadd.f32 %v1886, %v1887
        %1907 = vadd.xlane.f32.xlu0 %v1906
        %v1908 = vpop.xlane.xlu0 %1907
        %v1909 = vadd.f32 %v1888, %v1889
        %1910 = vadd.xlane.f32.xlu0 %v1909
        %v1911 = vpop.xlane.xlu0 %1910
        %v1912 = vadd.f32 %v1890, %v1891
        %1913 = vadd.xlane.f32.xlu0 %v1912
        %v1914 = vpop.xlane.xlu0 %1913
        %v1915 = vadd.f32 %v1892, %v1893
        %1916 = vadd.xlane.f32.xlu0 %v1915
        %v1917 = vpop.xlane.xlu0 %1916
        %v1918 = vadd.f32 %v1894, %v1895
        %1919 = vadd.xlane.f32.xlu0 %v1918
        %v1920 = vpop.xlane.xlu0 %1919
        %v1921 = vadd.f32 %v1896, %v1897
        %1922 = vadd.xlane.f32.xlu0 %v1921
        %v1923 = vpop.xlane.xlu0 %1922
        %v1924 = vrcp.pop 256.0
        %v1925 = vmul.f32 %v1902, %v1924
        %v1926 = vmul.f32 %v1905, %v1924
        %v1927 = vmul.f32 %v1908, %v1924
        %v1928 = vmul.f32 %v1911, %v1924
        %v1929 = vmul.f32 %v1914, %v1924
        %v1930 = vmul.f32 %v1917, %v1924
        %v1931 = vmul.f32 %v1920, %v1924
        %v1932 = vmul.f32 %v1923, %v1924
        %v1933 = vsub.f32 %v1882, %v1925
        %v1934 = vsub.f32 %v1883, %v1925
        %v1935 = vsub.f32 %v1884, %v1926
        %v1936 = vsub.f32 %v1885, %v1926
        %v1937 = vsub.f32 %v1886, %v1927
        %v1938 = vsub.f32 %v1887, %v1927
        %v1939 = vsub.f32 %v1888, %v1928
        %v1940 = vsub.f32 %v1889, %v1928
        %v1941 = vsub.f32 %v1890, %v1929
        %v1942 = vsub.f32 %v1891, %v1929
        %v1943 = vsub.f32 %v1892, %v1930
        %v1944 = vsub.f32 %v1893, %v1930
        %v1945 = vsub.f32 %v1894, %v1931
        %v1946 = vsub.f32 %v1895, %v1931
        %v1947 = vsub.f32 %v1896, %v1932
        %v1948 = vsub.f32 %v1897, %v1932
        %v1949 = vmul.f32 %v1933, %v1933
        %v1950 = vmul.f32 %v1934, %v1934
        %v1951 = vmul.f32 %v1935, %v1935
        %v1952 = vmul.f32 %v1936, %v1936
        %v1953 = vmul.f32 %v1937, %v1937
        %v1954 = vmul.f32 %v1938, %v1938
        %v1955 = vmul.f32 %v1939, %v1939
        %v1956 = vmul.f32 %v1940, %v1940
        %v1957 = vmul.f32 %v1941, %v1941
        %v1958 = vmul.f32 %v1942, %v1942
        %v1959 = vmul.f32 %v1943, %v1943
        %v1960 = vmul.f32 %v1944, %v1944
        %v1961 = vmul.f32 %v1945, %v1945
        %v1962 = vmul.f32 %v1946, %v1946
        %v1963 = vmul.f32 %v1947, %v1947
        %v1964 = vmul.f32 %v1948, %v1948
        %v1965 = vadd.f32 %v1949, %v1950
        %1966 = vadd.xlane.f32.xlu0 %v1965
        %v1967 = vpop.xlane.xlu0 %1966
        %v1968 = vadd.f32 %v1951, %v1952
        %1969 = vadd.xlane.f32.xlu0 %v1968
        %v1970 = vpop.xlane.xlu0 %1969
        %v1971 = vadd.f32 %v1953, %v1954
        %1972 = vadd.xlane.f32.xlu0 %v1971
        %v1973 = vpop.xlane.xlu0 %1972
        %v1974 = vadd.f32 %v1955, %v1956
        %1975 = vadd.xlane.f32.xlu0 %v1974
        %v1976 = vpop.xlane.xlu0 %1975
        %v1977 = vadd.f32 %v1957, %v1958
        %1978 = vadd.xlane.f32.xlu0 %v1977
        %v1979 = vpop.xlane.xlu0 %1978
        %v1980 = vadd.f32 %v1959, %v1960
        %1981 = vadd.xlane.f32.xlu0 %v1980
        %v1982 = vpop.xlane.xlu0 %1981
        %v1983 = vadd.f32 %v1961, %v1962
        %1984 = vadd.xlane.f32.xlu0 %v1983
        %v1985 = vpop.xlane.xlu0 %1984
        %v1986 = vadd.f32 %v1963, %v1964
        %1987 = vadd.xlane.f32.xlu0 %v1986
        %v1988 = vpop.xlane.xlu0 %1987
        %v1989 = vmul.f32 %v1967, %v1924
        %v1990 = vmul.f32 %v1970, %v1924
        %v1991 = vmul.f32 %v1973, %v1924
        %v1992 = vmul.f32 %v1976, %v1924
        %v1993 = vmul.f32 %v1979, %v1924
        %v1994 = vmul.f32 %v1982, %v1924
        %v1995 = vmul.f32 %v1985, %v1924
        %v1996 = vmul.f32 %v1988, %v1924
        %v1997 = vadd.f32 %v1989, 1e-06
        %v1998 = vadd.f32 %v1990, 1e-06
        %v1999 = vadd.f32 %v1991, 1e-06
        %v2000 = vadd.f32 %v1992, 1e-06
        %v2001 = vadd.f32 %v1993, 1e-06
        %v2002 = vadd.f32 %v1994, 1e-06
        %v2003 = vadd.f32 %v1995, 1e-06
        %v2004 = vadd.f32 %v1996, 1e-06
        %v2005 = vrsqrt.pop %v1997
        %v2006 = vrsqrt.pop %v1998
        %v2007 = vrsqrt.pop %v1999
        %v2008 = vrsqrt.pop %v2000
        %v2009 = vrsqrt.pop %v2001
        %v2010 = vrsqrt.pop %v2002
        %v2011 = vrsqrt.pop %v2003
        %v2012 = vrsqrt.pop %v2004
        %v2013 = vmul.f32 %v1933, %v2005
        %v2014 = vmul.f32 %v1934, %v2005
        %v2015 = vmul.f32 %v1935, %v2006
        %v2016 = vmul.f32 %v1936, %v2006
        %v2017 = vmul.f32 %v1937, %v2007
        %v2018 = vmul.f32 %v1938, %v2007
        %v2019 = vmul.f32 %v1939, %v2008
        %v2020 = vmul.f32 %v1940, %v2008
        %v2021 = vmul.f32 %v1941, %v2009
        %v2022 = vmul.f32 %v1942, %v2009
        %v2023 = vmul.f32 %v1943, %v2010
        %v2024 = vmul.f32 %v1944, %v2010
        %v2025 = vmul.f32 %v1945, %v2011
        %v2026 = vmul.f32 %v1946, %v2011
        %v2027 = vmul.f32 %v1947, %v2012
        %v2028 = vmul.f32 %v1948, %v2012
        %v2030 = vlaneseq
        %v2031 = vshrl.u32 %v2030, 7
        %v2032 = vsub.s32 0, %v2031
        %v2033 = vrot.slane %v1898, %v2032
        %v2034 = vlaneseq
        %v2035 = vshrl.u32 %v2034, 7
        %v2036 = vsub.s32 1, %v2035
        %v2037 = vrot.slane %v1898, %v2036
        %v2040 = vmul.f32 %v2013, %v2033
        %v2041 = vmul.f32 %v2014, %v2037
        %v2042 = vmul.f32 %v2015, %v2033
        %v2043 = vmul.f32 %v2016, %v2037
        %v2044 = vmul.f32 %v2017, %v2033
        %v2045 = vmul.f32 %v2018, %v2037
        %v2046 = vmul.f32 %v2019, %v2033
        %v2047 = vmul.f32 %v2020, %v2037
        %v2048 = vmul.f32 %v2021, %v2033
        %v2049 = vmul.f32 %v2022, %v2037
        %v2050 = vmul.f32 %v2023, %v2033
        %v2051 = vmul.f32 %v2024, %v2037
        %v2052 = vmul.f32 %v2025, %v2033
        %v2053 = vmul.f32 %v2026, %v2037
        %v2054 = vmul.f32 %v2027, %v2033
        %v2055 = vmul.f32 %v2028, %v2037
        %v2057 = vlaneseq
        %v2058 = vshrl.u32 %v2057, 7
        %v2059 = vsub.s32 0, %v2058
        %v2060 = vrot.slane %v1899, %v2059
        %v2061 = vlaneseq
        %v2062 = vshrl.u32 %v2061, 7
        %v2063 = vsub.s32 1, %v2062
        %v2064 = vrot.slane %v1899, %v2063
        %v2067 = vadd.f32 %v2040, %v2060
        %v2068 = vadd.f32 %v2041, %v2064
        %v2069 = vadd.f32 %v2042, %v2060
        %v2070 = vadd.f32 %v2043, %v2064
        %v2071 = vadd.f32 %v2044, %v2060
        %v2072 = vadd.f32 %v2045, %v2064
        %v2073 = vadd.f32 %v2046, %v2060
        %v2074 = vadd.f32 %v2047, %v2064
        %v2075 = vadd.f32 %v2048, %v2060
        %v2076 = vadd.f32 %v2049, %v2064
        %v2077 = vadd.f32 %v2050, %v2060
        %v2078 = vadd.f32 %v2051, %v2064
        %v2079 = vadd.f32 %v2052, %v2060
        %v2080 = vadd.f32 %v2053, %v2064
        %v2081 = vadd.f32 %v2054, %v2060
        %v2082 = vadd.f32 %v2055, %v2064
        %v2083 = vld [vmem:[#allocation9] sm:$0xff]
        %v2084 = vld [vmem:[#allocation9 + $0x8] sm:$0xff]
        %v2085 = vld [vmem:[#allocation9 + $0x10] sm:$0xff]
        %v2086 = vld [vmem:[#allocation9 + $0x18] sm:$0xff]
        %v2087 = vld [vmem:[#allocation9 + $0x20] sm:$0xff]
        %v2088 = vld [vmem:[#allocation9 + $0x28] sm:$0xff]
        %v2089 = vld [vmem:[#allocation9 + $0x30] sm:$0xff]
        %v2090 = vld [vmem:[#allocation9 + $0x38] sm:$0xff]
        %v2091 = vld [vmem:[#allocation9 + $0x40] sm:$0xff]
        %v2092 = vld [vmem:[#allocation9 + $0x48] sm:$0xff]
        %v2093 = vld [vmem:[#allocation9 + $0x50] sm:$0xff]
        %v2094 = vld [vmem:[#allocation9 + $0x58] sm:$0xff]
        %v2095 = vld [vmem:[#allocation9 + $0x60] sm:$0xff]
        %v2096 = vld [vmem:[#allocation9 + $0x68] sm:$0xff]
        %v2097 = vld [vmem:[#allocation9 + $0x70] sm:$0xff]
        %v2098 = vld [vmem:[#allocation9 + $0x78] sm:$0xff]
        %v2099 = vld [vmem:[#allocation9 + $0x80] sm:$0xff]
        %v2100 = vld [vmem:[#allocation9 + $0x88] sm:$0xff]
        %v2101 = vld [vmem:[#allocation9 + $0x90] sm:$0xff]
        %v2102 = vld [vmem:[#allocation9 + $0x98] sm:$0xff]
        %v2103 = vld [vmem:[#allocation9 + $0xa0] sm:$0xff]
        %v2104 = vld [vmem:[#allocation9 + $0xa8] sm:$0xff]
        %v2105 = vld [vmem:[#allocation9 + $0xb0] sm:$0xff]
        %v2106 = vld [vmem:[#allocation9 + $0xb8] sm:$0xff]
        %v2107 = vld [vmem:[#allocation9 + $0xc0] sm:$0xff]
        %v2108 = vld [vmem:[#allocation9 + $0xc8] sm:$0xff]
        %v2109 = vld [vmem:[#allocation9 + $0xd0] sm:$0xff]
        %v2110 = vld [vmem:[#allocation9 + $0xd8] sm:$0xff]
        %v2111 = vld [vmem:[#allocation9 + $0xe0] sm:$0xff]
        %v2112 = vld [vmem:[#allocation9 + $0xe8] sm:$0xff]
        %v2113 = vld [vmem:[#allocation9 + $0xf0] sm:$0xff]
        %v2114 = vld [vmem:[#allocation9 + $0xf8] sm:$0xff]
        %v2115 = vld [vmem:[#allocation9 + $0x100] sm:$0xff]
        %v2116 = vld [vmem:[#allocation9 + $0x108] sm:$0xff]
        %v2117 = vld [vmem:[#allocation9 + $0x110] sm:$0xff]
        %v2118 = vld [vmem:[#allocation9 + $0x118] sm:$0xff]
        %v2119 = vld [vmem:[#allocation9 + $0x120] sm:$0xff]
        %v2120 = vld [vmem:[#allocation9 + $0x128] sm:$0xff]
        %v2121 = vld [vmem:[#allocation9 + $0x130] sm:$0xff]
        %v2122 = vld [vmem:[#allocation9 + $0x138] sm:$0xff]
        %v2123 = vld [vmem:[#allocation9 + $0x140] sm:$0xff]
        %v2124 = vld [vmem:[#allocation9 + $0x148] sm:$0xff]
        %v2125 = vld [vmem:[#allocation9 + $0x150] sm:$0xff]
        %v2126 = vld [vmem:[#allocation9 + $0x158] sm:$0xff]
        %v2127 = vld [vmem:[#allocation9 + $0x160] sm:$0xff]
        %v2128 = vld [vmem:[#allocation9 + $0x168] sm:$0xff]
        %v2129 = vld [vmem:[#allocation9 + $0x170] sm:$0xff]
        %v2130 = vld [vmem:[#allocation9 + $0x178] sm:$0xff]
        %v2131 = vld [vmem:[#allocation9 + $0x180] sm:$0xff]
        %v2132 = vld [vmem:[#allocation9 + $0x188] sm:$0xff]
        %v2133 = vld [vmem:[#allocation9 + $0x190] sm:$0xff]
        %v2134 = vld [vmem:[#allocation9 + $0x198] sm:$0xff]
        %v2135 = vld [vmem:[#allocation9 + $0x1a0] sm:$0xff]
        %v2136 = vld [vmem:[#allocation9 + $0x1a8] sm:$0xff]
        %v2137 = vld [vmem:[#allocation9 + $0x1b0] sm:$0xff]
        %v2138 = vld [vmem:[#allocation9 + $0x1b8] sm:$0xff]
        %v2139 = vld [vmem:[#allocation9 + $0x1c0] sm:$0xff]
        %v2140 = vld [vmem:[#allocation9 + $0x1c8] sm:$0xff]
        %v2141 = vld [vmem:[#allocation9 + $0x1d0] sm:$0xff]
        %v2142 = vld [vmem:[#allocation9 + $0x1d8] sm:$0xff]
        %v2143 = vld [vmem:[#allocation9 + $0x1e0] sm:$0xff]
        %v2144 = vld [vmem:[#allocation9 + $0x1e8] sm:$0xff]
        %v2145 = vld [vmem:[#allocation9 + $0x1f0] sm:$0xff]
        %v2146 = vld [vmem:[#allocation9 + $0x1f8] sm:$0xff]
        %2147 = vmatprep.subr.mxu0 %v2084
        %2148 = vmatpush1.msra.mxu0 %v2083
        %2149 = vmatprep.subr.mxu0 %v2086
        %2150 = vmatpush1.msra.mxu0 %v2085
        %2151 = vmatprep.subr.mxu0 %v2088
        %2152 = vmatpush1.msra.mxu0 %v2087
        %2153 = vmatprep.subr.mxu0 %v2090
        %2154 = vmatpush1.msra.mxu0 %v2089
        %2155 = vmatprep.subr.mxu0 %v2092
        %2156 = vmatpush1.msra.mxu0 %v2091
        %2157 = vmatprep.subr.mxu0 %v2094
        %2158 = vmatpush1.msra.mxu0 %v2093
        %2159 = vmatprep.subr.mxu0 %v2096
        %2160 = vmatpush1.msra.mxu0 %v2095
        %2161 = vmatprep.subr.mxu0 %v2098
        %2162 = vmatpush1.msra.mxu0 %v2097
        %2163 = vmatprep.subr.mxu0 %v2100
        %2164 = vmatpush1.msra.mxu0 %v2099
        %2165 = vmatprep.subr.mxu0 %v2102
        %2166 = vmatpush1.msra.mxu0 %v2101
        %2167 = vmatprep.subr.mxu0 %v2104
        %2168 = vmatpush1.msra.mxu0 %v2103
        %2169 = vmatprep.subr.mxu0 %v2106
        %2170 = vmatpush1.msra.mxu0 %v2105
        %2171 = vmatprep.subr.mxu0 %v2108
        %2172 = vmatpush1.msra.mxu0 %v2107
        %2173 = vmatprep.subr.mxu0 %v2110
        %2174 = vmatpush1.msra.mxu0 %v2109
        %2175 = vmatprep.subr.mxu0 %v2112
        %2176 = vmatpush1.msra.mxu0 %v2111
        %2177 = vmatprep.subr.mxu0 %v2114
        %2178 = vmatpush1.msra.mxu0 %v2113
        %2179 = vmatprep.subr.mxu0 %v2116
        %2180 = vmatpush1.msra.mxu0 %v2115
        %2181 = vmatprep.subr.mxu0 %v2118
        %2182 = vmatpush1.msra.mxu0 %v2117
        %2183 = vmatprep.subr.mxu0 %v2120
        %2184 = vmatpush1.msra.mxu0 %v2119
        %2185 = vmatprep.subr.mxu0 %v2122
        %2186 = vmatpush1.msra.mxu0 %v2121
        %2187 = vmatprep.subr.mxu0 %v2124
        %2188 = vmatpush1.msra.mxu0 %v2123
        %2189 = vmatprep.subr.mxu0 %v2126
        %2190 = vmatpush1.msra.mxu0 %v2125
        %2191 = vmatprep.subr.mxu0 %v2128
        %2192 = vmatpush1.msra.mxu0 %v2127
        %2193 = vmatprep.subr.mxu0 %v2130
        %2194 = vmatpush1.msra.mxu0 %v2129
        %2195 = vmatprep.subr.mxu0 %v2132
        %2196 = vmatpush1.msra.mxu0 %v2131
        %2197 = vmatprep.subr.mxu0 %v2134
        %2198 = vmatpush1.msra.mxu0 %v2133
        %2199 = vmatprep.subr.mxu0 %v2136
        %2200 = vmatpush1.msra.mxu0 %v2135
        %2201 = vmatprep.subr.mxu0 %v2138
        %2202 = vmatpush1.msra.mxu0 %v2137
        %2203 = vmatprep.subr.mxu0 %v2140
        %2204 = vmatpush1.msra.mxu0 %v2139
        %2205 = vmatprep.subr.mxu0 %v2142
        %2206 = vmatpush1.msra.mxu0 %v2141
        %2207 = vmatprep.subr.mxu0 %v2144
        %2208 = vmatpush1.msra.mxu0 %v2143
        %2209 = vmatprep.subr.mxu0 %v2146
        %2210 = vmatpush1.msra.mxu0 %v2145
        %2211 = vmatprep.mubr.f32.mxu0 %v2068
        %2212 = vmatmul.mubr.f32.gmra.mrb[0].mxu0 %v2067
        %v2213 = vpop.f32.mrb[0].mxu0
        %v2214 = vadd.f32 0.0, %v2213
        %v2215 = vpop.f32.mrb[0].mxu0
        %v2216 = vadd.f32 0.0, %v2215
        %2217 = vmatprep.mubr.f32.mxu0 %v2070
        %2218 = vmatmul.mubr.f32.gmra.mrb[0].mxu0 %v2069
        %v2219 = vpop.f32.mrb[0].mxu0
        %v2220 = vadd.f32 0.0, %v2219
        %v2221 = vpop.f32.mrb[0].mxu0
        %v2222 = vadd.f32 0.0, %v2221
        %2223 = vmatprep.mubr.f32.mxu0 %v2072
        %2224 = vmatmul.mubr.f32.gmra.mrb[0].mxu0 %v2071
        %v2225 = vpop.f32.mrb[0].mxu0
        %v2226 = vadd.f32 0.0, %v2225
        %v2227 = vpop.f32.mrb[0].mxu0
        %v2228 = vadd.f32 0.0, %v2227
        %2229 = vmatprep.mubr.f32.mxu0 %v2074
        %2230 = vmatmul.mubr.f32.gmra.mrb[0].mxu0 %v2073
        %v2231 = vpop.f32.mrb[0].mxu0
        %v2232 = vadd.f32 0.0, %v2231
        %v2233 = vpop.f32.mrb[0].mxu0
        %v2234 = vadd.f32 0.0, %v2233
        %2235 = vmatprep.mubr.f32.mxu0 %v2076
        %2236 = vmatmul.mubr.f32.gmra.mrb[0].mxu0 %v2075
        %v2237 = vpop.f32.mrb[0].mxu0
        %v2238 = vadd.f32 0.0, %v2237
        %v2239 = vpop.f32.mrb[0].mxu0
        %v2240 = vadd.f32 0.0, %v2239
        %2241 = vmatprep.mubr.f32.mxu0 %v2078
        %2242 = vmatmul.mubr.f32.gmra.mrb[0].mxu0 %v2077
        %v2243 = vpop.f32.mrb[0].mxu0
        %v2244 = vadd.f32 0.0, %v2243
        %v2245 = vpop.f32.mrb[0].mxu0
        %v2246 = vadd.f32 0.0, %v2245
        %2247 = vmatprep.mubr.f32.mxu0 %v2080
        %2248 = vmatmul.mubr.f32.gmra.mrb[0].mxu0 %v2079
        %v2249 = vpop.f32.mrb[0].mxu0
        %v2250 = vadd.f32 0.0, %v2249
        %v2251 = vpop.f32.mrb[0].mxu0
        %v2252 = vadd.f32 0.0, %v2251
        %2253 = vmatprep.mubr.f32.mxu0 %v2082
        %2254 = vmatmul.mubr.f32.gmra.mrb[0].mxu0 %v2081
        %v2255 = vpop.f32.mrb[0].mxu0
        %v2256 = vadd.f32 0.0, %v2255
        %v2257 = vpop.f32.mrb[0].mxu0
        %v2258 = vadd.f32 0.0, %v2257
        %2259 = vdwg.mxu0
        %2268 = vrot.lane.b32.xlu0 %v2214, 64
        %v2269 = vpop.permute.xlu0 %2268
        %2270 = vrot.lane.b32.xlu0 %v2220, 64
        %v2271 = vpop.permute.xlu0 %2270
        %2272 = vrot.lane.b32.xlu0 %v2226, 64
        %v2273 = vpop.permute.xlu0 %2272
        %2274 = vrot.lane.b32.xlu0 %v2232, 64
        %v2275 = vpop.permute.xlu0 %2274
        %2276 = vrot.lane.b32.xlu0 %v2238, 64
        %v2277 = vpop.permute.xlu0 %2276
        %2278 = vrot.lane.b32.xlu0 %v2244, 64
        %v2279 = vpop.permute.xlu0 %2278
        %2280 = vrot.lane.b32.xlu0 %v2250, 64
        %v2281 = vpop.permute.xlu0 %2280
        %2282 = vrot.lane.b32.xlu0 %v2256, 64
        %v2283 = vpop.permute.xlu0 %2282
        %2292 = vrot.lane.b32.xlu0 %v2216, 64
        %v2293 = vpop.permute.xlu0 %2292
        %2294 = vrot.lane.b32.xlu0 %v2222, 64
        %v2295 = vpop.permute.xlu0 %2294
        %2296 = vrot.lane.b32.xlu0 %v2228, 64
        %v2297 = vpop.permute.xlu0 %2296
        %2298 = vrot.lane.b32.xlu0 %v2234, 64
        %v2299 = vpop.permute.xlu0 %2298
        %2300 = vrot.lane.b32.xlu0 %v2240, 64
        %v2301 = vpop.permute.xlu0 %2300
        %2302 = vrot.lane.b32.xlu0 %v2246, 64
        %v2303 = vpop.permute.xlu0 %2302
        %2304 = vrot.lane.b32.xlu0 %v2252, 64
        %v2305 = vpop.permute.xlu0 %2304
        %2306 = vrot.lane.b32.xlu0 %v2258, 64
        %v2307 = vpop.permute.xlu0 %2306
        %v2308 = vld [vmem:[#allocation2] sm:$0xff]
        %v2309 = vld [vmem:[#allocation2 + $0x8] sm:$0xff]
        %v2310 = vld [vmem:[#allocation2 + $0x10] sm:$0xff]
        %v2311 = vld [vmem:[#allocation2 + $0x18] sm:$0xff]
        %v2312 = vld [vmem:[#allocation2 + $0x20] sm:$0xff]
        %v2313 = vld [vmem:[#allocation2 + $0x28] sm:$0xff]
        %v2314 = vld [vmem:[#allocation2 + $0x30] sm:$0xff]
        %v2315 = vld [vmem:[#allocation2 + $0x38] sm:$0xff]
        %v2316 = vld [vmem:[#allocation2 + $0x40] sm:$0xff]
        %v2317 = vld [vmem:[#allocation2 + $0x48] sm:$0xff]
        %v2318 = vld [vmem:[#allocation2 + $0x50] sm:$0xff]
        %v2319 = vld [vmem:[#allocation2 + $0x58] sm:$0xff]
        %v2320 = vld [vmem:[#allocation2 + $0x60] sm:$0xff]
        %v2321 = vld [vmem:[#allocation2 + $0x68] sm:$0xff]
        %v2322 = vld [vmem:[#allocation2 + $0x70] sm:$0xff]
        %v2323 = vld [vmem:[#allocation2 + $0x78] sm:$0xff]
        %v2324 = vld [vmem:[#allocation2 + $0x80] sm:$0xff]
        %v2325 = vld [vmem:[#allocation2 + $0x88] sm:$0xff]
        %v2326 = vld [vmem:[#allocation2 + $0x90] sm:$0xff]
        %v2327 = vld [vmem:[#allocation2 + $0x98] sm:$0xff]
        %v2328 = vld [vmem:[#allocation2 + $0xa0] sm:$0xff]
        %v2329 = vld [vmem:[#allocation2 + $0xa8] sm:$0xff]
        %v2330 = vld [vmem:[#allocation2 + $0xb0] sm:$0xff]
        %v2331 = vld [vmem:[#allocation2 + $0xb8] sm:$0xff]
        %v2332 = vld [vmem:[#allocation2 + $0xc0] sm:$0xff]
        %v2333 = vld [vmem:[#allocation2 + $0xc8] sm:$0xff]
        %v2334 = vld [vmem:[#allocation2 + $0xd0] sm:$0xff]
        %v2335 = vld [vmem:[#allocation2 + $0xd8] sm:$0xff]
        %v2336 = vld [vmem:[#allocation2 + $0xe0] sm:$0xff]
        %v2337 = vld [vmem:[#allocation2 + $0xe8] sm:$0xff]
        %v2338 = vld [vmem:[#allocation2 + $0xf0] sm:$0xff]
        %v2339 = vld [vmem:[#allocation2 + $0xf8] sm:$0xff]
        %v2340 = vld [vmem:[#allocation2 + $0x100] sm:$0xff]
        %v2341 = vld [vmem:[#allocation2 + $0x108] sm:$0xff]
        %v2342 = vld [vmem:[#allocation2 + $0x110] sm:$0xff]
        %v2343 = vld [vmem:[#allocation2 + $0x118] sm:$0xff]
        %v2344 = vld [vmem:[#allocation2 + $0x120] sm:$0xff]
        %v2345 = vld [vmem:[#allocation2 + $0x128] sm:$0xff]
        %v2346 = vld [vmem:[#allocation2 + $0x130] sm:$0xff]
        %v2347 = vld [vmem:[#allocation2 + $0x138] sm:$0xff]
        %v2348 = vld [vmem:[#allocation2 + $0x140] sm:$0xff]
        %v2349 = vld [vmem:[#allocation2 + $0x148] sm:$0xff]
        %v2350 = vld [vmem:[#allocation2 + $0x150] sm:$0xff]
        %v2351 = vld [vmem:[#allocation2 + $0x158] sm:$0xff]
        %v2352 = vld [vmem:[#allocation2 + $0x160] sm:$0xff]
        %v2353 = vld [vmem:[#allocation2 + $0x168] sm:$0xff]
        %v2354 = vld [vmem:[#allocation2 + $0x170] sm:$0xff]
        %v2355 = vld [vmem:[#allocation2 + $0x178] sm:$0xff]
        %v2356 = vld [vmem:[#allocation2 + $0x180] sm:$0xff]
        %v2357 = vld [vmem:[#allocation2 + $0x188] sm:$0xff]
        %v2358 = vld [vmem:[#allocation2 + $0x190] sm:$0xff]
        %v2359 = vld [vmem:[#allocation2 + $0x198] sm:$0xff]
        %v2360 = vld [vmem:[#allocation2 + $0x1a0] sm:$0xff]
        %v2361 = vld [vmem:[#allocation2 + $0x1a8] sm:$0xff]
        %v2362 = vld [vmem:[#allocation2 + $0x1b0] sm:$0xff]
        %v2363 = vld [vmem:[#allocation2 + $0x1b8] sm:$0xff]
        %v2364 = vld [vmem:[#allocation2 + $0x1c0] sm:$0xff]
        %v2365 = vld [vmem:[#allocation2 + $0x1c8] sm:$0xff]
        %v2366 = vld [vmem:[#allocation2 + $0x1d0] sm:$0xff]
        %v2367 = vld [vmem:[#allocation2 + $0x1d8] sm:$0xff]
        %v2368 = vld [vmem:[#allocation2 + $0x1e0] sm:$0xff]
        %v2369 = vld [vmem:[#allocation2 + $0x1e8] sm:$0xff]
        %v2370 = vld [vmem:[#allocation2 + $0x1f0] sm:$0xff]
        %v2371 = vld [vmem:[#allocation2 + $0x1f8] sm:$0xff]
        %vm2372 = vcmask 523264
        %v2373 = vsel %vm2372, %v2214, 0
        %v2375 = vsel %vm2372, %v2220, 0
        %v2377 = vsel %vm2372, %v2226, 0
        %v2379 = vsel %vm2372, %v2232, 0
        %v2381 = vsel %vm2372, %v2238, 0
        %v2383 = vsel %vm2372, %v2244, 0
        %v2385 = vsel %vm2372, %v2250, 0
        %v2387 = vsel %vm2372, %v2256, 0
        %v2390 = vsel %vm2372, %v2308, 0
        %v2393 = vsel %vm2372, %v2309, 0
        %v2396 = vsel %vm2372, %v2310, 0
        %v2399 = vsel %vm2372, %v2311, 0
        %v2402 = vsel %vm2372, %v2312, 0
        %v2405 = vsel %vm2372, %v2313, 0
        %v2408 = vsel %vm2372, %v2314, 0
        %v2411 = vsel %vm2372, %v2315, 0
        %v2414 = vsel %vm2372, %v2316, 0
        %v2417 = vsel %vm2372, %v2317, 0
        %v2420 = vsel %vm2372, %v2318, 0
        %v2423 = vsel %vm2372, %v2319, 0
        %v2426 = vsel %vm2372, %v2320, 0
        %v2429 = vsel %vm2372, %v2321, 0
        %v2432 = vsel %vm2372, %v2322, 0
        %v2435 = vsel %vm2372, %v2323, 0
        %2437 = vmatprep.subr.mxu0 0.0
        %2438 = vmatpush1.xpose.msra.mxu0 %v2390
        %2439 = vmatprep.subr.mxu0 0.0
        %2440 = vmatpush1.xpose.msra.mxu0 %v2393
        %2441 = vmatprep.subr.mxu0 0.0
        %2442 = vmatpush1.xpose.msra.mxu0 %v2396
        %2443 = vmatprep.subr.mxu0 0.0
        %2444 = vmatpush1.xpose.msra.mxu0 %v2399
        %2445 = vmatprep.subr.mxu0 0.0
        %2446 = vmatpush1.xpose.msra.mxu0 %v2402
        %2447 = vmatprep.subr.mxu0 0.0
        %2448 = vmatpush1.xpose.msra.mxu0 %v2405
        %2449 = vmatprep.subr.mxu0 0.0
        %2450 = vmatpush1.xpose.msra.mxu0 %v2408
        %2451 = vmatprep.subr.mxu0 0.0
        %2452 = vmatpush1.xpose.msra.mxu0 %v2411
        %2453 = vmatprep.subr.mxu0 0.0
        %2454 = vmatpush1.xpose.msra.mxu0 %v2414
        %2455 = vmatprep.subr.mxu0 0.0
        %2456 = vmatpush1.xpose.msra.mxu0 %v2417
        %2457 = vmatprep.subr.mxu0 0.0
        %2458 = vmatpush1.xpose.msra.mxu0 %v2420
        %2459 = vmatprep.subr.mxu0 0.0
        %2460 = vmatpush1.xpose.msra.mxu0 %v2423
        %2461 = vmatprep.subr.mxu0 0.0
        %2462 = vmatpush1.xpose.msra.mxu0 %v2426
        %2463 = vmatprep.subr.mxu0 0.0
        %2464 = vmatpush1.xpose.msra.mxu0 %v2429
        %2465 = vmatprep.subr.mxu0 0.0
        %2466 = vmatpush1.xpose.msra.mxu0 %v2432
        %2467 = vmatprep.subr.mxu0 0.0
        %2468 = vmatpush1.xpose.msra.mxu0 %v2435
        %2469 = vmatprep.subr.mxu0 0.0
        %2470 = vmatpush1.xpose.msra.mxu0 0.0
        %2471 = vmatprep.subr.mxu0 0.0
        %2472 = vmatpush1.xpose.msra.mxu0 0.0
        %2473 = vmatprep.subr.mxu0 0.0
        %2474 = vmatpush1.xpose.msra.mxu0 0.0
        %2475 = vmatprep.subr.mxu0 0.0
        %2476 = vmatpush1.xpose.msra.mxu0 0.0
        %2477 = vmatprep.subr.mxu0 0.0
        %2478 = vmatpush1.xpose.msra.mxu0 0.0
        %2479 = vmatprep.subr.mxu0 0.0
        %2480 = vmatpush1.xpose.msra.mxu0 0.0
        %2481 = vmatprep.subr.mxu0 0.0
        %2482 = vmatpush1.xpose.msra.mxu0 0.0
        %2483 = vmatprep.subr.mxu0 0.0
        %2484 = vmatpush1.xpose.msra.mxu0 0.0
        %2485 = vmatprep.subr.mxu0 0.0
        %2486 = vmatpush1.xpose.msra.mxu0 0.0
        %2487 = vmatprep.subr.mxu0 0.0
        %2488 = vmatpush1.xpose.msra.mxu0 0.0
        %2489 = vmatprep.subr.mxu0 0.0
        %2490 = vmatpush1.xpose.msra.mxu0 0.0
        %2491 = vmatprep.subr.mxu0 0.0
        %2492 = vmatpush1.xpose.msra.mxu0 0.0
        %2493 = vmatprep.subr.mxu0 0.0
        %2494 = vmatpush1.xpose.msra.mxu0 0.0
        %2495 = vmatprep.subr.mxu0 0.0
        %2496 = vmatpush1.xpose.msra.mxu0 0.0
        %2497 = vmatprep.subr.mxu0 0.0
        %2498 = vmatpush1.xpose.msra.mxu0 0.0
        %2499 = vmatprep.subr.mxu0 0.0
        %2500 = vmatpush1.xpose.msra.mxu0 0.0
        %2501 = vmatprep.mubr.f32.mxu0 0.0
        %2502 = vmatmul.mubr.f32.gmra.mrb[0].mxu0 %v2373
        %v2503 = vpop.f32.mrb[0].mxu0
        %v2504 = vadd.f32 0.0, %v2503
        %v2505 = vpop.f32.mrb[0].mxu0
        %2506 = vmatprep.mubr.f32.mxu0 0.0
        %2507 = vmatmul.mubr.f32.gmra.mrb[0].mxu0 %v2375
        %v2508 = vpop.f32.mrb[0].mxu0
        %v2509 = vadd.f32 0.0, %v2508
        %v2510 = vpop.f32.mrb[0].mxu0
        %2511 = vmatprep.mubr.f32.mxu0 0.0
        %2512 = vmatmul.mubr.f32.gmra.mrb[0].mxu0 %v2377
        %v2513 = vpop.f32.mrb[0].mxu0
        %v2514 = vadd.f32 0.0, %v2513
        %v2515 = vpop.f32.mrb[0].mxu0
        %2516 = vmatprep.mubr.f32.mxu0 0.0
        %2517 = vmatmul.mubr.f32.gmra.mrb[0].mxu0 %v2379
        %v2518 = vpop.f32.mrb[0].mxu0
        %v2519 = vadd.f32 0.0, %v2518
        %v2520 = vpop.f32.mrb[0].mxu0
        %2521 = vmatprep.mubr.f32.mxu0 0.0
        %2522 = vmatmul.mubr.f32.gmra.mrb[0].mxu0 %v2381
        %v2523 = vpop.f32.mrb[0].mxu0
        %v2524 = vadd.f32 0.0, %v2523
        %v2525 = vpop.f32.mrb[0].mxu0
        %2526 = vmatprep.mubr.f32.mxu0 0.0
        %2527 = vmatmul.mubr.f32.gmra.mrb[0].mxu0 %v2383
        %v2528 = vpop.f32.mrb[0].mxu0
        %v2529 = vadd.f32 0.0, %v2528
        %v2530 = vpop.f32.mrb[0].mxu0
        %2531 = vmatprep.mubr.f32.mxu0 0.0
        %2532 = vmatmul.mubr.f32.gmra.mrb[0].mxu0 %v2385
        %v2533 = vpop.f32.mrb[0].mxu0
        %v2534 = vadd.f32 0.0, %v2533
        %v2535 = vpop.f32.mrb[0].mxu0
        %2536 = vmatprep.mubr.f32.mxu0 0.0
        %2537 = vmatmul.mubr.f32.gmra.mrb[0].mxu0 %v2387
        %v2538 = vpop.f32.mrb[0].mxu0
        %v2539 = vadd.f32 0.0, %v2538
        %v2540 = vpop.f32.mrb[0].mxu0
        %2541 = vdwg.mxu0
        %v2542 = vsel %vm2372, %v2269, 0
        %v2544 = vsel %vm2372, %v2271, 0
        %v2546 = vsel %vm2372, %v2273, 0
        %v2548 = vsel %vm2372, %v2275, 0
        %v2550 = vsel %vm2372, %v2277, 0
        %v2552 = vsel %vm2372, %v2279, 0
        %v2554 = vsel %vm2372, %v2281, 0
        %v2556 = vsel %vm2372, %v2283, 0
        %v2559 = vsel %vm2372, %v2324, 0
        %v2562 = vsel %vm2372, %v2325, 0
        %v2565 = vsel %vm2372, %v2326, 0
        %v2568 = vsel %vm2372, %v2327, 0
        %v2571 = vsel %vm2372, %v2328, 0
        %v2574 = vsel %vm2372, %v2329, 0
        %v2577 = vsel %vm2372, %v2330, 0
        %v2580 = vsel %vm2372, %v2331, 0
        %v2583 = vsel %vm2372, %v2332, 0
        %v2586 = vsel %vm2372, %v2333, 0
        %v2589 = vsel %vm2372, %v2334, 0
        %v2592 = vsel %vm2372, %v2335, 0
        %v2595 = vsel %vm2372, %v2336, 0
        %v2598 = vsel %vm2372, %v2337, 0
        %v2601 = vsel %vm2372, %v2338, 0
        %v2604 = vsel %vm2372, %v2339, 0
        %2606 = vmatprep.subr.mxu0 0.0
        %2607 = vmatpush1.xpose.msra.mxu0 %v2559
        %2608 = vmatprep.subr.mxu0 0.0
        %2609 = vmatpush1.xpose.msra.mxu0 %v2562
        %2610 = vmatprep.subr.mxu0 0.0
        %2611 = vmatpush1.xpose.msra.mxu0 %v2565
        %2612 = vmatprep.subr.mxu0 0.0
        %2613 = vmatpush1.xpose.msra.mxu0 %v2568
        %2614 = vmatprep.subr.mxu0 0.0
        %2615 = vmatpush1.xpose.msra.mxu0 %v2571
        %2616 = vmatprep.subr.mxu0 0.0
        %2617 = vmatpush1.xpose.msra.mxu0 %v2574
        %2618 = vmatprep.subr.mxu0 0.0
        %2619 = vmatpush1.xpose.msra.mxu0 %v2577
        %2620 = vmatprep.subr.mxu0 0.0
        %2621 = vmatpush1.xpose.msra.mxu0 %v2580
        %2622 = vmatprep.subr.mxu0 0.0
        %2623 = vmatpush1.xpose.msra.mxu0 %v2583
        %2624 = vmatprep.subr.mxu0 0.0
        %2625 = vmatpush1.xpose.msra.mxu0 %v2586
        %2626 = vmatprep.subr.mxu0 0.0
        %2627 = vmatpush1.xpose.msra.mxu0 %v2589
        %2628 = vmatprep.subr.mxu0 0.0
        %2629 = vmatpush1.xpose.msra.mxu0 %v2592
        %2630 = vmatprep.subr.mxu0 0.0
        %2631 = vmatpush1.xpose.msra.mxu0 %v2595
        %2632 = vmatprep.subr.mxu0 0.0
        %2633 = vmatpush1.xpose.msra.mxu0 %v2598
        %2634 = vmatprep.subr.mxu0 0.0
        %2635 = vmatpush1.xpose.msra.mxu0 %v2601
        %2636 = vmatprep.subr.mxu0 0.0
        %2637 = vmatpush1.xpose.msra.mxu0 %v2604
        %2638 = vmatprep.subr.mxu0 0.0
        %2639 = vmatpush1.xpose.msra.mxu0 0.0
        %2640 = vmatprep.subr.mxu0 0.0
        %2641 = vmatpush1.xpose.msra.mxu0 0.0
        %2642 = vmatprep.subr.mxu0 0.0
        %2643 = vmatpush1.xpose.msra.mxu0 0.0
        %2644 = vmatprep.subr.mxu0 0.0
        %2645 = vmatpush1.xpose.msra.mxu0 0.0
        %2646 = vmatprep.subr.mxu0 0.0
        %2647 = vmatpush1.xpose.msra.mxu0 0.0
        %2648 = vmatprep.subr.mxu0 0.0
        %2649 = vmatpush1.xpose.msra.mxu0 0.0
        %2650 = vmatprep.subr.mxu0 0.0
        %2651 = vmatpush1.xpose.msra.mxu0 0.0
        %2652 = vmatprep.subr.mxu0 0.0
        %2653 = vmatpush1.xpose.msra.mxu0 0.0
        %2654 = vmatprep.subr.mxu0 0.0
        %2655 = vmatpush1.xpose.msra.mxu0 0.0
        %2656 = vmatprep.subr.mxu0 0.0
        %2657 = vmatpush1.xpose.msra.mxu0 0.0
        %2658 = vmatprep.subr.mxu0 0.0
        %2659 = vmatpush1.xpose.msra.mxu0 0.0
        %2660 = vmatprep.subr.mxu0 0.0
        %2661 = vmatpush1.xpose.msra.mxu0 0.0
        %2662 = vmatprep.subr.mxu0 0.0
        %2663 = vmatpush1.xpose.msra.mxu0 0.0
        %2664 = vmatprep.subr.mxu0 0.0
        %2665 = vmatpush1.xpose.msra.mxu0 0.0
        %2666 = vmatprep.subr.mxu0 0.0
        %2667 = vmatpush1.xpose.msra.mxu0 0.0
        %2668 = vmatprep.subr.mxu0 0.0
        %2669 = vmatpush1.xpose.msra.mxu0 0.0
        %2670 = vmatprep.mubr.f32.mxu0 0.0
        %2671 = vmatmul.mubr.f32.gmra.mrb[0].mxu0 %v2542
        %v2672 = vpop.f32.mrb[0].mxu0
        %v2673 = vadd.f32 0.0, %v2672
        %v2674 = vpop.f32.mrb[0].mxu0
        %2675 = vmatprep.mubr.f32.mxu0 0.0
        %2676 = vmatmul.mubr.f32.gmra.mrb[0].mxu0 %v2544
        %v2677 = vpop.f32.mrb[0].mxu0
        %v2678 = vadd.f32 0.0, %v2677
        %v2679 = vpop.f32.mrb[0].mxu0
        %2680 = vmatprep.mubr.f32.mxu0 0.0
        %2681 = vmatmul.mubr.f32.gmra.mrb[0].mxu0 %v2546
        %v2682 = vpop.f32.mrb[0].mxu0
        %v2683 = vadd.f32 0.0, %v2682
        %v2684 = vpop.f32.mrb[0].mxu0
        %2685 = vmatprep.mubr.f32.mxu0 0.0
        %2686 = vmatmul.mubr.f32.gmra.mrb[0].mxu0 %v2548
        %v2687 = vpop.f32.mrb[0].mxu0
        %v2688 = vadd.f32 0.0, %v2687
        %v2689 = vpop.f32.mrb[0].mxu0
        %2690 = vmatprep.mubr.f32.mxu0 0.0
        %2691 = vmatmul.mubr.f32.gmra.mrb[0].mxu0 %v2550
        %v2692 = vpop.f32.mrb[0].mxu0
        %v2693 = vadd.f32 0.0, %v2692
        %v2694 = vpop.f32.mrb[0].mxu0
        %2695 = vmatprep.mubr.f32.mxu0 0.0
        %2696 = vmatmul.mubr.f32.gmra.mrb[0].mxu0 %v2552
        %v2697 = vpop.f32.mrb[0].mxu0
        %v2698 = vadd.f32 0.0, %v2697
        %v2699 = vpop.f32.mrb[0].mxu0
        %2700 = vmatprep.mubr.f32.mxu0 0.0
        %2701 = vmatmul.mubr.f32.gmra.mrb[0].mxu0 %v2554
        %v2702 = vpop.f32.mrb[0].mxu0
        %v2703 = vadd.f32 0.0, %v2702
        %v2704 = vpop.f32.mrb[0].mxu0
        %2705 = vmatprep.mubr.f32.mxu0 0.0
        %2706 = vmatmul.mubr.f32.gmra.mrb[0].mxu0 %v2556
        %v2707 = vpop.f32.mrb[0].mxu0
        %v2708 = vadd.f32 0.0, %v2707
        %v2709 = vpop.f32.mrb[0].mxu0
        %2710 = vdwg.mxu0
        %v2711 = vsel %vm2372, %v2216, 0
        %v2713 = vsel %vm2372, %v2222, 0
        %v2715 = vsel %vm2372, %v2228, 0
        %v2717 = vsel %vm2372, %v2234, 0
        %v2719 = vsel %vm2372, %v2240, 0
        %v2721 = vsel %vm2372, %v2246, 0
        %v2723 = vsel %vm2372, %v2252, 0
        %v2725 = vsel %vm2372, %v2258, 0
        %v2728 = vsel %vm2372, %v2340, 0
        %v2731 = vsel %vm2372, %v2341, 0
        %v2734 = vsel %vm2372, %v2342, 0
        %v2737 = vsel %vm2372, %v2343, 0
        %v2740 = vsel %vm2372, %v2344, 0
        %v2743 = vsel %vm2372, %v2345, 0
        %v2746 = vsel %vm2372, %v2346, 0
        %v2749 = vsel %vm2372, %v2347, 0
        %v2752 = vsel %vm2372, %v2348, 0
        %v2755 = vsel %vm2372, %v2349, 0
        %v2758 = vsel %vm2372, %v2350, 0
        %v2761 = vsel %vm2372, %v2351, 0
        %v2764 = vsel %vm2372, %v2352, 0
        %v2767 = vsel %vm2372, %v2353, 0
        %v2770 = vsel %vm2372, %v2354, 0
        %v2773 = vsel %vm2372, %v2355, 0
        %2775 = vmatprep.subr.mxu0 0.0
        %2776 = vmatpush1.xpose.msra.mxu0 %v2728
        %2777 = vmatprep.subr.mxu0 0.0
        %2778 = vmatpush1.xpose.msra.mxu0 %v2731
        %2779 = vmatprep.subr.mxu0 0.0
        %2780 = vmatpush1.xpose.msra.mxu0 %v2734
        %2781 = vmatprep.subr.mxu0 0.0
        %2782 = vmatpush1.xpose.msra.mxu0 %v2737
        %2783 = vmatprep.subr.mxu0 0.0
        %2784 = vmatpush1.xpose.msra.mxu0 %v2740
        %2785 = vmatprep.subr.mxu0 0.0
        %2786 = vmatpush1.xpose.msra.mxu0 %v2743
        %2787 = vmatprep.subr.mxu0 0.0
        %2788 = vmatpush1.xpose.msra.mxu0 %v2746
        %2789 = vmatprep.subr.mxu0 0.0
        %2790 = vmatpush1.xpose.msra.mxu0 %v2749
        %2791 = vmatprep.subr.mxu0 0.0
        %2792 = vmatpush1.xpose.msra.mxu0 %v2752
        %2793 = vmatprep.subr.mxu0 0.0
        %2794 = vmatpush1.xpose.msra.mxu0 %v2755
        %2795 = vmatprep.subr.mxu0 0.0
        %2796 = vmatpush1.xpose.msra.mxu0 %v2758
        %2797 = vmatprep.subr.mxu0 0.0
        %2798 = vmatpush1.xpose.msra.mxu0 %v2761
        %2799 = vmatprep.subr.mxu0 0.0
        %2800 = vmatpush1.xpose.msra.mxu0 %v2764
        %2801 = vmatprep.subr.mxu0 0.0
        %2802 = vmatpush1.xpose.msra.mxu0 %v2767
        %2803 = vmatprep.subr.mxu0 0.0
        %2804 = vmatpush1.xpose.msra.mxu0 %v2770
        %2805 = vmatprep.subr.mxu0 0.0
        %2806 = vmatpush1.xpose.msra.mxu0 %v2773
        %2807 = vmatprep.subr.mxu0 0.0
        %2808 = vmatpush1.xpose.msra.mxu0 0.0
        %2809 = vmatprep.subr.mxu0 0.0
        %2810 = vmatpush1.xpose.msra.mxu0 0.0
        %2811 = vmatprep.subr.mxu0 0.0
        %2812 = vmatpush1.xpose.msra.mxu0 0.0
        %2813 = vmatprep.subr.mxu0 0.0
        %2814 = vmatpush1.xpose.msra.mxu0 0.0
        %2815 = vmatprep.subr.mxu0 0.0
        %2816 = vmatpush1.xpose.msra.mxu0 0.0
        %2817 = vmatprep.subr.mxu0 0.0
        %2818 = vmatpush1.xpose.msra.mxu0 0.0
        %2819 = vmatprep.subr.mxu0 0.0
        %2820 = vmatpush1.xpose.msra.mxu0 0.0
        %2821 = vmatprep.subr.mxu0 0.0
        %2822 = vmatpush1.xpose.msra.mxu0 0.0
        %2823 = vmatprep.subr.mxu0 0.0
        %2824 = vmatpush1.xpose.msra.mxu0 0.0
        %2825 = vmatprep.subr.mxu0 0.0
        %2826 = vmatpush1.xpose.msra.mxu0 0.0
        %2827 = vmatprep.subr.mxu0 0.0
        %2828 = vmatpush1.xpose.msra.mxu0 0.0
        %2829 = vmatprep.subr.mxu0 0.0
        %2830 = vmatpush1.xpose.msra.mxu0 0.0
        %2831 = vmatprep.subr.mxu0 0.0
        %2832 = vmatpush1.xpose.msra.mxu0 0.0
        %2833 = vmatprep.subr.mxu0 0.0
        %2834 = vmatpush1.xpose.msra.mxu0 0.0
        %2835 = vmatprep.subr.mxu0 0.0
        %2836 = vmatpush1.xpose.msra.mxu0 0.0
        %2837 = vmatprep.subr.mxu0 0.0
        %2838 = vmatpush1.xpose.msra.mxu0 0.0
        %2839 = vmatprep.mubr.f32.mxu0 0.0
        %2840 = vmatmul.mubr.f32.gmra.mrb[0].mxu0 %v2711
        %v2841 = vpop.f32.mrb[0].mxu0
        %v2842 = vadd.f32 0.0, %v2841
        %v2843 = vpop.f32.mrb[0].mxu0
        %2844 = vmatprep.mubr.f32.mxu0 0.0
        %2845 = vmatmul.mubr.f32.gmra.mrb[0].mxu0 %v2713
        %v2846 = vpop.f32.mrb[0].mxu0
        %v2847 = vadd.f32 0.0, %v2846
        %v2848 = vpop.f32.mrb[0].mxu0
        %2849 = vmatprep.mubr.f32.mxu0 0.0
        %2850 = vmatmul.mubr.f32.gmra.mrb[0].mxu0 %v2715
        %v2851 = vpop.f32.mrb[0].mxu0
        %v2852 = vadd.f32 0.0, %v2851
        %v2853 = vpop.f32.mrb[0].mxu0
        %2854 = vmatprep.mubr.f32.mxu0 0.0
        %2855 = vmatmul.mubr.f32.gmra.mrb[0].mxu0 %v2717
        %v2856 = vpop.f32.mrb[0].mxu0
        %v2857 = vadd.f32 0.0, %v2856
        %v2858 = vpop.f32.mrb[0].mxu0
        %2859 = vmatprep.mubr.f32.mxu0 0.0
        %2860 = vmatmul.mubr.f32.gmra.mrb[0].mxu0 %v2719
        %v2861 = vpop.f32.mrb[0].mxu0
        %v2862 = vadd.f32 0.0, %v2861
        %v2863 = vpop.f32.mrb[0].mxu0
        %2864 = vmatprep.mubr.f32.mxu0 0.0
        %2865 = vmatmul.mubr.f32.gmra.mrb[0].mxu0 %v2721
        %v2866 = vpop.f32.mrb[0].mxu0
        %v2867 = vadd.f32 0.0, %v2866
        %v2868 = vpop.f32.mrb[0].mxu0
        %2869 = vmatprep.mubr.f32.mxu0 0.0
        %2870 = vmatmul.mubr.f32.gmra.mrb[0].mxu0 %v2723
        %v2871 = vpop.f32.mrb[0].mxu0
        %v2872 = vadd.f32 0.0, %v2871
        %v2873 = vpop.f32.mrb[0].mxu0
        %2874 = vmatprep.mubr.f32.mxu0 0.0
        %2875 = vmatmul.mubr.f32.gmra.mrb[0].mxu0 %v2725
        %v2876 = vpop.f32.mrb[0].mxu0
        %v2877 = vadd.f32 0.0, %v2876
        %v2878 = vpop.f32.mrb[0].mxu0
        %2879 = vdwg.mxu0
        %v2880 = vsel %vm2372, %v2293, 0
        %v2882 = vsel %vm2372, %v2295, 0
        %v2884 = vsel %vm2372, %v2297, 0
        %v2886 = vsel %vm2372, %v2299, 0
        %v2888 = vsel %vm2372, %v2301, 0
        %v2890 = vsel %vm2372, %v2303, 0
        %v2892 = vsel %vm2372, %v2305, 0
        %v2894 = vsel %vm2372, %v2307, 0
        %v2897 = vsel %vm2372, %v2356, 0
        %v2900 = vsel %vm2372, %v2357, 0
        %v2903 = vsel %vm2372, %v2358, 0
        %v2906 = vsel %vm2372, %v2359, 0
        %v2909 = vsel %vm2372, %v2360, 0
        %v2912 = vsel %vm2372, %v2361, 0
        %v2915 = vsel %vm2372, %v2362, 0
        %v2918 = vsel %vm2372, %v2363, 0
        %v2921 = vsel %vm2372, %v2364, 0
        %v2924 = vsel %vm2372, %v2365, 0
        %v2927 = vsel %vm2372, %v2366, 0
        %v2930 = vsel %vm2372, %v2367, 0
        %v2933 = vsel %vm2372, %v2368, 0
        %v2936 = vsel %vm2372, %v2369, 0
        %v2939 = vsel %vm2372, %v2370, 0
        %v2942 = vsel %vm2372, %v2371, 0
        %2944 = vmatprep.subr.mxu0 0.0
        %2945 = vmatpush1.xpose.msra.mxu0 %v2897
        %2946 = vmatprep.subr.mxu0 0.0
        %2947 = vmatpush1.xpose.msra.mxu0 %v2900
        %2948 = vmatprep.subr.mxu0 0.0
        %2949 = vmatpush1.xpose.msra.mxu0 %v2903
        %2950 = vmatprep.subr.mxu0 0.0
        %2951 = vmatpush1.xpose.msra.mxu0 %v2906
        %2952 = vmatprep.subr.mxu0 0.0
        %2953 = vmatpush1.xpose.msra.mxu0 %v2909
        %2954 = vmatprep.subr.mxu0 0.0
        %2955 = vmatpush1.xpose.msra.mxu0 %v2912
        %2956 = vmatprep.subr.mxu0 0.0
        %2957 = vmatpush1.xpose.msra.mxu0 %v2915
        %2958 = vmatprep.subr.mxu0 0.0
        %2959 = vmatpush1.xpose.msra.mxu0 %v2918
        %2960 = vmatprep.subr.mxu0 0.0
        %2961 = vmatpush1.xpose.msra.mxu0 %v2921
        %2962 = vmatprep.subr.mxu0 0.0
        %2963 = vmatpush1.xpose.msra.mxu0 %v2924
        %2964 = vmatprep.subr.mxu0 0.0
        %2965 = vmatpush1.xpose.msra.mxu0 %v2927
        %2966 = vmatprep.subr.mxu0 0.0
        %2967 = vmatpush1.xpose.msra.mxu0 %v2930
        %2968 = vmatprep.subr.mxu0 0.0
        %2969 = vmatpush1.xpose.msra.mxu0 %v2933
        %2970 = vmatprep.subr.mxu0 0.0
        %2971 = vmatpush1.xpose.msra.mxu0 %v2936
        %2972 = vmatprep.subr.mxu0 0.0
        %2973 = vmatpush1.xpose.msra.mxu0 %v2939
        %2974 = vmatprep.subr.mxu0 0.0
        %2975 = vmatpush1.xpose.msra.mxu0 %v2942
        %2976 = vmatprep.subr.mxu0 0.0
        %2977 = vmatpush1.xpose.msra.mxu0 0.0
        %2978 = vmatprep.subr.mxu0 0.0
        %2979 = vmatpush1.xpose.msra.mxu0 0.0
        %2980 = vmatprep.subr.mxu0 0.0
        %2981 = vmatpush1.xpose.msra.mxu0 0.0
        %2982 = vmatprep.subr.mxu0 0.0
        %2983 = vmatpush1.xpose.msra.mxu0 0.0
        %2984 = vmatprep.subr.mxu0 0.0
        %2985 = vmatpush1.xpose.msra.mxu0 0.0
        %2986 = vmatprep.subr.mxu0 0.0
        %2987 = vmatpush1.xpose.msra.mxu0 0.0
        %2988 = vmatprep.subr.mxu0 0.0
        %2989 = vmatpush1.xpose.msra.mxu0 0.0
        %2990 = vmatprep.subr.mxu0 0.0
        %2991 = vmatpush1.xpose.msra.mxu0 0.0
        %2992 = vmatprep.subr.mxu0 0.0
        %2993 = vmatpush1.xpose.msra.mxu0 0.0
        %2994 = vmatprep.subr.mxu0 0.0
        %2995 = vmatpush1.xpose.msra.mxu0 0.0
        %2996 = vmatprep.subr.mxu0 0.0
        %2997 = vmatpush1.xpose.msra.mxu0 0.0
        %2998 = vmatprep.subr.mxu0 0.0
        %2999 = vmatpush1.xpose.msra.mxu0 0.0
        %3000 = vmatprep.subr.mxu0 0.0
        %3001 = vmatpush1.xpose.msra.mxu0 0.0
        %3002 = vmatprep.subr.mxu0 0.0
        %3003 = vmatpush1.xpose.msra.mxu0 0.0
        %3004 = vmatprep.subr.mxu0 0.0
        %3005 = vmatpush1.xpose.msra.mxu0 0.0
        %3006 = vmatprep.subr.mxu0 0.0
        %3007 = vmatpush1.xpose.msra.mxu0 0.0
        %3008 = vmatprep.mubr.f32.mxu0 0.0
        %3009 = vmatmul.mubr.f32.gmra.mrb[0].mxu0 %v2880
        %v3010 = vpop.f32.mrb[0].mxu0
        %v3011 = vadd.f32 0.0, %v3010
        %v3012 = vpop.f32.mrb[0].mxu0
        %3013 = vmatprep.mubr.f32.mxu0 0.0
        %3014 = vmatmul.mubr.f32.gmra.mrb[0].mxu0 %v2882
        %v3015 = vpop.f32.mrb[0].mxu0
        %v3016 = vadd.f32 0.0, %v3015
        %v3017 = vpop.f32.mrb[0].mxu0
        %3018 = vmatprep.mubr.f32.mxu0 0.0
        %3019 = vmatmul.mubr.f32.gmra.mrb[0].mxu0 %v2884
        %v3020 = vpop.f32.mrb[0].mxu0
        %v3021 = vadd.f32 0.0, %v3020
        %v3022 = vpop.f32.mrb[0].mxu0
        %3023 = vmatprep.mubr.f32.mxu0 0.0
        %3024 = vmatmul.mubr.f32.gmra.mrb[0].mxu0 %v2886
        %v3025 = vpop.f32.mrb[0].mxu0
        %v3026 = vadd.f32 0.0, %v3025
        %v3027 = vpop.f32.mrb[0].mxu0
        %3028 = vmatprep.mubr.f32.mxu0 0.0
        %3029 = vmatmul.mubr.f32.gmra.mrb[0].mxu0 %v2888
        %v3030 = vpop.f32.mrb[0].mxu0
        %v3031 = vadd.f32 0.0, %v3030
        %v3032 = vpop.f32.mrb[0].mxu0
        %3033 = vmatprep.mubr.f32.mxu0 0.0
        %3034 = vmatmul.mubr.f32.gmra.mrb[0].mxu0 %v2890
        %v3035 = vpop.f32.mrb[0].mxu0
        %v3036 = vadd.f32 0.0, %v3035
        %v3037 = vpop.f32.mrb[0].mxu0
        %3038 = vmatprep.mubr.f32.mxu0 0.0
        %3039 = vmatmul.mubr.f32.gmra.mrb[0].mxu0 %v2892
        %v3040 = vpop.f32.mrb[0].mxu0
        %v3041 = vadd.f32 0.0, %v3040
        %v3042 = vpop.f32.mrb[0].mxu0
        %3043 = vmatprep.mubr.f32.mxu0 0.0
        %3044 = vmatmul.mubr.f32.gmra.mrb[0].mxu0 %v2894
        %v3045 = vpop.f32.mrb[0].mxu0
        %v3046 = vadd.f32 0.0, %v3045
        %v3047 = vpop.f32.mrb[0].mxu0
        %3048 = vdwg.mxu0
        %3049 = vmax.xlane.f32.xlu0 %v2504
        %v3050 = vpop.xlane.xlu0 %3049
        %3051 = vmax.xlane.f32.xlu0 %v2509
        %v3052 = vpop.xlane.xlu0 %3051
        %3053 = vmax.xlane.f32.xlu0 %v2514
        %v3054 = vpop.xlane.xlu0 %3053
        %3055 = vmax.xlane.f32.xlu0 %v2519
        %v3056 = vpop.xlane.xlu0 %3055
        %3057 = vmax.xlane.f32.xlu0 %v2524
        %v3058 = vpop.xlane.xlu0 %3057
        %3059 = vmax.xlane.f32.xlu0 %v2529
        %v3060 = vpop.xlane.xlu0 %3059
        %3061 = vmax.xlane.f32.xlu0 %v2534
        %v3062 = vpop.xlane.xlu0 %3061
        %3063 = vmax.xlane.f32.xlu0 %v2539
        %v3064 = vpop.xlane.xlu0 %3063
        %3065 = vmax.xlane.f32.xlu0 %v2673
        %v3066 = vpop.xlane.xlu0 %3065
        %3067 = vmax.xlane.f32.xlu0 %v2678
        %v3068 = vpop.xlane.xlu0 %3067
        %3069 = vmax.xlane.f32.xlu0 %v2683
        %v3070 = vpop.xlane.xlu0 %3069
        %3071 = vmax.xlane.f32.xlu0 %v2688
        %v3072 = vpop.xlane.xlu0 %3071
        %3073 = vmax.xlane.f32.xlu0 %v2693
        %v3074 = vpop.xlane.xlu0 %3073
        %3075 = vmax.xlane.f32.xlu0 %v2698
        %v3076 = vpop.xlane.xlu0 %3075
        %3077 = vmax.xlane.f32.xlu0 %v2703
        %v3078 = vpop.xlane.xlu0 %3077
        %3079 = vmax.xlane.f32.xlu0 %v2708
        %v3080 = vpop.xlane.xlu0 %3079
        %3081 = vmax.xlane.f32.xlu0 %v2842
        %v3082 = vpop.xlane.xlu0 %3081
        %3083 = vmax.xlane.f32.xlu0 %v2847
        %v3084 = vpop.xlane.xlu0 %3083
        %3085 = vmax.xlane.f32.xlu0 %v2852
        %v3086 = vpop.xlane.xlu0 %3085
        %3087 = vmax.xlane.f32.xlu0 %v2857
        %v3088 = vpop.xlane.xlu0 %3087
        %3089 = vmax.xlane.f32.xlu0 %v2862
        %v3090 = vpop.xlane.xlu0 %3089
        %3091 = vmax.xlane.f32.xlu0 %v2867
        %v3092 = vpop.xlane.xlu0 %3091
        %3093 = vmax.xlane.f32.xlu0 %v2872
        %v3094 = vpop.xlane.xlu0 %3093
        %3095 = vmax.xlane.f32.xlu0 %v2877
        %v3096 = vpop.xlane.xlu0 %3095
        %3097 = vmax.xlane.f32.xlu0 %v3011
        %v3098 = vpop.xlane.xlu0 %3097
        %3099 = vmax.xlane.f32.xlu0 %v3016
        %v3100 = vpop.xlane.xlu0 %3099
        %3101 = vmax.xlane.f32.xlu0 %v3021
        %v3102 = vpop.xlane.xlu0 %3101
        %3103 = vmax.xlane.f32.xlu0 %v3026
        %v3104 = vpop.xlane.xlu0 %3103
        %3105 = vmax.xlane.f32.xlu0 %v3031
        %v3106 = vpop.xlane.xlu0 %3105
        %3107 = vmax.xlane.f32.xlu0 %v3036
        %v3108 = vpop.xlane.xlu0 %3107
        %3109 = vmax.xlane.f32.xlu0 %v3041
        %v3110 = vpop.xlane.xlu0 %3109
        %3111 = vmax.xlane.f32.xlu0 %v3046
        %v3112 = vpop.xlane.xlu0 %3111
        %v3113 = vsub.f32 %v2504, %v3050
        %v3114 = vsub.f32 %v2509, %v3052
        %v3115 = vsub.f32 %v2514, %v3054
        %v3116 = vsub.f32 %v2519, %v3056
        %v3117 = vsub.f32 %v2524, %v3058
        %v3118 = vsub.f32 %v2529, %v3060
        %v3119 = vsub.f32 %v2534, %v3062
        %v3120 = vsub.f32 %v2539, %v3064
        %v3121 = vsub.f32 %v2673, %v3066
        %v3122 = vsub.f32 %v2678, %v3068
        %v3123 = vsub.f32 %v2683, %v3070
        %v3124 = vsub.f32 %v2688, %v3072
        %v3125 = vsub.f32 %v2693, %v3074
        %v3126 = vsub.f32 %v2698, %v3076
        %v3127 = vsub.f32 %v2703, %v3078
        %v3128 = vsub.f32 %v2708, %v3080
        %v3129 = vsub.f32 %v2842, %v3082
        %v3130 = vsub.f32 %v2847, %v3084
        %v3131 = vsub.f32 %v2852, %v3086
        %v3132 = vsub.f32 %v2857, %v3088
        %v3133 = vsub.f32 %v2862, %v3090
        %v3134 = vsub.f32 %v2867, %v3092
        %v3135 = vsub.f32 %v2872, %v3094
        %v3136 = vsub.f32 %v2877, %v3096
        %v3137 = vsub.f32 %v3011, %v3098
        %v3138 = vsub.f32 %v3016, %v3100
        %v3139 = vsub.f32 %v3021, %v3102
        %v3140 = vsub.f32 %v3026, %v3104
        %v3141 = vsub.f32 %v3031, %v3106
        %v3142 = vsub.f32 %v3036, %v3108
        %v3143 = vsub.f32 %v3041, %v3110
        %v3144 = vsub.f32 %v3046, %v3112
        %v3145 = vmul.f32 %v3113, 1.442695
        %v3146 = vpow.pop %v3145
        %v3147 = vmul.f32 %v3114, 1.442695
        %v3148 = vpow.pop %v3147
        %v3149 = vmul.f32 %v3115, 1.442695
        %v3150 = vpow.pop %v3149
        %v3151 = vmul.f32 %v3116, 1.442695
        %v3152 = vpow.pop %v3151
        %v3153 = vmul.f32 %v3117, 1.442695
        %v3154 = vpow.pop %v3153
        %v3155 = vmul.f32 %v3118, 1.442695
        %v3156 = vpow.pop %v3155
        %v3157 = vmul.f32 %v3119, 1.442695
        %v3158 = vpow.pop %v3157
        %v3159 = vmul.f32 %v3120, 1.442695
        %v3160 = vpow.pop %v3159
        %v3161 = vmul.f32 %v3121, 1.442695
        %v3162 = vpow.pop %v3161
        %v3163 = vmul.f32 %v3122, 1.442695
        %v3164 = vpow.pop %v3163
        %v3165 = vmul.f32 %v3123, 1.442695
        %v3166 = vpow.pop %v3165
        %v3167 = vmul.f32 %v3124, 1.442695
        %v3168 = vpow.pop %v3167
        %v3169 = vmul.f32 %v3125, 1.442695
        %v3170 = vpow.pop %v3169
        %v3171 = vmul.f32 %v3126, 1.442695
        %v3172 = vpow.pop %v3171
        %v3173 = vmul.f32 %v3127, 1.442695
        %v3174 = vpow.pop %v3173
        %v3175 = vmul.f32 %v3128, 1.442695
        %v3176 = vpow.pop %v3175
        %v3177 = vmul.f32 %v3129, 1.442695
        %v3178 = vpow.pop %v3177
        %v3179 = vmul.f32 %v3130, 1.442695
        %v3180 = vpow.pop %v3179
        %v3181 = vmul.f32 %v3131, 1.442695
        %v3182 = vpow.pop %v3181
        %v3183 = vmul.f32 %v3132, 1.442695
        %v3184 = vpow.pop %v3183
        %v3185 = vmul.f32 %v3133, 1.442695
        %v3186 = vpow.pop %v3185
        %v3187 = vmul.f32 %v3134, 1.442695
        %v3188 = vpow.pop %v3187
        %v3189 = vmul.f32 %v3135, 1.442695
        %v3190 = vpow.pop %v3189
        %v3191 = vmul.f32 %v3136, 1.442695
        %v3192 = vpow.pop %v3191
        %v3193 = vmul.f32 %v3137, 1.442695
        %v3194 = vpow.pop %v3193
        %v3195 = vmul.f32 %v3138, 1.442695
        %v3196 = vpow.pop %v3195
        %v3197 = vmul.f32 %v3139, 1.442695
        %v3198 = vpow.pop %v3197
        %v3199 = vmul.f32 %v3140, 1.442695
        %v3200 = vpow.pop %v3199
        %v3201 = vmul.f32 %v3141, 1.442695
        %v3202 = vpow.pop %v3201
        %v3203 = vmul.f32 %v3142, 1.442695
        %v3204 = vpow.pop %v3203
        %v3205 = vmul.f32 %v3143, 1.442695
        %v3206 = vpow.pop %v3205
        %v3207 = vmul.f32 %v3144, 1.442695
        %v3208 = vpow.pop %v3207
        %3209 = vadd.xlane.f32.xlu0 %v3146
        %v3210 = vpop.xlane.xlu0 %3209
        %3211 = vadd.xlane.f32.xlu0 %v3148
        %v3212 = vpop.xlane.xlu0 %3211
        %3213 = vadd.xlane.f32.xlu0 %v3150
        %v3214 = vpop.xlane.xlu0 %3213
        %3215 = vadd.xlane.f32.xlu0 %v3152
        %v3216 = vpop.xlane.xlu0 %3215
        %3217 = vadd.xlane.f32.xlu0 %v3154
        %v3218 = vpop.xlane.xlu0 %3217
        %3219 = vadd.xlane.f32.xlu0 %v3156
        %v3220 = vpop.xlane.xlu0 %3219
        %3221 = vadd.xlane.f32.xlu0 %v3158
        %v3222 = vpop.xlane.xlu0 %3221
        %3223 = vadd.xlane.f32.xlu0 %v3160
        %v3224 = vpop.xlane.xlu0 %3223
        %3225 = vadd.xlane.f32.xlu0 %v3162
        %v3226 = vpop.xlane.xlu0 %3225
        %3227 = vadd.xlane.f32.xlu0 %v3164
        %v3228 = vpop.xlane.xlu0 %3227
        %3229 = vadd.xlane.f32.xlu0 %v3166
        %v3230 = vpop.xlane.xlu0 %3229
        %3231 = vadd.xlane.f32.xlu0 %v3168
        %v3232 = vpop.xlane.xlu0 %3231
        %3233 = vadd.xlane.f32.xlu0 %v3170
        %v3234 = vpop.xlane.xlu0 %3233
        %3235 = vadd.xlane.f32.xlu0 %v3172
        %v3236 = vpop.xlane.xlu0 %3235
        %3237 = vadd.xlane.f32.xlu0 %v3174
        %v3238 = vpop.xlane.xlu0 %3237
        %3239 = vadd.xlane.f32.xlu0 %v3176
        %v3240 = vpop.xlane.xlu0 %3239
        %3241 = vadd.xlane.f32.xlu0 %v3178
        %v3242 = vpop.xlane.xlu0 %3241
        %3243 = vadd.xlane.f32.xlu0 %v3180
        %v3244 = vpop.xlane.xlu0 %3243
        %3245 = vadd.xlane.f32.xlu0 %v3182
        %v3246 = vpop.xlane.xlu0 %3245
        %3247 = vadd.xlane.f32.xlu0 %v3184
        %v3248 = vpop.xlane.xlu0 %3247
        %3249 = vadd.xlane.f32.xlu0 %v3186
        %v3250 = vpop.xlane.xlu0 %3249
        %3251 = vadd.xlane.f32.xlu0 %v3188
        %v3252 = vpop.xlane.xlu0 %3251
        %3253 = vadd.xlane.f32.xlu0 %v3190
        %v3254 = vpop.xlane.xlu0 %3253
        %3255 = vadd.xlane.f32.xlu0 %v3192
        %v3256 = vpop.xlane.xlu0 %3255
        %3257 = vadd.xlane.f32.xlu0 %v3194
        %v3258 = vpop.xlane.xlu0 %3257
        %3259 = vadd.xlane.f32.xlu0 %v3196
        %v3260 = vpop.xlane.xlu0 %3259
        %3261 = vadd.xlane.f32.xlu0 %v3198
        %v3262 = vpop.xlane.xlu0 %3261
        %3263 = vadd.xlane.f32.xlu0 %v3200
        %v3264 = vpop.xlane.xlu0 %3263
        %3265 = vadd.xlane.f32.xlu0 %v3202
        %v3266 = vpop.xlane.xlu0 %3265
        %3267 = vadd.xlane.f32.xlu0 %v3204
        %v3268 = vpop.xlane.xlu0 %3267
        %3269 = vadd.xlane.f32.xlu0 %v3206
        %v3270 = vpop.xlane.xlu0 %3269
        %3271 = vadd.xlane.f32.xlu0 %v3208
        %v3272 = vpop.xlane.xlu0 %3271
        %v3273 = vrcp.pop %v3210
        %v3274 = vrcp.pop %v3212
        %v3275 = vrcp.pop %v3214
        %v3276 = vrcp.pop %v3216
        %v3277 = vrcp.pop %v3218
        %v3278 = vrcp.pop %v3220
        %v3279 = vrcp.pop %v3222
        %v3280 = vrcp.pop %v3224
        %v3281 = vrcp.pop %v3226
        %v3282 = vrcp.pop %v3228
        %v3283 = vrcp.pop %v3230
        %v3284 = vrcp.pop %v3232
        %v3285 = vrcp.pop %v3234
        %v3286 = vrcp.pop %v3236
        %v3287 = vrcp.pop %v3238
        %v3288 = vrcp.pop %v3240
        %v3289 = vrcp.pop %v3242
        %v3290 = vrcp.pop %v3244
        %v3291 = vrcp.pop %v3246
        %v3292 = vrcp.pop %v3248
        %v3293 = vrcp.pop %v3250
        %v3294 = vrcp.pop %v3252
        %v3295 = vrcp.pop %v3254
        %v3296 = vrcp.pop %v3256
        %v3297 = vrcp.pop %v3258
        %v3298 = vrcp.pop %v3260
        %v3299 = vrcp.pop %v3262
        %v3300 = vrcp.pop %v3264
        %v3301 = vrcp.pop %v3266
        %v3302 = vrcp.pop %v3268
        %v3303 = vrcp.pop %v3270
        %v3304 = vrcp.pop %v3272
        %v3305 = vmul.f32 %v3210, %v3273
        %v3306 = vmul.f32 %v3212, %v3274
        %v3307 = vmul.f32 %v3214, %v3275
        %v3308 = vmul.f32 %v3216, %v3276
        %v3309 = vmul.f32 %v3218, %v3277
        %v3310 = vmul.f32 %v3220, %v3278
        %v3311 = vmul.f32 %v3222, %v3279
        %v3312 = vmul.f32 %v3224, %v3280
        %v3313 = vmul.f32 %v3226, %v3281
        %v3314 = vmul.f32 %v3228, %v3282
        %v3315 = vmul.f32 %v3230, %v3283
        %v3316 = vmul.f32 %v3232, %v3284
        %v3317 = vmul.f32 %v3234, %v3285
        %v3318 = vmul.f32 %v3236, %v3286
        %v3319 = vmul.f32 %v3238, %v3287
        %v3320 = vmul.f32 %v3240, %v3288
        %v3321 = vmul.f32 %v3242, %v3289
        %v3322 = vmul.f32 %v3244, %v3290
        %v3323 = vmul.f32 %v3246, %v3291
        %v3324 = vmul.f32 %v3248, %v3292
        %v3325 = vmul.f32 %v3250, %v3293
        %v3326 = vmul.f32 %v3252, %v3294
        %v3327 = vmul.f32 %v3254, %v3295
        %v3328 = vmul.f32 %v3256, %v3296
        %v3329 = vmul.f32 %v3258, %v3297
        %v3330 = vmul.f32 %v3260, %v3298
        %v3331 = vmul.f32 %v3262, %v3299
        %v3332 = vmul.f32 %v3264, %v3300
        %v3333 = vmul.f32 %v3266, %v3301
        %v3334 = vmul.f32 %v3268, %v3302
        %v3335 = vmul.f32 %v3270, %v3303
        %v3336 = vmul.f32 %v3272, %v3304
        %v3337 = vsub.f32 2.0, %v3305
        %v3338 = vsub.f32 2.0, %v3306
        %v3339 = vsub.f32 2.0, %v3307
        %v3340 = vsub.f32 2.0, %v3308
        %v3341 = vsub.f32 2.0, %v3309
        %v3342 = vsub.f32 2.0, %v3310
        %v3343 = vsub.f32 2.0, %v3311
        %v3344 = vsub.f32 2.0, %v3312
        %v3345 = vsub.f32 2.0, %v3313
        %v3346 = vsub.f32 2.0, %v3314
        %v3347 = vsub.f32 2.0, %v3315
        %v3348 = vsub.f32 2.0, %v3316
        %v3349 = vsub.f32 2.0, %v3317
        %v3350 = vsub.f32 2.0, %v3318
        %v3351 = vsub.f32 2.0, %v3319
        %v3352 = vsub.f32 2.0, %v3320
        %v3353 = vsub.f32 2.0, %v3321
        %v3354 = vsub.f32 2.0, %v3322
        %v3355 = vsub.f32 2.0, %v3323
        %v3356 = vsub.f32 2.0, %v3324
        %v3357 = vsub.f32 2.0, %v3325
        %v3358 = vsub.f32 2.0, %v3326
        %v3359 = vsub.f32 2.0, %v3327
        %v3360 = vsub.f32 2.0, %v3328
        %v3361 = vsub.f32 2.0, %v3329
        %v3362 = vsub.f32 2.0, %v3330
        %v3363 = vsub.f32 2.0, %v3331
        %v3364 = vsub.f32 2.0, %v3332
        %v3365 = vsub.f32 2.0, %v3333
        %v3366 = vsub.f32 2.0, %v3334
        %v3367 = vsub.f32 2.0, %v3335
        %v3368 = vsub.f32 2.0, %v3336
        %v3369 = vmul.f32 %v3273, %v3337
        %v3370 = vmul.f32 %v3274, %v3338
        %v3371 = vmul.f32 %v3275, %v3339
        %v3372 = vmul.f32 %v3276, %v3340
        %v3373 = vmul.f32 %v3277, %v3341
        %v3374 = vmul.f32 %v3278, %v3342
        %v3375 = vmul.f32 %v3279, %v3343
        %v3376 = vmul.f32 %v3280, %v3344
        %v3377 = vmul.f32 %v3281, %v3345
        %v3378 = vmul.f32 %v3282, %v3346
        %v3379 = vmul.f32 %v3283, %v3347
        %v3380 = vmul.f32 %v3284, %v3348
        %v3381 = vmul.f32 %v3285, %v3349
        %v3382 = vmul.f32 %v3286, %v3350
        %v3383 = vmul.f32 %v3287, %v3351
        %v3384 = vmul.f32 %v3288, %v3352
        %v3385 = vmul.f32 %v3289, %v3353
        %v3386 = vmul.f32 %v3290, %v3354
        %v3387 = vmul.f32 %v3291, %v3355
        %v3388 = vmul.f32 %v3292, %v3356
        %v3389 = vmul.f32 %v3293, %v3357
        %v3390 = vmul.f32 %v3294, %v3358
        %v3391 = vmul.f32 %v3295, %v3359
        %v3392 = vmul.f32 %v3296, %v3360
        %v3393 = vmul.f32 %v3297, %v3361
        %v3394 = vmul.f32 %v3298, %v3362
        %v3395 = vmul.f32 %v3299, %v3363
        %v3396 = vmul.f32 %v3300, %v3364
        %v3397 = vmul.f32 %v3301, %v3365
        %v3398 = vmul.f32 %v3302, %v3366
        %v3399 = vmul.f32 %v3303, %v3367
        %v3400 = vmul.f32 %v3304, %v3368
        %v3401 = vmul.f32 %v3146, %v3369
        %v3402 = vmul.f32 %v3148, %v3370
        %v3403 = vmul.f32 %v3150, %v3371
        %v3404 = vmul.f32 %v3152, %v3372
        %v3405 = vmul.f32 %v3154, %v3373
        %v3406 = vmul.f32 %v3156, %v3374
        %v3407 = vmul.f32 %v3158, %v3375
        %v3408 = vmul.f32 %v3160, %v3376
        %v3409 = vmul.f32 %v3162, %v3377
        %v3410 = vmul.f32 %v3164, %v3378
        %v3411 = vmul.f32 %v3166, %v3379
        %v3412 = vmul.f32 %v3168, %v3380
        %v3413 = vmul.f32 %v3170, %v3381
        %v3414 = vmul.f32 %v3172, %v3382
        %v3415 = vmul.f32 %v3174, %v3383
        %v3416 = vmul.f32 %v3176, %v3384
        %v3417 = vmul.f32 %v3178, %v3385
        %v3418 = vmul.f32 %v3180, %v3386
        %v3419 = vmul.f32 %v3182, %v3387
        %v3420 = vmul.f32 %v3184, %v3388
        %v3421 = vmul.f32 %v3186, %v3389
        %v3422 = vmul.f32 %v3188, %v3390
        %v3423 = vmul.f32 %v3190, %v3391
        %v3424 = vmul.f32 %v3192, %v3392
        %v3425 = vmul.f32 %v3194, %v3393
        %v3426 = vmul.f32 %v3196, %v3394
        %v3427 = vmul.f32 %v3198, %v3395
        %v3428 = vmul.f32 %v3200, %v3396
        %v3429 = vmul.f32 %v3202, %v3397
        %v3430 = vmul.f32 %v3204, %v3398
        %v3431 = vmul.f32 %v3206, %v3399
        %v3432 = vmul.f32 %v3208, %v3400
        %3433 = vst [vmem:[%s656] sm:$0xff] %v3401
        %3434 = vst [vmem:[%s656 + $0x8] sm:$0xff] %v3402
        %3435 = vst [vmem:[%s656 + $0x10] sm:$0xff] %v3403
        %3436 = vst [vmem:[%s656 + $0x18] sm:$0xff] %v3404
        %3437 = vst [vmem:[%s656 + $0x20] sm:$0xff] %v3405
        %3438 = vst [vmem:[%s656 + $0x28] sm:$0xff] %v3406
        %3439 = vst [vmem:[%s656 + $0x30] sm:$0xff] %v3407
        %3440 = vst [vmem:[%s656 + $0x38] sm:$0xff] %v3408
        %3441 = vst [vmem:[%s656 + $0x40] sm:$0xff] %v3409
        %3442 = vst [vmem:[%s656 + $0x48] sm:$0xff] %v3410
        %3443 = vst [vmem:[%s656 + $0x50] sm:$0xff] %v3411
        %3444 = vst [vmem:[%s656 + $0x58] sm:$0xff] %v3412
        %3445 = vst [vmem:[%s656 + $0x60] sm:$0xff] %v3413
        %3446 = vst [vmem:[%s656 + $0x68] sm:$0xff] %v3414
        %3447 = vst [vmem:[%s656 + $0x70] sm:$0xff] %v3415
        %3448 = vst [vmem:[%s656 + $0x78] sm:$0xff] %v3416
        %3449 = vst [vmem:[%s656 + $0x80] sm:$0xff] %v3417
        %3450 = vst [vmem:[%s656 + $0x88] sm:$0xff] %v3418
        %3451 = vst [vmem:[%s656 + $0x90] sm:$0xff] %v3419
        %3452 = vst [vmem:[%s656 + $0x98] sm:$0xff] %v3420
        %3453 = vst [vmem:[%s656 + $0xa0] sm:$0xff] %v3421
        %3454 = vst [vmem:[%s656 + $0xa8] sm:$0xff] %v3422
        %3455 = vst [vmem:[%s656 + $0xb0] sm:$0xff] %v3423
        %3456 = vst [vmem:[%s656 + $0xb8] sm:$0xff] %v3424
        %3457 = vst [vmem:[%s656 + $0xc0] sm:$0xff] %v3425
        %3458 = vst [vmem:[%s656 + $0xc8] sm:$0xff] %v3426
        %3459 = vst [vmem:[%s656 + $0xd0] sm:$0xff] %v3427
        %3460 = vst [vmem:[%s656 + $0xd8] sm:$0xff] %v3428
        %3461 = vst [vmem:[%s656 + $0xe0] sm:$0xff] %v3429
        %3462 = vst [vmem:[%s656 + $0xe8] sm:$0xff] %v3430
        %3463 = vst [vmem:[%s656 + $0xf0] sm:$0xff] %v3431
        %3464 = vst [vmem:[%s656 + $0xf8] sm:$0xff] %v3432
        %v3465 = vld [vmem:[#allocation3] sm:$0xff]
        %v3466 = vld [vmem:[#allocation3 + $0x8] sm:$0xff]
        %v3467 = vld [vmem:[#allocation3 + $0x10] sm:$0xff]
        %v3468 = vld [vmem:[#allocation3 + $0x18] sm:$0xff]
        %v3469 = vld [vmem:[#allocation3 + $0x20] sm:$0xff]
        %v3470 = vld [vmem:[#allocation3 + $0x28] sm:$0xff]
        %v3471 = vld [vmem:[#allocation3 + $0x30] sm:$0xff]
        %v3472 = vld [vmem:[#allocation3 + $0x38] sm:$0xff]
        %v3473 = vld [vmem:[#allocation3 + $0x40] sm:$0xff]
        %v3474 = vld [vmem:[#allocation3 + $0x48] sm:$0xff]
        %v3475 = vld [vmem:[#allocation3 + $0x50] sm:$0xff]
        %v3476 = vld [vmem:[#allocation3 + $0x58] sm:$0xff]
        %v3477 = vld [vmem:[#allocation3 + $0x60] sm:$0xff]
        %v3478 = vld [vmem:[#allocation3 + $0x68] sm:$0xff]
        %v3479 = vld [vmem:[#allocation3 + $0x70] sm:$0xff]
        %v3480 = vld [vmem:[#allocation3 + $0x78] sm:$0xff]
        %v3481 = vld [vmem:[#allocation3 + $0x80] sm:$0xff]
        %v3482 = vld [vmem:[#allocation3 + $0x88] sm:$0xff]
        %v3483 = vld [vmem:[#allocation3 + $0x90] sm:$0xff]
        %v3484 = vld [vmem:[#allocation3 + $0x98] sm:$0xff]
        %v3485 = vld [vmem:[#allocation3 + $0xa0] sm:$0xff]
        %v3486 = vld [vmem:[#allocation3 + $0xa8] sm:$0xff]
        %v3487 = vld [vmem:[#allocation3 + $0xb0] sm:$0xff]
        %v3488 = vld [vmem:[#allocation3 + $0xb8] sm:$0xff]
        %v3489 = vld [vmem:[#allocation3 + $0xc0] sm:$0xff]
        %v3490 = vld [vmem:[#allocation3 + $0xc8] sm:$0xff]
        %v3491 = vld [vmem:[#allocation3 + $0xd0] sm:$0xff]
        %v3492 = vld [vmem:[#allocation3 + $0xd8] sm:$0xff]
        %v3493 = vld [vmem:[#allocation3 + $0xe0] sm:$0xff]
        %v3494 = vld [vmem:[#allocation3 + $0xe8] sm:$0xff]
        %v3495 = vld [vmem:[#allocation3 + $0xf0] sm:$0xff]
        %v3496 = vld [vmem:[#allocation3 + $0xf8] sm:$0xff]
        %v3497 = vld [vmem:[#allocation3 + $0x100] sm:$0xff]
        %v3498 = vld [vmem:[#allocation3 + $0x108] sm:$0xff]
        %v3499 = vld [vmem:[#allocation3 + $0x110] sm:$0xff]
        %v3500 = vld [vmem:[#allocation3 + $0x118] sm:$0xff]
        %v3501 = vld [vmem:[#allocation3 + $0x120] sm:$0xff]
        %v3502 = vld [vmem:[#allocation3 + $0x128] sm:$0xff]
        %v3503 = vld [vmem:[#allocation3 + $0x130] sm:$0xff]
        %v3504 = vld [vmem:[#allocation3 + $0x138] sm:$0xff]
        %v3505 = vld [vmem:[#allocation3 + $0x140] sm:$0xff]
        %v3506 = vld [vmem:[#allocation3 + $0x148] sm:$0xff]
        %v3507 = vld [vmem:[#allocation3 + $0x150] sm:$0xff]
        %v3508 = vld [vmem:[#allocation3 + $0x158] sm:$0xff]
        %v3509 = vld [vmem:[#allocation3 + $0x160] sm:$0xff]
        %v3510 = vld [vmem:[#allocation3 + $0x168] sm:$0xff]
        %v3511 = vld [vmem:[#allocation3 + $0x170] sm:$0xff]
        %v3512 = vld [vmem:[#allocation3 + $0x178] sm:$0xff]
        %v3513 = vld [vmem:[#allocation3 + $0x180] sm:$0xff]
        %v3514 = vld [vmem:[#allocation3 + $0x188] sm:$0xff]
        %v3515 = vld [vmem:[#allocation3 + $0x190] sm:$0xff]
        %v3516 = vld [vmem:[#allocation3 + $0x198] sm:$0xff]
        %v3517 = vld [vmem:[#allocation3 + $0x1a0] sm:$0xff]
        %v3518 = vld [vmem:[#allocation3 + $0x1a8] sm:$0xff]
        %v3519 = vld [vmem:[#allocation3 + $0x1b0] sm:$0xff]
        %v3520 = vld [vmem:[#allocation3 + $0x1b8] sm:$0xff]
        %v3521 = vld [vmem:[#allocation3 + $0x1c0] sm:$0xff]
        %v3522 = vld [vmem:[#allocation3 + $0x1c8] sm:$0xff]
        %v3523 = vld [vmem:[#allocation3 + $0x1d0] sm:$0xff]
        %v3524 = vld [vmem:[#allocation3 + $0x1d8] sm:$0xff]
        %v3525 = vld [vmem:[#allocation3 + $0x1e0] sm:$0xff]
        %v3526 = vld [vmem:[#allocation3 + $0x1e8] sm:$0xff]
        %v3527 = vld [vmem:[#allocation3 + $0x1f0] sm:$0xff]
        %v3528 = vld [vmem:[#allocation3 + $0x1f8] sm:$0xff]
        %3529 = vmatprep.subr.mxu0 0.0
        %3530 = vmatpush1.msra.mxu0 %v3465
        %3531 = vmatprep.subr.mxu0 0.0
        %3532 = vmatpush1.msra.mxu0 %v3466
        %3533 = vmatprep.subr.mxu0 0.0
        %3534 = vmatpush1.msra.mxu0 %v3467
        %3535 = vmatprep.subr.mxu0 0.0
        %3536 = vmatpush1.msra.mxu0 %v3468
        %3537 = vmatprep.subr.mxu0 0.0
        %3538 = vmatpush1.msra.mxu0 %v3469
        %3539 = vmatprep.subr.mxu0 0.0
        %3540 = vmatpush1.msra.mxu0 %v3470
        %3541 = vmatprep.subr.mxu0 0.0
        %3542 = vmatpush1.msra.mxu0 %v3471
        %3543 = vmatprep.subr.mxu0 0.0
        %3544 = vmatpush1.msra.mxu0 %v3472
        %3545 = vmatprep.subr.mxu0 0.0
        %3546 = vmatpush1.msra.mxu0 %v3473
        %3547 = vmatprep.subr.mxu0 0.0
        %3548 = vmatpush1.msra.mxu0 %v3474
        %3549 = vmatprep.subr.mxu0 0.0
        %3550 = vmatpush1.msra.mxu0 %v3475
        %3551 = vmatprep.subr.mxu0 0.0
        %3552 = vmatpush1.msra.mxu0 %v3476
        %3553 = vmatprep.subr.mxu0 0.0
        %3554 = vmatpush1.msra.mxu0 %v3477
        %3555 = vmatprep.subr.mxu0 0.0
        %3556 = vmatpush1.msra.mxu0 %v3478
        %3557 = vmatprep.subr.mxu0 0.0
        %3558 = vmatpush1.msra.mxu0 %v3479
        %3559 = vmatprep.subr.mxu0 0.0
        %3560 = vmatpush1.msra.mxu0 %v3480
        %3561 = vmatprep.subr.mxu0 0.0
        %3562 = vmatpush1.msra.mxu0 0.0
        %3563 = vmatprep.subr.mxu0 0.0
        %3564 = vmatpush1.msra.mxu0 0.0
        %3565 = vmatprep.subr.mxu0 0.0
        %3566 = vmatpush1.msra.mxu0 0.0
        %3567 = vmatprep.subr.mxu0 0.0
        %3568 = vmatpush1.msra.mxu0 0.0
        %3569 = vmatprep.subr.mxu0 0.0
        %3570 = vmatpush1.msra.mxu0 0.0
        %3571 = vmatprep.subr.mxu0 0.0
        %3572 = vmatpush1.msra.mxu0 0.0
        %3573 = vmatprep.subr.mxu0 0.0
        %3574 = vmatpush1.msra.mxu0 0.0
        %3575 = vmatprep.subr.mxu0 0.0
        %3576 = vmatpush1.msra.mxu0 0.0
        %3577 = vmatprep.subr.mxu0 0.0
        %3578 = vmatpush1.msra.mxu0 0.0
        %3579 = vmatprep.subr.mxu0 0.0
        %3580 = vmatpush1.msra.mxu0 0.0
        %3581 = vmatprep.subr.mxu0 0.0
        %3582 = vmatpush1.msra.mxu0 0.0
        %3583 = vmatprep.subr.mxu0 0.0
        %3584 = vmatpush1.msra.mxu0 0.0
        %3585 = vmatprep.subr.mxu0 0.0
        %3586 = vmatpush1.msra.mxu0 0.0
        %3587 = vmatprep.subr.mxu0 0.0
        %3588 = vmatpush1.msra.mxu0 0.0
        %3589 = vmatprep.subr.mxu0 0.0
        %3590 = vmatpush1.msra.mxu0 0.0
        %3591 = vmatprep.subr.mxu0 0.0
        %3592 = vmatpush1.msra.mxu0 0.0
        %3593 = vmatprep.mubr.f32.mxu0 0.0
        %3594 = vmatmul.mubr.f32.gmra.mrb[0].mxu0 %v3401
        %v3595 = vpop.f32.mrb[0].mxu0
        %v3596 = vadd.f32 0.0, %v3595
        %v3597 = vpop.f32.mrb[0].mxu0
        %3598 = vmatprep.mubr.f32.mxu0 0.0
        %3599 = vmatmul.mubr.f32.gmra.mrb[0].mxu0 %v3402
        %v3600 = vpop.f32.mrb[0].mxu0
        %v3601 = vadd.f32 0.0, %v3600
        %v3602 = vpop.f32.mrb[0].mxu0
        %3603 = vmatprep.mubr.f32.mxu0 0.0
        %3604 = vmatmul.mubr.f32.gmra.mrb[0].mxu0 %v3403
        %v3605 = vpop.f32.mrb[0].mxu0
        %v3606 = vadd.f32 0.0, %v3605
        %v3607 = vpop.f32.mrb[0].mxu0
        %3608 = vmatprep.mubr.f32.mxu0 0.0
        %3609 = vmatmul.mubr.f32.gmra.mrb[0].mxu0 %v3404
        %v3610 = vpop.f32.mrb[0].mxu0
        %v3611 = vadd.f32 0.0, %v3610
        %v3612 = vpop.f32.mrb[0].mxu0
        %3613 = vmatprep.mubr.f32.mxu0 0.0
        %3614 = vmatmul.mubr.f32.gmra.mrb[0].mxu0 %v3405
        %v3615 = vpop.f32.mrb[0].mxu0
        %v3616 = vadd.f32 0.0, %v3615
        %v3617 = vpop.f32.mrb[0].mxu0
        %3618 = vmatprep.mubr.f32.mxu0 0.0
        %3619 = vmatmul.mubr.f32.gmra.mrb[0].mxu0 %v3406
        %v3620 = vpop.f32.mrb[0].mxu0
        %v3621 = vadd.f32 0.0, %v3620
        %v3622 = vpop.f32.mrb[0].mxu0
        %3623 = vmatprep.mubr.f32.mxu0 0.0
        %3624 = vmatmul.mubr.f32.gmra.mrb[0].mxu0 %v3407
        %v3625 = vpop.f32.mrb[0].mxu0
        %v3626 = vadd.f32 0.0, %v3625
        %v3627 = vpop.f32.mrb[0].mxu0
        %3628 = vmatprep.mubr.f32.mxu0 0.0
        %3629 = vmatmul.mubr.f32.gmra.mrb[0].mxu0 %v3408
        %v3630 = vpop.f32.mrb[0].mxu0
        %v3631 = vadd.f32 0.0, %v3630
        %v3632 = vpop.f32.mrb[0].mxu0
        %3633 = vdwg.mxu0
        %3634 = vmatprep.subr.mxu0 0.0
        %3635 = vmatpush1.msra.mxu0 %v3481
        %3636 = vmatprep.subr.mxu0 0.0
        %3637 = vmatpush1.msra.mxu0 %v3482
        %3638 = vmatprep.subr.mxu0 0.0
        %3639 = vmatpush1.msra.mxu0 %v3483
        %3640 = vmatprep.subr.mxu0 0.0
        %3641 = vmatpush1.msra.mxu0 %v3484
        %3642 = vmatprep.subr.mxu0 0.0
        %3643 = vmatpush1.msra.mxu0 %v3485
        %3644 = vmatprep.subr.mxu0 0.0
        %3645 = vmatpush1.msra.mxu0 %v3486
        %3646 = vmatprep.subr.mxu0 0.0
        %3647 = vmatpush1.msra.mxu0 %v3487
        %3648 = vmatprep.subr.mxu0 0.0
        %3649 = vmatpush1.msra.mxu0 %v3488
        %3650 = vmatprep.subr.mxu0 0.0
        %3651 = vmatpush1.msra.mxu0 %v3489
        %3652 = vmatprep.subr.mxu0 0.0
        %3653 = vmatpush1.msra.mxu0 %v3490
        %3654 = vmatprep.subr.mxu0 0.0
        %3655 = vmatpush1.msra.mxu0 %v3491
        %3656 = vmatprep.subr.mxu0 0.0
        %3657 = vmatpush1.msra.mxu0 %v3492
        %3658 = vmatprep.subr.mxu0 0.0
        %3659 = vmatpush1.msra.mxu0 %v3493
        %3660 = vmatprep.subr.mxu0 0.0
        %3661 = vmatpush1.msra.mxu0 %v3494
        %3662 = vmatprep.subr.mxu0 0.0
        %3663 = vmatpush1.msra.mxu0 %v3495
        %3664 = vmatprep.subr.mxu0 0.0
        %3665 = vmatpush1.msra.mxu0 %v3496
        %3666 = vmatprep.subr.mxu0 0.0
        %3667 = vmatpush1.msra.mxu0 0.0
        %3668 = vmatprep.subr.mxu0 0.0
        %3669 = vmatpush1.msra.mxu0 0.0
        %3670 = vmatprep.subr.mxu0 0.0
        %3671 = vmatpush1.msra.mxu0 0.0
        %3672 = vmatprep.subr.mxu0 0.0
        %3673 = vmatpush1.msra.mxu0 0.0
        %3674 = vmatprep.subr.mxu0 0.0
        %3675 = vmatpush1.msra.mxu0 0.0
        %3676 = vmatprep.subr.mxu0 0.0
        %3677 = vmatpush1.msra.mxu0 0.0
        %3678 = vmatprep.subr.mxu0 0.0
        %3679 = vmatpush1.msra.mxu0 0.0
        %3680 = vmatprep.subr.mxu0 0.0
        %3681 = vmatpush1.msra.mxu0 0.0
        %3682 = vmatprep.subr.mxu0 0.0
        %3683 = vmatpush1.msra.mxu0 0.0
        %3684 = vmatprep.subr.mxu0 0.0
        %3685 = vmatpush1.msra.mxu0 0.0
        %3686 = vmatprep.subr.mxu0 0.0
        %3687 = vmatpush1.msra.mxu0 0.0
        %3688 = vmatprep.subr.mxu0 0.0
        %3689 = vmatpush1.msra.mxu0 0.0
        %3690 = vmatprep.subr.mxu0 0.0
        %3691 = vmatpush1.msra.mxu0 0.0
        %3692 = vmatprep.subr.mxu0 0.0
        %3693 = vmatpush1.msra.mxu0 0.0
        %3694 = vmatprep.subr.mxu0 0.0
        %3695 = vmatpush1.msra.mxu0 0.0
        %3696 = vmatprep.subr.mxu0 0.0
        %3697 = vmatpush1.msra.mxu0 0.0
        %3698 = vmatprep.mubr.f32.mxu0 0.0
        %3699 = vmatmul.mubr.f32.gmra.mrb[0].mxu0 %v3409
        %v3700 = vpop.f32.mrb[0].mxu0
        %v3701 = vadd.f32 0.0, %v3700
        %v3702 = vpop.f32.mrb[0].mxu0
        %3703 = vmatprep.mubr.f32.mxu0 0.0
        %3704 = vmatmul.mubr.f32.gmra.mrb[0].mxu0 %v3410
        %v3705 = vpop.f32.mrb[0].mxu0
        %v3706 = vadd.f32 0.0, %v3705
        %v3707 = vpop.f32.mrb[0].mxu0
        %3708 = vmatprep.mubr.f32.mxu0 0.0
        %3709 = vmatmul.mubr.f32.gmra.mrb[0].mxu0 %v3411
        %v3710 = vpop.f32.mrb[0].mxu0
        %v3711 = vadd.f32 0.0, %v3710
        %v3712 = vpop.f32.mrb[0].mxu0
        %3713 = vmatprep.mubr.f32.mxu0 0.0
        %3714 = vmatmul.mubr.f32.gmra.mrb[0].mxu0 %v3412
        %v3715 = vpop.f32.mrb[0].mxu0
        %v3716 = vadd.f32 0.0, %v3715
        %v3717 = vpop.f32.mrb[0].mxu0
        %3718 = vmatprep.mubr.f32.mxu0 0.0
        %3719 = vmatmul.mubr.f32.gmra.mrb[0].mxu0 %v3413
        %v3720 = vpop.f32.mrb[0].mxu0
        %v3721 = vadd.f32 0.0, %v3720
        %v3722 = vpop.f32.mrb[0].mxu0
        %3723 = vmatprep.mubr.f32.mxu0 0.0
        %3724 = vmatmul.mubr.f32.gmra.mrb[0].mxu0 %v3414
        %v3725 = vpop.f32.mrb[0].mxu0
        %v3726 = vadd.f32 0.0, %v3725
        %v3727 = vpop.f32.mrb[0].mxu0
        %3728 = vmatprep.mubr.f32.mxu0 0.0
        %3729 = vmatmul.mubr.f32.gmra.mrb[0].mxu0 %v3415
        %v3730 = vpop.f32.mrb[0].mxu0
        %v3731 = vadd.f32 0.0, %v3730
        %v3732 = vpop.f32.mrb[0].mxu0
        %3733 = vmatprep.mubr.f32.mxu0 0.0
        %3734 = vmatmul.mubr.f32.gmra.mrb[0].mxu0 %v3416
        %v3735 = vpop.f32.mrb[0].mxu0
        %v3736 = vadd.f32 0.0, %v3735
        %v3737 = vpop.f32.mrb[0].mxu0
        %3738 = vdwg.mxu0
        %3739 = vmatprep.subr.mxu0 0.0
        %3740 = vmatpush1.msra.mxu0 %v3497
        %3741 = vmatprep.subr.mxu0 0.0
        %3742 = vmatpush1.msra.mxu0 %v3498
        %3743 = vmatprep.subr.mxu0 0.0
        %3744 = vmatpush1.msra.mxu0 %v3499
        %3745 = vmatprep.subr.mxu0 0.0
        %3746 = vmatpush1.msra.mxu0 %v3500
        %3747 = vmatprep.subr.mxu0 0.0
        %3748 = vmatpush1.msra.mxu0 %v3501
        %3749 = vmatprep.subr.mxu0 0.0
        %3750 = vmatpush1.msra.mxu0 %v3502
        %3751 = vmatprep.subr.mxu0 0.0
        %3752 = vmatpush1.msra.mxu0 %v3503
        %3753 = vmatprep.subr.mxu0 0.0
        %3754 = vmatpush1.msra.mxu0 %v3504
        %3755 = vmatprep.subr.mxu0 0.0
        %3756 = vmatpush1.msra.mxu0 %v3505
        %3757 = vmatprep.subr.mxu0 0.0
        %3758 = vmatpush1.msra.mxu0 %v3506
        %3759 = vmatprep.subr.mxu0 0.0
        %3760 = vmatpush1.msra.mxu0 %v3507
        %3761 = vmatprep.subr.mxu0 0.0
        %3762 = vmatpush1.msra.mxu0 %v3508
        %3763 = vmatprep.subr.mxu0 0.0
        %3764 = vmatpush1.msra.mxu0 %v3509
        %3765 = vmatprep.subr.mxu0 0.0
        %3766 = vmatpush1.msra.mxu0 %v3510
        %3767 = vmatprep.subr.mxu0 0.0
        %3768 = vmatpush1.msra.mxu0 %v3511
        %3769 = vmatprep.subr.mxu0 0.0
        %3770 = vmatpush1.msra.mxu0 %v3512
        %3771 = vmatprep.subr.mxu0 0.0
        %3772 = vmatpush1.msra.mxu0 0.0
        %3773 = vmatprep.subr.mxu0 0.0
        %3774 = vmatpush1.msra.mxu0 0.0
        %3775 = vmatprep.subr.mxu0 0.0
        %3776 = vmatpush1.msra.mxu0 0.0
        %3777 = vmatprep.subr.mxu0 0.0
        %3778 = vmatpush1.msra.mxu0 0.0
        %3779 = vmatprep.subr.mxu0 0.0
        %3780 = vmatpush1.msra.mxu0 0.0
        %3781 = vmatprep.subr.mxu0 0.0
        %3782 = vmatpush1.msra.mxu0 0.0
        %3783 = vmatprep.subr.mxu0 0.0
        %3784 = vmatpush1.msra.mxu0 0.0
        %3785 = vmatprep.subr.mxu0 0.0
        %3786 = vmatpush1.msra.mxu0 0.0
        %3787 = vmatprep.subr.mxu0 0.0
        %3788 = vmatpush1.msra.mxu0 0.0
        %3789 = vmatprep.subr.mxu0 0.0
        %3790 = vmatpush1.msra.mxu0 0.0
        %3791 = vmatprep.subr.mxu0 0.0
        %3792 = vmatpush1.msra.mxu0 0.0
        %3793 = vmatprep.subr.mxu0 0.0
        %3794 = vmatpush1.msra.mxu0 0.0
        %3795 = vmatprep.subr.mxu0 0.0
        %3796 = vmatpush1.msra.mxu0 0.0
        %3797 = vmatprep.subr.mxu0 0.0
        %3798 = vmatpush1.msra.mxu0 0.0
        %3799 = vmatprep.subr.mxu0 0.0
        %3800 = vmatpush1.msra.mxu0 0.0
        %3801 = vmatprep.subr.mxu0 0.0
        %3802 = vmatpush1.msra.mxu0 0.0
        %3803 = vmatprep.mubr.f32.mxu0 0.0
        %3804 = vmatmul.mubr.f32.gmra.mrb[0].mxu0 %v3417
        %v3805 = vpop.f32.mrb[0].mxu0
        %v3806 = vadd.f32 0.0, %v3805
        %v3807 = vpop.f32.mrb[0].mxu0
        %3808 = vmatprep.mubr.f32.mxu0 0.0
        %3809 = vmatmul.mubr.f32.gmra.mrb[0].mxu0 %v3418
        %v3810 = vpop.f32.mrb[0].mxu0
        %v3811 = vadd.f32 0.0, %v3810
        %v3812 = vpop.f32.mrb[0].mxu0
        %3813 = vmatprep.mubr.f32.mxu0 0.0
        %3814 = vmatmul.mubr.f32.gmra.mrb[0].mxu0 %v3419
        %v3815 = vpop.f32.mrb[0].mxu0
        %v3816 = vadd.f32 0.0, %v3815
        %v3817 = vpop.f32.mrb[0].mxu0
        %3818 = vmatprep.mubr.f32.mxu0 0.0
        %3819 = vmatmul.mubr.f32.gmra.mrb[0].mxu0 %v3420
        %v3820 = vpop.f32.mrb[0].mxu0
        %v3821 = vadd.f32 0.0, %v3820
        %v3822 = vpop.f32.mrb[0].mxu0
        %3823 = vmatprep.mubr.f32.mxu0 0.0
        %3824 = vmatmul.mubr.f32.gmra.mrb[0].mxu0 %v3421
        %v3825 = vpop.f32.mrb[0].mxu0
        %v3826 = vadd.f32 0.0, %v3825
        %v3827 = vpop.f32.mrb[0].mxu0
        %3828 = vmatprep.mubr.f32.mxu0 0.0
        %3829 = vmatmul.mubr.f32.gmra.mrb[0].mxu0 %v3422
        %v3830 = vpop.f32.mrb[0].mxu0
        %v3831 = vadd.f32 0.0, %v3830
        %v3832 = vpop.f32.mrb[0].mxu0
        %3833 = vmatprep.mubr.f32.mxu0 0.0
        %3834 = vmatmul.mubr.f32.gmra.mrb[0].mxu0 %v3423
        %v3835 = vpop.f32.mrb[0].mxu0
        %v3836 = vadd.f32 0.0, %v3835
        %v3837 = vpop.f32.mrb[0].mxu0
        %3838 = vmatprep.mubr.f32.mxu0 0.0
        %3839 = vmatmul.mubr.f32.gmra.mrb[0].mxu0 %v3424
        %v3840 = vpop.f32.mrb[0].mxu0
        %v3841 = vadd.f32 0.0, %v3840
        %v3842 = vpop.f32.mrb[0].mxu0
        %3843 = vdwg.mxu0
        %3844 = vmatprep.subr.mxu0 0.0
        %3845 = vmatpush1.msra.mxu0 %v3513
        %3846 = vmatprep.subr.mxu0 0.0
        %3847 = vmatpush1.msra.mxu0 %v3514
        %3848 = vmatprep.subr.mxu0 0.0
        %3849 = vmatpush1.msra.mxu0 %v3515
        %3850 = vmatprep.subr.mxu0 0.0
        %3851 = vmatpush1.msra.mxu0 %v3516
        %3852 = vmatprep.subr.mxu0 0.0
        %3853 = vmatpush1.msra.mxu0 %v3517
        %3854 = vmatprep.subr.mxu0 0.0
        %3855 = vmatpush1.msra.mxu0 %v3518
        %3856 = vmatprep.subr.mxu0 0.0
        %3857 = vmatpush1.msra.mxu0 %v3519
        %3858 = vmatprep.subr.mxu0 0.0
        %3859 = vmatpush1.msra.mxu0 %v3520
        %3860 = vmatprep.subr.mxu0 0.0
        %3861 = vmatpush1.msra.mxu0 %v3521
        %3862 = vmatprep.subr.mxu0 0.0
        %3863 = vmatpush1.msra.mxu0 %v3522
        %3864 = vmatprep.subr.mxu0 0.0
        %3865 = vmatpush1.msra.mxu0 %v3523
        %3866 = vmatprep.subr.mxu0 0.0
        %3867 = vmatpush1.msra.mxu0 %v3524
        %3868 = vmatprep.subr.mxu0 0.0
        %3869 = vmatpush1.msra.mxu0 %v3525
        %3870 = vmatprep.subr.mxu0 0.0
        %3871 = vmatpush1.msra.mxu0 %v3526
        %3872 = vmatprep.subr.mxu0 0.0
        %3873 = vmatpush1.msra.mxu0 %v3527
        %3874 = vmatprep.subr.mxu0 0.0
        %3875 = vmatpush1.msra.mxu0 %v3528
        %3876 = vmatprep.subr.mxu0 0.0
        %3877 = vmatpush1.msra.mxu0 0.0
        %3878 = vmatprep.subr.mxu0 0.0
        %3879 = vmatpush1.msra.mxu0 0.0
        %3880 = vmatprep.subr.mxu0 0.0
        %3881 = vmatpush1.msra.mxu0 0.0
        %3882 = vmatprep.subr.mxu0 0.0
        %3883 = vmatpush1.msra.mxu0 0.0
        %3884 = vmatprep.subr.mxu0 0.0
        %3885 = vmatpush1.msra.mxu0 0.0
        %3886 = vmatprep.subr.mxu0 0.0
        %3887 = vmatpush1.msra.mxu0 0.0
        %3888 = vmatprep.subr.mxu0 0.0
        %3889 = vmatpush1.msra.mxu0 0.0
        %3890 = vmatprep.subr.mxu0 0.0
        %3891 = vmatpush1.msra.mxu0 0.0
        %3892 = vmatprep.subr.mxu0 0.0
        %3893 = vmatpush1.msra.mxu0 0.0
        %3894 = vmatprep.subr.mxu0 0.0
        %3895 = vmatpush1.msra.mxu0 0.0
        %3896 = vmatprep.subr.mxu0 0.0
        %3897 = vmatpush1.msra.mxu0 0.0
        %3898 = vmatprep.subr.mxu0 0.0
        %3899 = vmatpush1.msra.mxu0 0.0
        %3900 = vmatprep.subr.mxu0 0.0
        %3901 = vmatpush1.msra.mxu0 0.0
        %3902 = vmatprep.subr.mxu0 0.0
        %3903 = vmatpush1.msra.mxu0 0.0
        %3904 = vmatprep.subr.mxu0 0.0
        %3905 = vmatpush1.msra.mxu0 0.0
        %3906 = vmatprep.subr.mxu0 0.0
        %3907 = vmatpush1.msra.mxu0 0.0
        %3908 = vmatprep.mubr.f32.mxu0 0.0
        %3909 = vmatmul.mubr.f32.gmra.mrb[0].mxu0 %v3425
        %v3910 = vpop.f32.mrb[0].mxu0
        %v3911 = vadd.f32 0.0, %v3910
        %v3912 = vpop.f32.mrb[0].mxu0
        %3913 = vmatprep.mubr.f32.mxu0 0.0
        %3914 = vmatmul.mubr.f32.gmra.mrb[0].mxu0 %v3426
        %v3915 = vpop.f32.mrb[0].mxu0
        %v3916 = vadd.f32 0.0, %v3915
        %v3917 = vpop.f32.mrb[0].mxu0
        %3918 = vmatprep.mubr.f32.mxu0 0.0
        %3919 = vmatmul.mubr.f32.gmra.mrb[0].mxu0 %v3427
        %v3920 = vpop.f32.mrb[0].mxu0
        %v3921 = vadd.f32 0.0, %v3920
        %v3922 = vpop.f32.mrb[0].mxu0
        %3923 = vmatprep.mubr.f32.mxu0 0.0
        %3924 = vmatmul.mubr.f32.gmra.mrb[0].mxu0 %v3428
        %v3925 = vpop.f32.mrb[0].mxu0
        %v3926 = vadd.f32 0.0, %v3925
        %v3927 = vpop.f32.mrb[0].mxu0
        %3928 = vmatprep.mubr.f32.mxu0 0.0
        %3929 = vmatmul.mubr.f32.gmra.mrb[0].mxu0 %v3429
        %v3930 = vpop.f32.mrb[0].mxu0
        %v3931 = vadd.f32 0.0, %v3930
        %v3932 = vpop.f32.mrb[0].mxu0
        %3933 = vmatprep.mubr.f32.mxu0 0.0
        %3934 = vmatmul.mubr.f32.gmra.mrb[0].mxu0 %v3430
        %v3935 = vpop.f32.mrb[0].mxu0
        %v3936 = vadd.f32 0.0, %v3935
        %v3937 = vpop.f32.mrb[0].mxu0
        %3938 = vmatprep.mubr.f32.mxu0 0.0
        %3939 = vmatmul.mubr.f32.gmra.mrb[0].mxu0 %v3431
        %v3940 = vpop.f32.mrb[0].mxu0
        %v3941 = vadd.f32 0.0, %v3940
        %v3942 = vpop.f32.mrb[0].mxu0
        %3943 = vmatprep.mubr.f32.mxu0 0.0
        %3944 = vmatmul.mubr.f32.gmra.mrb[0].mxu0 %v3432
        %v3945 = vpop.f32.mrb[0].mxu0
        %v3946 = vadd.f32 0.0, %v3945
        %v3947 = vpop.f32.mrb[0].mxu0
        %3948 = vdwg.mxu0
        %v3949 = vld [vmem:[#allocation12] sm:$0xff]
        %v3950 = vld [vmem:[#allocation12 + $0x8] sm:$0xff]
        %v3951 = vld [vmem:[#allocation12 + $0x10] sm:$0xff]
        %v3952 = vld [vmem:[#allocation12 + $0x18] sm:$0xff]
        %v3953 = vld [vmem:[#allocation12 + $0x20] sm:$0xff]
        %v3954 = vld [vmem:[#allocation12 + $0x28] sm:$0xff]
        %v3955 = vld [vmem:[#allocation12 + $0x30] sm:$0xff]
        %v3956 = vld [vmem:[#allocation12 + $0x38] sm:$0xff]
        %v3957 = vld [vmem:[#allocation12 + $0x40] sm:$0xff]
        %v3958 = vld [vmem:[#allocation12 + $0x48] sm:$0xff]
        %v3959 = vld [vmem:[#allocation12 + $0x50] sm:$0xff]
        %v3960 = vld [vmem:[#allocation12 + $0x58] sm:$0xff]
        %v3961 = vld [vmem:[#allocation12 + $0x60] sm:$0xff]
        %v3962 = vld [vmem:[#allocation12 + $0x68] sm:$0xff]
        %v3963 = vld [vmem:[#allocation12 + $0x70] sm:$0xff]
        %v3964 = vld [vmem:[#allocation12 + $0x78] sm:$0xff]
        %v3965 = vld [vmem:[#allocation12 + $0x80] sm:$0xff]
        %v3966 = vld [vmem:[#allocation12 + $0x88] sm:$0xff]
        %v3967 = vld [vmem:[#allocation12 + $0x90] sm:$0xff]
        %v3968 = vld [vmem:[#allocation12 + $0x98] sm:$0xff]
        %v3969 = vld [vmem:[#allocation12 + $0xa0] sm:$0xff]
        %v3970 = vld [vmem:[#allocation12 + $0xa8] sm:$0xff]
        %v3971 = vld [vmem:[#allocation12 + $0xb0] sm:$0xff]
        %v3972 = vld [vmem:[#allocation12 + $0xb8] sm:$0xff]
        %v3973 = vld [vmem:[#allocation12 + $0xc0] sm:$0xff]
        %v3974 = vld [vmem:[#allocation12 + $0xc8] sm:$0xff]
        %v3975 = vld [vmem:[#allocation12 + $0xd0] sm:$0xff]
        %v3976 = vld [vmem:[#allocation12 + $0xd8] sm:$0xff]
        %v3977 = vld [vmem:[#allocation12 + $0xe0] sm:$0xff]
        %v3978 = vld [vmem:[#allocation12 + $0xe8] sm:$0xff]
        %v3979 = vld [vmem:[#allocation12 + $0xf0] sm:$0xff]
        %v3980 = vld [vmem:[#allocation12 + $0xf8] sm:$0xff]
        %v3981 = vld [vmem:[#allocation12 + $0x100] sm:$0xff]
        %v3982 = vld [vmem:[#allocation12 + $0x108] sm:$0xff]
        %v3983 = vld [vmem:[#allocation12 + $0x110] sm:$0xff]
        %v3984 = vld [vmem:[#allocation12 + $0x118] sm:$0xff]
        %v3985 = vld [vmem:[#allocation12 + $0x120] sm:$0xff]
        %v3986 = vld [vmem:[#allocation12 + $0x128] sm:$0xff]
        %v3987 = vld [vmem:[#allocation12 + $0x130] sm:$0xff]
        %v3988 = vld [vmem:[#allocation12 + $0x138] sm:$0xff]
        %v3989 = vld [vmem:[#allocation12 + $0x140] sm:$0xff]
        %v3990 = vld [vmem:[#allocation12 + $0x148] sm:$0xff]
        %v3991 = vld [vmem:[#allocation12 + $0x150] sm:$0xff]
        %v3992 = vld [vmem:[#allocation12 + $0x158] sm:$0xff]
        %v3993 = vld [vmem:[#allocation12 + $0x160] sm:$0xff]
        %v3994 = vld [vmem:[#allocation12 + $0x168] sm:$0xff]
        %v3995 = vld [vmem:[#allocation12 + $0x170] sm:$0xff]
        %v3996 = vld [vmem:[#allocation12 + $0x178] sm:$0xff]
        %v3997 = vld [vmem:[#allocation12 + $0x180] sm:$0xff]
        %v3998 = vld [vmem:[#allocation12 + $0x188] sm:$0xff]
        %v3999 = vld [vmem:[#allocation12 + $0x190] sm:$0xff]
        %v4000 = vld [vmem:[#allocation12 + $0x198] sm:$0xff]
        %v4001 = vld [vmem:[#allocation12 + $0x1a0] sm:$0xff]
        %v4002 = vld [vmem:[#allocation12 + $0x1a8] sm:$0xff]
        %v4003 = vld [vmem:[#allocation12 + $0x1b0] sm:$0xff]
        %v4004 = vld [vmem:[#allocation12 + $0x1b8] sm:$0xff]
        %v4005 = vld [vmem:[#allocation12 + $0x1c0] sm:$0xff]
        %v4006 = vld [vmem:[#allocation12 + $0x1c8] sm:$0xff]
        %v4007 = vld [vmem:[#allocation12 + $0x1d0] sm:$0xff]
        %v4008 = vld [vmem:[#allocation12 + $0x1d8] sm:$0xff]
        %v4009 = vld [vmem:[#allocation12 + $0x1e0] sm:$0xff]
        %v4010 = vld [vmem:[#allocation12 + $0x1e8] sm:$0xff]
        %v4011 = vld [vmem:[#allocation12 + $0x1f0] sm:$0xff]
        %v4012 = vld [vmem:[#allocation12 + $0x1f8] sm:$0xff]
        %v4014 = vsel %vm2372, %v3596, 0
        %v4017 = vsel %vm2372, %v3601, 0
        %v4020 = vsel %vm2372, %v3606, 0
        %v4023 = vsel %vm2372, %v3611, 0
        %v4026 = vsel %vm2372, %v3616, 0
        %v4029 = vsel %vm2372, %v3621, 0
        %v4032 = vsel %vm2372, %v3626, 0
        %v4035 = vsel %vm2372, %v3631, 0
        %4037 = vmatprep.subr.mxu0 %v3950
        %4038 = vmatpush1.msra.mxu0 %v3949
        %4039 = vmatprep.subr.mxu0 %v3952
        %4040 = vmatpush1.msra.mxu0 %v3951
        %4041 = vmatprep.subr.mxu0 %v3954
        %4042 = vmatpush1.msra.mxu0 %v3953
        %4043 = vmatprep.subr.mxu0 %v3956
        %4044 = vmatpush1.msra.mxu0 %v3955
        %4045 = vmatprep.subr.mxu0 %v3958
        %4046 = vmatpush1.msra.mxu0 %v3957
        %4047 = vmatprep.subr.mxu0 %v3960
        %4048 = vmatpush1.msra.mxu0 %v3959
        %4049 = vmatprep.subr.mxu0 %v3962
        %4050 = vmatpush1.msra.mxu0 %v3961
        %4051 = vmatprep.subr.mxu0 %v3964
        %4052 = vmatpush1.msra.mxu0 %v3963
        %4053 = vmatprep.subr.mxu0 0.0
        %4054 = vmatpush1.msra.mxu0 0.0
        %4055 = vmatprep.subr.mxu0 0.0
        %4056 = vmatpush1.msra.mxu0 0.0
        %4057 = vmatprep.subr.mxu0 0.0
        %4058 = vmatpush1.msra.mxu0 0.0
        %4059 = vmatprep.subr.mxu0 0.0
        %4060 = vmatpush1.msra.mxu0 0.0
        %4061 = vmatprep.subr.mxu0 0.0
        %4062 = vmatpush1.msra.mxu0 0.0
        %4063 = vmatprep.subr.mxu0 0.0
        %4064 = vmatpush1.msra.mxu0 0.0
        %4065 = vmatprep.subr.mxu0 0.0
        %4066 = vmatpush1.msra.mxu0 0.0
        %4067 = vmatprep.subr.mxu0 0.0
        %4068 = vmatpush1.msra.mxu0 0.0
        %4069 = vmatprep.subr.mxu0 0.0
        %4070 = vmatpush1.msra.mxu0 0.0
        %4071 = vmatprep.subr.mxu0 0.0
        %4072 = vmatpush1.msra.mxu0 0.0
        %4073 = vmatprep.subr.mxu0 0.0
        %4074 = vmatpush1.msra.mxu0 0.0
        %4075 = vmatprep.subr.mxu0 0.0
        %4076 = vmatpush1.msra.mxu0 0.0
        %4077 = vmatprep.subr.mxu0 0.0
        %4078 = vmatpush1.msra.mxu0 0.0
        %4079 = vmatprep.subr.mxu0 0.0
        %4080 = vmatpush1.msra.mxu0 0.0
        %4081 = vmatprep.subr.mxu0 0.0
        %4082 = vmatpush1.msra.mxu0 0.0
        %4083 = vmatprep.subr.mxu0 0.0
        %4084 = vmatpush1.msra.mxu0 0.0
        %4085 = vmatprep.subr.mxu0 0.0
        %4086 = vmatpush1.msra.mxu0 0.0
        %4087 = vmatprep.subr.mxu0 0.0
        %4088 = vmatpush1.msra.mxu0 0.0
        %4089 = vmatprep.subr.mxu0 0.0
        %4090 = vmatpush1.msra.mxu0 0.0
        %4091 = vmatprep.subr.mxu0 0.0
        %4092 = vmatpush1.msra.mxu0 0.0
        %4093 = vmatprep.subr.mxu0 0.0
        %4094 = vmatpush1.msra.mxu0 0.0
        %4095 = vmatprep.subr.mxu0 0.0
        %4096 = vmatpush1.msra.mxu0 0.0
        %4097 = vmatprep.subr.mxu0 0.0
        %4098 = vmatpush1.msra.mxu0 0.0
        %4099 = vmatprep.subr.mxu0 0.0
        %4100 = vmatpush1.msra.mxu0 0.0
        %4101 = vmatprep.mubr.f32.mxu0 0.0
        %4102 = vmatmul.mubr.f32.gmra.mrb[0].mxu0 %v4014
        %v4103 = vpop.f32.mrb[0].mxu0
        %v4104 = vadd.f32 0.0, %v4103
        %v4105 = vpop.f32.mrb[0].mxu0
        %v4106 = vadd.f32 0.0, %v4105
        %4107 = vmatprep.mubr.f32.mxu0 0.0
        %4108 = vmatmul.mubr.f32.gmra.mrb[0].mxu0 %v4017
        %v4109 = vpop.f32.mrb[0].mxu0
        %v4110 = vadd.f32 0.0, %v4109
        %v4111 = vpop.f32.mrb[0].mxu0
        %v4112 = vadd.f32 0.0, %v4111
        %4113 = vmatprep.mubr.f32.mxu0 0.0
        %4114 = vmatmul.mubr.f32.gmra.mrb[0].mxu0 %v4020
        %v4115 = vpop.f32.mrb[0].mxu0
        %v4116 = vadd.f32 0.0, %v4115
        %v4117 = vpop.f32.mrb[0].mxu0
        %v4118 = vadd.f32 0.0, %v4117
        %4119 = vmatprep.mubr.f32.mxu0 0.0
        %4120 = vmatmul.mubr.f32.gmra.mrb[0].mxu0 %v4023
        %v4121 = vpop.f32.mrb[0].mxu0
        %v4122 = vadd.f32 0.0, %v4121
        %v4123 = vpop.f32.mrb[0].mxu0
        %v4124 = vadd.f32 0.0, %v4123
        %4125 = vmatprep.mubr.f32.mxu0 0.0
        %4126 = vmatmul.mubr.f32.gmra.mrb[0].mxu0 %v4026
        %v4127 = vpop.f32.mrb[0].mxu0
        %v4128 = vadd.f32 0.0, %v4127
        %v4129 = vpop.f32.mrb[0].mxu0
        %v4130 = vadd.f32 0.0, %v4129
        %4131 = vmatprep.mubr.f32.mxu0 0.0
        %4132 = vmatmul.mubr.f32.gmra.mrb[0].mxu0 %v4029
        %v4133 = vpop.f32.mrb[0].mxu0
        %v4134 = vadd.f32 0.0, %v4133
        %v4135 = vpop.f32.mrb[0].mxu0
        %v4136 = vadd.f32 0.0, %v4135
        %4137 = vmatprep.mubr.f32.mxu0 0.0
        %4138 = vmatmul.mubr.f32.gmra.mrb[0].mxu0 %v4032
        %v4139 = vpop.f32.mrb[0].mxu0
        %v4140 = vadd.f32 0.0, %v4139
        %v4141 = vpop.f32.mrb[0].mxu0
        %v4142 = vadd.f32 0.0, %v4141
        %4143 = vmatprep.mubr.f32.mxu0 0.0
        %4144 = vmatmul.mubr.f32.gmra.mrb[0].mxu0 %v4035
        %v4145 = vpop.f32.mrb[0].mxu0
        %v4146 = vadd.f32 0.0, %v4145
        %v4147 = vpop.f32.mrb[0].mxu0
        %v4148 = vadd.f32 0.0, %v4147
        %4149 = vdwg.mxu0
        %v4151 = vsel %vm2372, %v3701, 0
        %v4154 = vsel %vm2372, %v3706, 0
        %v4157 = vsel %vm2372, %v3711, 0
        %v4160 = vsel %vm2372, %v3716, 0
        %v4163 = vsel %vm2372, %v3721, 0
        %v4166 = vsel %vm2372, %v3726, 0
        %v4169 = vsel %vm2372, %v3731, 0
        %v4172 = vsel %vm2372, %v3736, 0
        %4174 = vmatprep.subr.mxu0 %v3966
        %4175 = vmatpush1.msra.mxu0 %v3965
        %4176 = vmatprep.subr.mxu0 %v3968
        %4177 = vmatpush1.msra.mxu0 %v3967
        %4178 = vmatprep.subr.mxu0 %v3970
        %4179 = vmatpush1.msra.mxu0 %v3969
        %4180 = vmatprep.subr.mxu0 %v3972
        %4181 = vmatpush1.msra.mxu0 %v3971
        %4182 = vmatprep.subr.mxu0 %v3974
        %4183 = vmatpush1.msra.mxu0 %v3973
        %4184 = vmatprep.subr.mxu0 %v3976
        %4185 = vmatpush1.msra.mxu0 %v3975
        %4186 = vmatprep.subr.mxu0 %v3978
        %4187 = vmatpush1.msra.mxu0 %v3977
        %4188 = vmatprep.subr.mxu0 %v3980
        %4189 = vmatpush1.msra.mxu0 %v3979
        %4190 = vmatprep.subr.mxu0 0.0
        %4191 = vmatpush1.msra.mxu0 0.0
        %4192 = vmatprep.subr.mxu0 0.0
        %4193 = vmatpush1.msra.mxu0 0.0
        %4194 = vmatprep.subr.mxu0 0.0
        %4195 = vmatpush1.msra.mxu0 0.0
        %4196 = vmatprep.subr.mxu0 0.0
        %4197 = vmatpush1.msra.mxu0 0.0
        %4198 = vmatprep.subr.mxu0 0.0
        %4199 = vmatpush1.msra.mxu0 0.0
        %4200 = vmatprep.subr.mxu0 0.0
        %4201 = vmatpush1.msra.mxu0 0.0
        %4202 = vmatprep.subr.mxu0 0.0
        %4203 = vmatpush1.msra.mxu0 0.0
        %4204 = vmatprep.subr.mxu0 0.0
        %4205 = vmatpush1.msra.mxu0 0.0
        %4206 = vmatprep.subr.mxu0 0.0
        %4207 = vmatpush1.msra.mxu0 0.0
        %4208 = vmatprep.subr.mxu0 0.0
        %4209 = vmatpush1.msra.mxu0 0.0
        %4210 = vmatprep.subr.mxu0 0.0
        %4211 = vmatpush1.msra.mxu0 0.0
        %4212 = vmatprep.subr.mxu0 0.0
        %4213 = vmatpush1.msra.mxu0 0.0
        %4214 = vmatprep.subr.mxu0 0.0
        %4215 = vmatpush1.msra.mxu0 0.0
        %4216 = vmatprep.subr.mxu0 0.0
        %4217 = vmatpush1.msra.mxu0 0.0
        %4218 = vmatprep.subr.mxu0 0.0
        %4219 = vmatpush1.msra.mxu0 0.0
        %4220 = vmatprep.subr.mxu0 0.0
        %4221 = vmatpush1.msra.mxu0 0.0
        %4222 = vmatprep.subr.mxu0 0.0
        %4223 = vmatpush1.msra.mxu0 0.0
        %4224 = vmatprep.subr.mxu0 0.0
        %4225 = vmatpush1.msra.mxu0 0.0
        %4226 = vmatprep.subr.mxu0 0.0
        %4227 = vmatpush1.msra.mxu0 0.0
        %4228 = vmatprep.subr.mxu0 0.0
        %4229 = vmatpush1.msra.mxu0 0.0
        %4230 = vmatprep.subr.mxu0 0.0
        %4231 = vmatpush1.msra.mxu0 0.0
        %4232 = vmatprep.subr.mxu0 0.0
        %4233 = vmatpush1.msra.mxu0 0.0
        %4234 = vmatprep.subr.mxu0 0.0
        %4235 = vmatpush1.msra.mxu0 0.0
        %4236 = vmatprep.subr.mxu0 0.0
        %4237 = vmatpush1.msra.mxu0 0.0
        %4238 = vmatprep.mubr.f32.mxu0 0.0
        %4239 = vmatmul.mubr.f32.gmra.mrb[0].mxu0 %v4151
        %v4240 = vpop.f32.mrb[0].mxu0
        %v4241 = vadd.f32 0.0, %v4240
        %v4242 = vpop.f32.mrb[0].mxu0
        %v4243 = vadd.f32 0.0, %v4242
        %4244 = vmatprep.mubr.f32.mxu0 0.0
        %4245 = vmatmul.mubr.f32.gmra.mrb[0].mxu0 %v4154
        %v4246 = vpop.f32.mrb[0].mxu0
        %v4247 = vadd.f32 0.0, %v4246
        %v4248 = vpop.f32.mrb[0].mxu0
        %v4249 = vadd.f32 0.0, %v4248
        %4250 = vmatprep.mubr.f32.mxu0 0.0
        %4251 = vmatmul.mubr.f32.gmra.mrb[0].mxu0 %v4157
        %v4252 = vpop.f32.mrb[0].mxu0
        %v4253 = vadd.f32 0.0, %v4252
        %v4254 = vpop.f32.mrb[0].mxu0
        %v4255 = vadd.f32 0.0, %v4254
        %4256 = vmatprep.mubr.f32.mxu0 0.0
        %4257 = vmatmul.mubr.f32.gmra.mrb[0].mxu0 %v4160
        %v4258 = vpop.f32.mrb[0].mxu0
        %v4259 = vadd.f32 0.0, %v4258
        %v4260 = vpop.f32.mrb[0].mxu0
        %v4261 = vadd.f32 0.0, %v4260
        %4262 = vmatprep.mubr.f32.mxu0 0.0
        %4263 = vmatmul.mubr.f32.gmra.mrb[0].mxu0 %v4163
        %v4264 = vpop.f32.mrb[0].mxu0
        %v4265 = vadd.f32 0.0, %v4264
        %v4266 = vpop.f32.mrb[0].mxu0
        %v4267 = vadd.f32 0.0, %v4266
        %4268 = vmatprep.mubr.f32.mxu0 0.0
        %4269 = vmatmul.mubr.f32.gmra.mrb[0].mxu0 %v4166
        %v4270 = vpop.f32.mrb[0].mxu0
        %v4271 = vadd.f32 0.0, %v4270
        %v4272 = vpop.f32.mrb[0].mxu0
        %v4273 = vadd.f32 0.0, %v4272
        %4274 = vmatprep.mubr.f32.mxu0 0.0
        %4275 = vmatmul.mubr.f32.gmra.mrb[0].mxu0 %v4169
        %v4276 = vpop.f32.mrb[0].mxu0
        %v4277 = vadd.f32 0.0, %v4276
        %v4278 = vpop.f32.mrb[0].mxu0
        %v4279 = vadd.f32 0.0, %v4278
        %4280 = vmatprep.mubr.f32.mxu0 0.0
        %4281 = vmatmul.mubr.f32.gmra.mrb[0].mxu0 %v4172
        %v4282 = vpop.f32.mrb[0].mxu0
        %v4283 = vadd.f32 0.0, %v4282
        %v4284 = vpop.f32.mrb[0].mxu0
        %v4285 = vadd.f32 0.0, %v4284
        %4286 = vdwg.mxu0
        %v4288 = vsel %vm2372, %v3806, 0
        %v4291 = vsel %vm2372, %v3811, 0
        %v4294 = vsel %vm2372, %v3816, 0
        %v4297 = vsel %vm2372, %v3821, 0
        %v4300 = vsel %vm2372, %v3826, 0
        %v4303 = vsel %vm2372, %v3831, 0
        %v4306 = vsel %vm2372, %v3836, 0
        %v4309 = vsel %vm2372, %v3841, 0
        %4311 = vmatprep.subr.mxu0 %v3982
        %4312 = vmatpush1.msra.mxu0 %v3981
        %4313 = vmatprep.subr.mxu0 %v3984
        %4314 = vmatpush1.msra.mxu0 %v3983
        %4315 = vmatprep.subr.mxu0 %v3986
        %4316 = vmatpush1.msra.mxu0 %v3985
        %4317 = vmatprep.subr.mxu0 %v3988
        %4318 = vmatpush1.msra.mxu0 %v3987
        %4319 = vmatprep.subr.mxu0 %v3990
        %4320 = vmatpush1.msra.mxu0 %v3989
        %4321 = vmatprep.subr.mxu0 %v3992
        %4322 = vmatpush1.msra.mxu0 %v3991
        %4323 = vmatprep.subr.mxu0 %v3994
        %4324 = vmatpush1.msra.mxu0 %v3993
        %4325 = vmatprep.subr.mxu0 %v3996
        %4326 = vmatpush1.msra.mxu0 %v3995
        %4327 = vmatprep.subr.mxu0 0.0
        %4328 = vmatpush1.msra.mxu0 0.0
        %4329 = vmatprep.subr.mxu0 0.0
        %4330 = vmatpush1.msra.mxu0 0.0
        %4331 = vmatprep.subr.mxu0 0.0
        %4332 = vmatpush1.msra.mxu0 0.0
        %4333 = vmatprep.subr.mxu0 0.0
        %4334 = vmatpush1.msra.mxu0 0.0
        %4335 = vmatprep.subr.mxu0 0.0
        %4336 = vmatpush1.msra.mxu0 0.0
        %4337 = vmatprep.subr.mxu0 0.0
        %4338 = vmatpush1.msra.mxu0 0.0
        %4339 = vmatprep.subr.mxu0 0.0
        %4340 = vmatpush1.msra.mxu0 0.0
        %4341 = vmatprep.subr.mxu0 0.0
        %4342 = vmatpush1.msra.mxu0 0.0
        %4343 = vmatprep.subr.mxu0 0.0
        %4344 = vmatpush1.msra.mxu0 0.0
        %4345 = vmatprep.subr.mxu0 0.0
        %4346 = vmatpush1.msra.mxu0 0.0
        %4347 = vmatprep.subr.mxu0 0.0
        %4348 = vmatpush1.msra.mxu0 0.0
        %4349 = vmatprep.subr.mxu0 0.0
        %4350 = vmatpush1.msra.mxu0 0.0
        %4351 = vmatprep.subr.mxu0 0.0
        %4352 = vmatpush1.msra.mxu0 0.0
        %4353 = vmatprep.subr.mxu0 0.0
        %4354 = vmatpush1.msra.mxu0 0.0
        %4355 = vmatprep.subr.mxu0 0.0
        %4356 = vmatpush1.msra.mxu0 0.0
        %4357 = vmatprep.subr.mxu0 0.0
        %4358 = vmatpush1.msra.mxu0 0.0
        %4359 = vmatprep.subr.mxu0 0.0
        %4360 = vmatpush1.msra.mxu0 0.0
        %4361 = vmatprep.subr.mxu0 0.0
        %4362 = vmatpush1.msra.mxu0 0.0
        %4363 = vmatprep.subr.mxu0 0.0
        %4364 = vmatpush1.msra.mxu0 0.0
        %4365 = vmatprep.subr.mxu0 0.0
        %4366 = vmatpush1.msra.mxu0 0.0
        %4367 = vmatprep.subr.mxu0 0.0
        %4368 = vmatpush1.msra.mxu0 0.0
        %4369 = vmatprep.subr.mxu0 0.0
        %4370 = vmatpush1.msra.mxu0 0.0
        %4371 = vmatprep.subr.mxu0 0.0
        %4372 = vmatpush1.msra.mxu0 0.0
        %4373 = vmatprep.subr.mxu0 0.0
        %4374 = vmatpush1.msra.mxu0 0.0
        %4375 = vmatprep.mubr.f32.mxu0 0.0
        %4376 = vmatmul.mubr.f32.gmra.mrb[0].mxu0 %v4288
        %v4377 = vpop.f32.mrb[0].mxu0
        %v4378 = vadd.f32 0.0, %v4377
        %v4379 = vpop.f32.mrb[0].mxu0
        %v4380 = vadd.f32 0.0, %v4379
        %4381 = vmatprep.mubr.f32.mxu0 0.0
        %4382 = vmatmul.mubr.f32.gmra.mrb[0].mxu0 %v4291
        %v4383 = vpop.f32.mrb[0].mxu0
        %v4384 = vadd.f32 0.0, %v4383
        %v4385 = vpop.f32.mrb[0].mxu0
        %v4386 = vadd.f32 0.0, %v4385
        %4387 = vmatprep.mubr.f32.mxu0 0.0
        %4388 = vmatmul.mubr.f32.gmra.mrb[0].mxu0 %v4294
        %v4389 = vpop.f32.mrb[0].mxu0
        %v4390 = vadd.f32 0.0, %v4389
        %v4391 = vpop.f32.mrb[0].mxu0
        %v4392 = vadd.f32 0.0, %v4391
        %4393 = vmatprep.mubr.f32.mxu0 0.0
        %4394 = vmatmul.mubr.f32.gmra.mrb[0].mxu0 %v4297
        %v4395 = vpop.f32.mrb[0].mxu0
        %v4396 = vadd.f32 0.0, %v4395
        %v4397 = vpop.f32.mrb[0].mxu0
        %v4398 = vadd.f32 0.0, %v4397
        %4399 = vmatprep.mubr.f32.mxu0 0.0
        %4400 = vmatmul.mubr.f32.gmra.mrb[0].mxu0 %v4300
        %v4401 = vpop.f32.mrb[0].mxu0
        %v4402 = vadd.f32 0.0, %v4401
        %v4403 = vpop.f32.mrb[0].mxu0
        %v4404 = vadd.f32 0.0, %v4403
        %4405 = vmatprep.mubr.f32.mxu0 0.0
        %4406 = vmatmul.mubr.f32.gmra.mrb[0].mxu0 %v4303
        %v4407 = vpop.f32.mrb[0].mxu0
        %v4408 = vadd.f32 0.0, %v4407
        %v4409 = vpop.f32.mrb[0].mxu0
        %v4410 = vadd.f32 0.0, %v4409
        %4411 = vmatprep.mubr.f32.mxu0 0.0
        %4412 = vmatmul.mubr.f32.gmra.mrb[0].mxu0 %v4306
        %v4413 = vpop.f32.mrb[0].mxu0
        %v4414 = vadd.f32 0.0, %v4413
        %v4415 = vpop.f32.mrb[0].mxu0
        %v4416 = vadd.f32 0.0, %v4415
        %4417 = vmatprep.mubr.f32.mxu0 0.0
        %4418 = vmatmul.mubr.f32.gmra.mrb[0].mxu0 %v4309
        %v4419 = vpop.f32.mrb[0].mxu0
        %v4420 = vadd.f32 0.0, %v4419
        %v4421 = vpop.f32.mrb[0].mxu0
        %v4422 = vadd.f32 0.0, %v4421
        %4423 = vdwg.mxu0
        %v4425 = vsel %vm2372, %v3911, 0
        %v4428 = vsel %vm2372, %v3916, 0
        %v4431 = vsel %vm2372, %v3921, 0
        %v4434 = vsel %vm2372, %v3926, 0
        %v4437 = vsel %vm2372, %v3931, 0
        %v4440 = vsel %vm2372, %v3936, 0
        %v4443 = vsel %vm2372, %v3941, 0
        %v4446 = vsel %vm2372, %v3946, 0
        %4448 = vmatprep.subr.mxu0 %v3998
        %4449 = vmatpush1.msra.mxu0 %v3997
        %4450 = vmatprep.subr.mxu0 %v4000
        %4451 = vmatpush1.msra.mxu0 %v3999
        %4452 = vmatprep.subr.mxu0 %v4002
        %4453 = vmatpush1.msra.mxu0 %v4001
        %4454 = vmatprep.subr.mxu0 %v4004
        %4455 = vmatpush1.msra.mxu0 %v4003
        %4456 = vmatprep.subr.mxu0 %v4006
        %4457 = vmatpush1.msra.mxu0 %v4005
        %4458 = vmatprep.subr.mxu0 %v4008
        %4459 = vmatpush1.msra.mxu0 %v4007
        %4460 = vmatprep.subr.mxu0 %v4010
        %4461 = vmatpush1.msra.mxu0 %v4009
        %4462 = vmatprep.subr.mxu0 %v4012
        %4463 = vmatpush1.msra.mxu0 %v4011
        %4464 = vmatprep.subr.mxu0 0.0
        %4465 = vmatpush1.msra.mxu0 0.0
        %4466 = vmatprep.subr.mxu0 0.0
        %4467 = vmatpush1.msra.mxu0 0.0
        %4468 = vmatprep.subr.mxu0 0.0
        %4469 = vmatpush1.msra.mxu0 0.0
        %4470 = vmatprep.subr.mxu0 0.0
        %4471 = vmatpush1.msra.mxu0 0.0
        %4472 = vmatprep.subr.mxu0 0.0
        %4473 = vmatpush1.msra.mxu0 0.0
        %4474 = vmatprep.subr.mxu0 0.0
        %4475 = vmatpush1.msra.mxu0 0.0
        %4476 = vmatprep.subr.mxu0 0.0
        %4477 = vmatpush1.msra.mxu0 0.0
        %4478 = vmatprep.subr.mxu0 0.0
        %4479 = vmatpush1.msra.mxu0 0.0
        %4480 = vmatprep.subr.mxu0 0.0
        %4481 = vmatpush1.msra.mxu0 0.0
        %4482 = vmatprep.subr.mxu0 0.0
        %4483 = vmatpush1.msra.mxu0 0.0
        %4484 = vmatprep.subr.mxu0 0.0
        %4485 = vmatpush1.msra.mxu0 0.0
        %4486 = vmatprep.subr.mxu0 0.0
        %4487 = vmatpush1.msra.mxu0 0.0
        %4488 = vmatprep.subr.mxu0 0.0
        %4489 = vmatpush1.msra.mxu0 0.0
        %4490 = vmatprep.subr.mxu0 0.0
        %4491 = vmatpush1.msra.mxu0 0.0
        %4492 = vmatprep.subr.mxu0 0.0
        %4493 = vmatpush1.msra.mxu0 0.0
        %4494 = vmatprep.subr.mxu0 0.0
        %4495 = vmatpush1.msra.mxu0 0.0
        %4496 = vmatprep.subr.mxu0 0.0
        %4497 = vmatpush1.msra.mxu0 0.0
        %4498 = vmatprep.subr.mxu0 0.0
        %4499 = vmatpush1.msra.mxu0 0.0
        %4500 = vmatprep.subr.mxu0 0.0
        %4501 = vmatpush1.msra.mxu0 0.0
        %4502 = vmatprep.subr.mxu0 0.0
        %4503 = vmatpush1.msra.mxu0 0.0
        %4504 = vmatprep.subr.mxu0 0.0
        %4505 = vmatpush1.msra.mxu0 0.0
        %4506 = vmatprep.subr.mxu0 0.0
        %4507 = vmatpush1.msra.mxu0 0.0
        %4508 = vmatprep.subr.mxu0 0.0
        %4509 = vmatpush1.msra.mxu0 0.0
        %4510 = vmatprep.subr.mxu0 0.0
        %4511 = vmatpush1.msra.mxu0 0.0
        %4512 = vmatprep.mubr.f32.mxu0 0.0
        %4513 = vmatmul.mubr.f32.gmra.mrb[0].mxu0 %v4425
        %v4514 = vpop.f32.mrb[0].mxu0
        %v4515 = vadd.f32 0.0, %v4514
        %v4516 = vpop.f32.mrb[0].mxu0
        %v4517 = vadd.f32 0.0, %v4516
        %4518 = vmatprep.mubr.f32.mxu0 0.0
        %4519 = vmatmul.mubr.f32.gmra.mrb[0].mxu0 %v4428
        %v4520 = vpop.f32.mrb[0].mxu0
        %v4521 = vadd.f32 0.0, %v4520
        %v4522 = vpop.f32.mrb[0].mxu0
        %v4523 = vadd.f32 0.0, %v4522
        %4524 = vmatprep.mubr.f32.mxu0 0.0
        %4525 = vmatmul.mubr.f32.gmra.mrb[0].mxu0 %v4431
        %v4526 = vpop.f32.mrb[0].mxu0
        %v4527 = vadd.f32 0.0, %v4526
        %v4528 = vpop.f32.mrb[0].mxu0
        %v4529 = vadd.f32 0.0, %v4528
        %4530 = vmatprep.mubr.f32.mxu0 0.0
        %4531 = vmatmul.mubr.f32.gmra.mrb[0].mxu0 %v4434
        %v4532 = vpop.f32.mrb[0].mxu0
        %v4533 = vadd.f32 0.0, %v4532
        %v4534 = vpop.f32.mrb[0].mxu0
        %v4535 = vadd.f32 0.0, %v4534
        %4536 = vmatprep.mubr.f32.mxu0 0.0
        %4537 = vmatmul.mubr.f32.gmra.mrb[0].mxu0 %v4437
        %v4538 = vpop.f32.mrb[0].mxu0
        %v4539 = vadd.f32 0.0, %v4538
        %v4540 = vpop.f32.mrb[0].mxu0
        %v4541 = vadd.f32 0.0, %v4540
        %4542 = vmatprep.mubr.f32.mxu0 0.0
        %4543 = vmatmul.mubr.f32.gmra.mrb[0].mxu0 %v4440
        %v4544 = vpop.f32.mrb[0].mxu0
        %v4545 = vadd.f32 0.0, %v4544
        %v4546 = vpop.f32.mrb[0].mxu0
        %v4547 = vadd.f32 0.0, %v4546
        %4548 = vmatprep.mubr.f32.mxu0 0.0
        %4549 = vmatmul.mubr.f32.gmra.mrb[0].mxu0 %v4443
        %v4550 = vpop.f32.mrb[0].mxu0
        %v4551 = vadd.f32 0.0, %v4550
        %v4552 = vpop.f32.mrb[0].mxu0
        %v4553 = vadd.f32 0.0, %v4552
        %4554 = vmatprep.mubr.f32.mxu0 0.0
        %4555 = vmatmul.mubr.f32.gmra.mrb[0].mxu0 %v4446
        %v4556 = vpop.f32.mrb[0].mxu0
        %v4557 = vadd.f32 0.0, %v4556
        %v4558 = vpop.f32.mrb[0].mxu0
        %v4559 = vadd.f32 0.0, %v4558
        %4560 = vdwg.mxu0
        %v4561 = vadd.f32 %v4104, %v4241
        %v4562 = vadd.f32 %v4561, %v4378
        %v4563 = vadd.f32 %v4562, %v4515
        %v4564 = vadd.f32 %v4106, %v4243
        %v4565 = vadd.f32 %v4564, %v4380
        %v4566 = vadd.f32 %v4565, %v4517
        %v4567 = vadd.f32 %v4110, %v4247
        %v4568 = vadd.f32 %v4567, %v4384
        %v4569 = vadd.f32 %v4568, %v4521
        %v4570 = vadd.f32 %v4112, %v4249
        %v4571 = vadd.f32 %v4570, %v4386
        %v4572 = vadd.f32 %v4571, %v4523
        %v4573 = vadd.f32 %v4116, %v4253
        %v4574 = vadd.f32 %v4573, %v4390
        %v4575 = vadd.f32 %v4574, %v4527
        %v4576 = vadd.f32 %v4118, %v4255
        %v4577 = vadd.f32 %v4576, %v4392
        %v4578 = vadd.f32 %v4577, %v4529
        %v4579 = vadd.f32 %v4122, %v4259
        %v4580 = vadd.f32 %v4579, %v4396
        %v4581 = vadd.f32 %v4580, %v4533
        %v4582 = vadd.f32 %v4124, %v4261
        %v4583 = vadd.f32 %v4582, %v4398
        %v4584 = vadd.f32 %v4583, %v4535
        %v4585 = vadd.f32 %v4128, %v4265
        %v4586 = vadd.f32 %v4585, %v4402
        %v4587 = vadd.f32 %v4586, %v4539
        %v4588 = vadd.f32 %v4130, %v4267
        %v4589 = vadd.f32 %v4588, %v4404
        %v4590 = vadd.f32 %v4589, %v4541
        %v4591 = vadd.f32 %v4134, %v4271
        %v4592 = vadd.f32 %v4591, %v4408
        %v4593 = vadd.f32 %v4592, %v4545
        %v4594 = vadd.f32 %v4136, %v4273
        %v4595 = vadd.f32 %v4594, %v4410
        %v4596 = vadd.f32 %v4595, %v4547
        %v4597 = vadd.f32 %v4140, %v4277
        %v4598 = vadd.f32 %v4597, %v4414
        %v4599 = vadd.f32 %v4598, %v4551
        %v4600 = vadd.f32 %v4142, %v4279
        %v4601 = vadd.f32 %v4600, %v4416
        %v4602 = vadd.f32 %v4601, %v4553
        %v4603 = vadd.f32 %v4146, %v4283
        %v4604 = vadd.f32 %v4603, %v4420
        %v4605 = vadd.f32 %v4604, %v4557
        %v4606 = vadd.f32 %v4148, %v4285
        %v4607 = vadd.f32 %v4606, %v4422
        %v4608 = vadd.f32 %v4607, %v4559
        %v4609 = vld [vmem:[%s7] sm:$0x3]
        %v4611 = vlaneseq
        %v4612 = vshrl.u32 %v4611, 7
        %v4613 = vsub.s32 0, %v4612
        %v4614 = vrot.slane %v4609, %v4613
        %v4615 = vlaneseq
        %v4616 = vshrl.u32 %v4615, 7
        %v4617 = vsub.s32 1, %v4616
        %v4618 = vrot.slane %v4609, %v4617
        %v4621 = vadd.f32 %v4563, %v4614
        %v4622 = vadd.f32 %v4566, %v4618
        %v4623 = vadd.f32 %v4569, %v4614
        %v4624 = vadd.f32 %v4572, %v4618
        %v4625 = vadd.f32 %v4575, %v4614
        %v4626 = vadd.f32 %v4578, %v4618
        %v4627 = vadd.f32 %v4581, %v4614
        %v4628 = vadd.f32 %v4584, %v4618
        %v4629 = vadd.f32 %v4587, %v4614
        %v4630 = vadd.f32 %v4590, %v4618
        %v4631 = vadd.f32 %v4593, %v4614
        %v4632 = vadd.f32 %v4596, %v4618
        %v4633 = vadd.f32 %v4599, %v4614
        %v4634 = vadd.f32 %v4602, %v4618
        %v4635 = vadd.f32 %v4605, %v4614
        %v4636 = vadd.f32 %v4608, %v4618
        %v4637 = vadd.f32 %v1882, %v4621
        %v4638 = vadd.f32 %v1883, %v4622
        %v4639 = vadd.f32 %v1884, %v4623
        %v4640 = vadd.f32 %v1885, %v4624
        %v4641 = vadd.f32 %v1886, %v4625
        %v4642 = vadd.f32 %v1887, %v4626
        %v4643 = vadd.f32 %v1888, %v4627
        %v4644 = vadd.f32 %v1889, %v4628
        %v4645 = vadd.f32 %v1890, %v4629
        %v4646 = vadd.f32 %v1891, %v4630
        %v4647 = vadd.f32 %v1892, %v4631
        %v4648 = vadd.f32 %v1893, %v4632
        %v4649 = vadd.f32 %v1894, %v4633
        %v4650 = vadd.f32 %v1895, %v4634
        %v4651 = vadd.f32 %v1896, %v4635
        %v4652 = vadd.f32 %v1897, %v4636
        %v4653 = vld [vmem:[%s8] sm:$0x3]
        %v4654 = vld [vmem:[%s9] sm:$0x3]
        %v4655 = vadd.f32 %v4637, %v4638
        %4656 = vadd.xlane.f32.xlu0 %v4655
        %v4657 = vpop.xlane.xlu0 %4656
        %v4658 = vadd.f32 %v4639, %v4640
        %4659 = vadd.xlane.f32.xlu0 %v4658
        %v4660 = vpop.xlane.xlu0 %4659
        %v4661 = vadd.f32 %v4641, %v4642
        %4662 = vadd.xlane.f32.xlu0 %v4661
        %v4663 = vpop.xlane.xlu0 %4662
        %v4664 = vadd.f32 %v4643, %v4644
        %4665 = vadd.xlane.f32.xlu0 %v4664
        %v4666 = vpop.xlane.xlu0 %4665
        %v4667 = vadd.f32 %v4645, %v4646
        %4668 = vadd.xlane.f32.xlu0 %v4667
        %v4669 = vpop.xlane.xlu0 %4668
        %v4670 = vadd.f32 %v4647, %v4648
        %4671 = vadd.xlane.f32.xlu0 %v4670
        %v4672 = vpop.xlane.xlu0 %4671
        %v4673 = vadd.f32 %v4649, %v4650
        %4674 = vadd.xlane.f32.xlu0 %v4673
        %v4675 = vpop.xlane.xlu0 %4674
        %v4676 = vadd.f32 %v4651, %v4652
        %4677 = vadd.xlane.f32.xlu0 %v4676
        %v4678 = vpop.xlane.xlu0 %4677
        %v4679 = vmul.f32 %v4657, %v1924
        %v4680 = vmul.f32 %v4660, %v1924
        %v4681 = vmul.f32 %v4663, %v1924
        %v4682 = vmul.f32 %v4666, %v1924
        %v4683 = vmul.f32 %v4669, %v1924
        %v4684 = vmul.f32 %v4672, %v1924
        %v4685 = vmul.f32 %v4675, %v1924
        %v4686 = vmul.f32 %v4678, %v1924
        %v4687 = vsub.f32 %v4637, %v4679
        %v4688 = vsub.f32 %v4638, %v4679
        %v4689 = vsub.f32 %v4639, %v4680
        %v4690 = vsub.f32 %v4640, %v4680
        %v4691 = vsub.f32 %v4641, %v4681
        %v4692 = vsub.f32 %v4642, %v4681
        %v4693 = vsub.f32 %v4643, %v4682
        %v4694 = vsub.f32 %v4644, %v4682
        %v4695 = vsub.f32 %v4645, %v4683
        %v4696 = vsub.f32 %v4646, %v4683
        %v4697 = vsub.f32 %v4647, %v4684
        %v4698 = vsub.f32 %v4648, %v4684
        %v4699 = vsub.f32 %v4649, %v4685
        %v4700 = vsub.f32 %v4650, %v4685
        %v4701 = vsub.f32 %v4651, %v4686
        %v4702 = vsub.f32 %v4652, %v4686
        %v4703 = vmul.f32 %v4687, %v4687
        %v4704 = vmul.f32 %v4688, %v4688
        %v4705 = vmul.f32 %v4689, %v4689
        %v4706 = vmul.f32 %v4690, %v4690
        %v4707 = vmul.f32 %v4691, %v4691
        %v4708 = vmul.f32 %v4692, %v4692
        %v4709 = vmul.f32 %v4693, %v4693
        %v4710 = vmul.f32 %v4694, %v4694
        %v4711 = vmul.f32 %v4695, %v4695
        %v4712 = vmul.f32 %v4696, %v4696
        %v4713 = vmul.f32 %v4697, %v4697
        %v4714 = vmul.f32 %v4698, %v4698
        %v4715 = vmul.f32 %v4699, %v4699
        %v4716 = vmul.f32 %v4700, %v4700
        %v4717 = vmul.f32 %v4701, %v4701
        %v4718 = vmul.f32 %v4702, %v4702
        %v4719 = vadd.f32 %v4703, %v4704
        %4720 = vadd.xlane.f32.xlu0 %v4719
        %v4721 = vpop.xlane.xlu0 %4720
        %v4722 = vadd.f32 %v4705, %v4706
        %4723 = vadd.xlane.f32.xlu0 %v4722
        %v4724 = vpop.xlane.xlu0 %4723
        %v4725 = vadd.f32 %v4707, %v4708
        %4726 = vadd.xlane.f32.xlu0 %v4725
        %v4727 = vpop.xlane.xlu0 %4726
        %v4728 = vadd.f32 %v4709, %v4710
        %4729 = vadd.xlane.f32.xlu0 %v4728
        %v4730 = vpop.xlane.xlu0 %4729
        %v4731 = vadd.f32 %v4711, %v4712
        %4732 = vadd.xlane.f32.xlu0 %v4731
        %v4733 = vpop.xlane.xlu0 %4732
        %v4734 = vadd.f32 %v4713, %v4714
        %4735 = vadd.xlane.f32.xlu0 %v4734
        %v4736 = vpop.xlane.xlu0 %4735
        %v4737 = vadd.f32 %v4715, %v4716
        %4738 = vadd.xlane.f32.xlu0 %v4737
        %v4739 = vpop.xlane.xlu0 %4738
        %v4740 = vadd.f32 %v4717, %v4718
        %4741 = vadd.xlane.f32.xlu0 %v4740
        %v4742 = vpop.xlane.xlu0 %4741
        %v4743 = vmul.f32 %v4721, %v1924
        %v4744 = vmul.f32 %v4724, %v1924
        %v4745 = vmul.f32 %v4727, %v1924
        %v4746 = vmul.f32 %v4730, %v1924
        %v4747 = vmul.f32 %v4733, %v1924
        %v4748 = vmul.f32 %v4736, %v1924
        %v4749 = vmul.f32 %v4739, %v1924
        %v4750 = vmul.f32 %v4742, %v1924
        %v4751 = vadd.f32 %v4743, 1e-06
        %v4752 = vadd.f32 %v4744, 1e-06
        %v4753 = vadd.f32 %v4745, 1e-06
        %v4754 = vadd.f32 %v4746, 1e-06
        %v4755 = vadd.f32 %v4747, 1e-06
        %v4756 = vadd.f32 %v4748, 1e-06
        %v4757 = vadd.f32 %v4749, 1e-06
        %v4758 = vadd.f32 %v4750, 1e-06
        %v4759 = vrsqrt.pop %v4751
        %v4760 = vrsqrt.pop %v4752
        %v4761 = vrsqrt.pop %v4753
        %v4762 = vrsqrt.pop %v4754
        %v4763 = vrsqrt.pop %v4755
        %v4764 = vrsqrt.pop %v4756
        %v4765 = vrsqrt.pop %v4757
        %v4766 = vrsqrt.pop %v4758
        %v4767 = vmul.f32 %v4687, %v4759
        %v4768 = vmul.f32 %v4688, %v4759
        %v4769 = vmul.f32 %v4689, %v4760
        %v4770 = vmul.f32 %v4690, %v4760
        %v4771 = vmul.f32 %v4691, %v4761
        %v4772 = vmul.f32 %v4692, %v4761
        %v4773 = vmul.f32 %v4693, %v4762
        %v4774 = vmul.f32 %v4694, %v4762
        %v4775 = vmul.f32 %v4695, %v4763
        %v4776 = vmul.f32 %v4696, %v4763
        %v4777 = vmul.f32 %v4697, %v4764
        %v4778 = vmul.f32 %v4698, %v4764
        %v4779 = vmul.f32 %v4699, %v4765
        %v4780 = vmul.f32 %v4700, %v4765
        %v4781 = vmul.f32 %v4701, %v4766
        %v4782 = vmul.f32 %v4702, %v4766
        %v4784 = vlaneseq
        %v4785 = vshrl.u32 %v4784, 7
        %v4786 = vsub.s32 0, %v4785
        %v4787 = vrot.slane %v4653, %v4786
        %v4788 = vlaneseq
        %v4789 = vshrl.u32 %v4788, 7
        %v4790 = vsub.s32 1, %v4789
        %v4791 = vrot.slane %v4653, %v4790
        %v4794 = vmul.f32 %v4767, %v4787
        %v4795 = vmul.f32 %v4768, %v4791
        %v4796 = vmul.f32 %v4769, %v4787
        %v4797 = vmul.f32 %v4770, %v4791
        %v4798 = vmul.f32 %v4771, %v4787
        %v4799 = vmul.f32 %v4772, %v4791
        %v4800 = vmul.f32 %v4773, %v4787
        %v4801 = vmul.f32 %v4774, %v4791
        %v4802 = vmul.f32 %v4775, %v4787
        %v4803 = vmul.f32 %v4776, %v4791
        %v4804 = vmul.f32 %v4777, %v4787
        %v4805 = vmul.f32 %v4778, %v4791
        %v4806 = vmul.f32 %v4779, %v4787
        %v4807 = vmul.f32 %v4780, %v4791
        %v4808 = vmul.f32 %v4781, %v4787
        %v4809 = vmul.f32 %v4782, %v4791
        %v4811 = vlaneseq
        %v4812 = vshrl.u32 %v4811, 7
        %v4813 = vsub.s32 0, %v4812
        %v4814 = vrot.slane %v4654, %v4813
        %v4815 = vlaneseq
        %v4816 = vshrl.u32 %v4815, 7
        %v4817 = vsub.s32 1, %v4816
        %v4818 = vrot.slane %v4654, %v4817
        %v4821 = vadd.f32 %v4794, %v4814
        %v4822 = vadd.f32 %v4795, %v4818
        %v4823 = vadd.f32 %v4796, %v4814
        %v4824 = vadd.f32 %v4797, %v4818
        %v4825 = vadd.f32 %v4798, %v4814
        %v4826 = vadd.f32 %v4799, %v4818
        %v4827 = vadd.f32 %v4800, %v4814
        %v4828 = vadd.f32 %v4801, %v4818
        %v4829 = vadd.f32 %v4802, %v4814
        %v4830 = vadd.f32 %v4803, %v4818
        %v4831 = vadd.f32 %v4804, %v4814
        %v4832 = vadd.f32 %v4805, %v4818
        %v4833 = vadd.f32 %v4806, %v4814
        %v4834 = vadd.f32 %v4807, %v4818
        %v4835 = vadd.f32 %v4808, %v4814
        %v4836 = vadd.f32 %v4809, %v4818
        %v4837 = vld [vmem:[#allocation13] sm:$0xff]
        %v4838 = vld [vmem:[#allocation13 + $0x8] sm:$0xff]
        %v4839 = vld [vmem:[#allocation13 + $0x10] sm:$0xff]
        %v4840 = vld [vmem:[#allocation13 + $0x18] sm:$0xff]
        %v4841 = vld [vmem:[#allocation13 + $0x20] sm:$0xff]
        %v4842 = vld [vmem:[#allocation13 + $0x28] sm:$0xff]
        %v4843 = vld [vmem:[#allocation13 + $0x30] sm:$0xff]
        %v4844 = vld [vmem:[#allocation13 + $0x38] sm:$0xff]
        %v4845 = vld [vmem:[#allocation13 + $0x40] sm:$0xff]
        %v4846 = vld [vmem:[#allocation13 + $0x48] sm:$0xff]
        %v4847 = vld [vmem:[#allocation13 + $0x50] sm:$0xff]
        %v4848 = vld [vmem:[#allocation13 + $0x58] sm:$0xff]
        %v4849 = vld [vmem:[#allocation13 + $0x60] sm:$0xff]
        %v4850 = vld [vmem:[#allocation13 + $0x68] sm:$0xff]
        %v4851 = vld [vmem:[#allocation13 + $0x70] sm:$0xff]
        %v4852 = vld [vmem:[#allocation13 + $0x78] sm:$0xff]
        %v4853 = vld [vmem:[#allocation13 + $0x80] sm:$0xff]
        %v4854 = vld [vmem:[#allocation13 + $0x88] sm:$0xff]
        %v4855 = vld [vmem:[#allocation13 + $0x90] sm:$0xff]
        %v4856 = vld [vmem:[#allocation13 + $0x98] sm:$0xff]
        %v4857 = vld [vmem:[#allocation13 + $0xa0] sm:$0xff]
        %v4858 = vld [vmem:[#allocation13 + $0xa8] sm:$0xff]
        %v4859 = vld [vmem:[#allocation13 + $0xb0] sm:$0xff]
        %v4860 = vld [vmem:[#allocation13 + $0xb8] sm:$0xff]
        %v4861 = vld [vmem:[#allocation13 + $0xc0] sm:$0xff]
        %v4862 = vld [vmem:[#allocation13 + $0xc8] sm:$0xff]
        %v4863 = vld [vmem:[#allocation13 + $0xd0] sm:$0xff]
        %v4864 = vld [vmem:[#allocation13 + $0xd8] sm:$0xff]
        %v4865 = vld [vmem:[#allocation13 + $0xe0] sm:$0xff]
        %v4866 = vld [vmem:[#allocation13 + $0xe8] sm:$0xff]
        %v4867 = vld [vmem:[#allocation13 + $0xf0] sm:$0xff]
        %v4868 = vld [vmem:[#allocation13 + $0xf8] sm:$0xff]
        %v4869 = vld [vmem:[#allocation13 + $0x100] sm:$0xff]
        %v4870 = vld [vmem:[#allocation13 + $0x108] sm:$0xff]
        %v4871 = vld [vmem:[#allocation13 + $0x110] sm:$0xff]
        %v4872 = vld [vmem:[#allocation13 + $0x118] sm:$0xff]
        %v4873 = vld [vmem:[#allocation13 + $0x120] sm:$0xff]
        %v4874 = vld [vmem:[#allocation13 + $0x128] sm:$0xff]
        %v4875 = vld [vmem:[#allocation13 + $0x130] sm:$0xff]
        %v4876 = vld [vmem:[#allocation13 + $0x138] sm:$0xff]
        %v4877 = vld [vmem:[#allocation13 + $0x140] sm:$0xff]
        %v4878 = vld [vmem:[#allocation13 + $0x148] sm:$0xff]
        %v4879 = vld [vmem:[#allocation13 + $0x150] sm:$0xff]
        %v4880 = vld [vmem:[#allocation13 + $0x158] sm:$0xff]
        %v4881 = vld [vmem:[#allocation13 + $0x160] sm:$0xff]
        %v4882 = vld [vmem:[#allocation13 + $0x168] sm:$0xff]
        %v4883 = vld [vmem:[#allocation13 + $0x170] sm:$0xff]
        %v4884 = vld [vmem:[#allocation13 + $0x178] sm:$0xff]
        %v4885 = vld [vmem:[#allocation13 + $0x180] sm:$0xff]
        %v4886 = vld [vmem:[#allocation13 + $0x188] sm:$0xff]
        %v4887 = vld [vmem:[#allocation13 + $0x190] sm:$0xff]
        %v4888 = vld [vmem:[#allocation13 + $0x198] sm:$0xff]
        %v4889 = vld [vmem:[#allocation13 + $0x1a0] sm:$0xff]
        %v4890 = vld [vmem:[#allocation13 + $0x1a8] sm:$0xff]
        %v4891 = vld [vmem:[#allocation13 + $0x1b0] sm:$0xff]
        %v4892 = vld [vmem:[#allocation13 + $0x1b8] sm:$0xff]
        %v4893 = vld [vmem:[#allocation13 + $0x1c0] sm:$0xff]
        %v4894 = vld [vmem:[#allocation13 + $0x1c8] sm:$0xff]
        %v4895 = vld [vmem:[#allocation13 + $0x1d0] sm:$0xff]
        %v4896 = vld [vmem:[#allocation13 + $0x1d8] sm:$0xff]
        %v4897 = vld [vmem:[#allocation13 + $0x1e0] sm:$0xff]
        %v4898 = vld [vmem:[#allocation13 + $0x1e8] sm:$0xff]
        %v4899 = vld [vmem:[#allocation13 + $0x1f0] sm:$0xff]
        %v4900 = vld [vmem:[#allocation13 + $0x1f8] sm:$0xff]
        %v4901 = vld [vmem:[#allocation13 + $0x200] sm:$0xff]
        %v4902 = vld [vmem:[#allocation13 + $0x208] sm:$0xff]
        %v4903 = vld [vmem:[#allocation13 + $0x210] sm:$0xff]
        %v4904 = vld [vmem:[#allocation13 + $0x218] sm:$0xff]
        %v4905 = vld [vmem:[#allocation13 + $0x220] sm:$0xff]
        %v4906 = vld [vmem:[#allocation13 + $0x228] sm:$0xff]
        %v4907 = vld [vmem:[#allocation13 + $0x230] sm:$0xff]
        %v4908 = vld [vmem:[#allocation13 + $0x238] sm:$0xff]
        %v4909 = vld [vmem:[#allocation13 + $0x240] sm:$0xff]
        %v4910 = vld [vmem:[#allocation13 + $0x248] sm:$0xff]
        %v4911 = vld [vmem:[#allocation13 + $0x250] sm:$0xff]
        %v4912 = vld [vmem:[#allocation13 + $0x258] sm:$0xff]
        %v4913 = vld [vmem:[#allocation13 + $0x260] sm:$0xff]
        %v4914 = vld [vmem:[#allocation13 + $0x268] sm:$0xff]
        %v4915 = vld [vmem:[#allocation13 + $0x270] sm:$0xff]
        %v4916 = vld [vmem:[#allocation13 + $0x278] sm:$0xff]
        %v4917 = vld [vmem:[#allocation13 + $0x280] sm:$0xff]
        %v4918 = vld [vmem:[#allocation13 + $0x288] sm:$0xff]
        %v4919 = vld [vmem:[#allocation13 + $0x290] sm:$0xff]
        %v4920 = vld [vmem:[#allocation13 + $0x298] sm:$0xff]
        %v4921 = vld [vmem:[#allocation13 + $0x2a0] sm:$0xff]
        %v4922 = vld [vmem:[#allocation13 + $0x2a8] sm:$0xff]
        %v4923 = vld [vmem:[#allocation13 + $0x2b0] sm:$0xff]
        %v4924 = vld [vmem:[#allocation13 + $0x2b8] sm:$0xff]
        %v4925 = vld [vmem:[#allocation13 + $0x2c0] sm:$0xff]
        %v4926 = vld [vmem:[#allocation13 + $0x2c8] sm:$0xff]
        %v4927 = vld [vmem:[#allocation13 + $0x2d0] sm:$0xff]
        %v4928 = vld [vmem:[#allocation13 + $0x2d8] sm:$0xff]
        %v4929 = vld [vmem:[#allocation13 + $0x2e0] sm:$0xff]
        %v4930 = vld [vmem:[#allocation13 + $0x2e8] sm:$0xff]
        %v4931 = vld [vmem:[#allocation13 + $0x2f0] sm:$0xff]
        %v4932 = vld [vmem:[#allocation13 + $0x2f8] sm:$0xff]
        %v4933 = vld [vmem:[#allocation13 + $0x300] sm:$0xff]
        %v4934 = vld [vmem:[#allocation13 + $0x308] sm:$0xff]
        %v4935 = vld [vmem:[#allocation13 + $0x310] sm:$0xff]
        %v4936 = vld [vmem:[#allocation13 + $0x318] sm:$0xff]
        %v4937 = vld [vmem:[#allocation13 + $0x320] sm:$0xff]
        %v4938 = vld [vmem:[#allocation13 + $0x328] sm:$0xff]
        %v4939 = vld [vmem:[#allocation13 + $0x330] sm:$0xff]
        %v4940 = vld [vmem:[#allocation13 + $0x338] sm:$0xff]
        %v4941 = vld [vmem:[#allocation13 + $0x340] sm:$0xff]
        %v4942 = vld [vmem:[#allocation13 + $0x348] sm:$0xff]
        %v4943 = vld [vmem:[#allocation13 + $0x350] sm:$0xff]
        %v4944 = vld [vmem:[#allocation13 + $0x358] sm:$0xff]
        %v4945 = vld [vmem:[#allocation13 + $0x360] sm:$0xff]
        %v4946 = vld [vmem:[#allocation13 + $0x368] sm:$0xff]
        %v4947 = vld [vmem:[#allocation13 + $0x370] sm:$0xff]
        %v4948 = vld [vmem:[#allocation13 + $0x378] sm:$0xff]
        %v4949 = vld [vmem:[#allocation13 + $0x380] sm:$0xff]
        %v4950 = vld [vmem:[#allocation13 + $0x388] sm:$0xff]
        %v4951 = vld [vmem:[#allocation13 + $0x390] sm:$0xff]
        %v4952 = vld [vmem:[#allocation13 + $0x398] sm:$0xff]
        %v4953 = vld [vmem:[#allocation13 + $0x3a0] sm:$0xff]
        %v4954 = vld [vmem:[#allocation13 + $0x3a8] sm:$0xff]
        %v4955 = vld [vmem:[#allocation13 + $0x3b0] sm:$0xff]
        %v4956 = vld [vmem:[#allocation13 + $0x3b8] sm:$0xff]
        %v4957 = vld [vmem:[#allocation13 + $0x3c0] sm:$0xff]
        %v4958 = vld [vmem:[#allocation13 + $0x3c8] sm:$0xff]
        %v4959 = vld [vmem:[#allocation13 + $0x3d0] sm:$0xff]
        %v4960 = vld [vmem:[#allocation13 + $0x3d8] sm:$0xff]
        %v4961 = vld [vmem:[#allocation13 + $0x3e0] sm:$0xff]
        %v4962 = vld [vmem:[#allocation13 + $0x3e8] sm:$0xff]
        %v4963 = vld [vmem:[#allocation13 + $0x3f0] sm:$0xff]
        %v4964 = vld [vmem:[#allocation13 + $0x3f8] sm:$0xff]
        %v4965 = vld [vmem:[#allocation13 + $0x400] sm:$0xff]
        %v4966 = vld [vmem:[#allocation13 + $0x408] sm:$0xff]
        %v4967 = vld [vmem:[#allocation13 + $0x410] sm:$0xff]
        %v4968 = vld [vmem:[#allocation13 + $0x418] sm:$0xff]
        %v4969 = vld [vmem:[#allocation13 + $0x420] sm:$0xff]
        %v4970 = vld [vmem:[#allocation13 + $0x428] sm:$0xff]
        %v4971 = vld [vmem:[#allocation13 + $0x430] sm:$0xff]
        %v4972 = vld [vmem:[#allocation13 + $0x438] sm:$0xff]
        %v4973 = vld [vmem:[#allocation13 + $0x440] sm:$0xff]
        %v4974 = vld [vmem:[#allocation13 + $0x448] sm:$0xff]
        %v4975 = vld [vmem:[#allocation13 + $0x450] sm:$0xff]
        %v4976 = vld [vmem:[#allocation13 + $0x458] sm:$0xff]
        %v4977 = vld [vmem:[#allocation13 + $0x460] sm:$0xff]
        %v4978 = vld [vmem:[#allocation13 + $0x468] sm:$0xff]
        %v4979 = vld [vmem:[#allocation13 + $0x470] sm:$0xff]
        %v4980 = vld [vmem:[#allocation13 + $0x478] sm:$0xff]
        %v4981 = vld [vmem:[#allocation13 + $0x480] sm:$0xff]
        %v4982 = vld [vmem:[#allocation13 + $0x488] sm:$0xff]
        %v4983 = vld [vmem:[#allocation13 + $0x490] sm:$0xff]
        %v4984 = vld [vmem:[#allocation13 + $0x498] sm:$0xff]
        %v4985 = vld [vmem:[#allocation13 + $0x4a0] sm:$0xff]
        %v4986 = vld [vmem:[#allocation13 + $0x4a8] sm:$0xff]
        %v4987 = vld [vmem:[#allocation13 + $0x4b0] sm:$0xff]
        %v4988 = vld [vmem:[#allocation13 + $0x4b8] sm:$0xff]
        %v4989 = vld [vmem:[#allocation13 + $0x4c0] sm:$0xff]
        %v4990 = vld [vmem:[#allocation13 + $0x4c8] sm:$0xff]
        %v4991 = vld [vmem:[#allocation13 + $0x4d0] sm:$0xff]
        %v4992 = vld [vmem:[#allocation13 + $0x4d8] sm:$0xff]
        %v4993 = vld [vmem:[#allocation13 + $0x4e0] sm:$0xff]
        %v4994 = vld [vmem:[#allocation13 + $0x4e8] sm:$0xff]
        %v4995 = vld [vmem:[#allocation13 + $0x4f0] sm:$0xff]
        %v4996 = vld [vmem:[#allocation13 + $0x4f8] sm:$0xff]
        %v4997 = vld [vmem:[#allocation13 + $0x500] sm:$0xff]
        %v4998 = vld [vmem:[#allocation13 + $0x508] sm:$0xff]
        %v4999 = vld [vmem:[#allocation13 + $0x510] sm:$0xff]
        %v5000 = vld [vmem:[#allocation13 + $0x518] sm:$0xff]
        %v5001 = vld [vmem:[#allocation13 + $0x520] sm:$0xff]
        %v5002 = vld [vmem:[#allocation13 + $0x528] sm:$0xff]
        %v5003 = vld [vmem:[#allocation13 + $0x530] sm:$0xff]
        %v5004 = vld [vmem:[#allocation13 + $0x538] sm:$0xff]
        %v5005 = vld [vmem:[#allocation13 + $0x540] sm:$0xff]
        %v5006 = vld [vmem:[#allocation13 + $0x548] sm:$0xff]
        %v5007 = vld [vmem:[#allocation13 + $0x550] sm:$0xff]
        %v5008 = vld [vmem:[#allocation13 + $0x558] sm:$0xff]
        %v5009 = vld [vmem:[#allocation13 + $0x560] sm:$0xff]
        %v5010 = vld [vmem:[#allocation13 + $0x568] sm:$0xff]
        %v5011 = vld [vmem:[#allocation13 + $0x570] sm:$0xff]
        %v5012 = vld [vmem:[#allocation13 + $0x578] sm:$0xff]
        %v5013 = vld [vmem:[#allocation13 + $0x580] sm:$0xff]
        %v5014 = vld [vmem:[#allocation13 + $0x588] sm:$0xff]
        %v5015 = vld [vmem:[#allocation13 + $0x590] sm:$0xff]
        %v5016 = vld [vmem:[#allocation13 + $0x598] sm:$0xff]
        %v5017 = vld [vmem:[#allocation13 + $0x5a0] sm:$0xff]
        %v5018 = vld [vmem:[#allocation13 + $0x5a8] sm:$0xff]
        %v5019 = vld [vmem:[#allocation13 + $0x5b0] sm:$0xff]
        %v5020 = vld [vmem:[#allocation13 + $0x5b8] sm:$0xff]
        %v5021 = vld [vmem:[#allocation13 + $0x5c0] sm:$0xff]
        %v5022 = vld [vmem:[#allocation13 + $0x5c8] sm:$0xff]
        %v5023 = vld [vmem:[#allocation13 + $0x5d0] sm:$0xff]
        %v5024 = vld [vmem:[#allocation13 + $0x5d8] sm:$0xff]
        %v5025 = vld [vmem:[#allocation13 + $0x5e0] sm:$0xff]
        %v5026 = vld [vmem:[#allocation13 + $0x5e8] sm:$0xff]
        %v5027 = vld [vmem:[#allocation13 + $0x5f0] sm:$0xff]
        %v5028 = vld [vmem:[#allocation13 + $0x5f8] sm:$0xff]
        %v5029 = vld [vmem:[#allocation13 + $0x600] sm:$0xff]
        %v5030 = vld [vmem:[#allocation13 + $0x608] sm:$0xff]
        %v5031 = vld [vmem:[#allocation13 + $0x610] sm:$0xff]
        %v5032 = vld [vmem:[#allocation13 + $0x618] sm:$0xff]
        %v5033 = vld [vmem:[#allocation13 + $0x620] sm:$0xff]
        %v5034 = vld [vmem:[#allocation13 + $0x628] sm:$0xff]
        %v5035 = vld [vmem:[#allocation13 + $0x630] sm:$0xff]
        %v5036 = vld [vmem:[#allocation13 + $0x638] sm:$0xff]
        %v5037 = vld [vmem:[#allocation13 + $0x640] sm:$0xff]
        %v5038 = vld [vmem:[#allocation13 + $0x648] sm:$0xff]
        %v5039 = vld [vmem:[#allocation13 + $0x650] sm:$0xff]
        %v5040 = vld [vmem:[#allocation13 + $0x658] sm:$0xff]
        %v5041 = vld [vmem:[#allocation13 + $0x660] sm:$0xff]
        %v5042 = vld [vmem:[#allocation13 + $0x668] sm:$0xff]
        %v5043 = vld [vmem:[#allocation13 + $0x670] sm:$0xff]
        %v5044 = vld [vmem:[#allocation13 + $0x678] sm:$0xff]
        %v5045 = vld [vmem:[#allocation13 + $0x680] sm:$0xff]
        %v5046 = vld [vmem:[#allocation13 + $0x688] sm:$0xff]
        %v5047 = vld [vmem:[#allocation13 + $0x690] sm:$0xff]
        %v5048 = vld [vmem:[#allocation13 + $0x698] sm:$0xff]
        %v5049 = vld [vmem:[#allocation13 + $0x6a0] sm:$0xff]
        %v5050 = vld [vmem:[#allocation13 + $0x6a8] sm:$0xff]
        %v5051 = vld [vmem:[#allocation13 + $0x6b0] sm:$0xff]
        %v5052 = vld [vmem:[#allocation13 + $0x6b8] sm:$0xff]
        %v5053 = vld [vmem:[#allocation13 + $0x6c0] sm:$0xff]
        %v5054 = vld [vmem:[#allocation13 + $0x6c8] sm:$0xff]
        %v5055 = vld [vmem:[#allocation13 + $0x6d0] sm:$0xff]
        %v5056 = vld [vmem:[#allocation13 + $0x6d8] sm:$0xff]
        %v5057 = vld [vmem:[#allocation13 + $0x6e0] sm:$0xff]
        %v5058 = vld [vmem:[#allocation13 + $0x6e8] sm:$0xff]
        %v5059 = vld [vmem:[#allocation13 + $0x6f0] sm:$0xff]
        %v5060 = vld [vmem:[#allocation13 + $0x6f8] sm:$0xff]
        %v5061 = vld [vmem:[#allocation13 + $0x700] sm:$0xff]
        %v5062 = vld [vmem:[#allocation13 + $0x708] sm:$0xff]
        %v5063 = vld [vmem:[#allocation13 + $0x710] sm:$0xff]
        %v5064 = vld [vmem:[#allocation13 + $0x718] sm:$0xff]
        %v5065 = vld [vmem:[#allocation13 + $0x720] sm:$0xff]
        %v5066 = vld [vmem:[#allocation13 + $0x728] sm:$0xff]
        %v5067 = vld [vmem:[#allocation13 + $0x730] sm:$0xff]
        %v5068 = vld [vmem:[#allocation13 + $0x738] sm:$0xff]
        %v5069 = vld [vmem:[#allocation13 + $0x740] sm:$0xff]
        %v5070 = vld [vmem:[#allocation13 + $0x748] sm:$0xff]
        %v5071 = vld [vmem:[#allocation13 + $0x750] sm:$0xff]
        %v5072 = vld [vmem:[#allocation13 + $0x758] sm:$0xff]
        %v5073 = vld [vmem:[#allocation13 + $0x760] sm:$0xff]
        %v5074 = vld [vmem:[#allocation13 + $0x768] sm:$0xff]
        %v5075 = vld [vmem:[#allocation13 + $0x770] sm:$0xff]
        %v5076 = vld [vmem:[#allocation13 + $0x778] sm:$0xff]
        %v5077 = vld [vmem:[#allocation13 + $0x780] sm:$0xff]
        %v5078 = vld [vmem:[#allocation13 + $0x788] sm:$0xff]
        %v5079 = vld [vmem:[#allocation13 + $0x790] sm:$0xff]
        %v5080 = vld [vmem:[#allocation13 + $0x798] sm:$0xff]
        %v5081 = vld [vmem:[#allocation13 + $0x7a0] sm:$0xff]
        %v5082 = vld [vmem:[#allocation13 + $0x7a8] sm:$0xff]
        %v5083 = vld [vmem:[#allocation13 + $0x7b0] sm:$0xff]
        %v5084 = vld [vmem:[#allocation13 + $0x7b8] sm:$0xff]
        %v5085 = vld [vmem:[#allocation13 + $0x7c0] sm:$0xff]
        %v5086 = vld [vmem:[#allocation13 + $0x7c8] sm:$0xff]
        %v5087 = vld [vmem:[#allocation13 + $0x7d0] sm:$0xff]
        %v5088 = vld [vmem:[#allocation13 + $0x7d8] sm:$0xff]
        %v5089 = vld [vmem:[#allocation13 + $0x7e0] sm:$0xff]
        %v5090 = vld [vmem:[#allocation13 + $0x7e8] sm:$0xff]
        %v5091 = vld [vmem:[#allocation13 + $0x7f0] sm:$0xff]
        %v5092 = vld [vmem:[#allocation13 + $0x7f8] sm:$0xff]
        %v5093 = vld [vmem:[%s11] sm:$0xff]
        %v5095 = vlaneseq
        %v5096 = vshrl.u32 %v5095, 7
        %v5097 = vsub.s32 0, %v5096
        %v5098 = vrot.slane %v5093, %v5097
        %v5099 = vlaneseq
        %v5100 = vshrl.u32 %v5099, 7
        %v5101 = vsub.s32 1, %v5100
        %v5102 = vrot.slane %v5093, %v5101
        %v5103 = vlaneseq
        %v5104 = vshrl.u32 %v5103, 7
        %v5105 = vsub.s32 2, %v5104
        %v5106 = vrot.slane %v5093, %v5105
        %v5107 = vlaneseq
        %v5108 = vshrl.u32 %v5107, 7
        %v5109 = vsub.s32 3, %v5108
        %v5110 = vrot.slane %v5093, %v5109
        %v5111 = vlaneseq
        %v5112 = vshrl.u32 %v5111, 7
        %v5113 = vsub.s32 4, %v5112
        %v5114 = vrot.slane %v5093, %v5113
        %v5115 = vlaneseq
        %v5116 = vshrl.u32 %v5115, 7
        %v5117 = vsub.s32 5, %v5116
        %v5118 = vrot.slane %v5093, %v5117
        %v5119 = vlaneseq
        %v5120 = vshrl.u32 %v5119, 7
        %v5121 = vsub.s32 6, %v5120
        %v5122 = vrot.slane %v5093, %v5121
        %v5123 = vlaneseq
        %v5124 = vshrl.u32 %v5123, 7
        %v5125 = vsub.s32 7, %v5124
        %v5126 = vrot.slane %v5093, %v5125
        %5135 = vmatprep.subr.mxu0 %v4838
        %5136 = vmatpush1.msra.mxu0 %v4837
        %5137 = vmatprep.subr.mxu0 %v4846
        %5138 = vmatpush1.msra.mxu0 %v4845
        %5139 = vmatprep.subr.mxu0 %v4854
        %5140 = vmatpush1.msra.mxu0 %v4853
        %5141 = vmatprep.subr.mxu0 %v4862
        %5142 = vmatpush1.msra.mxu0 %v4861
        %5143 = vmatprep.subr.mxu0 %v4870
        %5144 = vmatpush1.msra.mxu0 %v4869
        %5145 = vmatprep.subr.mxu0 %v4878
        %5146 = vmatpush1.msra.mxu0 %v4877
        %5147 = vmatprep.subr.mxu0 %v4886
        %5148 = vmatpush1.msra.mxu0 %v4885
        %5149 = vmatprep.subr.mxu0 %v4894
        %5150 = vmatpush1.msra.mxu0 %v4893
        %5151 = vmatprep.subr.mxu0 %v4902
        %5152 = vmatpush1.msra.mxu0 %v4901
        %5153 = vmatprep.subr.mxu0 %v4910
        %5154 = vmatpush1.msra.mxu0 %v4909
        %5155 = vmatprep.subr.mxu0 %v4918
        %5156 = vmatpush1.msra.mxu0 %v4917
        %5157 = vmatprep.subr.mxu0 %v4926
        %5158 = vmatpush1.msra.mxu0 %v4925
        %5159 = vmatprep.subr.mxu0 %v4934
        %5160 = vmatpush1.msra.mxu0 %v4933
        %5161 = vmatprep.subr.mxu0 %v4942
        %5162 = vmatpush1.msra.mxu0 %v4941
        %5163 = vmatprep.subr.mxu0 %v4950
        %5164 = vmatpush1.msra.mxu0 %v4949
        %5165 = vmatprep.subr.mxu0 %v4958
        %5166 = vmatpush1.msra.mxu0 %v4957
        %5167 = vmatprep.subr.mxu0 %v4966
        %5168 = vmatpush1.msra.mxu0 %v4965
        %5169 = vmatprep.subr.mxu0 %v4974
        %5170 = vmatpush1.msra.mxu0 %v4973
        %5171 = vmatprep.subr.mxu0 %v4982
        %5172 = vmatpush1.msra.mxu0 %v4981
        %5173 = vmatprep.subr.mxu0 %v4990
        %5174 = vmatpush1.msra.mxu0 %v4989
        %5175 = vmatprep.subr.mxu0 %v4998
        %5176 = vmatpush1.msra.mxu0 %v4997
        %5177 = vmatprep.subr.mxu0 %v5006
        %5178 = vmatpush1.msra.mxu0 %v5005
        %5179 = vmatprep.subr.mxu0 %v5014
        %5180 = vmatpush1.msra.mxu0 %v5013
        %5181 = vmatprep.subr.mxu0 %v5022
        %5182 = vmatpush1.msra.mxu0 %v5021
        %5183 = vmatprep.subr.mxu0 %v5030
        %5184 = vmatpush1.msra.mxu0 %v5029
        %5185 = vmatprep.subr.mxu0 %v5038
        %5186 = vmatpush1.msra.mxu0 %v5037
        %5187 = vmatprep.subr.mxu0 %v5046
        %5188 = vmatpush1.msra.mxu0 %v5045
        %5189 = vmatprep.subr.mxu0 %v5054
        %5190 = vmatpush1.msra.mxu0 %v5053
        %5191 = vmatprep.subr.mxu0 %v5062
        %5192 = vmatpush1.msra.mxu0 %v5061
        %5193 = vmatprep.subr.mxu0 %v5070
        %5194 = vmatpush1.msra.mxu0 %v5069
        %5195 = vmatprep.subr.mxu0 %v5078
        %5196 = vmatpush1.msra.mxu0 %v5077
        %5197 = vmatprep.subr.mxu0 %v5086
        %5198 = vmatpush1.msra.mxu0 %v5085
        %5199 = vmatprep.mubr.f32.mxu0 %v4822
        %5200 = vmatmul.mubr.f32.gmra.mrb[0].mxu0 %v4821
        %v5201 = vpop.f32.mrb[0].mxu0
        %v5202 = vadd.f32 %v5098, %v5201
        %v5203 = vpop.f32.mrb[0].mxu0
        %v5204 = vadd.f32 %v5102, %v5203
        %5205 = vmatprep.mubr.f32.mxu0 %v4824
        %5206 = vmatmul.mubr.f32.gmra.mrb[0].mxu0 %v4823
        %v5207 = vpop.f32.mrb[0].mxu0
        %v5208 = vadd.f32 %v5098, %v5207
        %v5209 = vpop.f32.mrb[0].mxu0
        %v5210 = vadd.f32 %v5102, %v5209
        %5211 = vmatprep.mubr.f32.mxu0 %v4826
        %5212 = vmatmul.mubr.f32.gmra.mrb[0].mxu0 %v4825
        %v5213 = vpop.f32.mrb[0].mxu0
        %v5214 = vadd.f32 %v5098, %v5213
        %v5215 = vpop.f32.mrb[0].mxu0
        %v5216 = vadd.f32 %v5102, %v5215
        %5217 = vmatprep.mubr.f32.mxu0 %v4828
        %5218 = vmatmul.mubr.f32.gmra.mrb[0].mxu0 %v4827
        %v5219 = vpop.f32.mrb[0].mxu0
        %v5220 = vadd.f32 %v5098, %v5219
        %v5221 = vpop.f32.mrb[0].mxu0
        %v5222 = vadd.f32 %v5102, %v5221
        %5223 = vmatprep.mubr.f32.mxu0 %v4830
        %5224 = vmatmul.mubr.f32.gmra.mrb[0].mxu0 %v4829
        %v5225 = vpop.f32.mrb[0].mxu0
        %v5226 = vadd.f32 %v5098, %v5225
        %v5227 = vpop.f32.mrb[0].mxu0
        %v5228 = vadd.f32 %v5102, %v5227
        %5229 = vmatprep.mubr.f32.mxu0 %v4832
        %5230 = vmatmul.mubr.f32.gmra.mrb[0].mxu0 %v4831
        %v5231 = vpop.f32.mrb[0].mxu0
        %v5232 = vadd.f32 %v5098, %v5231
        %v5233 = vpop.f32.mrb[0].mxu0
        %v5234 = vadd.f32 %v5102, %v5233
        %5235 = vmatprep.mubr.f32.mxu0 %v4834
        %5236 = vmatmul.mubr.f32.gmra.mrb[0].mxu0 %v4833
        %v5237 = vpop.f32.mrb[0].mxu0
        %v5238 = vadd.f32 %v5098, %v5237
        %v5239 = vpop.f32.mrb[0].mxu0
        %v5240 = vadd.f32 %v5102, %v5239
        %5241 = vmatprep.mubr.f32.mxu0 %v4836
        %5242 = vmatmul.mubr.f32.gmra.mrb[0].mxu0 %v4835
        %v5243 = vpop.f32.mrb[0].mxu0
        %v5244 = vadd.f32 %v5098, %v5243
        %v5245 = vpop.f32.mrb[0].mxu0
        %v5246 = vadd.f32 %v5102, %v5245
        %5247 = vdwg.mxu0
        %5248 = vmatprep.subr.mxu0 %v4840
        %5249 = vmatpush1.msra.mxu0 %v4839
        %5250 = vmatprep.subr.mxu0 %v4848
        %5251 = vmatpush1.msra.mxu0 %v4847
        %5252 = vmatprep.subr.mxu0 %v4856
        %5253 = vmatpush1.msra.mxu0 %v4855
        %5254 = vmatprep.subr.mxu0 %v4864
        %5255 = vmatpush1.msra.mxu0 %v4863
        %5256 = vmatprep.subr.mxu0 %v4872
        %5257 = vmatpush1.msra.mxu0 %v4871
        %5258 = vmatprep.subr.mxu0 %v4880
        %5259 = vmatpush1.msra.mxu0 %v4879
        %5260 = vmatprep.subr.mxu0 %v4888
        %5261 = vmatpush1.msra.mxu0 %v4887
        %5262 = vmatprep.subr.mxu0 %v4896
        %5263 = vmatpush1.msra.mxu0 %v4895
        %5264 = vmatprep.subr.mxu0 %v4904
        %5265 = vmatpush1.msra.mxu0 %v4903
        %5266 = vmatprep.subr.mxu0 %v4912
        %5267 = vmatpush1.msra.mxu0 %v4911
        %5268 = vmatprep.subr.mxu0 %v4920
        %5269 = vmatpush1.msra.mxu0 %v4919
        %5270 = vmatprep.subr.mxu0 %v4928
        %5271 = vmatpush1.msra.mxu0 %v4927
        %5272 = vmatprep.subr.mxu0 %v4936
        %5273 = vmatpush1.msra.mxu0 %v4935
        %5274 = vmatprep.subr.mxu0 %v4944
        %5275 = vmatpush1.msra.mxu0 %v4943
        %5276 = vmatprep.subr.mxu0 %v4952
        %5277 = vmatpush1.msra.mxu0 %v4951
        %5278 = vmatprep.subr.mxu0 %v4960
        %5279 = vmatpush1.msra.mxu0 %v4959
        %5280 = vmatprep.subr.mxu0 %v4968
        %5281 = vmatpush1.msra.mxu0 %v4967
        %5282 = vmatprep.subr.mxu0 %v4976
        %5283 = vmatpush1.msra.mxu0 %v4975
        %5284 = vmatprep.subr.mxu0 %v4984
        %5285 = vmatpush1.msra.mxu0 %v4983
        %5286 = vmatprep.subr.mxu0 %v4992
        %5287 = vmatpush1.msra.mxu0 %v4991
        %5288 = vmatprep.subr.mxu0 %v5000
        %5289 = vmatpush1.msra.mxu0 %v4999
        %5290 = vmatprep.subr.mxu0 %v5008
        %5291 = vmatpush1.msra.mxu0 %v5007
        %5292 = vmatprep.subr.mxu0 %v5016
        %5293 = vmatpush1.msra.mxu0 %v5015
        %5294 = vmatprep.subr.mxu0 %v5024
        %5295 = vmatpush1.msra.mxu0 %v5023
        %5296 = vmatprep.subr.mxu0 %v5032
        %5297 = vmatpush1.msra.mxu0 %v5031
        %5298 = vmatprep.subr.mxu0 %v5040
        %5299 = vmatpush1.msra.mxu0 %v5039
        %5300 = vmatprep.subr.mxu0 %v5048
        %5301 = vmatpush1.msra.mxu0 %v5047
        %5302 = vmatprep.subr.mxu0 %v5056
        %5303 = vmatpush1.msra.mxu0 %v5055
        %5304 = vmatprep.subr.mxu0 %v5064
        %5305 = vmatpush1.msra.mxu0 %v5063
        %5306 = vmatprep.subr.mxu0 %v5072
        %5307 = vmatpush1.msra.mxu0 %v5071
        %5308 = vmatprep.subr.mxu0 %v5080
        %5309 = vmatpush1.msra.mxu0 %v5079
        %5310 = vmatprep.subr.mxu0 %v5088
        %5311 = vmatpush1.msra.mxu0 %v5087
        %5312 = vmatprep.mubr.f32.mxu0 %v4822
        %5313 = vmatmul.mubr.f32.gmra.mrb[0].mxu0 %v4821
        %v5314 = vpop.f32.mrb[0].mxu0
        %v5315 = vadd.f32 %v5106, %v5314
        %v5316 = vpop.f32.mrb[0].mxu0
        %v5317 = vadd.f32 %v5110, %v5316
        %5318 = vmatprep.mubr.f32.mxu0 %v4824
        %5319 = vmatmul.mubr.f32.gmra.mrb[0].mxu0 %v4823
        %v5320 = vpop.f32.mrb[0].mxu0
        %v5321 = vadd.f32 %v5106, %v5320
        %v5322 = vpop.f32.mrb[0].mxu0
        %v5323 = vadd.f32 %v5110, %v5322
        %5324 = vmatprep.mubr.f32.mxu0 %v4826
        %5325 = vmatmul.mubr.f32.gmra.mrb[0].mxu0 %v4825
        %v5326 = vpop.f32.mrb[0].mxu0
        %v5327 = vadd.f32 %v5106, %v5326
        %v5328 = vpop.f32.mrb[0].mxu0
        %v5329 = vadd.f32 %v5110, %v5328
        %5330 = vmatprep.mubr.f32.mxu0 %v4828
        %5331 = vmatmul.mubr.f32.gmra.mrb[0].mxu0 %v4827
        %v5332 = vpop.f32.mrb[0].mxu0
        %v5333 = vadd.f32 %v5106, %v5332
        %v5334 = vpop.f32.mrb[0].mxu0
        %v5335 = vadd.f32 %v5110, %v5334
        %5336 = vmatprep.mubr.f32.mxu0 %v4830
        %5337 = vmatmul.mubr.f32.gmra.mrb[0].mxu0 %v4829
        %v5338 = vpop.f32.mrb[0].mxu0
        %v5339 = vadd.f32 %v5106, %v5338
        %v5340 = vpop.f32.mrb[0].mxu0
        %v5341 = vadd.f32 %v5110, %v5340
        %5342 = vmatprep.mubr.f32.mxu0 %v4832
        %5343 = vmatmul.mubr.f32.gmra.mrb[0].mxu0 %v4831
        %v5344 = vpop.f32.mrb[0].mxu0
        %v5345 = vadd.f32 %v5106, %v5344
        %v5346 = vpop.f32.mrb[0].mxu0
        %v5347 = vadd.f32 %v5110, %v5346
        %5348 = vmatprep.mubr.f32.mxu0 %v4834
        %5349 = vmatmul.mubr.f32.gmra.mrb[0].mxu0 %v4833
        %v5350 = vpop.f32.mrb[0].mxu0
        %v5351 = vadd.f32 %v5106, %v5350
        %v5352 = vpop.f32.mrb[0].mxu0
        %v5353 = vadd.f32 %v5110, %v5352
        %5354 = vmatprep.mubr.f32.mxu0 %v4836
        %5355 = vmatmul.mubr.f32.gmra.mrb[0].mxu0 %v4835
        %v5356 = vpop.f32.mrb[0].mxu0
        %v5357 = vadd.f32 %v5106, %v5356
        %v5358 = vpop.f32.mrb[0].mxu0
        %v5359 = vadd.f32 %v5110, %v5358
        %5360 = vdwg.mxu0
        %5361 = vmatprep.subr.mxu0 %v4842
        %5362 = vmatpush1.msra.mxu0 %v4841
        %5363 = vmatprep.subr.mxu0 %v4850
        %5364 = vmatpush1.msra.mxu0 %v4849
        %5365 = vmatprep.subr.mxu0 %v4858
        %5366 = vmatpush1.msra.mxu0 %v4857
        %5367 = vmatprep.subr.mxu0 %v4866
        %5368 = vmatpush1.msra.mxu0 %v4865
        %5369 = vmatprep.subr.mxu0 %v4874
        %5370 = vmatpush1.msra.mxu0 %v4873
        %5371 = vmatprep.subr.mxu0 %v4882
        %5372 = vmatpush1.msra.mxu0 %v4881
        %5373 = vmatprep.subr.mxu0 %v4890
        %5374 = vmatpush1.msra.mxu0 %v4889
        %5375 = vmatprep.subr.mxu0 %v4898
        %5376 = vmatpush1.msra.mxu0 %v4897
        %5377 = vmatprep.subr.mxu0 %v4906
        %5378 = vmatpush1.msra.mxu0 %v4905
        %5379 = vmatprep.subr.mxu0 %v4914
        %5380 = vmatpush1.msra.mxu0 %v4913
        %5381 = vmatprep.subr.mxu0 %v4922
        %5382 = vmatpush1.msra.mxu0 %v4921
        %5383 = vmatprep.subr.mxu0 %v4930
        %5384 = vmatpush1.msra.mxu0 %v4929
        %5385 = vmatprep.subr.mxu0 %v4938
        %5386 = vmatpush1.msra.mxu0 %v4937
        %5387 = vmatprep.subr.mxu0 %v4946
        %5388 = vmatpush1.msra.mxu0 %v4945
        %5389 = vmatprep.subr.mxu0 %v4954
        %5390 = vmatpush1.msra.mxu0 %v4953
        %5391 = vmatprep.subr.mxu0 %v4962
        %5392 = vmatpush1.msra.mxu0 %v4961
        %5393 = vmatprep.subr.mxu0 %v4970
        %5394 = vmatpush1.msra.mxu0 %v4969
        %5395 = vmatprep.subr.mxu0 %v4978
        %5396 = vmatpush1.msra.mxu0 %v4977
        %5397 = vmatprep.subr.mxu0 %v4986
        %5398 = vmatpush1.msra.mxu0 %v4985
        %5399 = vmatprep.subr.mxu0 %v4994
        %5400 = vmatpush1.msra.mxu0 %v4993
        %5401 = vmatprep.subr.mxu0 %v5002
        %5402 = vmatpush1.msra.mxu0 %v5001
        %5403 = vmatprep.subr.mxu0 %v5010
        %5404 = vmatpush1.msra.mxu0 %v5009
        %5405 = vmatprep.subr.mxu0 %v5018
        %5406 = vmatpush1.msra.mxu0 %v5017
        %5407 = vmatprep.subr.mxu0 %v5026
        %5408 = vmatpush1.msra.mxu0 %v5025
        %5409 = vmatprep.subr.mxu0 %v5034
        %5410 = vmatpush1.msra.mxu0 %v5033
        %5411 = vmatprep.subr.mxu0 %v5042
        %5412 = vmatpush1.msra.mxu0 %v5041
        %5413 = vmatprep.subr.mxu0 %v5050
        %5414 = vmatpush1.msra.mxu0 %v5049
        %5415 = vmatprep.subr.mxu0 %v5058
        %5416 = vmatpush1.msra.mxu0 %v5057
        %5417 = vmatprep.subr.mxu0 %v5066
        %5418 = vmatpush1.msra.mxu0 %v5065
        %5419 = vmatprep.subr.mxu0 %v5074
        %5420 = vmatpush1.msra.mxu0 %v5073
        %5421 = vmatprep.subr.mxu0 %v5082
        %5422 = vmatpush1.msra.mxu0 %v5081
        %5423 = vmatprep.subr.mxu0 %v5090
        %5424 = vmatpush1.msra.mxu0 %v5089
        %5425 = vmatprep.mubr.f32.mxu0 %v4822
        %5426 = vmatmul.mubr.f32.gmra.mrb[0].mxu0 %v4821
        %v5427 = vpop.f32.mrb[0].mxu0
        %v5428 = vadd.f32 %v5114, %v5427
        %v5429 = vpop.f32.mrb[0].mxu0
        %v5430 = vadd.f32 %v5118, %v5429
        %5431 = vmatprep.mubr.f32.mxu0 %v4824
        %5432 = vmatmul.mubr.f32.gmra.mrb[0].mxu0 %v4823
        %v5433 = vpop.f32.mrb[0].mxu0
        %v5434 = vadd.f32 %v5114, %v5433
        %v5435 = vpop.f32.mrb[0].mxu0
        %v5436 = vadd.f32 %v5118, %v5435
        %5437 = vmatprep.mubr.f32.mxu0 %v4826
        %5438 = vmatmul.mubr.f32.gmra.mrb[0].mxu0 %v4825
        %v5439 = vpop.f32.mrb[0].mxu0
        %v5440 = vadd.f32 %v5114, %v5439
        %v5441 = vpop.f32.mrb[0].mxu0
        %v5442 = vadd.f32 %v5118, %v5441
        %5443 = vmatprep.mubr.f32.mxu0 %v4828
        %5444 = vmatmul.mubr.f32.gmra.mrb[0].mxu0 %v4827
        %v5445 = vpop.f32.mrb[0].mxu0
        %v5446 = vadd.f32 %v5114, %v5445
        %v5447 = vpop.f32.mrb[0].mxu0
        %v5448 = vadd.f32 %v5118, %v5447
        %5449 = vmatprep.mubr.f32.mxu0 %v4830
        %5450 = vmatmul.mubr.f32.gmra.mrb[0].mxu0 %v4829
        %v5451 = vpop.f32.mrb[0].mxu0
        %v5452 = vadd.f32 %v5114, %v5451
        %v5453 = vpop.f32.mrb[0].mxu0
        %v5454 = vadd.f32 %v5118, %v5453
        %5455 = vmatprep.mubr.f32.mxu0 %v4832
        %5456 = vmatmul.mubr.f32.gmra.mrb[0].mxu0 %v4831
        %v5457 = vpop.f32.mrb[0].mxu0
        %v5458 = vadd.f32 %v5114, %v5457
        %v5459 = vpop.f32.mrb[0].mxu0
        %v5460 = vadd.f32 %v5118, %v5459
        %5461 = vmatprep.mubr.f32.mxu0 %v4834
        %5462 = vmatmul.mubr.f32.gmra.mrb[0].mxu0 %v4833
        %v5463 = vpop.f32.mrb[0].mxu0
        %v5464 = vadd.f32 %v5114, %v5463
        %v5465 = vpop.f32.mrb[0].mxu0
        %v5466 = vadd.f32 %v5118, %v5465
        %5467 = vmatprep.mubr.f32.mxu0 %v4836
        %5468 = vmatmul.mubr.f32.gmra.mrb[0].mxu0 %v4835
        %v5469 = vpop.f32.mrb[0].mxu0
        %v5470 = vadd.f32 %v5114, %v5469
        %v5471 = vpop.f32.mrb[0].mxu0
        %v5472 = vadd.f32 %v5118, %v5471
        %5473 = vdwg.mxu0
        %5474 = vmatprep.subr.mxu0 %v4844
        %5475 = vmatpush1.msra.mxu0 %v4843
        %5476 = vmatprep.subr.mxu0 %v4852
        %5477 = vmatpush1.msra.mxu0 %v4851
        %5478 = vmatprep.subr.mxu0 %v4860
        %5479 = vmatpush1.msra.mxu0 %v4859
        %5480 = vmatprep.subr.mxu0 %v4868
        %5481 = vmatpush1.msra.mxu0 %v4867
        %5482 = vmatprep.subr.mxu0 %v4876
        %5483 = vmatpush1.msra.mxu0 %v4875
        %5484 = vmatprep.subr.mxu0 %v4884
        %5485 = vmatpush1.msra.mxu0 %v4883
        %5486 = vmatprep.subr.mxu0 %v4892
        %5487 = vmatpush1.msra.mxu0 %v4891
        %5488 = vmatprep.subr.mxu0 %v4900
        %5489 = vmatpush1.msra.mxu0 %v4899
        %5490 = vmatprep.subr.mxu0 %v4908
        %5491 = vmatpush1.msra.mxu0 %v4907
        %5492 = vmatprep.subr.mxu0 %v4916
        %5493 = vmatpush1.msra.mxu0 %v4915
        %5494 = vmatprep.subr.mxu0 %v4924
        %5495 = vmatpush1.msra.mxu0 %v4923
        %5496 = vmatprep.subr.mxu0 %v4932
        %5497 = vmatpush1.msra.mxu0 %v4931
        %5498 = vmatprep.subr.mxu0 %v4940
        %5499 = vmatpush1.msra.mxu0 %v4939
        %5500 = vmatprep.subr.mxu0 %v4948
        %5501 = vmatpush1.msra.mxu0 %v4947
        %5502 = vmatprep.subr.mxu0 %v4956
        %5503 = vmatpush1.msra.mxu0 %v4955
        %5504 = vmatprep.subr.mxu0 %v4964
        %5505 = vmatpush1.msra.mxu0 %v4963
        %5506 = vmatprep.subr.mxu0 %v4972
        %5507 = vmatpush1.msra.mxu0 %v4971
        %5508 = vmatprep.subr.mxu0 %v4980
        %5509 = vmatpush1.msra.mxu0 %v4979
        %5510 = vmatprep.subr.mxu0 %v4988
        %5511 = vmatpush1.msra.mxu0 %v4987
        %5512 = vmatprep.subr.mxu0 %v4996
        %5513 = vmatpush1.msra.mxu0 %v4995
        %5514 = vmatprep.subr.mxu0 %v5004
        %5515 = vmatpush1.msra.mxu0 %v5003
        %5516 = vmatprep.subr.mxu0 %v5012
        %5517 = vmatpush1.msra.mxu0 %v5011
        %5518 = vmatprep.subr.mxu0 %v5020
        %5519 = vmatpush1.msra.mxu0 %v5019
        %5520 = vmatprep.subr.mxu0 %v5028
        %5521 = vmatpush1.msra.mxu0 %v5027
        %5522 = vmatprep.subr.mxu0 %v5036
        %5523 = vmatpush1.msra.mxu0 %v5035
        %5524 = vmatprep.subr.mxu0 %v5044
        %5525 = vmatpush1.msra.mxu0 %v5043
        %5526 = vmatprep.subr.mxu0 %v5052
        %5527 = vmatpush1.msra.mxu0 %v5051
        %5528 = vmatprep.subr.mxu0 %v5060
        %5529 = vmatpush1.msra.mxu0 %v5059
        %5530 = vmatprep.subr.mxu0 %v5068
        %5531 = vmatpush1.msra.mxu0 %v5067
        %5532 = vmatprep.subr.mxu0 %v5076
        %5533 = vmatpush1.msra.mxu0 %v5075
        %5534 = vmatprep.subr.mxu0 %v5084
        %5535 = vmatpush1.msra.mxu0 %v5083
        %5536 = vmatprep.subr.mxu0 %v5092
        %5537 = vmatpush1.msra.mxu0 %v5091
        %5538 = vmatprep.mubr.f32.mxu0 %v4822
        %5539 = vmatmul.mubr.f32.gmra.mrb[0].mxu0 %v4821
        %v5540 = vpop.f32.mrb[0].mxu0
        %v5541 = vadd.f32 %v5122, %v5540
        %v5542 = vpop.f32.mrb[0].mxu0
        %v5543 = vadd.f32 %v5126, %v5542
        %5544 = vmatprep.mubr.f32.mxu0 %v4824
        %5545 = vmatmul.mubr.f32.gmra.mrb[0].mxu0 %v4823
        %v5546 = vpop.f32.mrb[0].mxu0
        %v5547 = vadd.f32 %v5122, %v5546
        %v5548 = vpop.f32.mrb[0].mxu0
        %v5549 = vadd.f32 %v5126, %v5548
        %5550 = vmatprep.mubr.f32.mxu0 %v4826
        %5551 = vmatmul.mubr.f32.gmra.mrb[0].mxu0 %v4825
        %v5552 = vpop.f32.mrb[0].mxu0
        %v5553 = vadd.f32 %v5122, %v5552
        %v5554 = vpop.f32.mrb[0].mxu0
        %v5555 = vadd.f32 %v5126, %v5554
        %5556 = vmatprep.mubr.f32.mxu0 %v4828
        %5557 = vmatmul.mubr.f32.gmra.mrb[0].mxu0 %v4827
        %v5558 = vpop.f32.mrb[0].mxu0
        %v5559 = vadd.f32 %v5122, %v5558
        %v5560 = vpop.f32.mrb[0].mxu0
        %v5561 = vadd.f32 %v5126, %v5560
        %5562 = vmatprep.mubr.f32.mxu0 %v4830
        %5563 = vmatmul.mubr.f32.gmra.mrb[0].mxu0 %v4829
        %v5564 = vpop.f32.mrb[0].mxu0
        %v5565 = vadd.f32 %v5122, %v5564
        %v5566 = vpop.f32.mrb[0].mxu0
        %v5567 = vadd.f32 %v5126, %v5566
        %5568 = vmatprep.mubr.f32.mxu0 %v4832
        %5569 = vmatmul.mubr.f32.gmra.mrb[0].mxu0 %v4831
        %v5570 = vpop.f32.mrb[0].mxu0
        %v5571 = vadd.f32 %v5122, %v5570
        %v5572 = vpop.f32.mrb[0].mxu0
        %v5573 = vadd.f32 %v5126, %v5572
        %5574 = vmatprep.mubr.f32.mxu0 %v4834
        %5575 = vmatmul.mubr.f32.gmra.mrb[0].mxu0 %v4833
        %v5576 = vpop.f32.mrb[0].mxu0
        %v5577 = vadd.f32 %v5122, %v5576
        %v5578 = vpop.f32.mrb[0].mxu0
        %v5579 = vadd.f32 %v5126, %v5578
        %5580 = vmatprep.mubr.f32.mxu0 %v4836
        %5581 = vmatmul.mubr.f32.gmra.mrb[0].mxu0 %v4835
        %v5582 = vpop.f32.mrb[0].mxu0
        %v5583 = vadd.f32 %v5122, %v5582
        %v5584 = vpop.f32.mrb[0].mxu0
        %v5585 = vadd.f32 %v5126, %v5584
        %5586 = vdwg.mxu0
        %v5587 = vmul.f32 %v5202, 0.5
        %v5588 = vmul.f32 %v5204, 0.5
        %v5589 = vmul.f32 %v5315, 0.5
        %v5590 = vmul.f32 %v5317, 0.5
        %v5591 = vmul.f32 %v5428, 0.5
        %v5592 = vmul.f32 %v5430, 0.5
        %v5593 = vmul.f32 %v5541, 0.5
        %v5594 = vmul.f32 %v5543, 0.5
        %v5595 = vmul.f32 %v5208, 0.5
        %v5596 = vmul.f32 %v5210, 0.5
        %v5597 = vmul.f32 %v5321, 0.5
        %v5598 = vmul.f32 %v5323, 0.5
        %v5599 = vmul.f32 %v5434, 0.5
        %v5600 = vmul.f32 %v5436, 0.5
        %v5601 = vmul.f32 %v5547, 0.5
        %v5602 = vmul.f32 %v5549, 0.5
        %v5603 = vmul.f32 %v5214, 0.5
        %v5604 = vmul.f32 %v5216, 0.5
        %v5605 = vmul.f32 %v5327, 0.5
        %v5606 = vmul.f32 %v5329, 0.5
        %v5607 = vmul.f32 %v5440, 0.5
        %v5608 = vmul.f32 %v5442, 0.5
        %v5609 = vmul.f32 %v5553, 0.5
        %v5610 = vmul.f32 %v5555, 0.5
        %v5611 = vmul.f32 %v5220, 0.5
        %v5612 = vmul.f32 %v5222, 0.5
        %v5613 = vmul.f32 %v5333, 0.5
        %v5614 = vmul.f32 %v5335, 0.5
        %v5615 = vmul.f32 %v5446, 0.5
        %v5616 = vmul.f32 %v5448, 0.5
        %v5617 = vmul.f32 %v5559, 0.5
        %v5618 = vmul.f32 %v5561, 0.5
        %v5619 = vmul.f32 %v5226, 0.5
        %v5620 = vmul.f32 %v5228, 0.5
        %v5621 = vmul.f32 %v5339, 0.5
        %v5622 = vmul.f32 %v5341, 0.5
        %v5623 = vmul.f32 %v5452, 0.5
        %v5624 = vmul.f32 %v5454, 0.5
        %v5625 = vmul.f32 %v5565, 0.5
        %v5626 = vmul.f32 %v5567, 0.5
        %v5627 = vmul.f32 %v5232, 0.5
        %v5628 = vmul.f32 %v5234, 0.5
        %v5629 = vmul.f32 %v5345, 0.5
        %v5630 = vmul.f32 %v5347, 0.5
        %v5631 = vmul.f32 %v5458, 0.5
        %v5632 = vmul.f32 %v5460, 0.5
        %v5633 = vmul.f32 %v5571, 0.5
        %v5634 = vmul.f32 %v5573, 0.5
        %v5635 = vmul.f32 %v5238, 0.5
        %v5636 = vmul.f32 %v5240, 0.5
        %v5637 = vmul.f32 %v5351, 0.5
        %v5638 = vmul.f32 %v5353, 0.5
        %v5639 = vmul.f32 %v5464, 0.5
        %v5640 = vmul.f32 %v5466, 0.5
        %v5641 = vmul.f32 %v5577, 0.5
        %v5642 = vmul.f32 %v5579, 0.5
        %v5643 = vmul.f32 %v5244, 0.5
        %v5644 = vmul.f32 %v5246, 0.5
        %v5645 = vmul.f32 %v5357, 0.5
        %v5646 = vmul.f32 %v5359, 0.5
        %v5647 = vmul.f32 %v5470, 0.5
        %v5648 = vmul.f32 %v5472, 0.5
        %v5649 = vmul.f32 %v5583, 0.5
        %v5650 = vmul.f32 %v5585, 0.5
        %v5651 = vmul.f32 %v5202, 0.70710677
        %v5652 = vmul.f32 %v5204, 0.70710677
        %v5653 = vmul.f32 %v5315, 0.70710677
        %v5654 = vmul.f32 %v5317, 0.70710677
        %v5655 = vmul.f32 %v5428, 0.70710677
        %v5656 = vmul.f32 %v5430, 0.70710677
        %v5657 = vmul.f32 %v5541, 0.70710677
        %v5658 = vmul.f32 %v5543, 0.70710677
        %v5659 = vmul.f32 %v5208, 0.70710677
        %v5660 = vmul.f32 %v5210, 0.70710677
        %v5661 = vmul.f32 %v5321, 0.70710677
        %v5662 = vmul.f32 %v5323, 0.70710677
        %v5663 = vmul.f32 %v5434, 0.70710677
        %v5664 = vmul.f32 %v5436, 0.70710677
        %v5665 = vmul.f32 %v5547, 0.70710677
        %v5666 = vmul.f32 %v5549, 0.70710677
        %v5667 = vmul.f32 %v5214, 0.70710677
        %v5668 = vmul.f32 %v5216, 0.70710677
        %v5669 = vmul.f32 %v5327, 0.70710677
        %v5670 = vmul.f32 %v5329, 0.70710677
        %v5671 = vmul.f32 %v5440, 0.70710677
        %v5672 = vmul.f32 %v5442, 0.70710677
        %v5673 = vmul.f32 %v5553, 0.70710677
        %v5674 = vmul.f32 %v5555, 0.70710677
        %v5675 = vmul.f32 %v5220, 0.70710677
        %v5676 = vmul.f32 %v5222, 0.70710677
        %v5677 = vmul.f32 %v5333, 0.70710677
        %v5678 = vmul.f32 %v5335, 0.70710677
        %v5679 = vmul.f32 %v5446, 0.70710677
        %v5680 = vmul.f32 %v5448, 0.70710677
        %v5681 = vmul.f32 %v5559, 0.70710677
        %v5682 = vmul.f32 %v5561, 0.70710677
        %v5683 = vmul.f32 %v5226, 0.70710677
        %v5684 = vmul.f32 %v5228, 0.70710677
        %v5685 = vmul.f32 %v5339, 0.70710677
        %v5686 = vmul.f32 %v5341, 0.70710677
        %v5687 = vmul.f32 %v5452, 0.70710677
        %v5688 = vmul.f32 %v5454, 0.70710677
        %v5689 = vmul.f32 %v5565, 0.70710677
        %v5690 = vmul.f32 %v5567, 0.70710677
        %v5691 = vmul.f32 %v5232, 0.70710677
        %v5692 = vmul.f32 %v5234, 0.70710677
        %v5693 = vmul.f32 %v5345, 0.70710677
        %v5694 = vmul.f32 %v5347, 0.70710677
        %v5695 = vmul.f32 %v5458, 0.70710677
        %v5696 = vmul.f32 %v5460, 0.70710677
        %v5697 = vmul.f32 %v5571, 0.70710677
        %v5698 = vmul.f32 %v5573, 0.70710677
        %v5699 = vmul.f32 %v5238, 0.70710677
        %v5700 = vmul.f32 %v5240, 0.70710677
        %v5701 = vmul.f32 %v5351, 0.70710677
        %v5702 = vmul.f32 %v5353, 0.70710677
        %v5703 = vmul.f32 %v5464, 0.70710677
        %v5704 = vmul.f32 %v5466, 0.70710677
        %v5705 = vmul.f32 %v5577, 0.70710677
        %v5706 = vmul.f32 %v5579, 0.70710677
        %v5707 = vmul.f32 %v5244, 0.70710677
        %v5708 = vmul.f32 %v5246, 0.70710677
        %v5709 = vmul.f32 %v5357, 0.70710677
        %v5710 = vmul.f32 %v5359, 0.70710677
        %v5711 = vmul.f32 %v5470, 0.70710677
        %v5712 = vmul.f32 %v5472, 0.70710677
        %v5713 = vmul.f32 %v5583, 0.70710677
        %v5714 = vmul.f32 %v5585, 0.70710677
        %v5715 = vand.u32 2147483647, %v5651
        %v5716 = vand.u32 2147483647, %v5652
        %v5717 = vand.u32 2147483647, %v5653
        %v5718 = vand.u32 2147483647, %v5654
        %v5719 = vand.u32 2147483647, %v5655
        %v5720 = vand.u32 2147483647, %v5656
        %v5721 = vand.u32 2147483647, %v5657
        %v5722 = vand.u32 2147483647, %v5658
        %v5723 = vand.u32 2147483647, %v5659
        %v5724 = vand.u32 2147483647, %v5660
        %v5725 = vand.u32 2147483647, %v5661
        %v5726 = vand.u32 2147483647, %v5662
        %v5727 = vand.u32 2147483647, %v5663
        %v5728 = vand.u32 2147483647, %v5664
        %v5729 = vand.u32 2147483647, %v5665
        %v5730 = vand.u32 2147483647, %v5666
        %v5731 = vand.u32 2147483647, %v5667
        %v5732 = vand.u32 2147483647, %v5668
        %v5733 = vand.u32 2147483647, %v5669
        %v5734 = vand.u32 2147483647, %v5670
        %v5735 = vand.u32 2147483647, %v5671
        %v5736 = vand.u32 2147483647, %v5672
        %v5737 = vand.u32 2147483647, %v5673
        %v5738 = vand.u32 2147483647, %v5674
        %v5739 = vand.u32 2147483647, %v5675
        %v5740 = vand.u32 2147483647, %v5676
        %v5741 = vand.u32 2147483647, %v5677
        %v5742 = vand.u32 2147483647, %v5678
        %v5743 = vand.u32 2147483647, %v5679
        %v5744 = vand.u32 2147483647, %v5680
        %v5745 = vand.u32 2147483647, %v5681
        %v5746 = vand.u32 2147483647, %v5682
        %v5747 = vand.u32 2147483647, %v5683
        %v5748 = vand.u32 2147483647, %v5684
        %v5749 = vand.u32 2147483647, %v5685
        %v5750 = vand.u32 2147483647, %v5686
        %v5751 = vand.u32 2147483647, %v5687
        %v5752 = vand.u32 2147483647, %v5688
        %v5753 = vand.u32 2147483647, %v5689
        %v5754 = vand.u32 2147483647, %v5690
        %v5755 = vand.u32 2147483647, %v5691
        %v5756 = vand.u32 2147483647, %v5692
        %v5757 = vand.u32 2147483647, %v5693
        %v5758 = vand.u32 2147483647, %v5694
        %v5759 = vand.u32 2147483647, %v5695
        %v5760 = vand.u32 2147483647, %v5696
        %v5761 = vand.u32 2147483647, %v5697
        %v5762 = vand.u32 2147483647, %v5698
        %v5763 = vand.u32 2147483647, %v5699
        %v5764 = vand.u32 2147483647, %v5700
        %v5765 = vand.u32 2147483647, %v5701
        %v5766 = vand.u32 2147483647, %v5702
        %v5767 = vand.u32 2147483647, %v5703
        %v5768 = vand.u32 2147483647, %v5704
        %v5769 = vand.u32 2147483647, %v5705
        %v5770 = vand.u32 2147483647, %v5706
        %v5771 = vand.u32 2147483647, %v5707
        %v5772 = vand.u32 2147483647, %v5708
        %v5773 = vand.u32 2147483647, %v5709
        %v5774 = vand.u32 2147483647, %v5710
        %v5775 = vand.u32 2147483647, %v5711
        %v5776 = vand.u32 2147483647, %v5712
        %v5777 = vand.u32 2147483647, %v5713
        %v5778 = vand.u32 2147483647, %v5714
        %v5779 = vmul.f32 %v5715, 0.3275911
        %v5780 = vmul.f32 %v5716, 0.3275911
        %v5781 = vmul.f32 %v5717, 0.3275911
        %v5782 = vmul.f32 %v5718, 0.3275911
        %v5783 = vmul.f32 %v5719, 0.3275911
        %v5784 = vmul.f32 %v5720, 0.3275911
        %v5785 = vmul.f32 %v5721, 0.3275911
        %v5786 = vmul.f32 %v5722, 0.3275911
        %v5787 = vmul.f32 %v5723, 0.3275911
        %v5788 = vmul.f32 %v5724, 0.3275911
        %v5789 = vmul.f32 %v5725, 0.3275911
        %v5790 = vmul.f32 %v5726, 0.3275911
        %v5791 = vmul.f32 %v5727, 0.3275911
        %v5792 = vmul.f32 %v5728, 0.3275911
        %v5793 = vmul.f32 %v5729, 0.3275911
        %v5794 = vmul.f32 %v5730, 0.3275911
        %v5795 = vmul.f32 %v5731, 0.3275911
        %v5796 = vmul.f32 %v5732, 0.3275911
        %v5797 = vmul.f32 %v5733, 0.3275911
        %v5798 = vmul.f32 %v5734, 0.3275911
        %v5799 = vmul.f32 %v5735, 0.3275911
        %v5800 = vmul.f32 %v5736, 0.3275911
        %v5801 = vmul.f32 %v5737, 0.3275911
        %v5802 = vmul.f32 %v5738, 0.3275911
        %v5803 = vmul.f32 %v5739, 0.3275911
        %v5804 = vmul.f32 %v5740, 0.3275911
        %v5805 = vmul.f32 %v5741, 0.3275911
        %v5806 = vmul.f32 %v5742, 0.3275911
        %v5807 = vmul.f32 %v5743, 0.3275911
        %v5808 = vmul.f32 %v5744, 0.3275911
        %v5809 = vmul.f32 %v5745, 0.3275911
        %v5810 = vmul.f32 %v5746, 0.3275911
        %v5811 = vmul.f32 %v5747, 0.3275911
        %v5812 = vmul.f32 %v5748, 0.3275911
        %v5813 = vmul.f32 %v5749, 0.3275911
        %v5814 = vmul.f32 %v5750, 0.3275911
        %v5815 = vmul.f32 %v5751, 0.3275911
        %v5816 = vmul.f32 %v5752, 0.3275911
        %v5817 = vmul.f32 %v5753, 0.3275911
        %v5818 = vmul.f32 %v5754, 0.3275911
        %v5819 = vmul.f32 %v5755, 0.3275911
        %v5820 = vmul.f32 %v5756, 0.3275911
        %v5821 = vmul.f32 %v5757, 0.3275911
        %v5822 = vmul.f32 %v5758, 0.3275911
        %v5823 = vmul.f32 %v5759, 0.3275911
        %v5824 = vmul.f32 %v5760, 0.3275911
        %v5825 = vmul.f32 %v5761, 0.3275911
        %v5826 = vmul.f32 %v5762, 0.3275911
        %v5827 = vmul.f32 %v5763, 0.3275911
        %v5828 = vmul.f32 %v5764, 0.3275911
        %v5829 = vmul.f32 %v5765, 0.3275911
        %v5830 = vmul.f32 %v5766, 0.3275911
        %v5831 = vmul.f32 %v5767, 0.3275911
        %v5832 = vmul.f32 %v5768, 0.3275911
        %v5833 = vmul.f32 %v5769, 0.3275911
        %v5834 = vmul.f32 %v5770, 0.3275911
        %v5835 = vmul.f32 %v5771, 0.3275911
        %v5836 = vmul.f32 %v5772, 0.3275911
        %v5837 = vmul.f32 %v5773, 0.3275911
        %v5838 = vmul.f32 %v5774, 0.3275911
        %v5839 = vmul.f32 %v5775, 0.3275911
        %v5840 = vmul.f32 %v5776, 0.3275911
        %v5841 = vmul.f32 %v5777, 0.3275911
        %v5842 = vmul.f32 %v5778, 0.3275911
        %v5843 = vadd.f32 %v5779, 1.0
        %v5844 = vadd.f32 %v5780, 1.0
        %v5845 = vadd.f32 %v5781, 1.0
        %v5846 = vadd.f32 %v5782, 1.0
        %v5847 = vadd.f32 %v5783, 1.0
        %v5848 = vadd.f32 %v5784, 1.0
        %v5849 = vadd.f32 %v5785, 1.0
        %v5850 = vadd.f32 %v5786, 1.0
        %v5851 = vadd.f32 %v5787, 1.0
        %v5852 = vadd.f32 %v5788, 1.0
        %v5853 = vadd.f32 %v5789, 1.0
        %v5854 = vadd.f32 %v5790, 1.0
        %v5855 = vadd.f32 %v5791, 1.0
        %v5856 = vadd.f32 %v5792, 1.0
        %v5857 = vadd.f32 %v5793, 1.0
        %v5858 = vadd.f32 %v5794, 1.0
        %v5859 = vadd.f32 %v5795, 1.0
        %v5860 = vadd.f32 %v5796, 1.0
        %v5861 = vadd.f32 %v5797, 1.0
        %v5862 = vadd.f32 %v5798, 1.0
        %v5863 = vadd.f32 %v5799, 1.0
        %v5864 = vadd.f32 %v5800, 1.0
        %v5865 = vadd.f32 %v5801, 1.0
        %v5866 = vadd.f32 %v5802, 1.0
        %v5867 = vadd.f32 %v5803, 1.0
        %v5868 = vadd.f32 %v5804, 1.0
        %v5869 = vadd.f32 %v5805, 1.0
        %v5870 = vadd.f32 %v5806, 1.0
        %v5871 = vadd.f32 %v5807, 1.0
        %v5872 = vadd.f32 %v5808, 1.0
        %v5873 = vadd.f32 %v5809, 1.0
        %v5874 = vadd.f32 %v5810, 1.0
        %v5875 = vadd.f32 %v5811, 1.0
        %v5876 = vadd.f32 %v5812, 1.0
        %v5877 = vadd.f32 %v5813, 1.0
        %v5878 = vadd.f32 %v5814, 1.0
        %v5879 = vadd.f32 %v5815, 1.0
        %v5880 = vadd.f32 %v5816, 1.0
        %v5881 = vadd.f32 %v5817, 1.0
        %v5882 = vadd.f32 %v5818, 1.0
        %v5883 = vadd.f32 %v5819, 1.0
        %v5884 = vadd.f32 %v5820, 1.0
        %v5885 = vadd.f32 %v5821, 1.0
        %v5886 = vadd.f32 %v5822, 1.0
        %v5887 = vadd.f32 %v5823, 1.0
        %v5888 = vadd.f32 %v5824, 1.0
        %v5889 = vadd.f32 %v5825, 1.0
        %v5890 = vadd.f32 %v5826, 1.0
        %v5891 = vadd.f32 %v5827, 1.0
        %v5892 = vadd.f32 %v5828, 1.0
        %v5893 = vadd.f32 %v5829, 1.0
        %v5894 = vadd.f32 %v5830, 1.0
        %v5895 = vadd.f32 %v5831, 1.0
        %v5896 = vadd.f32 %v5832, 1.0
        %v5897 = vadd.f32 %v5833, 1.0
        %v5898 = vadd.f32 %v5834, 1.0
        %v5899 = vadd.f32 %v5835, 1.0
        %v5900 = vadd.f32 %v5836, 1.0
        %v5901 = vadd.f32 %v5837, 1.0
        %v5902 = vadd.f32 %v5838, 1.0
        %v5903 = vadd.f32 %v5839, 1.0
        %v5904 = vadd.f32 %v5840, 1.0
        %v5905 = vadd.f32 %v5841, 1.0
        %v5906 = vadd.f32 %v5842, 1.0
        %v5907 = vrcp.pop %v5843
        %v5908 = vrcp.pop %v5844
        %v5909 = vrcp.pop %v5845
        %v5910 = vrcp.pop %v5846
        %v5911 = vrcp.pop %v5847
        %v5912 = vrcp.pop %v5848
        %v5913 = vrcp.pop %v5849
        %v5914 = vrcp.pop %v5850
        %v5915 = vrcp.pop %v5851
        %v5916 = vrcp.pop %v5852
        %v5917 = vrcp.pop %v5853
        %v5918 = vrcp.pop %v5854
        %v5919 = vrcp.pop %v5855
        %v5920 = vrcp.pop %v5856
        %v5921 = vrcp.pop %v5857
        %v5922 = vrcp.pop %v5858
        %v5923 = vrcp.pop %v5859
        %v5924 = vrcp.pop %v5860
        %v5925 = vrcp.pop %v5861
        %v5926 = vrcp.pop %v5862
        %v5927 = vrcp.pop %v5863
        %v5928 = vrcp.pop %v5864
        %v5929 = vrcp.pop %v5865
        %v5930 = vrcp.pop %v5866
        %v5931 = vrcp.pop %v5867
        %v5932 = vrcp.pop %v5868
        %v5933 = vrcp.pop %v5869
        %v5934 = vrcp.pop %v5870
        %v5935 = vrcp.pop %v5871
        %v5936 = vrcp.pop %v5872
        %v5937 = vrcp.pop %v5873
        %v5938 = vrcp.pop %v5874
        %v5939 = vrcp.pop %v5875
        %v5940 = vrcp.pop %v5876
        %v5941 = vrcp.pop %v5877
        %v5942 = vrcp.pop %v5878
        %v5943 = vrcp.pop %v5879
        %v5944 = vrcp.pop %v5880
        %v5945 = vrcp.pop %v5881
        %v5946 = vrcp.pop %v5882
        %v5947 = vrcp.pop %v5883
        %v5948 = vrcp.pop %v5884
        %v5949 = vrcp.pop %v5885
        %v5950 = vrcp.pop %v5886
        %v5951 = vrcp.pop %v5887
        %v5952 = vrcp.pop %v5888
        %v5953 = vrcp.pop %v5889
        %v5954 = vrcp.pop %v5890
        %v5955 = vrcp.pop %v5891
        %v5956 = vrcp.pop %v5892
        %v5957 = vrcp.pop %v5893
        %v5958 = vrcp.pop %v5894
        %v5959 = vrcp.pop %v5895
        %v5960 = vrcp.pop %v5896
        %v5961 = vrcp.pop %v5897
        %v5962 = vrcp.pop %v5898
        %v5963 = vrcp.pop %v5899
        %v5964 = vrcp.pop %v5900
        %v5965 = vrcp.pop %v5901
        %v5966 = vrcp.pop %v5902
        %v5967 = vrcp.pop %v5903
        %v5968 = vrcp.pop %v5904
        %v5969 = vrcp.pop %v5905
        %v5970 = vrcp.pop %v5906
        %v5971 = vmul.f32 %v5843, %v5907
        %v5972 = vmul.f32 %v5844, %v5908
        %v5973 = vmul.f32 %v5845, %v5909
        %v5974 = vmul.f32 %v5846, %v5910
        %v5975 = vmul.f32 %v5847, %v5911
        %v5976 = vmul.f32 %v5848, %v5912
        %v5977 = vmul.f32 %v5849, %v5913
        %v5978 = vmul.f32 %v5850, %v5914
        %v5979 = vmul.f32 %v5851, %v5915
        %v5980 = vmul.f32 %v5852, %v5916
        %v5981 = vmul.f32 %v5853, %v5917
        %v5982 = vmul.f32 %v5854, %v5918
        %v5983 = vmul.f32 %v5855, %v5919
        %v5984 = vmul.f32 %v5856, %v5920
        %v5985 = vmul.f32 %v5857, %v5921
        %v5986 = vmul.f32 %v5858, %v5922
        %v5987 = vmul.f32 %v5859, %v5923
        %v5988 = vmul.f32 %v5860, %v5924
        %v5989 = vmul.f32 %v5861, %v5925
        %v5990 = vmul.f32 %v5862, %v5926
        %v5991 = vmul.f32 %v5863, %v5927
        %v5992 = vmul.f32 %v5864, %v5928
        %v5993 = vmul.f32 %v5865, %v5929
        %v5994 = vmul.f32 %v5866, %v5930
        %v5995 = vmul.f32 %v5867, %v5931
        %v5996 = vmul.f32 %v5868, %v5932
        %v5997 = vmul.f32 %v5869, %v5933
        %v5998 = vmul.f32 %v5870, %v5934
        %v5999 = vmul.f32 %v5871, %v5935
        %v6000 = vmul.f32 %v5872, %v5936
        %v6001 = vmul.f32 %v5873, %v5937
        %v6002 = vmul.f32 %v5874, %v5938
        %v6003 = vmul.f32 %v5875, %v5939
        %v6004 = vmul.f32 %v5876, %v5940
        %v6005 = vmul.f32 %v5877, %v5941
        %v6006 = vmul.f32 %v5878, %v5942
        %v6007 = vmul.f32 %v5879, %v5943
        %v6008 = vmul.f32 %v5880, %v5944
        %v6009 = vmul.f32 %v5881, %v5945
        %v6010 = vmul.f32 %v5882, %v5946
        %v6011 = vmul.f32 %v5883, %v5947
        %v6012 = vmul.f32 %v5884, %v5948
        %v6013 = vmul.f32 %v5885, %v5949
        %v6014 = vmul.f32 %v5886, %v5950
        %v6015 = vmul.f32 %v5887, %v5951
        %v6016 = vmul.f32 %v5888, %v5952
        %v6017 = vmul.f32 %v5889, %v5953
        %v6018 = vmul.f32 %v5890, %v5954
        %v6019 = vmul.f32 %v5891, %v5955
        %v6020 = vmul.f32 %v5892, %v5956
        %v6021 = vmul.f32 %v5893, %v5957
        %v6022 = vmul.f32 %v5894, %v5958
        %v6023 = vmul.f32 %v5895, %v5959
        %v6024 = vmul.f32 %v5896, %v5960
        %v6025 = vmul.f32 %v5897, %v5961
        %v6026 = vmul.f32 %v5898, %v5962
        %v6027 = vmul.f32 %v5899, %v5963
        %v6028 = vmul.f32 %v5900, %v5964
        %v6029 = vmul.f32 %v5901, %v5965
        %v6030 = vmul.f32 %v5902, %v5966
        %v6031 = vmul.f32 %v5903, %v5967
        %v6032 = vmul.f32 %v5904, %v5968
        %v6033 = vmul.f32 %v5905, %v5969
        %v6034 = vmul.f32 %v5906, %v5970
        %v6035 = vsub.f32 2.0, %v5971
        %v6036 = vsub.f32 2.0, %v5972
        %v6037 = vsub.f32 2.0, %v5973
        %v6038 = vsub.f32 2.0, %v5974
        %v6039 = vsub.f32 2.0, %v5975
        %v6040 = vsub.f32 2.0, %v5976
        %v6041 = vsub.f32 2.0, %v5977
        %v6042 = vsub.f32 2.0, %v5978
        %v6043 = vsub.f32 2.0, %v5979
        %v6044 = vsub.f32 2.0, %v5980
        %v6045 = vsub.f32 2.0, %v5981
        %v6046 = vsub.f32 2.0, %v5982
        %v6047 = vsub.f32 2.0, %v5983
        %v6048 = vsub.f32 2.0, %v5984
        %v6049 = vsub.f32 2.0, %v5985
        %v6050 = vsub.f32 2.0, %v5986
        %v6051 = vsub.f32 2.0, %v5987
        %v6052 = vsub.f32 2.0, %v5988
        %v6053 = vsub.f32 2.0, %v5989
        %v6054 = vsub.f32 2.0, %v5990
        %v6055 = vsub.f32 2.0, %v5991
        %v6056 = vsub.f32 2.0, %v5992
        %v6057 = vsub.f32 2.0, %v5993
        %v6058 = vsub.f32 2.0, %v5994
        %v6059 = vsub.f32 2.0, %v5995
        %v6060 = vsub.f32 2.0, %v5996
        %v6061 = vsub.f32 2.0, %v5997
        %v6062 = vsub.f32 2.0, %v5998
        %v6063 = vsub.f32 2.0, %v5999
        %v6064 = vsub.f32 2.0, %v6000
        %v6065 = vsub.f32 2.0, %v6001
        %v6066 = vsub.f32 2.0, %v6002
        %v6067 = vsub.f32 2.0, %v6003
        %v6068 = vsub.f32 2.0, %v6004
        %v6069 = vsub.f32 2.0, %v6005
        %v6070 = vsub.f32 2.0, %v6006
        %v6071 = vsub.f32 2.0, %v6007
        %v6072 = vsub.f32 2.0, %v6008
        %v6073 = vsub.f32 2.0, %v6009
        %v6074 = vsub.f32 2.0, %v6010
        %v6075 = vsub.f32 2.0, %v6011
        %v6076 = vsub.f32 2.0, %v6012
        %v6077 = vsub.f32 2.0, %v6013
        %v6078 = vsub.f32 2.0, %v6014
        %v6079 = vsub.f32 2.0, %v6015
        %v6080 = vsub.f32 2.0, %v6016
        %v6081 = vsub.f32 2.0, %v6017
        %v6082 = vsub.f32 2.0, %v6018
        %v6083 = vsub.f32 2.0, %v6019
        %v6084 = vsub.f32 2.0, %v6020
        %v6085 = vsub.f32 2.0, %v6021
        %v6086 = vsub.f32 2.0, %v6022
        %v6087 = vsub.f32 2.0, %v6023
        %v6088 = vsub.f32 2.0, %v6024
        %v6089 = vsub.f32 2.0, %v6025
        %v6090 = vsub.f32 2.0, %v6026
        %v6091 = vsub.f32 2.0, %v6027
        %v6092 = vsub.f32 2.0, %v6028
        %v6093 = vsub.f32 2.0, %v6029
        %v6094 = vsub.f32 2.0, %v6030
        %v6095 = vsub.f32 2.0, %v6031
        %v6096 = vsub.f32 2.0, %v6032
        %v6097 = vsub.f32 2.0, %v6033
        %v6098 = vsub.f32 2.0, %v6034
        %v6099 = vmul.f32 %v5907, %v6035
        %v6100 = vmul.f32 %v5908, %v6036
        %v6101 = vmul.f32 %v5909, %v6037
        %v6102 = vmul.f32 %v5910, %v6038
        %v6103 = vmul.f32 %v5911, %v6039
        %v6104 = vmul.f32 %v5912, %v6040
        %v6105 = vmul.f32 %v5913, %v6041
        %v6106 = vmul.f32 %v5914, %v6042
        %v6107 = vmul.f32 %v5915, %v6043
        %v6108 = vmul.f32 %v5916, %v6044
        %v6109 = vmul.f32 %v5917, %v6045
        %v6110 = vmul.f32 %v5918, %v6046
        %v6111 = vmul.f32 %v5919, %v6047
        %v6112 = vmul.f32 %v5920, %v6048
        %v6113 = vmul.f32 %v5921, %v6049
        %v6114 = vmul.f32 %v5922, %v6050
        %v6115 = vmul.f32 %v5923, %v6051
        %v6116 = vmul.f32 %v5924, %v6052
        %v6117 = vmul.f32 %v5925, %v6053
        %v6118 = vmul.f32 %v5926, %v6054
        %v6119 = vmul.f32 %v5927, %v6055
        %v6120 = vmul.f32 %v5928, %v6056
        %v6121 = vmul.f32 %v5929, %v6057
        %v6122 = vmul.f32 %v5930, %v6058
        %v6123 = vmul.f32 %v5931, %v6059
        %v6124 = vmul.f32 %v5932, %v6060
        %v6125 = vmul.f32 %v5933, %v6061
        %v6126 = vmul.f32 %v5934, %v6062
        %v6127 = vmul.f32 %v5935, %v6063
        %v6128 = vmul.f32 %v5936, %v6064
        %v6129 = vmul.f32 %v5937, %v6065
        %v6130 = vmul.f32 %v5938, %v6066
        %v6131 = vmul.f32 %v5939, %v6067
        %v6132 = vmul.f32 %v5940, %v6068
        %v6133 = vmul.f32 %v5941, %v6069
        %v6134 = vmul.f32 %v5942, %v6070
        %v6135 = vmul.f32 %v5943, %v6071
        %v6136 = vmul.f32 %v5944, %v6072
        %v6137 = vmul.f32 %v5945, %v6073
        %v6138 = vmul.f32 %v5946, %v6074
        %v6139 = vmul.f32 %v5947, %v6075
        %v6140 = vmul.f32 %v5948, %v6076
        %v6141 = vmul.f32 %v5949, %v6077
        %v6142 = vmul.f32 %v5950, %v6078
        %v6143 = vmul.f32 %v5951, %v6079
        %v6144 = vmul.f32 %v5952, %v6080
        %v6145 = vmul.f32 %v5953, %v6081
        %v6146 = vmul.f32 %v5954, %v6082
        %v6147 = vmul.f32 %v5955, %v6083
        %v6148 = vmul.f32 %v5956, %v6084
        %v6149 = vmul.f32 %v5957, %v6085
        %v6150 = vmul.f32 %v5958, %v6086
        %v6151 = vmul.f32 %v5959, %v6087
        %v6152 = vmul.f32 %v5960, %v6088
        %v6153 = vmul.f32 %v5961, %v6089
        %v6154 = vmul.f32 %v5962, %v6090
        %v6155 = vmul.f32 %v5963, %v6091
        %v6156 = vmul.f32 %v5964, %v6092
        %v6157 = vmul.f32 %v5965, %v6093
        %v6158 = vmul.f32 %v5966, %v6094
        %v6159 = vmul.f32 %v5967, %v6095
        %v6160 = vmul.f32 %v5968, %v6096
        %v6161 = vmul.f32 %v5969, %v6097
        %v6162 = vmul.f32 %v5970, %v6098
        %v6163 = vmul.f32 %v6099, 1.0614054
        %v6164 = vmul.f32 %v6100, 1.0614054
        %v6165 = vmul.f32 %v6101, 1.0614054
        %v6166 = vmul.f32 %v6102, 1.0614054
        %v6167 = vmul.f32 %v6103, 1.0614054
        %v6168 = vmul.f32 %v6104, 1.0614054
        %v6169 = vmul.f32 %v6105, 1.0614054
        %v6170 = vmul.f32 %v6106, 1.0614054
        %v6171 = vmul.f32 %v6107, 1.0614054
        %v6172 = vmul.f32 %v6108, 1.0614054
        %v6173 = vmul.f32 %v6109, 1.0614054
        %v6174 = vmul.f32 %v6110, 1.0614054
        %v6175 = vmul.f32 %v6111, 1.0614054
        %v6176 = vmul.f32 %v6112, 1.0614054
        %v6177 = vmul.f32 %v6113, 1.0614054
        %v6178 = vmul.f32 %v6114, 1.0614054
        %v6179 = vmul.f32 %v6115, 1.0614054
        %v6180 = vmul.f32 %v6116, 1.0614054
        %v6181 = vmul.f32 %v6117, 1.0614054
        %v6182 = vmul.f32 %v6118, 1.0614054
        %v6183 = vmul.f32 %v6119, 1.0614054
        %v6184 = vmul.f32 %v6120, 1.0614054
        %v6185 = vmul.f32 %v6121, 1.0614054
        %v6186 = vmul.f32 %v6122, 1.0614054
        %v6187 = vmul.f32 %v6123, 1.0614054
        %v6188 = vmul.f32 %v6124, 1.0614054
        %v6189 = vmul.f32 %v6125, 1.0614054
        %v6190 = vmul.f32 %v6126, 1.0614054
        %v6191 = vmul.f32 %v6127, 1.0614054
        %v6192 = vmul.f32 %v6128, 1.0614054
        %v6193 = vmul.f32 %v6129, 1.0614054
        %v6194 = vmul.f32 %v6130, 1.0614054
        %v6195 = vmul.f32 %v6131, 1.0614054
        %v6196 = vmul.f32 %v6132, 1.0614054
        %v6197 = vmul.f32 %v6133, 1.0614054
        %v6198 = vmul.f32 %v6134, 1.0614054
        %v6199 = vmul.f32 %v6135, 1.0614054
        %v6200 = vmul.f32 %v6136, 1.0614054
        %v6201 = vmul.f32 %v6137, 1.0614054
        %v6202 = vmul.f32 %v6138, 1.0614054
        %v6203 = vmul.f32 %v6139, 1.0614054
        %v6204 = vmul.f32 %v6140, 1.0614054
        %v6205 = vmul.f32 %v6141, 1.0614054
        %v6206 = vmul.f32 %v6142, 1.0614054
        %v6207 = vmul.f32 %v6143, 1.0614054
        %v6208 = vmul.f32 %v6144, 1.0614054
        %v6209 = vmul.f32 %v6145, 1.0614054
        %v6210 = vmul.f32 %v6146, 1.0614054
        %v6211 = vmul.f32 %v6147, 1.0614054
        %v6212 = vmul.f32 %v6148, 1.0614054
        %v6213 = vmul.f32 %v6149, 1.0614054
        %v6214 = vmul.f32 %v6150, 1.0614054
        %v6215 = vmul.f32 %v6151, 1.0614054
        %v6216 = vmul.f32 %v6152, 1.0614054
        %v6217 = vmul.f32 %v6153, 1.0614054
        %v6218 = vmul.f32 %v6154, 1.0614054
        %v6219 = vmul.f32 %v6155, 1.0614054
        %v6220 = vmul.f32 %v6156, 1.0614054
        %v6221 = vmul.f32 %v6157, 1.0614054
        %v6222 = vmul.f32 %v6158, 1.0614054
        %v6223 = vmul.f32 %v6159, 1.0614054
        %v6224 = vmul.f32 %v6160, 1.0614054
        %v6225 = vmul.f32 %v6161, 1.0614054
        %v6226 = vmul.f32 %v6162, 1.0614054
        %v6227 = vadd.f32 %v6163, -1.4531521
        %v6228 = vadd.f32 %v6164, -1.4531521
        %v6229 = vadd.f32 %v6165, -1.4531521
        %v6230 = vadd.f32 %v6166, -1.4531521
        %v6231 = vadd.f32 %v6167, -1.4531521
        %v6232 = vadd.f32 %v6168, -1.4531521
        %v6233 = vadd.f32 %v6169, -1.4531521
        %v6234 = vadd.f32 %v6170, -1.4531521
        %v6235 = vadd.f32 %v6171, -1.4531521
        %v6236 = vadd.f32 %v6172, -1.4531521
        %v6237 = vadd.f32 %v6173, -1.4531521
        %v6238 = vadd.f32 %v6174, -1.4531521
        %v6239 = vadd.f32 %v6175, -1.4531521
        %v6240 = vadd.f32 %v6176, -1.4531521
        %v6241 = vadd.f32 %v6177, -1.4531521
        %v6242 = vadd.f32 %v6178, -1.4531521
        %v6243 = vadd.f32 %v6179, -1.4531521
        %v6244 = vadd.f32 %v6180, -1.4531521
        %v6245 = vadd.f32 %v6181, -1.4531521
        %v6246 = vadd.f32 %v6182, -1.4531521
        %v6247 = vadd.f32 %v6183, -1.4531521
        %v6248 = vadd.f32 %v6184, -1.4531521
        %v6249 = vadd.f32 %v6185, -1.4531521
        %v6250 = vadd.f32 %v6186, -1.4531521
        %v6251 = vadd.f32 %v6187, -1.4531521
        %v6252 = vadd.f32 %v6188, -1.4531521
        %v6253 = vadd.f32 %v6189, -1.4531521
        %v6254 = vadd.f32 %v6190, -1.4531521
        %v6255 = vadd.f32 %v6191, -1.4531521
        %v6256 = vadd.f32 %v6192, -1.4531521
        %v6257 = vadd.f32 %v6193, -1.4531521
        %v6258 = vadd.f32 %v6194, -1.4531521
        %v6259 = vadd.f32 %v6195, -1.4531521
        %v6260 = vadd.f32 %v6196, -1.4531521
        %v6261 = vadd.f32 %v6197, -1.4531521
        %v6262 = vadd.f32 %v6198, -1.4531521
        %v6263 = vadd.f32 %v6199, -1.4531521
        %v6264 = vadd.f32 %v6200, -1.4531521
        %v6265 = vadd.f32 %v6201, -1.4531521
        %v6266 = vadd.f32 %v6202, -1.4531521
        %v6267 = vadd.f32 %v6203, -1.4531521
        %v6268 = vadd.f32 %v6204, -1.4531521
        %v6269 = vadd.f32 %v6205, -1.4531521
        %v6270 = vadd.f32 %v6206, -1.4531521
        %v6271 = vadd.f32 %v6207, -1.4531521
        %v6272 = vadd.f32 %v6208, -1.4531521
        %v6273 = vadd.f32 %v6209, -1.4531521
        %v6274 = vadd.f32 %v6210, -1.4531521
        %v6275 = vadd.f32 %v6211, -1.4531521
        %v6276 = vadd.f32 %v6212, -1.4531521
        %v6277 = vadd.f32 %v6213, -1.4531521
        %v6278 = vadd.f32 %v6214, -1.4531521
        %v6279 = vadd.f32 %v6215, -1.4531521
        %v6280 = vadd.f32 %v6216, -1.4531521
        %v6281 = vadd.f32 %v6217, -1.4531521
        %v6282 = vadd.f32 %v6218, -1.4531521
        %v6283 = vadd.f32 %v6219, -1.4531521
        %v6284 = vadd.f32 %v6220, -1.4531521
        %v6285 = vadd.f32 %v6221, -1.4531521
        %v6286 = vadd.f32 %v6222, -1.4531521
        %v6287 = vadd.f32 %v6223, -1.4531521
        %v6288 = vadd.f32 %v6224, -1.4531521
        %v6289 = vadd.f32 %v6225, -1.4531521
        %v6290 = vadd.f32 %v6226, -1.4531521
        %v6291 = vmul.f32 %v6099, %v6227
        %v6292 = vmul.f32 %v6100, %v6228
        %v6293 = vmul.f32 %v6101, %v6229
        %v6294 = vmul.f32 %v6102, %v6230
        %v6295 = vmul.f32 %v6103, %v6231
        %v6296 = vmul.f32 %v6104, %v6232
        %v6297 = vmul.f32 %v6105, %v6233
        %v6298 = vmul.f32 %v6106, %v6234
        %v6299 = vmul.f32 %v6107, %v6235
        %v6300 = vmul.f32 %v6108, %v6236
        %v6301 = vmul.f32 %v6109, %v6237
        %v6302 = vmul.f32 %v6110, %v6238
        %v6303 = vmul.f32 %v6111, %v6239
        %v6304 = vmul.f32 %v6112, %v6240
        %v6305 = vmul.f32 %v6113, %v6241
        %v6306 = vmul.f32 %v6114, %v6242
        %v6307 = vmul.f32 %v6115, %v6243
        %v6308 = vmul.f32 %v6116, %v6244
        %v6309 = vmul.f32 %v6117, %v6245
        %v6310 = vmul.f32 %v6118, %v6246
        %v6311 = vmul.f32 %v6119, %v6247
        %v6312 = vmul.f32 %v6120, %v6248
        %v6313 = vmul.f32 %v6121, %v6249
        %v6314 = vmul.f32 %v6122, %v6250
        %v6315 = vmul.f32 %v6123, %v6251
        %v6316 = vmul.f32 %v6124, %v6252
        %v6317 = vmul.f32 %v6125, %v6253
        %v6318 = vmul.f32 %v6126, %v6254
        %v6319 = vmul.f32 %v6127, %v6255
        %v6320 = vmul.f32 %v6128, %v6256
        %v6321 = vmul.f32 %v6129, %v6257
        %v6322 = vmul.f32 %v6130, %v6258
        %v6323 = vmul.f32 %v6131, %v6259
        %v6324 = vmul.f32 %v6132, %v6260
        %v6325 = vmul.f32 %v6133, %v6261
        %v6326 = vmul.f32 %v6134, %v6262
        %v6327 = vmul.f32 %v6135, %v6263
        %v6328 = vmul.f32 %v6136, %v6264
        %v6329 = vmul.f32 %v6137, %v6265
        %v6330 = vmul.f32 %v6138, %v6266
        %v6331 = vmul.f32 %v6139, %v6267
        %v6332 = vmul.f32 %v6140, %v6268
        %v6333 = vmul.f32 %v6141, %v6269
        %v6334 = vmul.f32 %v6142, %v6270
        %v6335 = vmul.f32 %v6143, %v6271
        %v6336 = vmul.f32 %v6144, %v6272
        %v6337 = vmul.f32 %v6145, %v6273
        %v6338 = vmul.f32 %v6146, %v6274
        %v6339 = vmul.f32 %v6147, %v6275
        %v6340 = vmul.f32 %v6148, %v6276
        %v6341 = vmul.f32 %v6149, %v6277
        %v6342 = vmul.f32 %v6150, %v6278
        %v6343 = vmul.f32 %v6151, %v6279
        %v6344 = vmul.f32 %v6152, %v6280
        %v6345 = vmul.f32 %v6153, %v6281
        %v6346 = vmul.f32 %v6154, %v6282
        %v6347 = vmul.f32 %v6155, %v6283
        %v6348 = vmul.f32 %v6156, %v6284
        %v6349 = vmul.f32 %v6157, %v6285
        %v6350 = vmul.f32 %v6158, %v6286
        %v6351 = vmul.f32 %v6159, %v6287
        %v6352 = vmul.f32 %v6160, %v6288
        %v6353 = vmul.f32 %v6161, %v6289
        %v6354 = vmul.f32 %v6162, %v6290
        %v6355 = vadd.f32 %v6291, 1.4214138
        %v6356 = vadd.f32 %v6292, 1.4214138
        %v6357 = vadd.f32 %v6293, 1.4214138
        %v6358 = vadd.f32 %v6294, 1.4214138
        %v6359 = vadd.f32 %v6295, 1.4214138
        %v6360 = vadd.f32 %v6296, 1.4214138
        %v6361 = vadd.f32 %v6297, 1.4214138
        %v6362 = vadd.f32 %v6298, 1.4214138
        %v6363 = vadd.f32 %v6299, 1.4214138
        %v6364 = vadd.f32 %v6300, 1.4214138
        %v6365 = vadd.f32 %v6301, 1.4214138
        %v6366 = vadd.f32 %v6302, 1.4214138
        %v6367 = vadd.f32 %v6303, 1.4214138
        %v6368 = vadd.f32 %v6304, 1.4214138
        %v6369 = vadd.f32 %v6305, 1.4214138
        %v6370 = vadd.f32 %v6306, 1.4214138
        %v6371 = vadd.f32 %v6307, 1.4214138
        %v6372 = vadd.f32 %v6308, 1.4214138
        %v6373 = vadd.f32 %v6309, 1.4214138
        %v6374 = vadd.f32 %v6310, 1.4214138
        %v6375 = vadd.f32 %v6311, 1.4214138
        %v6376 = vadd.f32 %v6312, 1.4214138
        %v6377 = vadd.f32 %v6313, 1.4214138
        %v6378 = vadd.f32 %v6314, 1.4214138
        %v6379 = vadd.f32 %v6315, 1.4214138
        %v6380 = vadd.f32 %v6316, 1.4214138
        %v6381 = vadd.f32 %v6317, 1.4214138
        %v6382 = vadd.f32 %v6318, 1.4214138
        %v6383 = vadd.f32 %v6319, 1.4214138
        %v6384 = vadd.f32 %v6320, 1.4214138
        %v6385 = vadd.f32 %v6321, 1.4214138
        %v6386 = vadd.f32 %v6322, 1.4214138
        %v6387 = vadd.f32 %v6323, 1.4214138
        %v6388 = vadd.f32 %v6324, 1.4214138
        %v6389 = vadd.f32 %v6325, 1.4214138
        %v6390 = vadd.f32 %v6326, 1.4214138
        %v6391 = vadd.f32 %v6327, 1.4214138
        %v6392 = vadd.f32 %v6328, 1.4214138
        %v6393 = vadd.f32 %v6329, 1.4214138
        %v6394 = vadd.f32 %v6330, 1.4214138
        %v6395 = vadd.f32 %v6331, 1.4214138
        %v6396 = vadd.f32 %v6332, 1.4214138
        %v6397 = vadd.f32 %v6333, 1.4214138
        %v6398 = vadd.f32 %v6334, 1.4214138
        %v6399 = vadd.f32 %v6335, 1.4214138
        %v6400 = vadd.f32 %v6336, 1.4214138
        %v6401 = vadd.f32 %v6337, 1.4214138
        %v6402 = vadd.f32 %v6338, 1.4214138
        %v6403 = vadd.f32 %v6339, 1.4214138
        %v6404 = vadd.f32 %v6340, 1.4214138
        %v6405 = vadd.f32 %v6341, 1.4214138
        %v6406 = vadd.f32 %v6342, 1.4214138
        %v6407 = vadd.f32 %v6343, 1.4214138
        %v6408 = vadd.f32 %v6344, 1.4214138
        %v6409 = vadd.f32 %v6345, 1.4214138
        %v6410 = vadd.f32 %v6346, 1.4214138
        %v6411 = vadd.f32 %v6347, 1.4214138
        %v6412 = vadd.f32 %v6348, 1.4214138
        %v6413 = vadd.f32 %v6349, 1.4214138
        %v6414 = vadd.f32 %v6350, 1.4214138
        %v6415 = vadd.f32 %v6351, 1.4214138
        %v6416 = vadd.f32 %v6352, 1.4214138
        %v6417 = vadd.f32 %v6353, 1.4214138
        %v6418 = vadd.f32 %v6354, 1.4214138
        %v6419 = vmul.f32 %v6099, %v6355
        %v6420 = vmul.f32 %v6100, %v6356
        %v6421 = vmul.f32 %v6101, %v6357
        %v6422 = vmul.f32 %v6102, %v6358
        %v6423 = vmul.f32 %v6103, %v6359
        %v6424 = vmul.f32 %v6104, %v6360
        %v6425 = vmul.f32 %v6105, %v6361
        %v6426 = vmul.f32 %v6106, %v6362
        %v6427 = vmul.f32 %v6107, %v6363
        %v6428 = vmul.f32 %v6108, %v6364
        %v6429 = vmul.f32 %v6109, %v6365
        %v6430 = vmul.f32 %v6110, %v6366
        %v6431 = vmul.f32 %v6111, %v6367
        %v6432 = vmul.f32 %v6112, %v6368
        %v6433 = vmul.f32 %v6113, %v6369
        %v6434 = vmul.f32 %v6114, %v6370
        %v6435 = vmul.f32 %v6115, %v6371
        %v6436 = vmul.f32 %v6116, %v6372
        %v6437 = vmul.f32 %v6117, %v6373
        %v6438 = vmul.f32 %v6118, %v6374
        %v6439 = vmul.f32 %v6119, %v6375
        %v6440 = vmul.f32 %v6120, %v6376
        %v6441 = vmul.f32 %v6121, %v6377
        %v6442 = vmul.f32 %v6122, %v6378
        %v6443 = vmul.f32 %v6123, %v6379
        %v6444 = vmul.f32 %v6124, %v6380
        %v6445 = vmul.f32 %v6125, %v6381
        %v6446 = vmul.f32 %v6126, %v6382
        %v6447 = vmul.f32 %v6127, %v6383
        %v6448 = vmul.f32 %v6128, %v6384
        %v6449 = vmul.f32 %v6129, %v6385
        %v6450 = vmul.f32 %v6130, %v6386
        %v6451 = vmul.f32 %v6131, %v6387
        %v6452 = vmul.f32 %v6132, %v6388
        %v6453 = vmul.f32 %v6133, %v6389
        %v6454 = vmul.f32 %v6134, %v6390
        %v6455 = vmul.f32 %v6135, %v6391
        %v6456 = vmul.f32 %v6136, %v6392
        %v6457 = vmul.f32 %v6137, %v6393
        %v6458 = vmul.f32 %v6138, %v6394
        %v6459 = vmul.f32 %v6139, %v6395
        %v6460 = vmul.f32 %v6140, %v6396
        %v6461 = vmul.f32 %v6141, %v6397
        %v6462 = vmul.f32 %v6142, %v6398
        %v6463 = vmul.f32 %v6143, %v6399
        %v6464 = vmul.f32 %v6144, %v6400
        %v6465 = vmul.f32 %v6145, %v6401
        %v6466 = vmul.f32 %v6146, %v6402
        %v6467 = vmul.f32 %v6147, %v6403
        %v6468 = vmul.f32 %v6148, %v6404
        %v6469 = vmul.f32 %v6149, %v6405
        %v6470 = vmul.f32 %v6150, %v6406
        %v6471 = vmul.f32 %v6151, %v6407
        %v6472 = vmul.f32 %v6152, %v6408
        %v6473 = vmul.f32 %v6153, %v6409
        %v6474 = vmul.f32 %v6154, %v6410
        %v6475 = vmul.f32 %v6155, %v6411
        %v6476 = vmul.f32 %v6156, %v6412
        %v6477 = vmul.f32 %v6157, %v6413
        %v6478 = vmul.f32 %v6158, %v6414
        %v6479 = vmul.f32 %v6159, %v6415
        %v6480 = vmul.f32 %v6160, %v6416
        %v6481 = vmul.f32 %v6161, %v6417
        %v6482 = vmul.f32 %v6162, %v6418
        %v6483 = vadd.f32 %v6419, -0.28449672
        %v6484 = vadd.f32 %v6420, -0.28449672
        %v6485 = vadd.f32 %v6421, -0.28449672
        %v6486 = vadd.f32 %v6422, -0.28449672
        %v6487 = vadd.f32 %v6423, -0.28449672
        %v6488 = vadd.f32 %v6424, -0.28449672
        %v6489 = vadd.f32 %v6425, -0.28449672
        %v6490 = vadd.f32 %v6426, -0.28449672
        %v6491 = vadd.f32 %v6427, -0.28449672
        %v6492 = vadd.f32 %v6428, -0.28449672
        %v6493 = vadd.f32 %v6429, -0.28449672
        %v6494 = vadd.f32 %v6430, -0.28449672
        %v6495 = vadd.f32 %v6431, -0.28449672
        %v6496 = vadd.f32 %v6432, -0.28449672
        %v6497 = vadd.f32 %v6433, -0.28449672
        %v6498 = vadd.f32 %v6434, -0.28449672
        %v6499 = vadd.f32 %v6435, -0.28449672
        %v6500 = vadd.f32 %v6436, -0.28449672
        %v6501 = vadd.f32 %v6437, -0.28449672
        %v6502 = vadd.f32 %v6438, -0.28449672
        %v6503 = vadd.f32 %v6439, -0.28449672
        %v6504 = vadd.f32 %v6440, -0.28449672
        %v6505 = vadd.f32 %v6441, -0.28449672
        %v6506 = vadd.f32 %v6442, -0.28449672
        %v6507 = vadd.f32 %v6443, -0.28449672
        %v6508 = vadd.f32 %v6444, -0.28449672
        %v6509 = vadd.f32 %v6445, -0.28449672
        %v6510 = vadd.f32 %v6446, -0.28449672
        %v6511 = vadd.f32 %v6447, -0.28449672
        %v6512 = vadd.f32 %v6448, -0.28449672
        %v6513 = vadd.f32 %v6449, -0.28449672
        %v6514 = vadd.f32 %v6450, -0.28449672
        %v6515 = vadd.f32 %v6451, -0.28449672
        %v6516 = vadd.f32 %v6452, -0.28449672
        %v6517 = vadd.f32 %v6453, -0.28449672
        %v6518 = vadd.f32 %v6454, -0.28449672
        %v6519 = vadd.f32 %v6455, -0.28449672
        %v6520 = vadd.f32 %v6456, -0.28449672
        %v6521 = vadd.f32 %v6457, -0.28449672
        %v6522 = vadd.f32 %v6458, -0.28449672
        %v6523 = vadd.f32 %v6459, -0.28449672
        %v6524 = vadd.f32 %v6460, -0.28449672
        %v6525 = vadd.f32 %v6461, -0.28449672
        %v6526 = vadd.f32 %v6462, -0.28449672
        %v6527 = vadd.f32 %v6463, -0.28449672
        %v6528 = vadd.f32 %v6464, -0.28449672
        %v6529 = vadd.f32 %v6465, -0.28449672
        %v6530 = vadd.f32 %v6466, -0.28449672
        %v6531 = vadd.f32 %v6467, -0.28449672
        %v6532 = vadd.f32 %v6468, -0.28449672
        %v6533 = vadd.f32 %v6469, -0.28449672
        %v6534 = vadd.f32 %v6470, -0.28449672
        %v6535 = vadd.f32 %v6471, -0.28449672
        %v6536 = vadd.f32 %v6472, -0.28449672
        %v6537 = vadd.f32 %v6473, -0.28449672
        %v6538 = vadd.f32 %v6474, -0.28449672
        %v6539 = vadd.f32 %v6475, -0.28449672
        %v6540 = vadd.f32 %v6476, -0.28449672
        %v6541 = vadd.f32 %v6477, -0.28449672
        %v6542 = vadd.f32 %v6478, -0.28449672
        %v6543 = vadd.f32 %v6479, -0.28449672
        %v6544 = vadd.f32 %v6480, -0.28449672
        %v6545 = vadd.f32 %v6481, -0.28449672
        %v6546 = vadd.f32 %v6482, -0.28449672
        %v6547 = vmul.f32 %v6099, %v6483
        %v6548 = vmul.f32 %v6100, %v6484
        %v6549 = vmul.f32 %v6101, %v6485
        %v6550 = vmul.f32 %v6102, %v6486
        %v6551 = vmul.f32 %v6103, %v6487
        %v6552 = vmul.f32 %v6104, %v6488
        %v6553 = vmul.f32 %v6105, %v6489
        %v6554 = vmul.f32 %v6106, %v6490
        %v6555 = vmul.f32 %v6107, %v6491
        %v6556 = vmul.f32 %v6108, %v6492
        %v6557 = vmul.f32 %v6109, %v6493
        %v6558 = vmul.f32 %v6110, %v6494
        %v6559 = vmul.f32 %v6111, %v6495
        %v6560 = vmul.f32 %v6112, %v6496
        %v6561 = vmul.f32 %v6113, %v6497
        %v6562 = vmul.f32 %v6114, %v6498
        %v6563 = vmul.f32 %v6115, %v6499
        %v6564 = vmul.f32 %v6116, %v6500
        %v6565 = vmul.f32 %v6117, %v6501
        %v6566 = vmul.f32 %v6118, %v6502
        %v6567 = vmul.f32 %v6119, %v6503
        %v6568 = vmul.f32 %v6120, %v6504
        %v6569 = vmul.f32 %v6121, %v6505
        %v6570 = vmul.f32 %v6122, %v6506
        %v6571 = vmul.f32 %v6123, %v6507
        %v6572 = vmul.f32 %v6124, %v6508
        %v6573 = vmul.f32 %v6125, %v6509
        %v6574 = vmul.f32 %v6126, %v6510
        %v6575 = vmul.f32 %v6127, %v6511
        %v6576 = vmul.f32 %v6128, %v6512
        %v6577 = vmul.f32 %v6129, %v6513
        %v6578 = vmul.f32 %v6130, %v6514
        %v6579 = vmul.f32 %v6131, %v6515
        %v6580 = vmul.f32 %v6132, %v6516
        %v6581 = vmul.f32 %v6133, %v6517
        %v6582 = vmul.f32 %v6134, %v6518
        %v6583 = vmul.f32 %v6135, %v6519
        %v6584 = vmul.f32 %v6136, %v6520
        %v6585 = vmul.f32 %v6137, %v6521
        %v6586 = vmul.f32 %v6138, %v6522
        %v6587 = vmul.f32 %v6139, %v6523
        %v6588 = vmul.f32 %v6140, %v6524
        %v6589 = vmul.f32 %v6141, %v6525
        %v6590 = vmul.f32 %v6142, %v6526
        %v6591 = vmul.f32 %v6143, %v6527
        %v6592 = vmul.f32 %v6144, %v6528
        %v6593 = vmul.f32 %v6145, %v6529
        %v6594 = vmul.f32 %v6146, %v6530
        %v6595 = vmul.f32 %v6147, %v6531
        %v6596 = vmul.f32 %v6148, %v6532
        %v6597 = vmul.f32 %v6149, %v6533
        %v6598 = vmul.f32 %v6150, %v6534
        %v6599 = vmul.f32 %v6151, %v6535
        %v6600 = vmul.f32 %v6152, %v6536
        %v6601 = vmul.f32 %v6153, %v6537
        %v6602 = vmul.f32 %v6154, %v6538
        %v6603 = vmul.f32 %v6155, %v6539
        %v6604 = vmul.f32 %v6156, %v6540
        %v6605 = vmul.f32 %v6157, %v6541
        %v6606 = vmul.f32 %v6158, %v6542
        %v6607 = vmul.f32 %v6159, %v6543
        %v6608 = vmul.f32 %v6160, %v6544
        %v6609 = vmul.f32 %v6161, %v6545
        %v6610 = vmul.f32 %v6162, %v6546
        %v6611 = vadd.f32 %v6547, 0.2548296
        %v6612 = vadd.f32 %v6548, 0.2548296
        %v6613 = vadd.f32 %v6549, 0.2548296
        %v6614 = vadd.f32 %v6550, 0.2548296
        %v6615 = vadd.f32 %v6551, 0.2548296
        %v6616 = vadd.f32 %v6552, 0.2548296
        %v6617 = vadd.f32 %v6553, 0.2548296
        %v6618 = vadd.f32 %v6554, 0.2548296
        %v6619 = vadd.f32 %v6555, 0.2548296
        %v6620 = vadd.f32 %v6556, 0.2548296
        %v6621 = vadd.f32 %v6557, 0.2548296
        %v6622 = vadd.f32 %v6558, 0.2548296
        %v6623 = vadd.f32 %v6559, 0.2548296
        %v6624 = vadd.f32 %v6560, 0.2548296
        %v6625 = vadd.f32 %v6561, 0.2548296
        %v6626 = vadd.f32 %v6562, 0.2548296
        %v6627 = vadd.f32 %v6563, 0.2548296
        %v6628 = vadd.f32 %v6564, 0.2548296
        %v6629 = vadd.f32 %v6565, 0.2548296
        %v6630 = vadd.f32 %v6566, 0.2548296
        %v6631 = vadd.f32 %v6567, 0.2548296
        %v6632 = vadd.f32 %v6568, 0.2548296
        %v6633 = vadd.f32 %v6569, 0.2548296
        %v6634 = vadd.f32 %v6570, 0.2548296
        %v6635 = vadd.f32 %v6571, 0.2548296
        %v6636 = vadd.f32 %v6572, 0.2548296
        %v6637 = vadd.f32 %v6573, 0.2548296
        %v6638 = vadd.f32 %v6574, 0.2548296
        %v6639 = vadd.f32 %v6575, 0.2548296
        %v6640 = vadd.f32 %v6576, 0.2548296
        %v6641 = vadd.f32 %v6577, 0.2548296
        %v6642 = vadd.f32 %v6578, 0.2548296
        %v6643 = vadd.f32 %v6579, 0.2548296
        %v6644 = vadd.f32 %v6580, 0.2548296
        %v6645 = vadd.f32 %v6581, 0.2548296
        %v6646 = vadd.f32 %v6582, 0.2548296
        %v6647 = vadd.f32 %v6583, 0.2548296
        %v6648 = vadd.f32 %v6584, 0.2548296
        %v6649 = vadd.f32 %v6585, 0.2548296
        %v6650 = vadd.f32 %v6586, 0.2548296
        %v6651 = vadd.f32 %v6587, 0.2548296
        %v6652 = vadd.f32 %v6588, 0.2548296
        %v6653 = vadd.f32 %v6589, 0.2548296
        %v6654 = vadd.f32 %v6590, 0.2548296
        %v6655 = vadd.f32 %v6591, 0.2548296
        %v6656 = vadd.f32 %v6592, 0.2548296
        %v6657 = vadd.f32 %v6593, 0.2548296
        %v6658 = vadd.f32 %v6594, 0.2548296
        %v6659 = vadd.f32 %v6595, 0.2548296
        %v6660 = vadd.f32 %v6596, 0.2548296
        %v6661 = vadd.f32 %v6597, 0.2548296
        %v6662 = vadd.f32 %v6598, 0.2548296
        %v6663 = vadd.f32 %v6599, 0.2548296
        %v6664 = vadd.f32 %v6600, 0.2548296
        %v6665 = vadd.f32 %v6601, 0.2548296
        %v6666 = vadd.f32 %v6602, 0.2548296
        %v6667 = vadd.f32 %v6603, 0.2548296
        %v6668 = vadd.f32 %v6604, 0.2548296
        %v6669 = vadd.f32 %v6605, 0.2548296
        %v6670 = vadd.f32 %v6606, 0.2548296
        %v6671 = vadd.f32 %v6607, 0.2548296
        %v6672 = vadd.f32 %v6608, 0.2548296
        %v6673 = vadd.f32 %v6609, 0.2548296
        %v6674 = vadd.f32 %v6610, 0.2548296
        %v6675 = vmul.f32 %v6099, %v6611
        %v6676 = vmul.f32 %v6100, %v6612
        %v6677 = vmul.f32 %v6101, %v6613
        %v6678 = vmul.f32 %v6102, %v6614
        %v6679 = vmul.f32 %v6103, %v6615
        %v6680 = vmul.f32 %v6104, %v6616
        %v6681 = vmul.f32 %v6105, %v6617
        %v6682 = vmul.f32 %v6106, %v6618
        %v6683 = vmul.f32 %v6107, %v6619
        %v6684 = vmul.f32 %v6108, %v6620
        %v6685 = vmul.f32 %v6109, %v6621
        %v6686 = vmul.f32 %v6110, %v6622
        %v6687 = vmul.f32 %v6111, %v6623
        %v6688 = vmul.f32 %v6112, %v6624
        %v6689 = vmul.f32 %v6113, %v6625
        %v6690 = vmul.f32 %v6114, %v6626
        %v6691 = vmul.f32 %v6115, %v6627
        %v6692 = vmul.f32 %v6116, %v6628
        %v6693 = vmul.f32 %v6117, %v6629
        %v6694 = vmul.f32 %v6118, %v6630
        %v6695 = vmul.f32 %v6119, %v6631
        %v6696 = vmul.f32 %v6120, %v6632
        %v6697 = vmul.f32 %v6121, %v6633
        %v6698 = vmul.f32 %v6122, %v6634
        %v6699 = vmul.f32 %v6123, %v6635
        %v6700 = vmul.f32 %v6124, %v6636
        %v6701 = vmul.f32 %v6125, %v6637
        %v6702 = vmul.f32 %v6126, %v6638
        %v6703 = vmul.f32 %v6127, %v6639
        %v6704 = vmul.f32 %v6128, %v6640
        %v6705 = vmul.f32 %v6129, %v6641
        %v6706 = vmul.f32 %v6130, %v6642
        %v6707 = vmul.f32 %v6131, %v6643
        %v6708 = vmul.f32 %v6132, %v6644
        %v6709 = vmul.f32 %v6133, %v6645
        %v6710 = vmul.f32 %v6134, %v6646
        %v6711 = vmul.f32 %v6135, %v6647
        %v6712 = vmul.f32 %v6136, %v6648
        %v6713 = vmul.f32 %v6137, %v6649
        %v6714 = vmul.f32 %v6138, %v6650
        %v6715 = vmul.f32 %v6139, %v6651
        %v6716 = vmul.f32 %v6140, %v6652
        %v6717 = vmul.f32 %v6141, %v6653
        %v6718 = vmul.f32 %v6142, %v6654
        %v6719 = vmul.f32 %v6143, %v6655
        %v6720 = vmul.f32 %v6144, %v6656
        %v6721 = vmul.f32 %v6145, %v6657
        %v6722 = vmul.f32 %v6146, %v6658
        %v6723 = vmul.f32 %v6147, %v6659
        %v6724 = vmul.f32 %v6148, %v6660
        %v6725 = vmul.f32 %v6149, %v6661
        %v6726 = vmul.f32 %v6150, %v6662
        %v6727 = vmul.f32 %v6151, %v6663
        %v6728 = vmul.f32 %v6152, %v6664
        %v6729 = vmul.f32 %v6153, %v6665
        %v6730 = vmul.f32 %v6154, %v6666
        %v6731 = vmul.f32 %v6155, %v6667
        %v6732 = vmul.f32 %v6156, %v6668
        %v6733 = vmul.f32 %v6157, %v6669
        %v6734 = vmul.f32 %v6158, %v6670
        %v6735 = vmul.f32 %v6159, %v6671
        %v6736 = vmul.f32 %v6160, %v6672
        %v6737 = vmul.f32 %v6161, %v6673
        %v6738 = vmul.f32 %v6162, %v6674
        %v6739 = vsub.f32 0.0, %v5715
        %v6740 = vsub.f32 0.0, %v5716
        %v6741 = vsub.f32 0.0, %v5717
        %v6742 = vsub.f32 0.0, %v5718
        %v6743 = vsub.f32 0.0, %v5719
        %v6744 = vsub.f32 0.0, %v5720
        %v6745 = vsub.f32 0.0, %v5721
        %v6746 = vsub.f32 0.0, %v5722
        %v6747 = vsub.f32 0.0, %v5723
        %v6748 = vsub.f32 0.0, %v5724
        %v6749 = vsub.f32 0.0, %v5725
        %v6750 = vsub.f32 0.0, %v5726
        %v6751 = vsub.f32 0.0, %v5727
        %v6752 = vsub.f32 0.0, %v5728
        %v6753 = vsub.f32 0.0, %v5729
        %v6754 = vsub.f32 0.0, %v5730
        %v6755 = vsub.f32 0.0, %v5731
        %v6756 = vsub.f32 0.0, %v5732
        %v6757 = vsub.f32 0.0, %v5733
        %v6758 = vsub.f32 0.0, %v5734
        %v6759 = vsub.f32 0.0, %v5735
        %v6760 = vsub.f32 0.0, %v5736
        %v6761 = vsub.f32 0.0, %v5737
        %v6762 = vsub.f32 0.0, %v5738
        %v6763 = vsub.f32 0.0, %v5739
        %v6764 = vsub.f32 0.0, %v5740
        %v6765 = vsub.f32 0.0, %v5741
        %v6766 = vsub.f32 0.0, %v5742
        %v6767 = vsub.f32 0.0, %v5743
        %v6768 = vsub.f32 0.0, %v5744
        %v6769 = vsub.f32 0.0, %v5745
        %v6770 = vsub.f32 0.0, %v5746
        %v6771 = vsub.f32 0.0, %v5747
        %v6772 = vsub.f32 0.0, %v5748
        %v6773 = vsub.f32 0.0, %v5749
        %v6774 = vsub.f32 0.0, %v5750
        %v6775 = vsub.f32 0.0, %v5751
        %v6776 = vsub.f32 0.0, %v5752
        %v6777 = vsub.f32 0.0, %v5753
        %v6778 = vsub.f32 0.0, %v5754
        %v6779 = vsub.f32 0.0, %v5755
        %v6780 = vsub.f32 0.0, %v5756
        %v6781 = vsub.f32 0.0, %v5757
        %v6782 = vsub.f32 0.0, %v5758
        %v6783 = vsub.f32 0.0, %v5759
        %v6784 = vsub.f32 0.0, %v5760
        %v6785 = vsub.f32 0.0, %v5761
        %v6786 = vsub.f32 0.0, %v5762
        %v6787 = vsub.f32 0.0, %v5763
        %v6788 = vsub.f32 0.0, %v5764
        %v6789 = vsub.f32 0.0, %v5765
        %v6790 = vsub.f32 0.0, %v5766
        %v6791 = vsub.f32 0.0, %v5767
        %v6792 = vsub.f32 0.0, %v5768
        %v6793 = vsub.f32 0.0, %v5769
        %v6794 = vsub.f32 0.0, %v5770
        %v6795 = vsub.f32 0.0, %v5771
        %v6796 = vsub.f32 0.0, %v5772
        %v6797 = vsub.f32 0.0, %v5773
        %v6798 = vsub.f32 0.0, %v5774
        %v6799 = vsub.f32 0.0, %v5775
        %v6800 = vsub.f32 0.0, %v5776
        %v6801 = vsub.f32 0.0, %v5777
        %v6802 = vsub.f32 0.0, %v5778
        %v6803 = vmul.f32 %v6739, %v5715
        %v6804 = vmul.f32 %v6740, %v5716
        %v6805 = vmul.f32 %v6741, %v5717
        %v6806 = vmul.f32 %v6742, %v5718
        %v6807 = vmul.f32 %v6743, %v5719
        %v6808 = vmul.f32 %v6744, %v5720
        %v6809 = vmul.f32 %v6745, %v5721
        %v6810 = vmul.f32 %v6746, %v5722
        %v6811 = vmul.f32 %v6747, %v5723
        %v6812 = vmul.f32 %v6748, %v5724
        %v6813 = vmul.f32 %v6749, %v5725
        %v6814 = vmul.f32 %v6750, %v5726
        %v6815 = vmul.f32 %v6751, %v5727
        %v6816 = vmul.f32 %v6752, %v5728
        %v6817 = vmul.f32 %v6753, %v5729
        %v6818 = vmul.f32 %v6754, %v5730
        %v6819 = vmul.f32 %v6755, %v5731
        %v6820 = vmul.f32 %v6756, %v5732
        %v6821 = vmul.f32 %v6757, %v5733
        %v6822 = vmul.f32 %v6758, %v5734
        %v6823 = vmul.f32 %v6759, %v5735
        %v6824 = vmul.f32 %v6760, %v5736
        %v6825 = vmul.f32 %v6761, %v5737
        %v6826 = vmul.f32 %v6762, %v5738
        %v6827 = vmul.f32 %v6763, %v5739
        %v6828 = vmul.f32 %v6764, %v5740
        %v6829 = vmul.f32 %v6765, %v5741
        %v6830 = vmul.f32 %v6766, %v5742
        %v6831 = vmul.f32 %v6767, %v5743
        %v6832 = vmul.f32 %v6768, %v5744
        %v6833 = vmul.f32 %v6769, %v5745
        %v6834 = vmul.f32 %v6770, %v5746
        %v6835 = vmul.f32 %v6771, %v5747
        %v6836 = vmul.f32 %v6772, %v5748
        %v6837 = vmul.f32 %v6773, %v5749
        %v6838 = vmul.f32 %v6774, %v5750
        %v6839 = vmul.f32 %v6775, %v5751
        %v6840 = vmul.f32 %v6776, %v5752
        %v6841 = vmul.f32 %v6777, %v5753
        %v6842 = vmul.f32 %v6778, %v5754
        %v6843 = vmul.f32 %v6779, %v5755
        %v6844 = vmul.f32 %v6780, %v5756
        %v6845 = vmul.f32 %v6781, %v5757
        %v6846 = vmul.f32 %v6782, %v5758
        %v6847 = vmul.f32 %v6783, %v5759
        %v6848 = vmul.f32 %v6784, %v5760
        %v6849 = vmul.f32 %v6785, %v5761
        %v6850 = vmul.f32 %v6786, %v5762
        %v6851 = vmul.f32 %v6787, %v5763
        %v6852 = vmul.f32 %v6788, %v5764
        %v6853 = vmul.f32 %v6789, %v5765
        %v6854 = vmul.f32 %v6790, %v5766
        %v6855 = vmul.f32 %v6791, %v5767
        %v6856 = vmul.f32 %v6792, %v5768
        %v6857 = vmul.f32 %v6793, %v5769
        %v6858 = vmul.f32 %v6794, %v5770
        %v6859 = vmul.f32 %v6795, %v5771
        %v6860 = vmul.f32 %v6796, %v5772
        %v6861 = vmul.f32 %v6797, %v5773
        %v6862 = vmul.f32 %v6798, %v5774
        %v6863 = vmul.f32 %v6799, %v5775
        %v6864 = vmul.f32 %v6800, %v5776
        %v6865 = vmul.f32 %v6801, %v5777
        %v6866 = vmul.f32 %v6802, %v5778
        %v6867 = vmul.f32 %v6803, 1.442695
        %v6868 = vpow.pop %v6867
        %v6869 = vmul.f32 %v6804, 1.442695
        %v6870 = vpow.pop %v6869
        %v6871 = vmul.f32 %v6805, 1.442695
        %v6872 = vpow.pop %v6871
        %v6873 = vmul.f32 %v6806, 1.442695
        %v6874 = vpow.pop %v6873
        %v6875 = vmul.f32 %v6807, 1.442695
        %v6876 = vpow.pop %v6875
        %v6877 = vmul.f32 %v6808, 1.442695
        %v6878 = vpow.pop %v6877
        %v6879 = vmul.f32 %v6809, 1.442695
        %v6880 = vpow.pop %v6879
        %v6881 = vmul.f32 %v6810, 1.442695
        %v6882 = vpow.pop %v6881
        %v6883 = vmul.f32 %v6811, 1.442695
        %v6884 = vpow.pop %v6883
        %v6885 = vmul.f32 %v6812, 1.442695
        %v6886 = vpow.pop %v6885
        %v6887 = vmul.f32 %v6813, 1.442695
        %v6888 = vpow.pop %v6887
        %v6889 = vmul.f32 %v6814, 1.442695
        %v6890 = vpow.pop %v6889
        %v6891 = vmul.f32 %v6815, 1.442695
        %v6892 = vpow.pop %v6891
        %v6893 = vmul.f32 %v6816, 1.442695
        %v6894 = vpow.pop %v6893
        %v6895 = vmul.f32 %v6817, 1.442695
        %v6896 = vpow.pop %v6895
        %v6897 = vmul.f32 %v6818, 1.442695
        %v6898 = vpow.pop %v6897
        %v6899 = vmul.f32 %v6819, 1.442695
        %v6900 = vpow.pop %v6899
        %v6901 = vmul.f32 %v6820, 1.442695
        %v6902 = vpow.pop %v6901
        %v6903 = vmul.f32 %v6821, 1.442695
        %v6904 = vpow.pop %v6903
        %v6905 = vmul.f32 %v6822, 1.442695
        %v6906 = vpow.pop %v6905
        %v6907 = vmul.f32 %v6823, 1.442695
        %v6908 = vpow.pop %v6907
        %v6909 = vmul.f32 %v6824, 1.442695
        %v6910 = vpow.pop %v6909
        %v6911 = vmul.f32 %v6825, 1.442695
        %v6912 = vpow.pop %v6911
        %v6913 = vmul.f32 %v6826, 1.442695
        %v6914 = vpow.pop %v6913
        %v6915 = vmul.f32 %v6827, 1.442695
        %v6916 = vpow.pop %v6915
        %v6917 = vmul.f32 %v6828, 1.442695
        %v6918 = vpow.pop %v6917
        %v6919 = vmul.f32 %v6829, 1.442695
        %v6920 = vpow.pop %v6919
        %v6921 = vmul.f32 %v6830, 1.442695
        %v6922 = vpow.pop %v6921
        %v6923 = vmul.f32 %v6831, 1.442695
        %v6924 = vpow.pop %v6923
        %v6925 = vmul.f32 %v6832, 1.442695
        %v6926 = vpow.pop %v6925
        %v6927 = vmul.f32 %v6833, 1.442695
        %v6928 = vpow.pop %v6927
        %v6929 = vmul.f32 %v6834, 1.442695
        %v6930 = vpow.pop %v6929
        %v6931 = vmul.f32 %v6835, 1.442695
        %v6932 = vpow.pop %v6931
        %v6933 = vmul.f32 %v6836, 1.442695
        %v6934 = vpow.pop %v6933
        %v6935 = vmul.f32 %v6837, 1.442695
        %v6936 = vpow.pop %v6935
        %v6937 = vmul.f32 %v6838, 1.442695
        %v6938 = vpow.pop %v6937
        %v6939 = vmul.f32 %v6839, 1.442695
        %v6940 = vpow.pop %v6939
        %v6941 = vmul.f32 %v6840, 1.442695
        %v6942 = vpow.pop %v6941
        %v6943 = vmul.f32 %v6841, 1.442695
        %v6944 = vpow.pop %v6943
        %v6945 = vmul.f32 %v6842, 1.442695
        %v6946 = vpow.pop %v6945
        %v6947 = vmul.f32 %v6843, 1.442695
        %v6948 = vpow.pop %v6947
        %v6949 = vmul.f32 %v6844, 1.442695
        %v6950 = vpow.pop %v6949
        %v6951 = vmul.f32 %v6845, 1.442695
        %v6952 = vpow.pop %v6951
        %v6953 = vmul.f32 %v6846, 1.442695
        %v6954 = vpow.pop %v6953
        %v6955 = vmul.f32 %v6847, 1.442695
        %v6956 = vpow.pop %v6955
        %v6957 = vmul.f32 %v6848, 1.442695
        %v6958 = vpow.pop %v6957
        %v6959 = vmul.f32 %v6849, 1.442695
        %v6960 = vpow.pop %v6959
        %v6961 = vmul.f32 %v6850, 1.442695
        %v6962 = vpow.pop %v6961
        %v6963 = vmul.f32 %v6851, 1.442695
        %v6964 = vpow.pop %v6963
        %v6965 = vmul.f32 %v6852, 1.442695
        %v6966 = vpow.pop %v6965
        %v6967 = vmul.f32 %v6853, 1.442695
        %v6968 = vpow.pop %v6967
        %v6969 = vmul.f32 %v6854, 1.442695
        %v6970 = vpow.pop %v6969
        %v6971 = vmul.f32 %v6855, 1.442695
        %v6972 = vpow.pop %v6971
        %v6973 = vmul.f32 %v6856, 1.442695
        %v6974 = vpow.pop %v6973
        %v6975 = vmul.f32 %v6857, 1.442695
        %v6976 = vpow.pop %v6975
        %v6977 = vmul.f32 %v6858, 1.442695
        %v6978 = vpow.pop %v6977
        %v6979 = vmul.f32 %v6859, 1.442695
        %v6980 = vpow.pop %v6979
        %v6981 = vmul.f32 %v6860, 1.442695
        %v6982 = vpow.pop %v6981
        %v6983 = vmul.f32 %v6861, 1.442695
        %v6984 = vpow.pop %v6983
        %v6985 = vmul.f32 %v6862, 1.442695
        %v6986 = vpow.pop %v6985
        %v6987 = vmul.f32 %v6863, 1.442695
        %v6988 = vpow.pop %v6987
        %v6989 = vmul.f32 %v6864, 1.442695
        %v6990 = vpow.pop %v6989
        %v6991 = vmul.f32 %v6865, 1.442695
        %v6992 = vpow.pop %v6991
        %v6993 = vmul.f32 %v6866, 1.442695
        %v6994 = vpow.pop %v6993
        %v6995 = vmul.f32 %v6675, %v6868
        %v6996 = vmul.f32 %v6676, %v6870
        %v6997 = vmul.f32 %v6677, %v6872
        %v6998 = vmul.f32 %v6678, %v6874
        %v6999 = vmul.f32 %v6679, %v6876
        %v7000 = vmul.f32 %v6680, %v6878
        %v7001 = vmul.f32 %v6681, %v6880
        %v7002 = vmul.f32 %v6682, %v6882
        %v7003 = vmul.f32 %v6683, %v6884
        %v7004 = vmul.f32 %v6684, %v6886
        %v7005 = vmul.f32 %v6685, %v6888
        %v7006 = vmul.f32 %v6686, %v6890
        %v7007 = vmul.f32 %v6687, %v6892
        %v7008 = vmul.f32 %v6688, %v6894
        %v7009 = vmul.f32 %v6689, %v6896
        %v7010 = vmul.f32 %v6690, %v6898
        %v7011 = vmul.f32 %v6691, %v6900
        %v7012 = vmul.f32 %v6692, %v6902
        %v7013 = vmul.f32 %v6693, %v6904
        %v7014 = vmul.f32 %v6694, %v6906
        %v7015 = vmul.f32 %v6695, %v6908
        %v7016 = vmul.f32 %v6696, %v6910
        %v7017 = vmul.f32 %v6697, %v6912
        %v7018 = vmul.f32 %v6698, %v6914
        %v7019 = vmul.f32 %v6699, %v6916
        %v7020 = vmul.f32 %v6700, %v6918
        %v7021 = vmul.f32 %v6701, %v6920
        %v7022 = vmul.f32 %v6702, %v6922
        %v7023 = vmul.f32 %v6703, %v6924
        %v7024 = vmul.f32 %v6704, %v6926
        %v7025 = vmul.f32 %v6705, %v6928
        %v7026 = vmul.f32 %v6706, %v6930
        %v7027 = vmul.f32 %v6707, %v6932
        %v7028 = vmul.f32 %v6708, %v6934
        %v7029 = vmul.f32 %v6709, %v6936
        %v7030 = vmul.f32 %v6710, %v6938
        %v7031 = vmul.f32 %v6711, %v6940
        %v7032 = vmul.f32 %v6712, %v6942
        %v7033 = vmul.f32 %v6713, %v6944
        %v7034 = vmul.f32 %v6714, %v6946
        %v7035 = vmul.f32 %v6715, %v6948
        %v7036 = vmul.f32 %v6716, %v6950
        %v7037 = vmul.f32 %v6717, %v6952
        %v7038 = vmul.f32 %v6718, %v6954
        %v7039 = vmul.f32 %v6719, %v6956
        %v7040 = vmul.f32 %v6720, %v6958
        %v7041 = vmul.f32 %v6721, %v6960
        %v7042 = vmul.f32 %v6722, %v6962
        %v7043 = vmul.f32 %v6723, %v6964
        %v7044 = vmul.f32 %v6724, %v6966
        %v7045 = vmul.f32 %v6725, %v6968
        %v7046 = vmul.f32 %v6726, %v6970
        %v7047 = vmul.f32 %v6727, %v6972
        %v7048 = vmul.f32 %v6728, %v6974
        %v7049 = vmul.f32 %v6729, %v6976
        %v7050 = vmul.f32 %v6730, %v6978
        %v7051 = vmul.f32 %v6731, %v6980
        %v7052 = vmul.f32 %v6732, %v6982
        %v7053 = vmul.f32 %v6733, %v6984
        %v7054 = vmul.f32 %v6734, %v6986
        %v7055 = vmul.f32 %v6735, %v6988
        %v7056 = vmul.f32 %v6736, %v6990
        %v7057 = vmul.f32 %v6737, %v6992
        %v7058 = vmul.f32 %v6738, %v6994
        %v7059 = vsub.f32 1.0, %v6995
        %v7060 = vsub.f32 1.0, %v6996
        %v7061 = vsub.f32 1.0, %v6997
        %v7062 = vsub.f32 1.0, %v6998
        %v7063 = vsub.f32 1.0, %v6999
        %v7064 = vsub.f32 1.0, %v7000
        %v7065 = vsub.f32 1.0, %v7001
        %v7066 = vsub.f32 1.0, %v7002
        %v7067 = vsub.f32 1.0, %v7003
        %v7068 = vsub.f32 1.0, %v7004
        %v7069 = vsub.f32 1.0, %v7005
        %v7070 = vsub.f32 1.0, %v7006
        %v7071 = vsub.f32 1.0, %v7007
        %v7072 = vsub.f32 1.0, %v7008
        %v7073 = vsub.f32 1.0, %v7009
        %v7074 = vsub.f32 1.0, %v7010
        %v7075 = vsub.f32 1.0, %v7011
        %v7076 = vsub.f32 1.0, %v7012
        %v7077 = vsub.f32 1.0, %v7013
        %v7078 = vsub.f32 1.0, %v7014
        %v7079 = vsub.f32 1.0, %v7015
        %v7080 = vsub.f32 1.0, %v7016
        %v7081 = vsub.f32 1.0, %v7017
        %v7082 = vsub.f32 1.0, %v7018
        %v7083 = vsub.f32 1.0, %v7019
        %v7084 = vsub.f32 1.0, %v7020
        %v7085 = vsub.f32 1.0, %v7021
        %v7086 = vsub.f32 1.0, %v7022
        %v7087 = vsub.f32 1.0, %v7023
        %v7088 = vsub.f32 1.0, %v7024
        %v7089 = vsub.f32 1.0, %v7025
        %v7090 = vsub.f32 1.0, %v7026
        %v7091 = vsub.f32 1.0, %v7027
        %v7092 = vsub.f32 1.0, %v7028
        %v7093 = vsub.f32 1.0, %v7029
        %v7094 = vsub.f32 1.0, %v7030
        %v7095 = vsub.f32 1.0, %v7031
        %v7096 = vsub.f32 1.0, %v7032
        %v7097 = vsub.f32 1.0, %v7033
        %v7098 = vsub.f32 1.0, %v7034
        %v7099 = vsub.f32 1.0, %v7035
        %v7100 = vsub.f32 1.0, %v7036
        %v7101 = vsub.f32 1.0, %v7037
        %v7102 = vsub.f32 1.0, %v7038
        %v7103 = vsub.f32 1.0, %v7039
        %v7104 = vsub.f32 1.0, %v7040
        %v7105 = vsub.f32 1.0, %v7041
        %v7106 = vsub.f32 1.0, %v7042
        %v7107 = vsub.f32 1.0, %v7043
        %v7108 = vsub.f32 1.0, %v7044
        %v7109 = vsub.f32 1.0, %v7045
        %v7110 = vsub.f32 1.0, %v7046
        %v7111 = vsub.f32 1.0, %v7047
        %v7112 = vsub.f32 1.0, %v7048
        %v7113 = vsub.f32 1.0, %v7049
        %v7114 = vsub.f32 1.0, %v7050
        %v7115 = vsub.f32 1.0, %v7051
        %v7116 = vsub.f32 1.0, %v7052
        %v7117 = vsub.f32 1.0, %v7053
        %v7118 = vsub.f32 1.0, %v7054
        %v7119 = vsub.f32 1.0, %v7055
        %v7120 = vsub.f32 1.0, %v7056
        %v7121 = vsub.f32 1.0, %v7057
        %v7122 = vsub.f32 1.0, %v7058
        %vm7123 = vcmp.ge.f32.partialorder %v5651, 0.0
        %vm7124 = vcmp.ge.f32.partialorder %v5652, 0.0
        %vm7125 = vcmp.ge.f32.partialorder %v5653, 0.0
        %vm7126 = vcmp.ge.f32.partialorder %v5654, 0.0
        %vm7127 = vcmp.ge.f32.partialorder %v5655, 0.0
        %vm7128 = vcmp.ge.f32.partialorder %v5656, 0.0
        %vm7129 = vcmp.ge.f32.partialorder %v5657, 0.0
        %vm7130 = vcmp.ge.f32.partialorder %v5658, 0.0
        %vm7131 = vcmp.ge.f32.partialorder %v5659, 0.0
        %vm7132 = vcmp.ge.f32.partialorder %v5660, 0.0
        %vm7133 = vcmp.ge.f32.partialorder %v5661, 0.0
        %vm7134 = vcmp.ge.f32.partialorder %v5662, 0.0
        %vm7135 = vcmp.ge.f32.partialorder %v5663, 0.0
        %vm7136 = vcmp.ge.f32.partialorder %v5664, 0.0
        %vm7137 = vcmp.ge.f32.partialorder %v5665, 0.0
        %vm7138 = vcmp.ge.f32.partialorder %v5666, 0.0
        %vm7139 = vcmp.ge.f32.partialorder %v5667, 0.0
        %vm7140 = vcmp.ge.f32.partialorder %v5668, 0.0
        %vm7141 = vcmp.ge.f32.partialorder %v5669, 0.0
        %vm7142 = vcmp.ge.f32.partialorder %v5670, 0.0
        %vm7143 = vcmp.ge.f32.partialorder %v5671, 0.0
        %vm7144 = vcmp.ge.f32.partialorder %v5672, 0.0
        %vm7145 = vcmp.ge.f32.partialorder %v5673, 0.0
        %vm7146 = vcmp.ge.f32.partialorder %v5674, 0.0
        %vm7147 = vcmp.ge.f32.partialorder %v5675, 0.0
        %vm7148 = vcmp.ge.f32.partialorder %v5676, 0.0
        %vm7149 = vcmp.ge.f32.partialorder %v5677, 0.0
        %vm7150 = vcmp.ge.f32.partialorder %v5678, 0.0
        %vm7151 = vcmp.ge.f32.partialorder %v5679, 0.0
        %vm7152 = vcmp.ge.f32.partialorder %v5680, 0.0
        %vm7153 = vcmp.ge.f32.partialorder %v5681, 0.0
        %vm7154 = vcmp.ge.f32.partialorder %v5682, 0.0
        %vm7155 = vcmp.ge.f32.partialorder %v5683, 0.0
        %vm7156 = vcmp.ge.f32.partialorder %v5684, 0.0
        %vm7157 = vcmp.ge.f32.partialorder %v5685, 0.0
        %vm7158 = vcmp.ge.f32.partialorder %v5686, 0.0
        %vm7159 = vcmp.ge.f32.partialorder %v5687, 0.0
        %vm7160 = vcmp.ge.f32.partialorder %v5688, 0.0
        %vm7161 = vcmp.ge.f32.partialorder %v5689, 0.0
        %vm7162 = vcmp.ge.f32.partialorder %v5690, 0.0
        %vm7163 = vcmp.ge.f32.partialorder %v5691, 0.0
        %vm7164 = vcmp.ge.f32.partialorder %v5692, 0.0
        %vm7165 = vcmp.ge.f32.partialorder %v5693, 0.0
        %vm7166 = vcmp.ge.f32.partialorder %v5694, 0.0
        %vm7167 = vcmp.ge.f32.partialorder %v5695, 0.0
        %vm7168 = vcmp.ge.f32.partialorder %v5696, 0.0
        %vm7169 = vcmp.ge.f32.partialorder %v5697, 0.0
        %vm7170 = vcmp.ge.f32.partialorder %v5698, 0.0
        %vm7171 = vcmp.ge.f32.partialorder %v5699, 0.0
        %vm7172 = vcmp.ge.f32.partialorder %v5700, 0.0
        %vm7173 = vcmp.ge.f32.partialorder %v5701, 0.0
        %vm7174 = vcmp.ge.f32.partialorder %v5702, 0.0
        %vm7175 = vcmp.ge.f32.partialorder %v5703, 0.0
        %vm7176 = vcmp.ge.f32.partialorder %v5704, 0.0
        %vm7177 = vcmp.ge.f32.partialorder %v5705, 0.0
        %vm7178 = vcmp.ge.f32.partialorder %v5706, 0.0
        %vm7179 = vcmp.ge.f32.partialorder %v5707, 0.0
        %vm7180 = vcmp.ge.f32.partialorder %v5708, 0.0
        %vm7181 = vcmp.ge.f32.partialorder %v5709, 0.0
        %vm7182 = vcmp.ge.f32.partialorder %v5710, 0.0
        %vm7183 = vcmp.ge.f32.partialorder %v5711, 0.0
        %vm7184 = vcmp.ge.f32.partialorder %v5712, 0.0
        %vm7185 = vcmp.ge.f32.partialorder %v5713, 0.0
        %vm7186 = vcmp.ge.f32.partialorder %v5714, 0.0
        %v7187 = vsub.f32 0.0, %v7059
        %v7188 = vsub.f32 0.0, %v7060
        %v7189 = vsub.f32 0.0, %v7061
        %v7190 = vsub.f32 0.0, %v7062
        %v7191 = vsub.f32 0.0, %v7063
        %v7192 = vsub.f32 0.0, %v7064
        %v7193 = vsub.f32 0.0, %v7065
        %v7194 = vsub.f32 0.0, %v7066
        %v7195 = vsub.f32 0.0, %v7067
        %v7196 = vsub.f32 0.0, %v7068
        %v7197 = vsub.f32 0.0, %v7069
        %v7198 = vsub.f32 0.0, %v7070
        %v7199 = vsub.f32 0.0, %v7071
        %v7200 = vsub.f32 0.0, %v7072
        %v7201 = vsub.f32 0.0, %v7073
        %v7202 = vsub.f32 0.0, %v7074
        %v7203 = vsub.f32 0.0, %v7075
        %v7204 = vsub.f32 0.0, %v7076
        %v7205 = vsub.f32 0.0, %v7077
        %v7206 = vsub.f32 0.0, %v7078
        %v7207 = vsub.f32 0.0, %v7079
        %v7208 = vsub.f32 0.0, %v7080
        %v7209 = vsub.f32 0.0, %v7081
        %v7210 = vsub.f32 0.0, %v7082
        %v7211 = vsub.f32 0.0, %v7083
        %v7212 = vsub.f32 0.0, %v7084
        %v7213 = vsub.f32 0.0, %v7085
        %v7214 = vsub.f32 0.0, %v7086
        %v7215 = vsub.f32 0.0, %v7087
        %v7216 = vsub.f32 0.0, %v7088
        %v7217 = vsub.f32 0.0, %v7089
        %v7218 = vsub.f32 0.0, %v7090
        %v7219 = vsub.f32 0.0, %v7091
        %v7220 = vsub.f32 0.0, %v7092
        %v7221 = vsub.f32 0.0, %v7093
        %v7222 = vsub.f32 0.0, %v7094
        %v7223 = vsub.f32 0.0, %v7095
        %v7224 = vsub.f32 0.0, %v7096
        %v7225 = vsub.f32 0.0, %v7097
        %v7226 = vsub.f32 0.0, %v7098
        %v7227 = vsub.f32 0.0, %v7099
        %v7228 = vsub.f32 0.0, %v7100
        %v7229 = vsub.f32 0.0, %v7101
        %v7230 = vsub.f32 0.0, %v7102
        %v7231 = vsub.f32 0.0, %v7103
        %v7232 = vsub.f32 0.0, %v7104
        %v7233 = vsub.f32 0.0, %v7105
        %v7234 = vsub.f32 0.0, %v7106
        %v7235 = vsub.f32 0.0, %v7107
        %v7236 = vsub.f32 0.0, %v7108
        %v7237 = vsub.f32 0.0, %v7109
        %v7238 = vsub.f32 0.0, %v7110
        %v7239 = vsub.f32 0.0, %v7111
        %v7240 = vsub.f32 0.0, %v7112
        %v7241 = vsub.f32 0.0, %v7113
        %v7242 = vsub.f32 0.0, %v7114
        %v7243 = vsub.f32 0.0, %v7115
        %v7244 = vsub.f32 0.0, %v7116
        %v7245 = vsub.f32 0.0, %v7117
        %v7246 = vsub.f32 0.0, %v7118
        %v7247 = vsub.f32 0.0, %v7119
        %v7248 = vsub.f32 0.0, %v7120
        %v7249 = vsub.f32 0.0, %v7121
        %v7250 = vsub.f32 0.0, %v7122
        %v7251 = vsel %vm7123, %v7059, %v7187
        %v7252 = vsel %vm7124, %v7060, %v7188
        %v7253 = vsel %vm7125, %v7061, %v7189
        %v7254 = vsel %vm7126, %v7062, %v7190
        %v7255 = vsel %vm7127, %v7063, %v7191
        %v7256 = vsel %vm7128, %v7064, %v7192
        %v7257 = vsel %vm7129, %v7065, %v7193
        %v7258 = vsel %vm7130, %v7066, %v7194
        %v7259 = vsel %vm7131, %v7067, %v7195
        %v7260 = vsel %vm7132, %v7068, %v7196
        %v7261 = vsel %vm7133, %v7069, %v7197
        %v7262 = vsel %vm7134, %v7070, %v7198
        %v7263 = vsel %vm7135, %v7071, %v7199
        %v7264 = vsel %vm7136, %v7072, %v7200
        %v7265 = vsel %vm7137, %v7073, %v7201
        %v7266 = vsel %vm7138, %v7074, %v7202
        %v7267 = vsel %vm7139, %v7075, %v7203
        %v7268 = vsel %vm7140, %v7076, %v7204
        %v7269 = vsel %vm7141, %v7077, %v7205
        %v7270 = vsel %vm7142, %v7078, %v7206
        %v7271 = vsel %vm7143, %v7079, %v7207
        %v7272 = vsel %vm7144, %v7080, %v7208
        %v7273 = vsel %vm7145, %v7081, %v7209
        %v7274 = vsel %vm7146, %v7082, %v7210
        %v7275 = vsel %vm7147, %v7083, %v7211
        %v7276 = vsel %vm7148, %v7084, %v7212
        %v7277 = vsel %vm7149, %v7085, %v7213
        %v7278 = vsel %vm7150, %v7086, %v7214
        %v7279 = vsel %vm7151, %v7087, %v7215
        %v7280 = vsel %vm7152, %v7088, %v7216
        %v7281 = vsel %vm7153, %v7089, %v7217
        %v7282 = vsel %vm7154, %v7090, %v7218
        %v7283 = vsel %vm7155, %v7091, %v7219
        %v7284 = vsel %vm7156, %v7092, %v7220
        %v7285 = vsel %vm7157, %v7093, %v7221
        %v7286 = vsel %vm7158, %v7094, %v7222
        %v7287 = vsel %vm7159, %v7095, %v7223
        %v7288 = vsel %vm7160, %v7096, %v7224
        %v7289 = vsel %vm7161, %v7097, %v7225
        %v7290 = vsel %vm7162, %v7098, %v7226
        %v7291 = vsel %vm7163, %v7099, %v7227
        %v7292 = vsel %vm7164, %v7100, %v7228
        %v7293 = vsel %vm7165, %v7101, %v7229
        %v7294 = vsel %vm7166, %v7102, %v7230
        %v7295 = vsel %vm7167, %v7103, %v7231
        %v7296 = vsel %vm7168, %v7104, %v7232
        %v7297 = vsel %vm7169, %v7105, %v7233
        %v7298 = vsel %vm7170, %v7106, %v7234
        %v7299 = vsel %vm7171, %v7107, %v7235
        %v7300 = vsel %vm7172, %v7108, %v7236
        %v7301 = vsel %vm7173, %v7109, %v7237
        %v7302 = vsel %vm7174, %v7110, %v7238
        %v7303 = vsel %vm7175, %v7111, %v7239
        %v7304 = vsel %vm7176, %v7112, %v7240
        %v7305 = vsel %vm7177, %v7113, %v7241
        %v7306 = vsel %vm7178, %v7114, %v7242
        %v7307 = vsel %vm7179, %v7115, %v7243
        %v7308 = vsel %vm7180, %v7116, %v7244
        %v7309 = vsel %vm7181, %v7117, %v7245
        %v7310 = vsel %vm7182, %v7118, %v7246
        %v7311 = vsel %vm7183, %v7119, %v7247
        %v7312 = vsel %vm7184, %v7120, %v7248
        %v7313 = vsel %vm7185, %v7121, %v7249
        %v7314 = vsel %vm7186, %v7122, %v7250
        %v7315 = vadd.f32 %v7251, 1.0
        %v7316 = vadd.f32 %v7252, 1.0
        %v7317 = vadd.f32 %v7253, 1.0
        %v7318 = vadd.f32 %v7254, 1.0
        %v7319 = vadd.f32 %v7255, 1.0
        %v7320 = vadd.f32 %v7256, 1.0
        %v7321 = vadd.f32 %v7257, 1.0
        %v7322 = vadd.f32 %v7258, 1.0
        %v7323 = vadd.f32 %v7259, 1.0
        %v7324 = vadd.f32 %v7260, 1.0
        %v7325 = vadd.f32 %v7261, 1.0
        %v7326 = vadd.f32 %v7262, 1.0
        %v7327 = vadd.f32 %v7263, 1.0
        %v7328 = vadd.f32 %v7264, 1.0
        %v7329 = vadd.f32 %v7265, 1.0
        %v7330 = vadd.f32 %v7266, 1.0
        %v7331 = vadd.f32 %v7267, 1.0
        %v7332 = vadd.f32 %v7268, 1.0
        %v7333 = vadd.f32 %v7269, 1.0
        %v7334 = vadd.f32 %v7270, 1.0
        %v7335 = vadd.f32 %v7271, 1.0
        %v7336 = vadd.f32 %v7272, 1.0
        %v7337 = vadd.f32 %v7273, 1.0
        %v7338 = vadd.f32 %v7274, 1.0
        %v7339 = vadd.f32 %v7275, 1.0
        %v7340 = vadd.f32 %v7276, 1.0
        %v7341 = vadd.f32 %v7277, 1.0
        %v7342 = vadd.f32 %v7278, 1.0
        %v7343 = vadd.f32 %v7279, 1.0
        %v7344 = vadd.f32 %v7280, 1.0
        %v7345 = vadd.f32 %v7281, 1.0
        %v7346 = vadd.f32 %v7282, 1.0
        %v7347 = vadd.f32 %v7283, 1.0
        %v7348 = vadd.f32 %v7284, 1.0
        %v7349 = vadd.f32 %v7285, 1.0
        %v7350 = vadd.f32 %v7286, 1.0
        %v7351 = vadd.f32 %v7287, 1.0
        %v7352 = vadd.f32 %v7288, 1.0
        %v7353 = vadd.f32 %v7289, 1.0
        %v7354 = vadd.f32 %v7290, 1.0
        %v7355 = vadd.f32 %v7291, 1.0
        %v7356 = vadd.f32 %v7292, 1.0
        %v7357 = vadd.f32 %v7293, 1.0
        %v7358 = vadd.f32 %v7294, 1.0
        %v7359 = vadd.f32 %v7295, 1.0
        %v7360 = vadd.f32 %v7296, 1.0
        %v7361 = vadd.f32 %v7297, 1.0
        %v7362 = vadd.f32 %v7298, 1.0
        %v7363 = vadd.f32 %v7299, 1.0
        %v7364 = vadd.f32 %v7300, 1.0
        %v7365 = vadd.f32 %v7301, 1.0
        %v7366 = vadd.f32 %v7302, 1.0
        %v7367 = vadd.f32 %v7303, 1.0
        %v7368 = vadd.f32 %v7304, 1.0
        %v7369 = vadd.f32 %v7305, 1.0
        %v7370 = vadd.f32 %v7306, 1.0
        %v7371 = vadd.f32 %v7307, 1.0
        %v7372 = vadd.f32 %v7308, 1.0
        %v7373 = vadd.f32 %v7309, 1.0
        %v7374 = vadd.f32 %v7310, 1.0
        %v7375 = vadd.f32 %v7311, 1.0
        %v7376 = vadd.f32 %v7312, 1.0
        %v7377 = vadd.f32 %v7313, 1.0
        %v7378 = vadd.f32 %v7314, 1.0
        %v7379 = vmul.f32 %v5587, %v7315
        %v7380 = vmul.f32 %v5588, %v7316
        %v7381 = vmul.f32 %v5589, %v7317
        %v7382 = vmul.f32 %v5590, %v7318
        %v7383 = vmul.f32 %v5591, %v7319
        %v7384 = vmul.f32 %v5592, %v7320
        %v7385 = vmul.f32 %v5593, %v7321
        %v7386 = vmul.f32 %v5594, %v7322
        %v7387 = vmul.f32 %v5595, %v7323
        %v7388 = vmul.f32 %v5596, %v7324
        %v7389 = vmul.f32 %v5597, %v7325
        %v7390 = vmul.f32 %v5598, %v7326
        %v7391 = vmul.f32 %v5599, %v7327
        %v7392 = vmul.f32 %v5600, %v7328
        %v7393 = vmul.f32 %v5601, %v7329
        %v7394 = vmul.f32 %v5602, %v7330
        %v7395 = vmul.f32 %v5603, %v7331
        %v7396 = vmul.f32 %v5604, %v7332
        %v7397 = vmul.f32 %v5605, %v7333
        %v7398 = vmul.f32 %v5606, %v7334
        %v7399 = vmul.f32 %v5607, %v7335
        %v7400 = vmul.f32 %v5608, %v7336
        %v7401 = vmul.f32 %v5609, %v7337
        %v7402 = vmul.f32 %v5610, %v7338
        %v7403 = vmul.f32 %v5611, %v7339
        %v7404 = vmul.f32 %v5612, %v7340
        %v7405 = vmul.f32 %v5613, %v7341
        %v7406 = vmul.f32 %v5614, %v7342
        %v7407 = vmul.f32 %v5615, %v7343
        %v7408 = vmul.f32 %v5616, %v7344
        %v7409 = vmul.f32 %v5617, %v7345
        %v7410 = vmul.f32 %v5618, %v7346
        %v7411 = vmul.f32 %v5619, %v7347
        %v7412 = vmul.f32 %v5620, %v7348
        %v7413 = vmul.f32 %v5621, %v7349
        %v7414 = vmul.f32 %v5622, %v7350
        %v7415 = vmul.f32 %v5623, %v7351
        %v7416 = vmul.f32 %v5624, %v7352
        %v7417 = vmul.f32 %v5625, %v7353
        %v7418 = vmul.f32 %v5626, %v7354
        %v7419 = vmul.f32 %v5627, %v7355
        %v7420 = vmul.f32 %v5628, %v7356
        %v7421 = vmul.f32 %v5629, %v7357
        %v7422 = vmul.f32 %v5630, %v7358
        %v7423 = vmul.f32 %v5631, %v7359
        %v7424 = vmul.f32 %v5632, %v7360
        %v7425 = vmul.f32 %v5633, %v7361
        %v7426 = vmul.f32 %v5634, %v7362
        %v7427 = vmul.f32 %v5635, %v7363
        %v7428 = vmul.f32 %v5636, %v7364
        %v7429 = vmul.f32 %v5637, %v7365
        %v7430 = vmul.f32 %v5638, %v7366
        %v7431 = vmul.f32 %v5639, %v7367
        %v7432 = vmul.f32 %v5640, %v7368
        %v7433 = vmul.f32 %v5641, %v7369
        %v7434 = vmul.f32 %v5642, %v7370
        %v7435 = vmul.f32 %v5643, %v7371
        %v7436 = vmul.f32 %v5644, %v7372
        %v7437 = vmul.f32 %v5645, %v7373
        %v7438 = vmul.f32 %v5646, %v7374
        %v7439 = vmul.f32 %v5647, %v7375
        %v7440 = vmul.f32 %v5648, %v7376
        %v7441 = vmul.f32 %v5649, %v7377
        %v7442 = vmul.f32 %v5650, %v7378
        %v7443 = vld [vmem:[#allocation15] sm:$0xff]
        %v7444 = vld [vmem:[#allocation15 + $0x8] sm:$0xff]
        %v7445 = vld [vmem:[#allocation15 + $0x10] sm:$0xff]
        %v7446 = vld [vmem:[#allocation15 + $0x18] sm:$0xff]
        %v7447 = vld [vmem:[#allocation15 + $0x20] sm:$0xff]
        %v7448 = vld [vmem:[#allocation15 + $0x28] sm:$0xff]
        %v7449 = vld [vmem:[#allocation15 + $0x30] sm:$0xff]
        %v7450 = vld [vmem:[#allocation15 + $0x38] sm:$0xff]
        %v7451 = vld [vmem:[#allocation15 + $0x40] sm:$0xff]
        %v7452 = vld [vmem:[#allocation15 + $0x48] sm:$0xff]
        %v7453 = vld [vmem:[#allocation15 + $0x50] sm:$0xff]
        %v7454 = vld [vmem:[#allocation15 + $0x58] sm:$0xff]
        %v7455 = vld [vmem:[#allocation15 + $0x60] sm:$0xff]
        %v7456 = vld [vmem:[#allocation15 + $0x68] sm:$0xff]
        %v7457 = vld [vmem:[#allocation15 + $0x70] sm:$0xff]
        %v7458 = vld [vmem:[#allocation15 + $0x78] sm:$0xff]
        %v7459 = vld [vmem:[#allocation15 + $0x80] sm:$0xff]
        %v7460 = vld [vmem:[#allocation15 + $0x88] sm:$0xff]
        %v7461 = vld [vmem:[#allocation15 + $0x90] sm:$0xff]
        %v7462 = vld [vmem:[#allocation15 + $0x98] sm:$0xff]
        %v7463 = vld [vmem:[#allocation15 + $0xa0] sm:$0xff]
        %v7464 = vld [vmem:[#allocation15 + $0xa8] sm:$0xff]
        %v7465 = vld [vmem:[#allocation15 + $0xb0] sm:$0xff]
        %v7466 = vld [vmem:[#allocation15 + $0xb8] sm:$0xff]
        %v7467 = vld [vmem:[#allocation15 + $0xc0] sm:$0xff]
        %v7468 = vld [vmem:[#allocation15 + $0xc8] sm:$0xff]
        %v7469 = vld [vmem:[#allocation15 + $0xd0] sm:$0xff]
        %v7470 = vld [vmem:[#allocation15 + $0xd8] sm:$0xff]
        %v7471 = vld [vmem:[#allocation15 + $0xe0] sm:$0xff]
        %v7472 = vld [vmem:[#allocation15 + $0xe8] sm:$0xff]
        %v7473 = vld [vmem:[#allocation15 + $0xf0] sm:$0xff]
        %v7474 = vld [vmem:[#allocation15 + $0xf8] sm:$0xff]
        %v7475 = vld [vmem:[#allocation15 + $0x100] sm:$0xff]
        %v7476 = vld [vmem:[#allocation15 + $0x108] sm:$0xff]
        %v7477 = vld [vmem:[#allocation15 + $0x110] sm:$0xff]
        %v7478 = vld [vmem:[#allocation15 + $0x118] sm:$0xff]
        %v7479 = vld [vmem:[#allocation15 + $0x120] sm:$0xff]
        %v7480 = vld [vmem:[#allocation15 + $0x128] sm:$0xff]
        %v7481 = vld [vmem:[#allocation15 + $0x130] sm:$0xff]
        %v7482 = vld [vmem:[#allocation15 + $0x138] sm:$0xff]
        %v7483 = vld [vmem:[#allocation15 + $0x140] sm:$0xff]
        %v7484 = vld [vmem:[#allocation15 + $0x148] sm:$0xff]
        %v7485 = vld [vmem:[#allocation15 + $0x150] sm:$0xff]
        %v7486 = vld [vmem:[#allocation15 + $0x158] sm:$0xff]
        %v7487 = vld [vmem:[#allocation15 + $0x160] sm:$0xff]
        %v7488 = vld [vmem:[#allocation15 + $0x168] sm:$0xff]
        %v7489 = vld [vmem:[#allocation15 + $0x170] sm:$0xff]
        %v7490 = vld [vmem:[#allocation15 + $0x178] sm:$0xff]
        %v7491 = vld [vmem:[#allocation15 + $0x180] sm:$0xff]
        %v7492 = vld [vmem:[#allocation15 + $0x188] sm:$0xff]
        %v7493 = vld [vmem:[#allocation15 + $0x190] sm:$0xff]
        %v7494 = vld [vmem:[#allocation15 + $0x198] sm:$0xff]
        %v7495 = vld [vmem:[#allocation15 + $0x1a0] sm:$0xff]
        %v7496 = vld [vmem:[#allocation15 + $0x1a8] sm:$0xff]
        %v7497 = vld [vmem:[#allocation15 + $0x1b0] sm:$0xff]
        %v7498 = vld [vmem:[#allocation15 + $0x1b8] sm:$0xff]
        %v7499 = vld [vmem:[#allocation15 + $0x1c0] sm:$0xff]
        %v7500 = vld [vmem:[#allocation15 + $0x1c8] sm:$0xff]
        %v7501 = vld [vmem:[#allocation15 + $0x1d0] sm:$0xff]
        %v7502 = vld [vmem:[#allocation15 + $0x1d8] sm:$0xff]
        %v7503 = vld [vmem:[#allocation15 + $0x1e0] sm:$0xff]
        %v7504 = vld [vmem:[#allocation15 + $0x1e8] sm:$0xff]
        %v7505 = vld [vmem:[#allocation15 + $0x1f0] sm:$0xff]
        %v7506 = vld [vmem:[#allocation15 + $0x1f8] sm:$0xff]
        %v7507 = vld [vmem:[#allocation15 + $0x200] sm:$0xff]
        %v7508 = vld [vmem:[#allocation15 + $0x208] sm:$0xff]
        %v7509 = vld [vmem:[#allocation15 + $0x210] sm:$0xff]
        %v7510 = vld [vmem:[#allocation15 + $0x218] sm:$0xff]
        %v7511 = vld [vmem:[#allocation15 + $0x220] sm:$0xff]
        %v7512 = vld [vmem:[#allocation15 + $0x228] sm:$0xff]
        %v7513 = vld [vmem:[#allocation15 + $0x230] sm:$0xff]
        %v7514 = vld [vmem:[#allocation15 + $0x238] sm:$0xff]
        %v7515 = vld [vmem:[#allocation15 + $0x240] sm:$0xff]
        %v7516 = vld [vmem:[#allocation15 + $0x248] sm:$0xff]
        %v7517 = vld [vmem:[#allocation15 + $0x250] sm:$0xff]
        %v7518 = vld [vmem:[#allocation15 + $0x258] sm:$0xff]
        %v7519 = vld [vmem:[#allocation15 + $0x260] sm:$0xff]
        %v7520 = vld [vmem:[#allocation15 + $0x268] sm:$0xff]
        %v7521 = vld [vmem:[#allocation15 + $0x270] sm:$0xff]
        %v7522 = vld [vmem:[#allocation15 + $0x278] sm:$0xff]
        %v7523 = vld [vmem:[#allocation15 + $0x280] sm:$0xff]
        %v7524 = vld [vmem:[#allocation15 + $0x288] sm:$0xff]
        %v7525 = vld [vmem:[#allocation15 + $0x290] sm:$0xff]
        %v7526 = vld [vmem:[#allocation15 + $0x298] sm:$0xff]
        %v7527 = vld [vmem:[#allocation15 + $0x2a0] sm:$0xff]
        %v7528 = vld [vmem:[#allocation15 + $0x2a8] sm:$0xff]
        %v7529 = vld [vmem:[#allocation15 + $0x2b0] sm:$0xff]
        %v7530 = vld [vmem:[#allocation15 + $0x2b8] sm:$0xff]
        %v7531 = vld [vmem:[#allocation15 + $0x2c0] sm:$0xff]
        %v7532 = vld [vmem:[#allocation15 + $0x2c8] sm:$0xff]
        %v7533 = vld [vmem:[#allocation15 + $0x2d0] sm:$0xff]
        %v7534 = vld [vmem:[#allocation15 + $0x2d8] sm:$0xff]
        %v7535 = vld [vmem:[#allocation15 + $0x2e0] sm:$0xff]
        %v7536 = vld [vmem:[#allocation15 + $0x2e8] sm:$0xff]
        %v7537 = vld [vmem:[#allocation15 + $0x2f0] sm:$0xff]
        %v7538 = vld [vmem:[#allocation15 + $0x2f8] sm:$0xff]
        %v7539 = vld [vmem:[#allocation15 + $0x300] sm:$0xff]
        %v7540 = vld [vmem:[#allocation15 + $0x308] sm:$0xff]
        %v7541 = vld [vmem:[#allocation15 + $0x310] sm:$0xff]
        %v7542 = vld [vmem:[#allocation15 + $0x318] sm:$0xff]
        %v7543 = vld [vmem:[#allocation15 + $0x320] sm:$0xff]
        %v7544 = vld [vmem:[#allocation15 + $0x328] sm:$0xff]
        %v7545 = vld [vmem:[#allocation15 + $0x330] sm:$0xff]
        %v7546 = vld [vmem:[#allocation15 + $0x338] sm:$0xff]
        %v7547 = vld [vmem:[#allocation15 + $0x340] sm:$0xff]
        %v7548 = vld [vmem:[#allocation15 + $0x348] sm:$0xff]
        %v7549 = vld [vmem:[#allocation15 + $0x350] sm:$0xff]
        %v7550 = vld [vmem:[#allocation15 + $0x358] sm:$0xff]
        %v7551 = vld [vmem:[#allocation15 + $0x360] sm:$0xff]
        %v7552 = vld [vmem:[#allocation15 + $0x368] sm:$0xff]
        %v7553 = vld [vmem:[#allocation15 + $0x370] sm:$0xff]
        %v7554 = vld [vmem:[#allocation15 + $0x378] sm:$0xff]
        %v7555 = vld [vmem:[#allocation15 + $0x380] sm:$0xff]
        %v7556 = vld [vmem:[#allocation15 + $0x388] sm:$0xff]
        %v7557 = vld [vmem:[#allocation15 + $0x390] sm:$0xff]
        %v7558 = vld [vmem:[#allocation15 + $0x398] sm:$0xff]
        %v7559 = vld [vmem:[#allocation15 + $0x3a0] sm:$0xff]
        %v7560 = vld [vmem:[#allocation15 + $0x3a8] sm:$0xff]
        %v7561 = vld [vmem:[#allocation15 + $0x3b0] sm:$0xff]
        %v7562 = vld [vmem:[#allocation15 + $0x3b8] sm:$0xff]
        %v7563 = vld [vmem:[#allocation15 + $0x3c0] sm:$0xff]
        %v7564 = vld [vmem:[#allocation15 + $0x3c8] sm:$0xff]
        %v7565 = vld [vmem:[#allocation15 + $0x3d0] sm:$0xff]
        %v7566 = vld [vmem:[#allocation15 + $0x3d8] sm:$0xff]
        %v7567 = vld [vmem:[#allocation15 + $0x3e0] sm:$0xff]
        %v7568 = vld [vmem:[#allocation15 + $0x3e8] sm:$0xff]
        %v7569 = vld [vmem:[#allocation15 + $0x3f0] sm:$0xff]
        %v7570 = vld [vmem:[#allocation15 + $0x3f8] sm:$0xff]
        %v7571 = vld [vmem:[#allocation15 + $0x400] sm:$0xff]
        %v7572 = vld [vmem:[#allocation15 + $0x408] sm:$0xff]
        %v7573 = vld [vmem:[#allocation15 + $0x410] sm:$0xff]
        %v7574 = vld [vmem:[#allocation15 + $0x418] sm:$0xff]
        %v7575 = vld [vmem:[#allocation15 + $0x420] sm:$0xff]
        %v7576 = vld [vmem:[#allocation15 + $0x428] sm:$0xff]
        %v7577 = vld [vmem:[#allocation15 + $0x430] sm:$0xff]
        %v7578 = vld [vmem:[#allocation15 + $0x438] sm:$0xff]
        %v7579 = vld [vmem:[#allocation15 + $0x440] sm:$0xff]
        %v7580 = vld [vmem:[#allocation15 + $0x448] sm:$0xff]
        %v7581 = vld [vmem:[#allocation15 + $0x450] sm:$0xff]
        %v7582 = vld [vmem:[#allocation15 + $0x458] sm:$0xff]
        %v7583 = vld [vmem:[#allocation15 + $0x460] sm:$0xff]
        %v7584 = vld [vmem:[#allocation15 + $0x468] sm:$0xff]
        %v7585 = vld [vmem:[#allocation15 + $0x470] sm:$0xff]
        %v7586 = vld [vmem:[#allocation15 + $0x478] sm:$0xff]
        %v7587 = vld [vmem:[#allocation15 + $0x480] sm:$0xff]
        %v7588 = vld [vmem:[#allocation15 + $0x488] sm:$0xff]
        %v7589 = vld [vmem:[#allocation15 + $0x490] sm:$0xff]
        %v7590 = vld [vmem:[#allocation15 + $0x498] sm:$0xff]
        %v7591 = vld [vmem:[#allocation15 + $0x4a0] sm:$0xff]
        %v7592 = vld [vmem:[#allocation15 + $0x4a8] sm:$0xff]
        %v7593 = vld [vmem:[#allocation15 + $0x4b0] sm:$0xff]
        %v7594 = vld [vmem:[#allocation15 + $0x4b8] sm:$0xff]
        %v7595 = vld [vmem:[#allocation15 + $0x4c0] sm:$0xff]
        %v7596 = vld [vmem:[#allocation15 + $0x4c8] sm:$0xff]
        %v7597 = vld [vmem:[#allocation15 + $0x4d0] sm:$0xff]
        %v7598 = vld [vmem:[#allocation15 + $0x4d8] sm:$0xff]
        %v7599 = vld [vmem:[#allocation15 + $0x4e0] sm:$0xff]
        %v7600 = vld [vmem:[#allocation15 + $0x4e8] sm:$0xff]
        %v7601 = vld [vmem:[#allocation15 + $0x4f0] sm:$0xff]
        %v7602 = vld [vmem:[#allocation15 + $0x4f8] sm:$0xff]
        %v7603 = vld [vmem:[#allocation15 + $0x500] sm:$0xff]
        %v7604 = vld [vmem:[#allocation15 + $0x508] sm:$0xff]
        %v7605 = vld [vmem:[#allocation15 + $0x510] sm:$0xff]
        %v7606 = vld [vmem:[#allocation15 + $0x518] sm:$0xff]
        %v7607 = vld [vmem:[#allocation15 + $0x520] sm:$0xff]
        %v7608 = vld [vmem:[#allocation15 + $0x528] sm:$0xff]
        %v7609 = vld [vmem:[#allocation15 + $0x530] sm:$0xff]
        %v7610 = vld [vmem:[#allocation15 + $0x538] sm:$0xff]
        %v7611 = vld [vmem:[#allocation15 + $0x540] sm:$0xff]
        %v7612 = vld [vmem:[#allocation15 + $0x548] sm:$0xff]
        %v7613 = vld [vmem:[#allocation15 + $0x550] sm:$0xff]
        %v7614 = vld [vmem:[#allocation15 + $0x558] sm:$0xff]
        %v7615 = vld [vmem:[#allocation15 + $0x560] sm:$0xff]
        %v7616 = vld [vmem:[#allocation15 + $0x568] sm:$0xff]
        %v7617 = vld [vmem:[#allocation15 + $0x570] sm:$0xff]
        %v7618 = vld [vmem:[#allocation15 + $0x578] sm:$0xff]
        %v7619 = vld [vmem:[#allocation15 + $0x580] sm:$0xff]
        %v7620 = vld [vmem:[#allocation15 + $0x588] sm:$0xff]
        %v7621 = vld [vmem:[#allocation15 + $0x590] sm:$0xff]
        %v7622 = vld [vmem:[#allocation15 + $0x598] sm:$0xff]
        %v7623 = vld [vmem:[#allocation15 + $0x5a0] sm:$0xff]
        %v7624 = vld [vmem:[#allocation15 + $0x5a8] sm:$0xff]
        %v7625 = vld [vmem:[#allocation15 + $0x5b0] sm:$0xff]
        %v7626 = vld [vmem:[#allocation15 + $0x5b8] sm:$0xff]
        %v7627 = vld [vmem:[#allocation15 + $0x5c0] sm:$0xff]
        %v7628 = vld [vmem:[#allocation15 + $0x5c8] sm:$0xff]
        %v7629 = vld [vmem:[#allocation15 + $0x5d0] sm:$0xff]
        %v7630 = vld [vmem:[#allocation15 + $0x5d8] sm:$0xff]
        %v7631 = vld [vmem:[#allocation15 + $0x5e0] sm:$0xff]
        %v7632 = vld [vmem:[#allocation15 + $0x5e8] sm:$0xff]
        %v7633 = vld [vmem:[#allocation15 + $0x5f0] sm:$0xff]
        %v7634 = vld [vmem:[#allocation15 + $0x5f8] sm:$0xff]
        %v7635 = vld [vmem:[#allocation15 + $0x600] sm:$0xff]
        %v7636 = vld [vmem:[#allocation15 + $0x608] sm:$0xff]
        %v7637 = vld [vmem:[#allocation15 + $0x610] sm:$0xff]
        %v7638 = vld [vmem:[#allocation15 + $0x618] sm:$0xff]
        %v7639 = vld [vmem:[#allocation15 + $0x620] sm:$0xff]
        %v7640 = vld [vmem:[#allocation15 + $0x628] sm:$0xff]
        %v7641 = vld [vmem:[#allocation15 + $0x630] sm:$0xff]
        %v7642 = vld [vmem:[#allocation15 + $0x638] sm:$0xff]
        %v7643 = vld [vmem:[#allocation15 + $0x640] sm:$0xff]
        %v7644 = vld [vmem:[#allocation15 + $0x648] sm:$0xff]
        %v7645 = vld [vmem:[#allocation15 + $0x650] sm:$0xff]
        %v7646 = vld [vmem:[#allocation15 + $0x658] sm:$0xff]
        %v7647 = vld [vmem:[#allocation15 + $0x660] sm:$0xff]
        %v7648 = vld [vmem:[#allocation15 + $0x668] sm:$0xff]
        %v7649 = vld [vmem:[#allocation15 + $0x670] sm:$0xff]
        %v7650 = vld [vmem:[#allocation15 + $0x678] sm:$0xff]
        %v7651 = vld [vmem:[#allocation15 + $0x680] sm:$0xff]
        %v7652 = vld [vmem:[#allocation15 + $0x688] sm:$0xff]
        %v7653 = vld [vmem:[#allocation15 + $0x690] sm:$0xff]
        %v7654 = vld [vmem:[#allocation15 + $0x698] sm:$0xff]
        %v7655 = vld [vmem:[#allocation15 + $0x6a0] sm:$0xff]
        %v7656 = vld [vmem:[#allocation15 + $0x6a8] sm:$0xff]
        %v7657 = vld [vmem:[#allocation15 + $0x6b0] sm:$0xff]
        %v7658 = vld [vmem:[#allocation15 + $0x6b8] sm:$0xff]
        %v7659 = vld [vmem:[#allocation15 + $0x6c0] sm:$0xff]
        %v7660 = vld [vmem:[#allocation15 + $0x6c8] sm:$0xff]
        %v7661 = vld [vmem:[#allocation15 + $0x6d0] sm:$0xff]
        %v7662 = vld [vmem:[#allocation15 + $0x6d8] sm:$0xff]
        %v7663 = vld [vmem:[#allocation15 + $0x6e0] sm:$0xff]
        %v7664 = vld [vmem:[#allocation15 + $0x6e8] sm:$0xff]
        %v7665 = vld [vmem:[#allocation15 + $0x6f0] sm:$0xff]
        %v7666 = vld [vmem:[#allocation15 + $0x6f8] sm:$0xff]
        %v7667 = vld [vmem:[#allocation15 + $0x700] sm:$0xff]
        %v7668 = vld [vmem:[#allocation15 + $0x708] sm:$0xff]
        %v7669 = vld [vmem:[#allocation15 + $0x710] sm:$0xff]
        %v7670 = vld [vmem:[#allocation15 + $0x718] sm:$0xff]
        %v7671 = vld [vmem:[#allocation15 + $0x720] sm:$0xff]
        %v7672 = vld [vmem:[#allocation15 + $0x728] sm:$0xff]
        %v7673 = vld [vmem:[#allocation15 + $0x730] sm:$0xff]
        %v7674 = vld [vmem:[#allocation15 + $0x738] sm:$0xff]
        %v7675 = vld [vmem:[#allocation15 + $0x740] sm:$0xff]
        %v7676 = vld [vmem:[#allocation15 + $0x748] sm:$0xff]
        %v7677 = vld [vmem:[#allocation15 + $0x750] sm:$0xff]
        %v7678 = vld [vmem:[#allocation15 + $0x758] sm:$0xff]
        %v7679 = vld [vmem:[#allocation15 + $0x760] sm:$0xff]
        %v7680 = vld [vmem:[#allocation15 + $0x768] sm:$0xff]
        %v7681 = vld [vmem:[#allocation15 + $0x770] sm:$0xff]
        %v7682 = vld [vmem:[#allocation15 + $0x778] sm:$0xff]
        %v7683 = vld [vmem:[#allocation15 + $0x780] sm:$0xff]
        %v7684 = vld [vmem:[#allocation15 + $0x788] sm:$0xff]
        %v7685 = vld [vmem:[#allocation15 + $0x790] sm:$0xff]
        %v7686 = vld [vmem:[#allocation15 + $0x798] sm:$0xff]
        %v7687 = vld [vmem:[#allocation15 + $0x7a0] sm:$0xff]
        %v7688 = vld [vmem:[#allocation15 + $0x7a8] sm:$0xff]
        %v7689 = vld [vmem:[#allocation15 + $0x7b0] sm:$0xff]
        %v7690 = vld [vmem:[#allocation15 + $0x7b8] sm:$0xff]
        %v7691 = vld [vmem:[#allocation15 + $0x7c0] sm:$0xff]
        %v7692 = vld [vmem:[#allocation15 + $0x7c8] sm:$0xff]
        %v7693 = vld [vmem:[#allocation15 + $0x7d0] sm:$0xff]
        %v7694 = vld [vmem:[#allocation15 + $0x7d8] sm:$0xff]
        %v7695 = vld [vmem:[#allocation15 + $0x7e0] sm:$0xff]
        %v7696 = vld [vmem:[#allocation15 + $0x7e8] sm:$0xff]
        %v7697 = vld [vmem:[#allocation15 + $0x7f0] sm:$0xff]
        %v7698 = vld [vmem:[#allocation15 + $0x7f8] sm:$0xff]
        %v7699 = vld [vmem:[%s13] sm:$0x3]
        %v7701 = vlaneseq
        %v7702 = vshrl.u32 %v7701, 7
        %v7703 = vsub.s32 0, %v7702
        %v7704 = vrot.slane %v7699, %v7703
        %v7705 = vlaneseq
        %v7706 = vshrl.u32 %v7705, 7
        %v7707 = vsub.s32 1, %v7706
        %v7708 = vrot.slane %v7699, %v7707
        %7711 = vmatprep.subr.mxu0 %v7444
        %7712 = vmatpush1.msra.mxu0 %v7443
        %7713 = vmatprep.subr.mxu0 %v7446
        %7714 = vmatpush1.msra.mxu0 %v7445
        %7715 = vmatprep.subr.mxu0 %v7448
        %7716 = vmatpush1.msra.mxu0 %v7447
        %7717 = vmatprep.subr.mxu0 %v7450
        %7718 = vmatpush1.msra.mxu0 %v7449
        %7719 = vmatprep.subr.mxu0 %v7452
        %7720 = vmatpush1.msra.mxu0 %v7451
        %7721 = vmatprep.subr.mxu0 %v7454
        %7722 = vmatpush1.msra.mxu0 %v7453
        %7723 = vmatprep.subr.mxu0 %v7456
        %7724 = vmatpush1.msra.mxu0 %v7455
        %7725 = vmatprep.subr.mxu0 %v7458
        %7726 = vmatpush1.msra.mxu0 %v7457
        %7727 = vmatprep.subr.mxu0 %v7460
        %7728 = vmatpush1.msra.mxu0 %v7459
        %7729 = vmatprep.subr.mxu0 %v7462
        %7730 = vmatpush1.msra.mxu0 %v7461
        %7731 = vmatprep.subr.mxu0 %v7464
        %7732 = vmatpush1.msra.mxu0 %v7463
        %7733 = vmatprep.subr.mxu0 %v7466
        %7734 = vmatpush1.msra.mxu0 %v7465
        %7735 = vmatprep.subr.mxu0 %v7468
        %7736 = vmatpush1.msra.mxu0 %v7467
        %7737 = vmatprep.subr.mxu0 %v7470
        %7738 = vmatpush1.msra.mxu0 %v7469
        %7739 = vmatprep.subr.mxu0 %v7472
        %7740 = vmatpush1.msra.mxu0 %v7471
        %7741 = vmatprep.subr.mxu0 %v7474
        %7742 = vmatpush1.msra.mxu0 %v7473
        %7743 = vmatprep.subr.mxu0 %v7476
        %7744 = vmatpush1.msra.mxu0 %v7475
        %7745 = vmatprep.subr.mxu0 %v7478
        %7746 = vmatpush1.msra.mxu0 %v7477
        %7747 = vmatprep.subr.mxu0 %v7480
        %7748 = vmatpush1.msra.mxu0 %v7479
        %7749 = vmatprep.subr.mxu0 %v7482
        %7750 = vmatpush1.msra.mxu0 %v7481
        %7751 = vmatprep.subr.mxu0 %v7484
        %7752 = vmatpush1.msra.mxu0 %v7483
        %7753 = vmatprep.subr.mxu0 %v7486
        %7754 = vmatpush1.msra.mxu0 %v7485
        %7755 = vmatprep.subr.mxu0 %v7488
        %7756 = vmatpush1.msra.mxu0 %v7487
        %7757 = vmatprep.subr.mxu0 %v7490
        %7758 = vmatpush1.msra.mxu0 %v7489
        %7759 = vmatprep.subr.mxu0 %v7492
        %7760 = vmatpush1.msra.mxu0 %v7491
        %7761 = vmatprep.subr.mxu0 %v7494
        %7762 = vmatpush1.msra.mxu0 %v7493
        %7763 = vmatprep.subr.mxu0 %v7496
        %7764 = vmatpush1.msra.mxu0 %v7495
        %7765 = vmatprep.subr.mxu0 %v7498
        %7766 = vmatpush1.msra.mxu0 %v7497
        %7767 = vmatprep.subr.mxu0 %v7500
        %7768 = vmatpush1.msra.mxu0 %v7499
        %7769 = vmatprep.subr.mxu0 %v7502
        %7770 = vmatpush1.msra.mxu0 %v7501
        %7771 = vmatprep.subr.mxu0 %v7504
        %7772 = vmatpush1.msra.mxu0 %v7503
        %7773 = vmatprep.subr.mxu0 %v7506
        %7774 = vmatpush1.msra.mxu0 %v7505
        %7775 = vmatprep.mubr.f32.mxu0 %v7380
        %7776 = vmatmul.mubr.f32.gmra.mrb[0].mxu0 %v7379
        %v7777 = vpop.f32.mrb[0].mxu0
        %v7778 = vadd.f32 %v7704, %v7777
        %v7779 = vpop.f32.mrb[0].mxu0
        %v7780 = vadd.f32 %v7708, %v7779
        %7781 = vmatprep.mubr.f32.mxu0 %v7388
        %7782 = vmatmul.mubr.f32.gmra.mrb[0].mxu0 %v7387
        %v7783 = vpop.f32.mrb[0].mxu0
        %v7784 = vadd.f32 %v7704, %v7783
        %v7785 = vpop.f32.mrb[0].mxu0
        %v7786 = vadd.f32 %v7708, %v7785
        %7787 = vmatprep.mubr.f32.mxu0 %v7396
        %7788 = vmatmul.mubr.f32.gmra.mrb[0].mxu0 %v7395
        %v7789 = vpop.f32.mrb[0].mxu0
        %v7790 = vadd.f32 %v7704, %v7789
        %v7791 = vpop.f32.mrb[0].mxu0
        %v7792 = vadd.f32 %v7708, %v7791
        %7793 = vmatprep.mubr.f32.mxu0 %v7404
        %7794 = vmatmul.mubr.f32.gmra.mrb[0].mxu0 %v7403
        %v7795 = vpop.f32.mrb[0].mxu0
        %v7796 = vadd.f32 %v7704, %v7795
        %v7797 = vpop.f32.mrb[0].mxu0
        %v7798 = vadd.f32 %v7708, %v7797
        %7799 = vmatprep.mubr.f32.mxu0 %v7412
        %7800 = vmatmul.mubr.f32.gmra.mrb[0].mxu0 %v7411
        %v7801 = vpop.f32.mrb[0].mxu0
        %v7802 = vadd.f32 %v7704, %v7801
        %v7803 = vpop.f32.mrb[0].mxu0
        %v7804 = vadd.f32 %v7708, %v7803
        %7805 = vmatprep.mubr.f32.mxu0 %v7420
        %7806 = vmatmul.mubr.f32.gmra.mrb[0].mxu0 %v7419
        %v7807 = vpop.f32.mrb[0].mxu0
        %v7808 = vadd.f32 %v7704, %v7807
        %v7809 = vpop.f32.mrb[0].mxu0
        %v7810 = vadd.f32 %v7708, %v7809
        %7811 = vmatprep.mubr.f32.mxu0 %v7428
        %7812 = vmatmul.mubr.f32.gmra.mrb[0].mxu0 %v7427
        %v7813 = vpop.f32.mrb[0].mxu0
        %v7814 = vadd.f32 %v7704, %v7813
        %v7815 = vpop.f32.mrb[0].mxu0
        %v7816 = vadd.f32 %v7708, %v7815
        %7817 = vmatprep.mubr.f32.mxu0 %v7436
        %7818 = vmatmul.mubr.f32.gmra.mrb[0].mxu0 %v7435
        %v7819 = vpop.f32.mrb[0].mxu0
        %v7820 = vadd.f32 %v7704, %v7819
        %v7821 = vpop.f32.mrb[0].mxu0
        %v7822 = vadd.f32 %v7708, %v7821
        %7823 = vdwg.mxu0
        %7824 = vmatprep.subr.mxu0 %v7508
        %7825 = vmatpush1.msra.mxu0 %v7507
        %7826 = vmatprep.subr.mxu0 %v7510
        %7827 = vmatpush1.msra.mxu0 %v7509
        %7828 = vmatprep.subr.mxu0 %v7512
        %7829 = vmatpush1.msra.mxu0 %v7511
        %7830 = vmatprep.subr.mxu0 %v7514
        %7831 = vmatpush1.msra.mxu0 %v7513
        %7832 = vmatprep.subr.mxu0 %v7516
        %7833 = vmatpush1.msra.mxu0 %v7515
        %7834 = vmatprep.subr.mxu0 %v7518
        %7835 = vmatpush1.msra.mxu0 %v7517
        %7836 = vmatprep.subr.mxu0 %v7520
        %7837 = vmatpush1.msra.mxu0 %v7519
        %7838 = vmatprep.subr.mxu0 %v7522
        %7839 = vmatpush1.msra.mxu0 %v7521
        %7840 = vmatprep.subr.mxu0 %v7524
        %7841 = vmatpush1.msra.mxu0 %v7523
        %7842 = vmatprep.subr.mxu0 %v7526
        %7843 = vmatpush1.msra.mxu0 %v7525
        %7844 = vmatprep.subr.mxu0 %v7528
        %7845 = vmatpush1.msra.mxu0 %v7527
        %7846 = vmatprep.subr.mxu0 %v7530
        %7847 = vmatpush1.msra.mxu0 %v7529
        %7848 = vmatprep.subr.mxu0 %v7532
        %7849 = vmatpush1.msra.mxu0 %v7531
        %7850 = vmatprep.subr.mxu0 %v7534
        %7851 = vmatpush1.msra.mxu0 %v7533
        %7852 = vmatprep.subr.mxu0 %v7536
        %7853 = vmatpush1.msra.mxu0 %v7535
        %7854 = vmatprep.subr.mxu0 %v7538
        %7855 = vmatpush1.msra.mxu0 %v7537
        %7856 = vmatprep.subr.mxu0 %v7540
        %7857 = vmatpush1.msra.mxu0 %v7539
        %7858 = vmatprep.subr.mxu0 %v7542
        %7859 = vmatpush1.msra.mxu0 %v7541
        %7860 = vmatprep.subr.mxu0 %v7544
        %7861 = vmatpush1.msra.mxu0 %v7543
        %7862 = vmatprep.subr.mxu0 %v7546
        %7863 = vmatpush1.msra.mxu0 %v7545
        %7864 = vmatprep.subr.mxu0 %v7548
        %7865 = vmatpush1.msra.mxu0 %v7547
        %7866 = vmatprep.subr.mxu0 %v7550
        %7867 = vmatpush1.msra.mxu0 %v7549
        %7868 = vmatprep.subr.mxu0 %v7552
        %7869 = vmatpush1.msra.mxu0 %v7551
        %7870 = vmatprep.subr.mxu0 %v7554
        %7871 = vmatpush1.msra.mxu0 %v7553
        %7872 = vmatprep.subr.mxu0 %v7556
        %7873 = vmatpush1.msra.mxu0 %v7555
        %7874 = vmatprep.subr.mxu0 %v7558
        %7875 = vmatpush1.msra.mxu0 %v7557
        %7876 = vmatprep.subr.mxu0 %v7560
        %7877 = vmatpush1.msra.mxu0 %v7559
        %7878 = vmatprep.subr.mxu0 %v7562
        %7879 = vmatpush1.msra.mxu0 %v7561
        %7880 = vmatprep.subr.mxu0 %v7564
        %7881 = vmatpush1.msra.mxu0 %v7563
        %7882 = vmatprep.subr.mxu0 %v7566
        %7883 = vmatpush1.msra.mxu0 %v7565
        %7884 = vmatprep.subr.mxu0 %v7568
        %7885 = vmatpush1.msra.mxu0 %v7567
        %7886 = vmatprep.subr.mxu0 %v7570
        %7887 = vmatpush1.msra.mxu0 %v7569
        %7888 = vmatprep.mubr.f32.mxu0 %v7382
        %7889 = vmatmul.mubr.f32.gmra.mrb[0].mxu0 %v7381
        %v7890 = vpop.f32.mrb[0].mxu0
        %v7891 = vadd.f32 %v7778, %v7890
        %v7892 = vpop.f32.mrb[0].mxu0
        %v7893 = vadd.f32 %v7780, %v7892
        %7894 = vmatprep.mubr.f32.mxu0 %v7390
        %7895 = vmatmul.mubr.f32.gmra.mrb[0].mxu0 %v7389
        %v7896 = vpop.f32.mrb[0].mxu0
        %v7897 = vadd.f32 %v7784, %v7896
        %v7898 = vpop.f32.mrb[0].mxu0
        %v7899 = vadd.f32 %v7786, %v7898
        %7900 = vmatprep.mubr.f32.mxu0 %v7398
        %7901 = vmatmul.mubr.f32.gmra.mrb[0].mxu0 %v7397
        %v7902 = vpop.f32.mrb[0].mxu0
        %v7903 = vadd.f32 %v7790, %v7902
        %v7904 = vpop.f32.mrb[0].mxu0
        %v7905 = vadd.f32 %v7792, %v7904
        %7906 = vmatprep.mubr.f32.mxu0 %v7406
        %7907 = vmatmul.mubr.f32.gmra.mrb[0].mxu0 %v7405
        %v7908 = vpop.f32.mrb[0].mxu0
        %v7909 = vadd.f32 %v7796, %v7908
        %v7910 = vpop.f32.mrb[0].mxu0
        %v7911 = vadd.f32 %v7798, %v7910
        %7912 = vmatprep.mubr.f32.mxu0 %v7414
        %7913 = vmatmul.mubr.f32.gmra.mrb[0].mxu0 %v7413
        %v7914 = vpop.f32.mrb[0].mxu0
        %v7915 = vadd.f32 %v7802, %v7914
        %v7916 = vpop.f32.mrb[0].mxu0
        %v7917 = vadd.f32 %v7804, %v7916
        %7918 = vmatprep.mubr.f32.mxu0 %v7422
        %7919 = vmatmul.mubr.f32.gmra.mrb[0].mxu0 %v7421
        %v7920 = vpop.f32.mrb[0].mxu0
        %v7921 = vadd.f32 %v7808, %v7920
        %v7922 = vpop.f32.mrb[0].mxu0
        %v7923 = vadd.f32 %v7810, %v7922
        %7924 = vmatprep.mubr.f32.mxu0 %v7430
        %7925 = vmatmul.mubr.f32.gmra.mrb[0].mxu0 %v7429
        %v7926 = vpop.f32.mrb[0].mxu0
        %v7927 = vadd.f32 %v7814, %v7926
        %v7928 = vpop.f32.mrb[0].mxu0
        %v7929 = vadd.f32 %v7816, %v7928
        %7930 = vmatprep.mubr.f32.mxu0 %v7438
        %7931 = vmatmul.mubr.f32.gmra.mrb[0].mxu0 %v7437
        %v7932 = vpop.f32.mrb[0].mxu0
        %v7933 = vadd.f32 %v7820, %v7932
        %v7934 = vpop.f32.mrb[0].mxu0
        %v7935 = vadd.f32 %v7822, %v7934
        %7936 = vdwg.mxu0
        %7937 = vmatprep.subr.mxu0 %v7572
        %7938 = vmatpush1.msra.mxu0 %v7571
        %7939 = vmatprep.subr.mxu0 %v7574
        %7940 = vmatpush1.msra.mxu0 %v7573
        %7941 = vmatprep.subr.mxu0 %v7576
        %7942 = vmatpush1.msra.mxu0 %v7575
        %7943 = vmatprep.subr.mxu0 %v7578
        %7944 = vmatpush1.msra.mxu0 %v7577
        %7945 = vmatprep.subr.mxu0 %v7580
        %7946 = vmatpush1.msra.mxu0 %v7579
        %7947 = vmatprep.subr.mxu0 %v7582
        %7948 = vmatpush1.msra.mxu0 %v7581
        %7949 = vmatprep.subr.mxu0 %v7584
        %7950 = vmatpush1.msra.mxu0 %v7583
        %7951 = vmatprep.subr.mxu0 %v7586
        %7952 = vmatpush1.msra.mxu0 %v7585
        %7953 = vmatprep.subr.mxu0 %v7588
        %7954 = vmatpush1.msra.mxu0 %v7587
        %7955 = vmatprep.subr.mxu0 %v7590
        %7956 = vmatpush1.msra.mxu0 %v7589
        %7957 = vmatprep.subr.mxu0 %v7592
        %7958 = vmatpush1.msra.mxu0 %v7591
        %7959 = vmatprep.subr.mxu0 %v7594
        %7960 = vmatpush1.msra.mxu0 %v7593
        %7961 = vmatprep.subr.mxu0 %v7596
        %7962 = vmatpush1.msra.mxu0 %v7595
        %7963 = vmatprep.subr.mxu0 %v7598
        %7964 = vmatpush1.msra.mxu0 %v7597
        %7965 = vmatprep.subr.mxu0 %v7600
        %7966 = vmatpush1.msra.mxu0 %v7599
        %7967 = vmatprep.subr.mxu0 %v7602
        %7968 = vmatpush1.msra.mxu0 %v7601
        %7969 = vmatprep.subr.mxu0 %v7604
        %7970 = vmatpush1.msra.mxu0 %v7603
        %7971 = vmatprep.subr.mxu0 %v7606
        %7972 = vmatpush1.msra.mxu0 %v7605
        %7973 = vmatprep.subr.mxu0 %v7608
        %7974 = vmatpush1.msra.mxu0 %v7607
        %7975 = vmatprep.subr.mxu0 %v7610
        %7976 = vmatpush1.msra.mxu0 %v7609
        %7977 = vmatprep.subr.mxu0 %v7612
        %7978 = vmatpush1.msra.mxu0 %v7611
        %7979 = vmatprep.subr.mxu0 %v7614
        %7980 = vmatpush1.msra.mxu0 %v7613
        %7981 = vmatprep.subr.mxu0 %v7616
        %7982 = vmatpush1.msra.mxu0 %v7615
        %7983 = vmatprep.subr.mxu0 %v7618
        %7984 = vmatpush1.msra.mxu0 %v7617
        %7985 = vmatprep.subr.mxu0 %v7620
        %7986 = vmatpush1.msra.mxu0 %v7619
        %7987 = vmatprep.subr.mxu0 %v7622
        %7988 = vmatpush1.msra.mxu0 %v7621
        %7989 = vmatprep.subr.mxu0 %v7624
        %7990 = vmatpush1.msra.mxu0 %v7623
        %7991 = vmatprep.subr.mxu0 %v7626
        %7992 = vmatpush1.msra.mxu0 %v7625
        %7993 = vmatprep.subr.mxu0 %v7628
        %7994 = vmatpush1.msra.mxu0 %v7627
        %7995 = vmatprep.subr.mxu0 %v7630
        %7996 = vmatpush1.msra.mxu0 %v7629
        %7997 = vmatprep.subr.mxu0 %v7632
        %7998 = vmatpush1.msra.mxu0 %v7631
        %7999 = vmatprep.subr.mxu0 %v7634
        %8000 = vmatpush1.msra.mxu0 %v7633
        %8001 = vmatprep.mubr.f32.mxu0 %v7384
        %8002 = vmatmul.mubr.f32.gmra.mrb[0].mxu0 %v7383
        %v8003 = vpop.f32.mrb[0].mxu0
        %v8004 = vadd.f32 %v7891, %v8003
        %v8005 = vpop.f32.mrb[0].mxu0
        %v8006 = vadd.f32 %v7893, %v8005
        %8007 = vmatprep.mubr.f32.mxu0 %v7392
        %8008 = vmatmul.mubr.f32.gmra.mrb[0].mxu0 %v7391
        %v8009 = vpop.f32.mrb[0].mxu0
        %v8010 = vadd.f32 %v7897, %v8009
        %v8011 = vpop.f32.mrb[0].mxu0
        %v8012 = vadd.f32 %v7899, %v8011
        %8013 = vmatprep.mubr.f32.mxu0 %v7400
        %8014 = vmatmul.mubr.f32.gmra.mrb[0].mxu0 %v7399
        %v8015 = vpop.f32.mrb[0].mxu0
        %v8016 = vadd.f32 %v7903, %v8015
        %v8017 = vpop.f32.mrb[0].mxu0
        %v8018 = vadd.f32 %v7905, %v8017
        %8019 = vmatprep.mubr.f32.mxu0 %v7408
        %8020 = vmatmul.mubr.f32.gmra.mrb[0].mxu0 %v7407
        %v8021 = vpop.f32.mrb[0].mxu0
        %v8022 = vadd.f32 %v7909, %v8021
        %v8023 = vpop.f32.mrb[0].mxu0
        %v8024 = vadd.f32 %v7911, %v8023
        %8025 = vmatprep.mubr.f32.mxu0 %v7416
        %8026 = vmatmul.mubr.f32.gmra.mrb[0].mxu0 %v7415
        %v8027 = vpop.f32.mrb[0].mxu0
        %v8028 = vadd.f32 %v7915, %v8027
        %v8029 = vpop.f32.mrb[0].mxu0
        %v8030 = vadd.f32 %v7917, %v8029
        %8031 = vmatprep.mubr.f32.mxu0 %v7424
        %8032 = vmatmul.mubr.f32.gmra.mrb[0].mxu0 %v7423
        %v8033 = vpop.f32.mrb[0].mxu0
        %v8034 = vadd.f32 %v7921, %v8033
        %v8035 = vpop.f32.mrb[0].mxu0
        %v8036 = vadd.f32 %v7923, %v8035
        %8037 = vmatprep.mubr.f32.mxu0 %v7432
        %8038 = vmatmul.mubr.f32.gmra.mrb[0].mxu0 %v7431
        %v8039 = vpop.f32.mrb[0].mxu0
        %v8040 = vadd.f32 %v7927, %v8039
        %v8041 = vpop.f32.mrb[0].mxu0
        %v8042 = vadd.f32 %v7929, %v8041
        %8043 = vmatprep.mubr.f32.mxu0 %v7440
        %8044 = vmatmul.mubr.f32.gmra.mrb[0].mxu0 %v7439
        %v8045 = vpop.f32.mrb[0].mxu0
        %v8046 = vadd.f32 %v7933, %v8045
        %v8047 = vpop.f32.mrb[0].mxu0
        %v8048 = vadd.f32 %v7935, %v8047
        %8049 = vdwg.mxu0
        %8050 = vmatprep.subr.mxu0 %v7636
        %8051 = vmatpush1.msra.mxu0 %v7635
        %8052 = vmatprep.subr.mxu0 %v7638
        %8053 = vmatpush1.msra.mxu0 %v7637
        %8054 = vmatprep.subr.mxu0 %v7640
        %8055 = vmatpush1.msra.mxu0 %v7639
        %8056 = vmatprep.subr.mxu0 %v7642
        %8057 = vmatpush1.msra.mxu0 %v7641
        %8058 = vmatprep.subr.mxu0 %v7644
        %8059 = vmatpush1.msra.mxu0 %v7643
        %8060 = vmatprep.subr.mxu0 %v7646
        %8061 = vmatpush1.msra.mxu0 %v7645
        %8062 = vmatprep.subr.mxu0 %v7648
        %8063 = vmatpush1.msra.mxu0 %v7647
        %8064 = vmatprep.subr.mxu0 %v7650
        %8065 = vmatpush1.msra.mxu0 %v7649
        %8066 = vmatprep.subr.mxu0 %v7652
        %8067 = vmatpush1.msra.mxu0 %v7651
        %8068 = vmatprep.subr.mxu0 %v7654
        %8069 = vmatpush1.msra.mxu0 %v7653
        %8070 = vmatprep.subr.mxu0 %v7656
        %8071 = vmatpush1.msra.mxu0 %v7655
        %8072 = vmatprep.subr.mxu0 %v7658
        %8073 = vmatpush1.msra.mxu0 %v7657
        %8074 = vmatprep.subr.mxu0 %v7660
        %8075 = vmatpush1.msra.mxu0 %v7659
        %8076 = vmatprep.subr.mxu0 %v7662
        %8077 = vmatpush1.msra.mxu0 %v7661
        %8078 = vmatprep.subr.mxu0 %v7664
        %8079 = vmatpush1.msra.mxu0 %v7663
        %8080 = vmatprep.subr.mxu0 %v7666
        %8081 = vmatpush1.msra.mxu0 %v7665
        %8082 = vmatprep.subr.mxu0 %v7668
        %8083 = vmatpush1.msra.mxu0 %v7667
        %8084 = vmatprep.subr.mxu0 %v7670
        %8085 = vmatpush1.msra.mxu0 %v7669
        %8086 = vmatprep.subr.mxu0 %v7672
        %8087 = vmatpush1.msra.mxu0 %v7671
        %8088 = vmatprep.subr.mxu0 %v7674
        %8089 = vmatpush1.msra.mxu0 %v7673
        %8090 = vmatprep.subr.mxu0 %v7676
        %8091 = vmatpush1.msra.mxu0 %v7675
        %8092 = vmatprep.subr.mxu0 %v7678
        %8093 = vmatpush1.msra.mxu0 %v7677
        %8094 = vmatprep.subr.mxu0 %v7680
        %8095 = vmatpush1.msra.mxu0 %v7679
        %8096 = vmatprep.subr.mxu0 %v7682
        %8097 = vmatpush1.msra.mxu0 %v7681
        %8098 = vmatprep.subr.mxu0 %v7684
        %8099 = vmatpush1.msra.mxu0 %v7683
        %8100 = vmatprep.subr.mxu0 %v7686
        %8101 = vmatpush1.msra.mxu0 %v7685
        %8102 = vmatprep.subr.mxu0 %v7688
        %8103 = vmatpush1.msra.mxu0 %v7687
        %8104 = vmatprep.subr.mxu0 %v7690
        %8105 = vmatpush1.msra.mxu0 %v7689
        %8106 = vmatprep.subr.mxu0 %v7692
        %8107 = vmatpush1.msra.mxu0 %v7691
        %8108 = vmatprep.subr.mxu0 %v7694
        %8109 = vmatpush1.msra.mxu0 %v7693
        %8110 = vmatprep.subr.mxu0 %v7696
        %8111 = vmatpush1.msra.mxu0 %v7695
        %8112 = vmatprep.subr.mxu0 %v7698
        %8113 = vmatpush1.msra.mxu0 %v7697
        %8114 = vmatprep.mubr.f32.mxu0 %v7386
        %8115 = vmatmul.mubr.f32.gmra.mrb[0].mxu0 %v7385
        %v8116 = vpop.f32.mrb[0].mxu0
        %v8117 = vadd.f32 %v8004, %v8116
        %v8118 = vpop.f32.mrb[0].mxu0
        %v8119 = vadd.f32 %v8006, %v8118
        %8120 = vmatprep.mubr.f32.mxu0 %v7394
        %8121 = vmatmul.mubr.f32.gmra.mrb[0].mxu0 %v7393
        %v8122 = vpop.f32.mrb[0].mxu0
        %v8123 = vadd.f32 %v8010, %v8122
        %v8124 = vpop.f32.mrb[0].mxu0
        %v8125 = vadd.f32 %v8012, %v8124
        %8126 = vmatprep.mubr.f32.mxu0 %v7402
        %8127 = vmatmul.mubr.f32.gmra.mrb[0].mxu0 %v7401
        %v8128 = vpop.f32.mrb[0].mxu0
        %v8129 = vadd.f32 %v8016, %v8128
        %v8130 = vpop.f32.mrb[0].mxu0
        %v8131 = vadd.f32 %v8018, %v8130
        %8132 = vmatprep.mubr.f32.mxu0 %v7410
        %8133 = vmatmul.mubr.f32.gmra.mrb[0].mxu0 %v7409
        %v8134 = vpop.f32.mrb[0].mxu0
        %v8135 = vadd.f32 %v8022, %v8134
        %v8136 = vpop.f32.mrb[0].mxu0
        %v8137 = vadd.f32 %v8024, %v8136
        %8138 = vmatprep.mubr.f32.mxu0 %v7418
        %8139 = vmatmul.mubr.f32.gmra.mrb[0].mxu0 %v7417
        %v8140 = vpop.f32.mrb[0].mxu0
        %v8141 = vadd.f32 %v8028, %v8140
        %v8142 = vpop.f32.mrb[0].mxu0
        %v8143 = vadd.f32 %v8030, %v8142
        %8144 = vmatprep.mubr.f32.mxu0 %v7426
        %8145 = vmatmul.mubr.f32.gmra.mrb[0].mxu0 %v7425
        %v8146 = vpop.f32.mrb[0].mxu0
        %v8147 = vadd.f32 %v8034, %v8146
        %v8148 = vpop.f32.mrb[0].mxu0
        %v8149 = vadd.f32 %v8036, %v8148
        %8150 = vmatprep.mubr.f32.mxu0 %v7434
        %8151 = vmatmul.mubr.f32.gmra.mrb[0].mxu0 %v7433
        %v8152 = vpop.f32.mrb[0].mxu0
        %v8153 = vadd.f32 %v8040, %v8152
        %v8154 = vpop.f32.mrb[0].mxu0
        %v8155 = vadd.f32 %v8042, %v8154
        %8156 = vmatprep.mubr.f32.mxu0 %v7442
        %8157 = vmatmul.mubr.f32.gmra.mrb[0].mxu0 %v7441
        %v8158 = vpop.f32.mrb[0].mxu0
        %v8159 = vadd.f32 %v8046, %v8158
        %v8160 = vpop.f32.mrb[0].mxu0
        %v8161 = vadd.f32 %v8048, %v8160
        %8162 = vdwg.mxu0
        %v8163 = vadd.f32 %v4637, %v8117
        %v8164 = vadd.f32 %v4638, %v8119
        %v8165 = vadd.f32 %v4639, %v8123
        %v8166 = vadd.f32 %v4640, %v8125
        %v8167 = vadd.f32 %v4641, %v8129
        %v8168 = vadd.f32 %v4642, %v8131
        %v8169 = vadd.f32 %v4643, %v8135
        %v8170 = vadd.f32 %v4644, %v8137
        %v8171 = vadd.f32 %v4645, %v8141
        %v8172 = vadd.f32 %v4646, %v8143
        %v8173 = vadd.f32 %v4647, %v8147
        %v8174 = vadd.f32 %v4648, %v8149
        %v8175 = vadd.f32 %v4649, %v8153
        %v8176 = vadd.f32 %v4650, %v8155
        %v8177 = vadd.f32 %v4651, %v8159
        %v8178 = vadd.f32 %v4652, %v8161
        %8179 = vst [vmem:[%s649] sm:$0xff] %v8163
        %8180 = vst [vmem:[%s649 + $0x8] sm:$0xff] %v8164
        %8181 = vst [vmem:[%s649 + $0x10] sm:$0xff] %v8165
        %8182 = vst [vmem:[%s649 + $0x18] sm:$0xff] %v8166
        %8183 = vst [vmem:[%s649 + $0x20] sm:$0xff] %v8167
        %8184 = vst [vmem:[%s649 + $0x28] sm:$0xff] %v8168
        %8185 = vst [vmem:[%s649 + $0x30] sm:$0xff] %v8169
        %8186 = vst [vmem:[%s649 + $0x38] sm:$0xff] %v8170
        %8187 = vst [vmem:[%s649 + $0x40] sm:$0xff] %v8171
        %8188 = vst [vmem:[%s649 + $0x48] sm:$0xff] %v8172
        %8189 = vst [vmem:[%s649 + $0x50] sm:$0xff] %v8173
        %8190 = vst [vmem:[%s649 + $0x58] sm:$0xff] %v8174
        %8191 = vst [vmem:[%s649 + $0x60] sm:$0xff] %v8175
        %8192 = vst [vmem:[%s649 + $0x68] sm:$0xff] %v8176
        %8193 = vst [vmem:[%s649 + $0x70] sm:$0xff] %v8177
        %8194 = vst [vmem:[%s649 + $0x78] sm:$0xff] %v8178
        %s8195 = sand.u32 %s369, 1
        %s8196 = scalar_lea.sflag [#allocation6], %s8195
        %s8197 = sand.u32 %s369, 1
        %s8198 = smul.addr %s8197, 128
        %s8199 = scalar_lea.vmem [#allocation16], %s8198
        %s8200 = sand.u32 %s397, 1
        %s8201 = scalar_lea.sflag [#allocation18], %s8200
        %s8202 = sand.u32 %s397, 1
        %s8203 = smul.addr %s8202, 256
        %s8204 = scalar_lea.vmem [#allocation17], %s8203
        // Predicated region
        $region109: #{tpu_custom_call.1} parent=75 // pred_check
          %p8205 = pneg %p379
        $region110: #{tpu_custom_call.1} parent=75 // pred_check_branch
          %8207 = sbr.rel (%p8205) target = $region112
        $region111: #{tpu_custom_call.1} parent=75 // pred_region
          %s8208 = smul.u32 8, %s46
          %s8210 = ssub.s32 2048, 2048
          %8211 = vsyncadd %s8196, %s8210
          %s8212 = smul.addr %s8208, 2
          %s8213 = smul.addr %s45, 32
          %s8214 = sadd.s32 %s8212, %s8213
          %s8215 = smul.addr %s8214, 128
          %s8216 = scalar_lea.hbm %s14, %s8215
          %s8217 = sshll.u32 %s8199, 4
          %s8218 = int_to_ptr.vmem [resolvable:$true] %s8217
          %8223 = dma.vmem_to_hbm [thread:$0]  %s8218, 2048, %s8216, %s8196, 256, 256, 16
        $region112: #{tpu_custom_call.1} parent=75 // pred_fallthru
          _
        // Predicated region
        $region113: #{tpu_custom_call.1} parent=75 // pred_check
          %p8224 = pneg %p407
        $region114: #{tpu_custom_call.1} parent=75 // pred_check_branch
          %8226 = sbr.rel (%p8224) target = $region116
        $region115: #{tpu_custom_call.1} parent=75 // pred_region
          #allocation20 [shape = 'u32[6]{0}', space=smem, size = 0x18, scoped, tag = 'DMA stride descriptor']
          %s8227 = smul.u32 8, %s46
          %s8229 = ssub.s32 4096, 4096
          %8230 = vsyncadd %s8201, %s8229
          %s8231 = smul.addr %s45, 64
          %s8232 = sadd.s32 %s8227, %s8231
          %s8233 = smul.addr %s8232, 128
          %s8234 = scalar_lea.hbm %s15, %s8233
          %s8236 = sshll.u32 1, 14
          %s8237 = sxor.u32 4294967295, %s8236
          %s8240 = sshll.u32 7, 18
          %s8241 = sxor.u32 4294967295, %s8240
          %s8242 = sand.u32 0, %s8241
          %s8244 = sor.u32 %s8242, 0
          %s8246 = sshll.u32 3, 24
          %s8247 = sxor.u32 4294967295, %s8246
          %s8248 = sand.u32 %s8244, %s8247
          %s8250 = sor.u32 %s8248, 0
          %s8251 = sshll.u32 %s8204, 4
          %s8252 = int_to_ptr.vmem [resolvable:$true] %s8251
          %8258 = sst [smem:[#allocation20]] 1024
          %s8259 = scalar_lea.smem [#allocation20], 1
          %8260 = sst [smem:[%s8259]] 2048
          %s8261 = scalar_lea.smem [#allocation20], 2
          %8262 = sst [smem:[%s8261]] 8
          %s8263 = scalar_lea.smem [#allocation20], 3
          %8264 = sst [smem:[%s8263]] 128
          %s8265 = scalar_lea.smem [#allocation20], 4
          %8266 = sst [smem:[%s8265]] 128
          %s8267 = scalar_lea.smem [#allocation20], 5
          %8268 = sst [smem:[%s8267]] 8
          %8270 = dma.general %s8252, 4096, %s8234, %s8201, [#allocation19], [#allocation20], %s8250, 0
        $region116: #{tpu_custom_call.1} parent=75 // pred_fallthru
          _
      $region76: #{tpu_custom_call.1} parent=5 // pred_fallthru
        _
      %p8271 = scmp.le.s32.totalorder 2, %s36
      // Predicated region
      $region117: #{tpu_custom_call.1} parent=5 // pred_check
        %p8272 = pneg %p8271
      $region118: #{tpu_custom_call.1} parent=5 // pred_check_branch
        %8274 = sbr.rel (%p8272) target = $region120
      $region119: #{tpu_custom_call.1} parent=5 // pred_region
        %s8275 = ssub.s32 %s36, 2
        // Predicated region
        $region121: #{tpu_custom_call.1} parent=119 // pred_check
          %p8276 = pneg %p385
        $region122: #{tpu_custom_call.1} parent=119 // pred_check_branch
          %8278 = sbr.rel (%p8276) target = $region124
        $region123: #{tpu_custom_call.1} parent=119 // pred_region
          %s8279 = sand.u32 %s370, 1
          %s8280 = scalar_lea.sflag [#allocation6], %s8279
          %s8281 = sand.u32 %s370, 1
          %s8282 = smul.addr %s8281, 128
          %s8283 = scalar_lea.vmem [#allocation16], %s8282
          %8284 = dma.done %s8280, 2048
        $region124: #{tpu_custom_call.1} parent=119 // pred_fallthru
          _
        // Predicated region
        $region125: #{tpu_custom_call.1} parent=119 // pred_check
          %p8285 = pneg %p413
        $region126: #{tpu_custom_call.1} parent=119 // pred_check_branch
          %8287 = sbr.rel (%p8285) target = $region128
        $region127: #{tpu_custom_call.1} parent=119 // pred_region
          %s8288 = sand.u32 %s398, 1
          %s8289 = scalar_lea.sflag [#allocation18], %s8288
          %s8290 = sand.u32 %s398, 1
          %s8291 = smul.addr %s8290, 256
          %s8292 = scalar_lea.vmem [#allocation17], %s8291
          %8293 = dma.done %s8289, 4096
        $region128: #{tpu_custom_call.1} parent=119 // pred_fallthru
          _
      $region120: #{tpu_custom_call.1} parent=5 // pred_fallthru
        _
    $region6: #{tpu_custom_call.1} parent=1 // loop_footer
      %s40 = sadd.s32 1, %s36
    $region7: #{tpu_custom_call.1} parent=1 // loop_footer_branch
      %35 = sbr.rel target = $region3
    $region8: #{tpu_custom_call.1} parent=1 // loop_exit
      _
    %8294 = vsyncpa [#allocation5], 1
    %s8295 = scalar_lea.sflag [#allocation5], 1
    %8296 = vsyncpa %s8295, 1
    %8297 = vsyncpa [#allocation8], 1
    %s8298 = scalar_lea.sflag [#allocation8], 1
    %8299 = vsyncpa %s8298, 1
    %8300 = vsyncpa [#allocation11], 1
    %8301 = vsyncpa [#allocation14], 1
    %8302 = vsyncpa [#allocation6], 1
    %s8303 = scalar_lea.sflag [#allocation6], 1
    %8304 = vsyncpa %s8303, 1
    %8305 = vsyncpa [#allocation18], 1
    %s8306 = scalar_lea.sflag [#allocation18], 1
    %8307 = vsyncpa %s8306, 1

</llo_original>
